<compile_context>
chip_gen: v7x
topology: tpu7x:2x2x1
jax: 0.10.0
libtpu: 0.0.40
codegen_flags: <defaults>
</compile_context>

<pallas_src>
import functools
from types import SimpleNamespace

import jax
import jax.numpy as jnp
import numpy as np
from jax import lax
from jax.experimental import pallas as pl
from jax.experimental.pallas import tpu as pltpu


# ----------------------------------------------------------------------------
# Static network configuration (the PyTorch module defaults)
# ----------------------------------------------------------------------------
def make_config():
    conv_out = [24, 48]
    conv_ks = [3, 5]
    lin_out = [400, 120, 60]
    in_size = (28, 28)
    out_size = 10

    h, w = in_size
    oh1, ow1 = h - (conv_ks[0] - 1), w - (conv_ks[0] - 1)      # valid conv
    ph1, pw1 = oh1 // 2, ow1 // 2                              # 2x2/2 max-pool
    oh2, ow2 = ph1 - (conv_ks[1] - 1), pw1 - (conv_ks[1] - 1)
    ph2, pw2 = oh2 // 2, ow2 // 2                              # floor (drops odd edge)
    feat = ph2 * pw2 * conv_out[1]
    return SimpleNamespace(
        CIN=1, C1=conv_out[0], C2=conv_out[1],
        KH1=conv_ks[0], KW1=conv_ks[0], KH2=conv_ks[1], KW2=conv_ks[1],
        H=h, W=w, OH1=oh1, OW1=ow1, PH1=ph1, PW1=pw1,
        OH2=oh2, OW2=ow2, PH2=ph2, PW2=pw2,
        FEAT=feat, L1=lin_out[0], L2=lin_out[1], L3=lin_out[2], NOUT=out_size,
        EPS=1e-5)


CFG = make_config()


# ----------------------------------------------------------------------------
# Fused kernel: the entire forward pass for BT samples per grid step.
# Activation layout inside the kernel:
#   rows (leading dim) = spatial row, sublanes = (spatial col, sample), lanes = channel
# so every pooling / conv-tap window is a contiguous, tile-aligned 2-D slice.
# ----------------------------------------------------------------------------
def _fused_net_kernel(p_ref, w1_ref, b1_ref, w2_ref, b2_ref,
                      wf1_ref, bf1_ref, wf2_ref, bf2_ref, wf3_ref, bf3_ref,
                      wo_ref, bo_ref, o_ref, y1_s, z2_s, xflat_s, *, bt, cfg):
    f32 = jnp.float32
    bf16 = jnp.bfloat16
    C1, C2 = cfg.C1, cfg.C2
    OW2U = 2 * cfg.PW2            # conv1 output columns actually used (8)

    # ---- conv0 (im2col MXU matmul) + 2x2 max-pool + folded-BN bias + ReLU ----
    # bias/ReLU commute with max-pool (same bias per channel, ReLU monotone),
    # so pool first and apply bias+ReLU on the 4x smaller pooled tensor.
    w1 = w1_ref[...]                                      # (9, C1) bf16
    b1 = b1_ref[...]                                      # (1, C1) f32

    @pl.loop(0, cfg.PH1)                                  # 13 pooled output rows
    def _conv0_row(ip):
        # split the 26 output columns into (14, 12) chunks (pool pairs stay intact)
        for j0, nj in ((0, 14), (14, cfg.OW1 - 14)):
            lhs_a = p_ref[2 * ip, pl.ds(j0 * bt, nj * bt), :]      # (nj*bt, 9) bf16
            lhs_b = p_ref[2 * ip + 1, pl.ds(j0 * bt, nj * bt), :]
            za = jnp.dot(lhs_a, w1, preferred_element_type=f32)    # (nj*bt, C1)
            zb = jnp.dot(lhs_b, w1, preferred_element_type=f32)
            zr = jnp.maximum(za, zb)                               # H-pool
            for jj in range(nj // 2):                              # W-pool
                jp = j0 // 2 + jj
                wmax = jnp.maximum(zr[(2 * jj) * bt:(2 * jj + 1) * bt, :],
                                   zr[(2 * jj + 1) * bt:(2 * jj + 2) * bt, :])
                y = jnp.maximum(wmax + b1, 0.0)                    # (bt, C1)
                y1_s[ip, jp * bt:(jp + 1) * bt, :] = y.astype(bf16)

    # ---- conv1: 25 tap-wise 2-D MXU matmuls, f32 accumulation ----
    # Only the 8 output rows / 8 output cols that survive the floor-mode pool
    # are computed (row/col 8 of the 9x9 output is dropped).
    @pl.loop(0, 2 * cfg.PH2)                              # 8 used conv1 output rows
    def _conv1_row(i):
        acc = jnp.zeros((OW2U * bt, C2), f32)
        for dh in range(cfg.KH2):
            src = y1_s[i + dh]                            # (13*bt, C1) bf16
            for dw in range(cfg.KW2):
                lhs = src[dw * bt:(dw + OW2U) * bt, :]    # (8*bt, C1) bf16
                acc = acc + jnp.dot(lhs, w2_ref[dh * cfg.KW2 + dw],
                                    preferred_element_type=f32)
        z2_s[i] = acc

    # ---- maxpool1 (floor) + folded-BN bias + ReLU + flatten into (bt, FEAT) ----
    b2 = b2_ref[...]                                      # (1, C2) f32
    for hp in range(cfg.PH2):
        m = jnp.maximum(z2_s[2 * hp], z2_s[2 * hp + 1])   # H-pool (8*bt, C2)
        for wp in range(cfg.PW2):
            blk = jnp.maximum(m[(2 * wp) * bt:(2 * wp + 1) * bt, :],
                              m[(2 * wp + 1) * bt:(2 * wp + 2) * bt, :])
            blk = jnp.maximum(blk + b2, 0.0)              # (bt, C2)
            pos = hp * cfg.PW2 + wp
            xflat_s[:, pos * C2:(pos + 1) * C2] = blk

    # ---- dense0..2 (+ folded BN) + ReLU, then the output head ----
    # (the PyTorch NCHW-flatten permutation is pre-folded into wf1)
    h = jnp.dot(xflat_s[...].astype(bf16), wf1_ref[...],
                preferred_element_type=f32)
    h = jnp.maximum(h + bf1_ref[...], 0.0)
    h = jnp.maximum(jnp.dot(h.astype(bf16), wf2_ref[...],
                            preferred_element_type=f32) + bf2_ref[...], 0.0)
    h = jnp.maximum(jnp.dot(h.astype(bf16), wf3_ref[...],
                            preferred_element_type=f32) + bf3_ref[...], 0.0)
    o_ref[...] = jnp.dot(h.astype(bf16), wo_ref[...],
                         preferred_element_type=f32) + bo_ref[...]


# ----------------------------------------------------------------------------
# One-time parameter preparation: fold eval-mode BatchNorm + layout plumbing.
# Matmul operands are pre-cast to bf16; biases stay f32 (added post-matmul).
# ----------------------------------------------------------------------------
def fold_params(p, cfg=CFG):
    def bn_scale(g, v):
        return g / jnp.sqrt(v + cfg.EPS)

    bf16, f32 = jnp.bfloat16, jnp.float32

    # conv0 + BatchNorm2d
    s = bn_scale(p["bn_c0_g"], p["bn_c0_v"])
    w = p["conv0_w"] * s[:, None, None, None]
    b = (p["conv0_b"] - p["bn_c0_m"]) * s + p["bn_c0_b"]
    w1 = jnp.transpose(w, (2, 3, 1, 0)).reshape(cfg.KH1 * cfg.KW1 * cfg.CIN, cfg.C1)
    b1 = b.reshape(1, cfg.C1)

    # conv1 + BatchNorm2d
    s = bn_scale(p["bn_c1_g"], p["bn_c1_v"])
    w = p["conv1_w"] * s[:, None, None, None]
    b = (p["conv1_b"] - p["bn_c1_m"]) * s + p["bn_c1_b"]
    w2 = jnp.transpose(w, (2, 3, 1, 0)).reshape(cfg.KH2 * cfg.KW2, cfg.C1, cfg.C2)
    b2 = b.reshape(1, cfg.C2)

    # dense0 + BatchNorm1d, with the NCHW flatten permutation folded in
    # (kernel feature order is (hp, wp, c); PyTorch's is (c, hp, wp))
    s = bn_scale(p["bn_l0_g"], p["bn_l0_v"])
    w = p["fc1_w"] * s[:, None]
    b = (p["fc1_b"] - p["bn_l0_m"]) * s + p["bn_l0_b"]
    wf1 = jnp.transpose(w.reshape(cfg.L1, cfg.C2, cfg.PH2, cfg.PW2), (2, 3, 1, 0))
    wf1 = wf1.reshape(cfg.FEAT, cfg.L1)
    bf1 = b.reshape(1, cfg.L1)

    # dense1 + BatchNorm1d
    s = bn_scale(p["bn_l1_g"], p["bn_l1_v"])
    wf2 = jnp.transpose(p["fc2_w"] * s[:, None])
    bf2 = ((p["fc2_b"] - p["bn_l1_m"]) * s + p["bn_l1_b"]).reshape(1, cfg.L2)

    # dense2 + BatchNorm1d
    s = bn_scale(p["bn_l2_g"], p["bn_l2_v"])
    wf3 = jnp.transpose(p["fc3_w"] * s[:, None])
    bf3 = ((p["fc3_b"] - p["bn_l2_m"]) * s + p["bn_l2_b"]).reshape(1, cfg.L3)

    # output head
    wo = jnp.transpose(p["out_w"])
    bo = p["out_b"].reshape(1, cfg.NOUT)

    return (w1.astype(bf16), b1.astype(f32),
            w2.astype(bf16), b2.astype(f32),
            wf1.astype(bf16), bf1.astype(f32),
            wf2.astype(bf16), bf2.astype(f32),
            wf3.astype(bf16), bf3.astype(f32),
            wo.astype(bf16), bo.astype(f32))


# ----------------------------------------------------------------------------
# Wrapper: one fused pallas_call, batch-blocked grid
# ----------------------------------------------------------------------------
def _const_spec(arr):
    nd = arr.ndim
    return pl.BlockSpec(arr.shape, lambda g, _n=nd: (0,) * _n)


def network_forward(x_nchw, folded, *, batch_block=16, cfg=CFG):
    assert x_nchw.shape[1] == cfg.CIN == 1
    B = x_nchw.shape[0]
    # batch tile: multiple of 16 (keeps every slice aligned to the bf16 (16,128) tile)
    bt = max(16, (min(batch_block, max(B, 16)) // 16) * 16)
    G = -(-B // bt)
    Bp = G * bt
    K1 = cfg.KH1 * cfg.KW1 * cfg.CIN

    x = x_nchw[:, 0].astype(jnp.float32)
    if Bp != B:
        x = jnp.concatenate(
            [x, jnp.zeros((Bp - B, cfg.H, cfg.W), jnp.float32)], axis=0)

    # conv0 im2col (cheap XLA slicing), laid out so the kernel only ever takes
    # contiguous 2-D slices: rows = conv0 output row, sublanes = (col, sample),
    # lanes = the 9 taps.  Shipped in bf16 to cut HBM traffic.
    xg = x.reshape(G, bt, cfg.H, cfg.W)
    taps = [xg[:, :, dh:dh + cfg.OH1, dw:dw + cfg.OW1]
            for dh in range(cfg.KH1) for dw in range(cfg.KW1)]
    p = jnp.stack(taps, axis=-1)                       # (G, bt, OH1, OW1, 9)
    p = jnp.transpose(p, (0, 2, 3, 1, 4))              # (G, OH1, OW1, bt, 9)
    p = p.reshape(G * cfg.OH1, cfg.OW1 * bt, K1).astype(jnp.bfloat16)

    in_specs = [pl.BlockSpec((cfg.OH1, cfg.OW1 * bt, K1), lambda g: (g, 0, 0))]
    in_specs += [_const_spec(t) for t in folded]

    # rough per-step VMEM footprint (lane-padded) -> scoped VMEM limit
    def _pad(n, t):
        return -(-n // t) * t
    est = (2 * cfg.OH1 * _pad(cfg.OW1 * bt, 16) * 128 * 2        # patches, dbl-buffered
           + cfg.PH1 * _pad(cfg.PW1 * bt, 16) * 128 * 2          # y1 scratch (bf16)
           + 2 * cfg.PH2 * _pad(2 * cfg.PW2 * bt, 8) * 128 * 4   # conv1-row scratch
           + _pad(bt, 8) * _pad(cfg.FEAT, 128) * 4               # flattened features
           + 4 * 2 ** 20)                                        # weights + slack
    vmem_limit = int(min(100 * 2 ** 20, max(32 * 2 ** 20, 2 * est)))

    kernel = functools.partial(_fused_net_kernel, bt=bt, cfg=cfg)
    out = pl.pallas_call(
        kernel,
        out_shape=jax.ShapeDtypeStruct((Bp, cfg.NOUT), jnp.float32),
        grid=(G,),
        in_specs=in_specs,
        out_specs=pl.BlockSpec((bt, cfg.NOUT), lambda g: (g, 0)),
        scratch_shapes=[
            pltpu.VMEM((cfg.PH1, cfg.PW1 * bt, cfg.C1), jnp.bfloat16),        # pooled conv0
            pltpu.VMEM((2 * cfg.PH2, 2 * cfg.PW2 * bt, cfg.C2), jnp.float32),  # conv1 rows
            pltpu.VMEM((bt, cfg.FEAT), jnp.float32),                           # flat features
        ],
        compiler_params=pltpu.CompilerParams(
            dimension_semantics=("parallel",),
            vmem_limit_bytes=vmem_limit),
    )(p, *folded)
    return out[:B]


# ----------------------------------------------------------------------------
# Deterministic parameters (PyTorch shapes) + pure-JAX eval-mode reference
# ----------------------------------------------------------------------------
def init_params(key, cfg=CFG):
    ks = iter(jax.random.split(key, 32))

    def u(shape, bound):
        return jax.random.uniform(next(ks), shape, jnp.float32, -bound, bound)

    p = {}
    fan1 = cfg.CIN * cfg.KH1 * cfg.KW1
    p["conv0_w"] = u((cfg.C1, cfg.CIN, cfg.KH1, cfg.KW1), 1.0 / np.sqrt(fan1))
    p["conv0_b"] = u((cfg.C1,), 1.0 / np.sqrt(fan1))
    fan2 = cfg.C1 * cfg.KH2 * cfg.KW2
    p["conv1_w"] = u((cfg.C2, cfg.C1, cfg.KH2, cfg.KW2), 1.0 / np.sqrt(fan2))
    p["conv1_b"] = u((cfg.C2,), 1.0 / np.sqrt(fan2))
    p["fc1_w"] = u((cfg.L1, cfg.FEAT), 1.0 / np.sqrt(cfg.FEAT))
    p["fc1_b"] = u((cfg.L1,), 1.0 / np.sqrt(cfg.FEAT))
    p["fc2_w"] = u((cfg.L2, cfg.L1), 1.0 / np.sqrt(cfg.L1))
    p["fc2_b"] = u((cfg.L2,), 1.0 / np.sqrt(cfg.L1))
    p["fc3_w"] = u((cfg.L3, cfg.L2), 1.0 / np.sqrt(cfg.L2))
    p["fc3_b"] = u((cfg.L3,), 1.0 / np.sqrt(cfg.L2))
    p["out_w"] = u((cfg.NOUT, cfg.L3), 1.0 / np.sqrt(cfg.L3))
    p["out_b"] = u((cfg.NOUT,), 1.0 / np.sqrt(cfg.L3))

    def bn(name, n):  # non-trivial eval-mode BN params/statistics
        p[f"bn_{name}_g"] = jax.random.uniform(next(ks), (n,), jnp.float32, 0.8, 1.2)
        p[f"bn_{name}_b"] = 0.1 * jax.random.normal(next(ks), (n,), jnp.float32)
        p[f"bn_{name}_m"] = 0.1 * jax.random.normal(next(ks), (n,), jnp.float32)
        p[f"bn_{name}_v"] = jax.random.uniform(next(ks), (n,), jnp.float32, 0.5, 1.5)

    bn("c0", cfg.C1); bn("c1", cfg.C2)
    bn("l0", cfg.L1); bn("l1", cfg.L2); bn("l2", cfg.L3)
    return p


def reference_forward(x_nchw, p, cfg=CFG):
    """Pure-JAX f32 eval-mode forward: conv->BN->ReLU->maxpool (x2), NCHW flatten,
    (dense->BN->ReLU) x3, output Linear.  Dropout is identity at inference."""
    hi = lax.Precision.HIGHEST

    def bn2d(z, g, b, m, v):
        inv = g / jnp.sqrt(v + cfg.EPS)
        return (z - m[None, :, None, None]) * inv[None, :, None, None] \
            + b[None, :, None, None]

    def bn1d(z, g, b, m, v):
        return (z - m) * (g / jnp.sqrt(v + cfg.EPS)) + b

    def conv(z, w, b):
        y = lax.conv_general_dilated(z, w, (1, 1), "VALID",
                                     dimension_numbers=("NCHW", "OIHW", "NCHW"),
                                     precision=hi)
        return y + b[None, :, None, None]

    def pool(z):
        return lax.reduce_window(z, -jnp.inf, lax.max,
                                 (1, 1, 2, 2), (1, 1, 2, 2), "VALID")

    x = x_nchw.astype(jnp.float32)
    y = pool(jnp.maximum(bn2d(conv(x, p["conv0_w"], p["conv0_b"]),
                              p["bn_c0_g"], p["bn_c0_b"], p["bn_c0_m"], p["bn_c0_v"]), 0.0))
    y = pool(jnp.maximum(bn2d(conv(y, p["conv1_w"], p["conv1_b"]),
                              p["bn_c1_g"], p["bn_c1_b"], p["bn_c1_m"], p["bn_c1_v"]), 0.0))
    y = y.reshape(y.shape[0], -1)                                 # t.view(B, -1)
    y = jnp.maximum(bn1d(jnp.dot(y, p["fc1_w"].T, precision=hi) + p["fc1_b"],
                         p["bn_l0_g"], p["bn_l0_b"], p["bn_l0_m"], p["bn_l0_v"]), 0.0)
    y = jnp.maximum(bn1d(jnp.dot(y, p["fc2_w"].T, precision=hi) + p["fc2_b"],
                         p["bn_l1_g"], p["bn_l1_b"], p["bn_l1_m"], p["bn_l1_v"]), 0.0)
    y = jnp.maximum(bn1d(jnp.dot(y, p["fc3_w"].T, precision=hi) + p["fc3_b"],
                         p["bn_l2_g"], p["bn_l2_b"], p["bn_l2_m"], p["bn_l2_v"]), 0.0)
    return jnp.dot(y, p["out_w"].T, precision=hi) + p["out_b"]


# ----------------------------------------------------------------------------
if __name__ == "__main__":
    key = jax.random.PRNGKey(0)
    pkey, xkey = jax.random.split(key)
    params = init_params(pkey)
    B = 32
    x = jax.random.normal(xkey, (B, 1, CFG.H, CFG.W), jnp.float32)

    folded = fold_params(params)                      # one-time, outside the jit
    fwd = jax.jit(functools.partial(network_forward, batch_block=16))
    out = jax.block_until_ready(fwd(x, folded))

    ref = jax.block_until_ready(reference_forward(x, params))
    assert out.shape == (B, CFG.NOUT), out.shape
    # bf16 matmul operands (f32 accumulation) vs the f32 reference
    np.testing.assert_allclose(np.asarray(out), np.asarray(ref),
                               rtol=2e-2, atol=2e-2)
    print("KERNEL_OK")
</pallas_src>

<mosaic_0001>
module attributes {stable_mosaic.version = 11 : i64} {
  func.func @_fused_net_kernel(%arg0: i32, %arg1: memref<26x416x9xbf16, #tpu.memory_space<vmem>>, %arg2: memref<9x24xbf16, #tpu.memory_space<vmem>>, %arg3: memref<1x24xf32, #tpu.memory_space<vmem>>, %arg4: memref<25x24x48xbf16, #tpu.memory_space<vmem>>, %arg5: memref<1x48xf32, #tpu.memory_space<vmem>>, %arg6: memref<768x400xbf16, #tpu.memory_space<vmem>>, %arg7: memref<1x400xf32, #tpu.memory_space<vmem>>, %arg8: memref<400x120xbf16, #tpu.memory_space<vmem>>, %arg9: memref<1x120xf32, #tpu.memory_space<vmem>>, %arg10: memref<120x60xbf16, #tpu.memory_space<vmem>>, %arg11: memref<1x60xf32, #tpu.memory_space<vmem>>, %arg12: memref<60x10xbf16, #tpu.memory_space<vmem>>, %arg13: memref<1x10xf32, #tpu.memory_space<vmem>>, %arg14: memref<16x10xf32, #tpu.memory_space<vmem>>, %arg15: memref<13x208x24xbf16, #tpu.memory_space<vmem>>, %arg16: memref<8x128x48xf32, #tpu.memory_space<vmem>>, %arg17: memref<16x768xf32, #tpu.memory_space<vmem>>) attributes {dimension_semantics = [#tpu.dimension_semantics<parallel>], iteration_bounds = array<i64: 2>, scalar_prefetch = 0 : i64, scratch_operands = 3 : i64, tpu.core_type = #tpu.core_type<tc>, window_params = [{transform_indices = @transform_0, window_bounds = array<i64: 26, 416, 9>}, {pipeline_mode = #tpu.pipeline_mode<synchronous>, transform_indices = @transform_1, window_bounds = array<i64: 9, 24>}, {pipeline_mode = #tpu.pipeline_mode<synchronous>, transform_indices = @transform_2, window_bounds = array<i64: 1, 24>}, {pipeline_mode = #tpu.pipeline_mode<synchronous>, transform_indices = @transform_3, window_bounds = array<i64: 25, 24, 48>}, {pipeline_mode = #tpu.pipeline_mode<synchronous>, transform_indices = @transform_4, window_bounds = array<i64: 1, 48>}, {pipeline_mode = #tpu.pipeline_mode<synchronous>, transform_indices = @transform_5, window_bounds = array<i64: 768, 400>}, {pipeline_mode = #tpu.pipeline_mode<synchronous>, transform_indices = @transform_6, window_bounds = array<i64: 1, 400>}, {pipeline_mode = #tpu.pipeline_mode<synchronous>, transform_indices = @transform_7, window_bounds = array<i64: 400, 120>}, {pipeline_mode = #tpu.pipeline_mode<synchronous>, transform_indices = @transform_8, window_bounds = array<i64: 1, 120>}, {pipeline_mode = #tpu.pipeline_mode<synchronous>, transform_indices = @transform_9, window_bounds = array<i64: 120, 60>}, {pipeline_mode = #tpu.pipeline_mode<synchronous>, transform_indices = @transform_10, window_bounds = array<i64: 1, 60>}, {pipeline_mode = #tpu.pipeline_mode<synchronous>, transform_indices = @transform_11, window_bounds = array<i64: 60, 10>}, {pipeline_mode = #tpu.pipeline_mode<synchronous>, transform_indices = @transform_12, window_bounds = array<i64: 1, 10>}, {transform_indices = @transform_13, window_bounds = array<i64: 16, 10>}]} {
    %c0 = arith.constant 0 : index
    %c0_0 = arith.constant 0 : index
    %0 = vector.load %arg2[%c0, %c0_0] : memref<9x24xbf16, #tpu.memory_space<vmem>>, vector<9x24xbf16>
    %c0_1 = arith.constant 0 : index
    %c0_2 = arith.constant 0 : index
    %1 = vector.load %arg3[%c0_1, %c0_2] : memref<1x24xf32, #tpu.memory_space<vmem>>, vector<1x24xf32>
    %c0_i32 = arith.constant 0 : i32
    %c13_i32 = arith.constant 13 : i32
    %2 = arith.addi %c0_i32, %c13_i32 : i32
    %c1_i32 = arith.constant 1 : i32
    scf.for %arg18 = %c0_i32 to %2 step %c1_i32  : i32 {
      %c1_i32_85 = arith.constant 1 : i32
      %185 = arith.muli %arg18, %c1_i32_85 : i32
      %c0_i32_86 = arith.constant 0 : i32
      %186 = arith.addi %c0_i32_86, %185 : i32
      %c2_i32 = arith.constant 2 : i32
      %187 = arith.muli %c2_i32, %186 : i32
      %188 = arith.index_cast %187 : i32 to index
      %c0_87 = arith.constant 0 : index
      %c0_88 = arith.constant 0 : index
      %189 = vector.load %arg1[%188, %c0_87, %c0_88] : memref<26x416x9xbf16, #tpu.memory_space<vmem>>, vector<1x224x9xbf16>
      %190 = vector.shape_cast %189 : vector<1x224x9xbf16> to vector<224x9xbf16>
      %c2_i32_89 = arith.constant 2 : i32
      %191 = arith.muli %c2_i32_89, %186 : i32
      %c1_i32_90 = arith.constant 1 : i32
      %192 = arith.addi %191, %c1_i32_90 : i32
      %193 = arith.index_cast %192 : i32 to index
      %c0_91 = arith.constant 0 : index
      %c0_92 = arith.constant 0 : index
      %194 = vector.load %arg1[%193, %c0_91, %c0_92] : memref<26x416x9xbf16, #tpu.memory_space<vmem>>, vector<1x224x9xbf16>
      %195 = vector.shape_cast %194 : vector<1x224x9xbf16> to vector<224x9xbf16>
      %cst_93 = arith.constant dense<0.000000e+00> : vector<224x24xf32>
      %196 = tpu.matmul %190, %0, %cst_93 {dimension_numbers = #tpu.dot_dimension_numbers<[1], [0], [0], [1], [0, 0, 1, 1], [], []>} : vector<224x9xbf16>, vector<9x24xbf16>, vector<224x24xf32> -> vector<224x24xf32>
      %cst_94 = arith.constant dense<0.000000e+00> : vector<224x24xf32>
      %197 = tpu.matmul %195, %0, %cst_94 {dimension_numbers = #tpu.dot_dimension_numbers<[1], [0], [0], [1], [0, 0, 1, 1], [], []>} : vector<224x9xbf16>, vector<9x24xbf16>, vector<224x24xf32> -> vector<224x24xf32>
      %198 = arith.maximumf %196, %197 : vector<224x24xf32>
      %199 = vector.extract_strided_slice %198 {offsets = [0, 0], sizes = [16, 24], strides = [1, 1]} : vector<224x24xf32> to vector<16x24xf32>
      %200 = vector.extract_strided_slice %198 {offsets = [16, 0], sizes = [16, 24], strides = [1, 1]} : vector<224x24xf32> to vector<16x24xf32>
      %201 = arith.maximumf %199, %200 : vector<16x24xf32>
      %202 = vector.broadcast %1 : vector<1x24xf32> to vector<16x24xf32>
      %203 = arith.addf %201, %202 : vector<16x24xf32>
      %cst_95 = arith.constant 0.000000e+00 : f32
      %204 = vector.broadcast %cst_95 : f32 to vector<16x24xf32>
      %205 = arith.maximumf %203, %204 : vector<16x24xf32>
      %206 = arith.truncf %205 : vector<16x24xf32> to vector<16x24xbf16>
      %207 = arith.index_cast %186 : i32 to index
      %c0_96 = arith.constant 0 : index
      %c0_97 = arith.constant 0 : index
      %208 = vector.load %arg15[%207, %c0_96, %c0_97] : memref<13x208x24xbf16, #tpu.memory_space<vmem>>, vector<1x16x24xbf16>
      %209 = vector.shape_cast %208 : vector<1x16x24xbf16> to vector<16x24xbf16>
      %210 = vector.shape_cast %206 : vector<16x24xbf16> to vector<1x16x24xbf16>
      tpu.vector_store %arg15[%207, %c0_96, %c0_97], %210 {strides = array<i32>} : memref<13x208x24xbf16, #tpu.memory_space<vmem>>, vector<1x16x24xbf16>,
      %211 = vector.extract_strided_slice %198 {offsets = [32, 0], sizes = [16, 24], strides = [1, 1]} : vector<224x24xf32> to vector<16x24xf32>
      %212 = vector.extract_strided_slice %198 {offsets = [48, 0], sizes = [16, 24], strides = [1, 1]} : vector<224x24xf32> to vector<16x24xf32>
      %213 = arith.maximumf %211, %212 : vector<16x24xf32>
      %214 = vector.broadcast %1 : vector<1x24xf32> to vector<16x24xf32>
      %215 = arith.addf %213, %214 : vector<16x24xf32>
      %cst_98 = arith.constant 0.000000e+00 : f32
      %216 = vector.broadcast %cst_98 : f32 to vector<16x24xf32>
      %217 = arith.maximumf %215, %216 : vector<16x24xf32>
      %218 = arith.truncf %217 : vector<16x24xf32> to vector<16x24xbf16>
      %219 = arith.index_cast %186 : i32 to index
      %c16 = arith.constant 16 : index
      %c0_99 = arith.constant 0 : index
      %220 = vector.load %arg15[%219, %c16, %c0_99] : memref<13x208x24xbf16, #tpu.memory_space<vmem>>, vector<1x16x24xbf16>
      %221 = vector.shape_cast %220 : vector<1x16x24xbf16> to vector<16x24xbf16>
      %222 = vector.shape_cast %218 : vector<16x24xbf16> to vector<1x16x24xbf16>
      tpu.vector_store %arg15[%219, %c16, %c0_99], %222 {strides = array<i32>} : memref<13x208x24xbf16, #tpu.memory_space<vmem>>, vector<1x16x24xbf16>,
      %223 = vector.extract_strided_slice %198 {offsets = [64, 0], sizes = [16, 24], strides = [1, 1]} : vector<224x24xf32> to vector<16x24xf32>
      %224 = vector.extract_strided_slice %198 {offsets = [80, 0], sizes = [16, 24], strides = [1, 1]} : vector<224x24xf32> to vector<16x24xf32>
      %225 = arith.maximumf %223, %224 : vector<16x24xf32>
      %226 = vector.broadcast %1 : vector<1x24xf32> to vector<16x24xf32>
      %227 = arith.addf %225, %226 : vector<16x24xf32>
      %cst_100 = arith.constant 0.000000e+00 : f32
      %228 = vector.broadcast %cst_100 : f32 to vector<16x24xf32>
      %229 = arith.maximumf %227, %228 : vector<16x24xf32>
      %230 = arith.truncf %229 : vector<16x24xf32> to vector<16x24xbf16>
      %231 = arith.index_cast %186 : i32 to index
      %c32 = arith.constant 32 : index
      %c0_101 = arith.constant 0 : index
      %232 = vector.load %arg15[%231, %c32, %c0_101] : memref<13x208x24xbf16, #tpu.memory_space<vmem>>, vector<1x16x24xbf16>
      %233 = vector.shape_cast %232 : vector<1x16x24xbf16> to vector<16x24xbf16>
      %234 = vector.shape_cast %230 : vector<16x24xbf16> to vector<1x16x24xbf16>
      tpu.vector_store %arg15[%231, %c32, %c0_101], %234 {strides = array<i32>} : memref<13x208x24xbf16, #tpu.memory_space<vmem>>, vector<1x16x24xbf16>,
      %235 = vector.extract_strided_slice %198 {offsets = [96, 0], sizes = [16, 24], strides = [1, 1]} : vector<224x24xf32> to vector<16x24xf32>
      %236 = vector.extract_strided_slice %198 {offsets = [112, 0], sizes = [16, 24], strides = [1, 1]} : vector<224x24xf32> to vector<16x24xf32>
      %237 = arith.maximumf %235, %236 : vector<16x24xf32>
      %238 = vector.broadcast %1 : vector<1x24xf32> to vector<16x24xf32>
      %239 = arith.addf %237, %238 : vector<16x24xf32>
      %cst_102 = arith.constant 0.000000e+00 : f32
      %240 = vector.broadcast %cst_102 : f32 to vector<16x24xf32>
      %241 = arith.maximumf %239, %240 : vector<16x24xf32>
      %242 = arith.truncf %241 : vector<16x24xf32> to vector<16x24xbf16>
      %243 = arith.index_cast %186 : i32 to index
      %c48_103 = arith.constant 48 : index
      %c0_104 = arith.constant 0 : index
      %244 = vector.load %arg15[%243, %c48_103, %c0_104] : memref<13x208x24xbf16, #tpu.memory_space<vmem>>, vector<1x16x24xbf16>
      %245 = vector.shape_cast %244 : vector<1x16x24xbf16> to vector<16x24xbf16>
      %246 = vector.shape_cast %242 : vector<16x24xbf16> to vector<1x16x24xbf16>
      tpu.vector_store %arg15[%243, %c48_103, %c0_104], %246 {strides = array<i32>} : memref<13x208x24xbf16, #tpu.memory_space<vmem>>, vector<1x16x24xbf16>,
      %247 = vector.extract_strided_slice %198 {offsets = [128, 0], sizes = [16, 24], strides = [1, 1]} : vector<224x24xf32> to vector<16x24xf32>
      %248 = vector.extract_strided_slice %198 {offsets = [144, 0], sizes = [16, 24], strides = [1, 1]} : vector<224x24xf32> to vector<16x24xf32>
      %249 = arith.maximumf %247, %248 : vector<16x24xf32>
      %250 = vector.broadcast %1 : vector<1x24xf32> to vector<16x24xf32>
      %251 = arith.addf %249, %250 : vector<16x24xf32>
      %cst_105 = arith.constant 0.000000e+00 : f32
      %252 = vector.broadcast %cst_105 : f32 to vector<16x24xf32>
      %253 = arith.maximumf %251, %252 : vector<16x24xf32>
      %254 = arith.truncf %253 : vector<16x24xf32> to vector<16x24xbf16>
      %255 = arith.index_cast %186 : i32 to index
      %c64 = arith.constant 64 : index
      %c0_106 = arith.constant 0 : index
      %256 = vector.load %arg15[%255, %c64, %c0_106] : memref<13x208x24xbf16, #tpu.memory_space<vmem>>, vector<1x16x24xbf16>
      %257 = vector.shape_cast %256 : vector<1x16x24xbf16> to vector<16x24xbf16>
      %258 = vector.shape_cast %254 : vector<16x24xbf16> to vector<1x16x24xbf16>
      tpu.vector_store %arg15[%255, %c64, %c0_106], %258 {strides = array<i32>} : memref<13x208x24xbf16, #tpu.memory_space<vmem>>, vector<1x16x24xbf16>,
      %259 = vector.extract_strided_slice %198 {offsets = [160, 0], sizes = [16, 24], strides = [1, 1]} : vector<224x24xf32> to vector<16x24xf32>
      %260 = vector.extract_strided_slice %198 {offsets = [176, 0], sizes = [16, 24], strides = [1, 1]} : vector<224x24xf32> to vector<16x24xf32>
      %261 = arith.maximumf %259, %260 : vector<16x24xf32>
      %262 = vector.broadcast %1 : vector<1x24xf32> to vector<16x24xf32>
      %263 = arith.addf %261, %262 : vector<16x24xf32>
      %cst_107 = arith.constant 0.000000e+00 : f32
      %264 = vector.broadcast %cst_107 : f32 to vector<16x24xf32>
      %265 = arith.maximumf %263, %264 : vector<16x24xf32>
      %266 = arith.truncf %265 : vector<16x24xf32> to vector<16x24xbf16>
      %267 = arith.index_cast %186 : i32 to index
      %c80 = arith.constant 80 : index
      %c0_108 = arith.constant 0 : index
      %268 = vector.load %arg15[%267, %c80, %c0_108] : memref<13x208x24xbf16, #tpu.memory_space<vmem>>, vector<1x16x24xbf16>
      %269 = vector.shape_cast %268 : vector<1x16x24xbf16> to vector<16x24xbf16>
      %270 = vector.shape_cast %266 : vector<16x24xbf16> to vector<1x16x24xbf16>
      tpu.vector_store %arg15[%267, %c80, %c0_108], %270 {strides = array<i32>} : memref<13x208x24xbf16, #tpu.memory_space<vmem>>, vector<1x16x24xbf16>,
      %271 = vector.extract_strided_slice %198 {offsets = [192, 0], sizes = [16, 24], strides = [1, 1]} : vector<224x24xf32> to vector<16x24xf32>
      %272 = vector.extract_strided_slice %198 {offsets = [208, 0], sizes = [16, 24], strides = [1, 1]} : vector<224x24xf32> to vector<16x24xf32>
      %273 = arith.maximumf %271, %272 : vector<16x24xf32>
      %274 = vector.broadcast %1 : vector<1x24xf32> to vector<16x24xf32>
      %275 = arith.addf %273, %274 : vector<16x24xf32>
      %cst_109 = arith.constant 0.000000e+00 : f32
      %276 = vector.broadcast %cst_109 : f32 to vector<16x24xf32>
      %277 = arith.maximumf %275, %276 : vector<16x24xf32>
      %278 = arith.truncf %277 : vector<16x24xf32> to vector<16x24xbf16>
      %279 = arith.index_cast %186 : i32 to index
      %c96_110 = arith.constant 96 : index
      %c0_111 = arith.constant 0 : index
      %280 = vector.load %arg15[%279, %c96_110, %c0_111] : memref<13x208x24xbf16, #tpu.memory_space<vmem>>, vector<1x16x24xbf16>
      %281 = vector.shape_cast %280 : vector<1x16x24xbf16> to vector<16x24xbf16>
      %282 = vector.shape_cast %278 : vector<16x24xbf16> to vector<1x16x24xbf16>
      tpu.vector_store %arg15[%279, %c96_110, %c0_111], %282 {strides = array<i32>} : memref<13x208x24xbf16, #tpu.memory_space<vmem>>, vector<1x16x24xbf16>,
      %c2_i32_112 = arith.constant 2 : i32
      %283 = arith.muli %c2_i32_112, %186 : i32
      %284 = arith.index_cast %283 : i32 to index
      %c224 = arith.constant 224 : index
      %c0_113 = arith.constant 0 : index
      %285 = vector.load %arg1[%284, %c224, %c0_113] : memref<26x416x9xbf16, #tpu.memory_space<vmem>>, vector<1x192x9xbf16>
      %286 = vector.shape_cast %285 : vector<1x192x9xbf16> to vector<192x9xbf16>
      %c2_i32_114 = arith.constant 2 : i32
      %287 = arith.muli %c2_i32_114, %186 : i32
      %c1_i32_115 = arith.constant 1 : i32
      %288 = arith.addi %287, %c1_i32_115 : i32
      %289 = arith.index_cast %288 : i32 to index
      %c224_116 = arith.constant 224 : index
      %c0_117 = arith.constant 0 : index
      %290 = vector.load %arg1[%289, %c224_116, %c0_117] : memref<26x416x9xbf16, #tpu.memory_space<vmem>>, vector<1x192x9xbf16>
      %291 = vector.shape_cast %290 : vector<1x192x9xbf16> to vector<192x9xbf16>
      %cst_118 = arith.constant dense<0.000000e+00> : vector<192x24xf32>
      %292 = tpu.matmul %286, %0, %cst_118 {dimension_numbers = #tpu.dot_dimension_numbers<[1], [0], [0], [1], [0, 0, 1, 1], [], []>} : vector<192x9xbf16>, vector<9x24xbf16>, vector<192x24xf32> -> vector<192x24xf32>
      %cst_119 = arith.constant dense<0.000000e+00> : vector<192x24xf32>
      %293 = tpu.matmul %291, %0, %cst_119 {dimension_numbers = #tpu.dot_dimension_numbers<[1], [0], [0], [1], [0, 0, 1, 1], [], []>} : vector<192x9xbf16>, vector<9x24xbf16>, vector<192x24xf32> -> vector<192x24xf32>
      %294 = arith.maximumf %292, %293 : vector<192x24xf32>
      %295 = vector.extract_strided_slice %294 {offsets = [0, 0], sizes = [16, 24], strides = [1, 1]} : vector<192x24xf32> to vector<16x24xf32>
      %296 = vector.extract_strided_slice %294 {offsets = [16, 0], sizes = [16, 24], strides = [1, 1]} : vector<192x24xf32> to vector<16x24xf32>
      %297 = arith.maximumf %295, %296 : vector<16x24xf32>
      %298 = vector.broadcast %1 : vector<1x24xf32> to vector<16x24xf32>
      %299 = arith.addf %297, %298 : vector<16x24xf32>
      %cst_120 = arith.constant 0.000000e+00 : f32
      %300 = vector.broadcast %cst_120 : f32 to vector<16x24xf32>
      %301 = arith.maximumf %299, %300 : vector<16x24xf32>
      %302 = arith.truncf %301 : vector<16x24xf32> to vector<16x24xbf16>
      %303 = arith.index_cast %186 : i32 to index
      %c112 = arith.constant 112 : index
      %c0_121 = arith.constant 0 : index
      %304 = vector.load %arg15[%303, %c112, %c0_121] : memref<13x208x24xbf16, #tpu.memory_space<vmem>>, vector<1x16x24xbf16>
      %305 = vector.shape_cast %304 : vector<1x16x24xbf16> to vector<16x24xbf16>
      %306 = vector.shape_cast %302 : vector<16x24xbf16> to vector<1x16x24xbf16>
      tpu.vector_store %arg15[%303, %c112, %c0_121], %306 {strides = array<i32>} : memref<13x208x24xbf16, #tpu.memory_space<vmem>>, vector<1x16x24xbf16>,
      %307 = vector.extract_strided_slice %294 {offsets = [32, 0], sizes = [16, 24], strides = [1, 1]} : vector<192x24xf32> to vector<16x24xf32>
      %308 = vector.extract_strided_slice %294 {offsets = [48, 0], sizes = [16, 24], strides = [1, 1]} : vector<192x24xf32> to vector<16x24xf32>
      %309 = arith.maximumf %307, %308 : vector<16x24xf32>
      %310 = vector.broadcast %1 : vector<1x24xf32> to vector<16x24xf32>
      %311 = arith.addf %309, %310 : vector<16x24xf32>
      %cst_122 = arith.constant 0.000000e+00 : f32
      %312 = vector.broadcast %cst_122 : f32 to vector<16x24xf32>
      %313 = arith.maximumf %311, %312 : vector<16x24xf32>
      %314 = arith.truncf %313 : vector<16x24xf32> to vector<16x24xbf16>
      %315 = arith.index_cast %186 : i32 to index
      %c128 = arith.constant 128 : index
      %c0_123 = arith.constant 0 : index
      %316 = vector.load %arg15[%315, %c128, %c0_123] : memref<13x208x24xbf16, #tpu.memory_space<vmem>>, vector<1x16x24xbf16>
      %317 = vector.shape_cast %316 : vector<1x16x24xbf16> to vector<16x24xbf16>
      %318 = vector.shape_cast %314 : vector<16x24xbf16> to vector<1x16x24xbf16>
      tpu.vector_store %arg15[%315, %c128, %c0_123], %318 {strides = array<i32>} : memref<13x208x24xbf16, #tpu.memory_space<vmem>>, vector<1x16x24xbf16>,
      %319 = vector.extract_strided_slice %294 {offsets = [64, 0], sizes = [16, 24], strides = [1, 1]} : vector<192x24xf32> to vector<16x24xf32>
      %320 = vector.extract_strided_slice %294 {offsets = [80, 0], sizes = [16, 24], strides = [1, 1]} : vector<192x24xf32> to vector<16x24xf32>
      %321 = arith.maximumf %319, %320 : vector<16x24xf32>
      %322 = vector.broadcast %1 : vector<1x24xf32> to vector<16x24xf32>
      %323 = arith.addf %321, %322 : vector<16x24xf32>
      %cst_124 = arith.constant 0.000000e+00 : f32
      %324 = vector.broadcast %cst_124 : f32 to vector<16x24xf32>
      %325 = arith.maximumf %323, %324 : vector<16x24xf32>
      %326 = arith.truncf %325 : vector<16x24xf32> to vector<16x24xbf16>
      %327 = arith.index_cast %186 : i32 to index
      %c144_125 = arith.constant 144 : index
      %c0_126 = arith.constant 0 : index
      %328 = vector.load %arg15[%327, %c144_125, %c0_126] : memref<13x208x24xbf16, #tpu.memory_space<vmem>>, vector<1x16x24xbf16>
      %329 = vector.shape_cast %328 : vector<1x16x24xbf16> to vector<16x24xbf16>
      %330 = vector.shape_cast %326 : vector<16x24xbf16> to vector<1x16x24xbf16>
      tpu.vector_store %arg15[%327, %c144_125, %c0_126], %330 {strides = array<i32>} : memref<13x208x24xbf16, #tpu.memory_space<vmem>>, vector<1x16x24xbf16>,
      %331 = vector.extract_strided_slice %294 {offsets = [96, 0], sizes = [16, 24], strides = [1, 1]} : vector<192x24xf32> to vector<16x24xf32>
      %332 = vector.extract_strided_slice %294 {offsets = [112, 0], sizes = [16, 24], strides = [1, 1]} : vector<192x24xf32> to vector<16x24xf32>
      %333 = arith.maximumf %331, %332 : vector<16x24xf32>
      %334 = vector.broadcast %1 : vector<1x24xf32> to vector<16x24xf32>
      %335 = arith.addf %333, %334 : vector<16x24xf32>
      %cst_127 = arith.constant 0.000000e+00 : f32
      %336 = vector.broadcast %cst_127 : f32 to vector<16x24xf32>
      %337 = arith.maximumf %335, %336 : vector<16x24xf32>
      %338 = arith.truncf %337 : vector<16x24xf32> to vector<16x24xbf16>
      %339 = arith.index_cast %186 : i32 to index
      %c160 = arith.constant 160 : index
      %c0_128 = arith.constant 0 : index
      %340 = vector.load %arg15[%339, %c160, %c0_128] : memref<13x208x24xbf16, #tpu.memory_space<vmem>>, vector<1x16x24xbf16>
      %341 = vector.shape_cast %340 : vector<1x16x24xbf16> to vector<16x24xbf16>
      %342 = vector.shape_cast %338 : vector<16x24xbf16> to vector<1x16x24xbf16>
      tpu.vector_store %arg15[%339, %c160, %c0_128], %342 {strides = array<i32>} : memref<13x208x24xbf16, #tpu.memory_space<vmem>>, vector<1x16x24xbf16>,
      %343 = vector.extract_strided_slice %294 {offsets = [128, 0], sizes = [16, 24], strides = [1, 1]} : vector<192x24xf32> to vector<16x24xf32>
      %344 = vector.extract_strided_slice %294 {offsets = [144, 0], sizes = [16, 24], strides = [1, 1]} : vector<192x24xf32> to vector<16x24xf32>
      %345 = arith.maximumf %343, %344 : vector<16x24xf32>
      %346 = vector.broadcast %1 : vector<1x24xf32> to vector<16x24xf32>
      %347 = arith.addf %345, %346 : vector<16x24xf32>
      %cst_129 = arith.constant 0.000000e+00 : f32
      %348 = vector.broadcast %cst_129 : f32 to vector<16x24xf32>
      %349 = arith.maximumf %347, %348 : vector<16x24xf32>
      %350 = arith.truncf %349 : vector<16x24xf32> to vector<16x24xbf16>
      %351 = arith.index_cast %186 : i32 to index
      %c176 = arith.constant 176 : index
      %c0_130 = arith.constant 0 : index
      %352 = vector.load %arg15[%351, %c176, %c0_130] : memref<13x208x24xbf16, #tpu.memory_space<vmem>>, vector<1x16x24xbf16>
      %353 = vector.shape_cast %352 : vector<1x16x24xbf16> to vector<16x24xbf16>
      %354 = vector.shape_cast %350 : vector<16x24xbf16> to vector<1x16x24xbf16>
      tpu.vector_store %arg15[%351, %c176, %c0_130], %354 {strides = array<i32>} : memref<13x208x24xbf16, #tpu.memory_space<vmem>>, vector<1x16x24xbf16>,
      %355 = vector.extract_strided_slice %294 {offsets = [160, 0], sizes = [16, 24], strides = [1, 1]} : vector<192x24xf32> to vector<16x24xf32>
      %356 = vector.extract_strided_slice %294 {offsets = [176, 0], sizes = [16, 24], strides = [1, 1]} : vector<192x24xf32> to vector<16x24xf32>
      %357 = arith.maximumf %355, %356 : vector<16x24xf32>
      %358 = vector.broadcast %1 : vector<1x24xf32> to vector<16x24xf32>
      %359 = arith.addf %357, %358 : vector<16x24xf32>
      %cst_131 = arith.constant 0.000000e+00 : f32
      %360 = vector.broadcast %cst_131 : f32 to vector<16x24xf32>
      %361 = arith.maximumf %359, %360 : vector<16x24xf32>
      %362 = arith.truncf %361 : vector<16x24xf32> to vector<16x24xbf16>
      %363 = arith.index_cast %186 : i32 to index
      %c192_132 = arith.constant 192 : index
      %c0_133 = arith.constant 0 : index
      %364 = vector.load %arg15[%363, %c192_132, %c0_133] : memref<13x208x24xbf16, #tpu.memory_space<vmem>>, vector<1x16x24xbf16>
      %365 = vector.shape_cast %364 : vector<1x16x24xbf16> to vector<16x24xbf16>
      %366 = vector.shape_cast %362 : vector<16x24xbf16> to vector<1x16x24xbf16>
      tpu.vector_store %arg15[%363, %c192_132, %c0_133], %366 {strides = array<i32>} : memref<13x208x24xbf16, #tpu.memory_space<vmem>>, vector<1x16x24xbf16>,
    }
    %c13_i32_3 = arith.constant 13 : i32
    %c0_i32_4 = arith.constant 0 : i32
    %c8_i32 = arith.constant 8 : i32
    %3 = arith.addi %c0_i32_4, %c8_i32 : i32
    %c1_i32_5 = arith.constant 1 : i32
    scf.for %arg18 = %c0_i32_4 to %3 step %c1_i32_5  : i32 {
      %c1_i32_85 = arith.constant 1 : i32
      %185 = arith.muli %arg18, %c1_i32_85 : i32
      %c0_i32_86 = arith.constant 0 : i32
      %186 = arith.addi %c0_i32_86, %185 : i32
      %cst_87 = arith.constant 0.000000e+00 : f32
      %187 = vector.broadcast %cst_87 : f32 to vector<128x48xf32>
      %c0_i32_88 = arith.constant 0 : i32
      %188 = arith.addi %186, %c0_i32_88 : i32
      %189 = arith.index_cast %188 : i32 to index
      %c0_89 = arith.constant 0 : index
      %c0_90 = arith.constant 0 : index
      %190 = vector.load %arg15[%189, %c0_89, %c0_90] : memref<13x208x24xbf16, #tpu.memory_space<vmem>>, vector<1x208x24xbf16>
      %191 = vector.shape_cast %190 : vector<1x208x24xbf16> to vector<208x24xbf16>
      %192 = vector.extract_strided_slice %191 {offsets = [0, 0], sizes = [128, 24], strides = [1, 1]} : vector<208x24xbf16> to vector<128x24xbf16>
      %c0_91 = arith.constant 0 : index
      %c0_92 = arith.constant 0 : index
      %c0_93 = arith.constant 0 : index
      %193 = vector.load %arg4[%c0_91, %c0_92, %c0_93] : memref<25x24x48xbf16, #tpu.memory_space<vmem>>, vector<1x24x48xbf16>
      %194 = vector.shape_cast %193 : vector<1x24x48xbf16> to vector<24x48xbf16>
      %cst_94 = arith.constant dense<0.000000e+00> : vector<128x48xf32>
      %195 = tpu.matmul %192, %194, %cst_94 {dimension_numbers = #tpu.dot_dimension_numbers<[1], [0], [0], [1], [0, 0, 1, 1], [], []>} : vector<128x24xbf16>, vector<24x48xbf16>, vector<128x48xf32> -> vector<128x48xf32>
      %196 = arith.addf %187, %195 : vector<128x48xf32>
      %197 = vector.extract_strided_slice %191 {offsets = [16, 0], sizes = [128, 24], strides = [1, 1]} : vector<208x24xbf16> to vector<128x24xbf16>
      %c1_95 = arith.constant 1 : index
      %c0_96 = arith.constant 0 : index
      %c0_97 = arith.constant 0 : index
      %198 = vector.load %arg4[%c1_95, %c0_96, %c0_97] : memref<25x24x48xbf16, #tpu.memory_space<vmem>>, vector<1x24x48xbf16>
      %199 = vector.shape_cast %198 : vector<1x24x48xbf16> to vector<24x48xbf16>
      %cst_98 = arith.constant dense<0.000000e+00> : vector<128x48xf32>
      %200 = tpu.matmul %197, %199, %cst_98 {dimension_numbers = #tpu.dot_dimension_numbers<[1], [0], [0], [1], [0, 0, 1, 1], [], []>} : vector<128x24xbf16>, vector<24x48xbf16>, vector<128x48xf32> -> vector<128x48xf32>
      %201 = arith.addf %196, %200 : vector<128x48xf32>
      %202 = vector.extract_strided_slice %191 {offsets = [32, 0], sizes = [128, 24], strides = [1, 1]} : vector<208x24xbf16> to vector<128x24xbf16>
      %c2_99 = arith.constant 2 : index
      %c0_100 = arith.constant 0 : index
      %c0_101 = arith.constant 0 : index
      %203 = vector.load %arg4[%c2_99, %c0_100, %c0_101] : memref<25x24x48xbf16, #tpu.memory_space<vmem>>, vector<1x24x48xbf16>
      %204 = vector.shape_cast %203 : vector<1x24x48xbf16> to vector<24x48xbf16>
      %cst_102 = arith.constant dense<0.000000e+00> : vector<128x48xf32>
      %205 = tpu.matmul %202, %204, %cst_102 {dimension_numbers = #tpu.dot_dimension_numbers<[1], [0], [0], [1], [0, 0, 1, 1], [], []>} : vector<128x24xbf16>, vector<24x48xbf16>, vector<128x48xf32> -> vector<128x48xf32>
      %206 = arith.addf %201, %205 : vector<128x48xf32>
      %207 = vector.extract_strided_slice %191 {offsets = [48, 0], sizes = [128, 24], strides = [1, 1]} : vector<208x24xbf16> to vector<128x24xbf16>
      %c3_103 = arith.constant 3 : index
      %c0_104 = arith.constant 0 : index
      %c0_105 = arith.constant 0 : index
      %208 = vector.load %arg4[%c3_103, %c0_104, %c0_105] : memref<25x24x48xbf16, #tpu.memory_space<vmem>>, vector<1x24x48xbf16>
      %209 = vector.shape_cast %208 : vector<1x24x48xbf16> to vector<24x48xbf16>
      %cst_106 = arith.constant dense<0.000000e+00> : vector<128x48xf32>
      %210 = tpu.matmul %207, %209, %cst_106 {dimension_numbers = #tpu.dot_dimension_numbers<[1], [0], [0], [1], [0, 0, 1, 1], [], []>} : vector<128x24xbf16>, vector<24x48xbf16>, vector<128x48xf32> -> vector<128x48xf32>
      %211 = arith.addf %206, %210 : vector<128x48xf32>
      %212 = vector.extract_strided_slice %191 {offsets = [64, 0], sizes = [128, 24], strides = [1, 1]} : vector<208x24xbf16> to vector<128x24xbf16>
      %c4_107 = arith.constant 4 : index
      %c0_108 = arith.constant 0 : index
      %c0_109 = arith.constant 0 : index
      %213 = vector.load %arg4[%c4_107, %c0_108, %c0_109] : memref<25x24x48xbf16, #tpu.memory_space<vmem>>, vector<1x24x48xbf16>
      %214 = vector.shape_cast %213 : vector<1x24x48xbf16> to vector<24x48xbf16>
      %cst_110 = arith.constant dense<0.000000e+00> : vector<128x48xf32>
      %215 = tpu.matmul %212, %214, %cst_110 {dimension_numbers = #tpu.dot_dimension_numbers<[1], [0], [0], [1], [0, 0, 1, 1], [], []>} : vector<128x24xbf16>, vector<24x48xbf16>, vector<128x48xf32> -> vector<128x48xf32>
      %216 = arith.addf %211, %215 : vector<128x48xf32>
      %c1_i32_111 = arith.constant 1 : i32
      %217 = arith.addi %186, %c1_i32_111 : i32
      %218 = arith.index_cast %217 : i32 to index
      %c0_112 = arith.constant 0 : index
      %c0_113 = arith.constant 0 : index
      %219 = vector.load %arg15[%218, %c0_112, %c0_113] : memref<13x208x24xbf16, #tpu.memory_space<vmem>>, vector<1x208x24xbf16>
      %220 = vector.shape_cast %219 : vector<1x208x24xbf16> to vector<208x24xbf16>
      %221 = vector.extract_strided_slice %220 {offsets = [0, 0], sizes = [128, 24], strides = [1, 1]} : vector<208x24xbf16> to vector<128x24xbf16>
      %c5_114 = arith.constant 5 : index
      %c0_115 = arith.constant 0 : index
      %c0_116 = arith.constant 0 : index
      %222 = vector.load %arg4[%c5_114, %c0_115, %c0_116] : memref<25x24x48xbf16, #tpu.memory_space<vmem>>, vector<1x24x48xbf16>
      %223 = vector.shape_cast %222 : vector<1x24x48xbf16> to vector<24x48xbf16>
      %cst_117 = arith.constant dense<0.000000e+00> : vector<128x48xf32>
      %224 = tpu.matmul %221, %223, %cst_117 {dimension_numbers = #tpu.dot_dimension_numbers<[1], [0], [0], [1], [0, 0, 1, 1], [], []>} : vector<128x24xbf16>, vector<24x48xbf16>, vector<128x48xf32> -> vector<128x48xf32>
      %225 = arith.addf %216, %224 : vector<128x48xf32>
      %226 = vector.extract_strided_slice %220 {offsets = [16, 0], sizes = [128, 24], strides = [1, 1]} : vector<208x24xbf16> to vector<128x24xbf16>
      %c6_118 = arith.constant 6 : index
      %c0_119 = arith.constant 0 : index
      %c0_120 = arith.constant 0 : index
      %227 = vector.load %arg4[%c6_118, %c0_119, %c0_120] : memref<25x24x48xbf16, #tpu.memory_space<vmem>>, vector<1x24x48xbf16>
      %228 = vector.shape_cast %227 : vector<1x24x48xbf16> to vector<24x48xbf16>
      %cst_121 = arith.constant dense<0.000000e+00> : vector<128x48xf32>
      %229 = tpu.matmul %226, %228, %cst_121 {dimension_numbers = #tpu.dot_dimension_numbers<[1], [0], [0], [1], [0, 0, 1, 1], [], []>} : vector<128x24xbf16>, vector<24x48xbf16>, vector<128x48xf32> -> vector<128x48xf32>
      %230 = arith.addf %225, %229 : vector<128x48xf32>
      %231 = vector.extract_strided_slice %220 {offsets = [32, 0], sizes = [128, 24], strides = [1, 1]} : vector<208x24xbf16> to vector<128x24xbf16>
      %c7_122 = arith.constant 7 : index
      %c0_123 = arith.constant 0 : index
      %c0_124 = arith.constant 0 : index
      %232 = vector.load %arg4[%c7_122, %c0_123, %c0_124] : memref<25x24x48xbf16, #tpu.memory_space<vmem>>, vector<1x24x48xbf16>
      %233 = vector.shape_cast %232 : vector<1x24x48xbf16> to vector<24x48xbf16>
      %cst_125 = arith.constant dense<0.000000e+00> : vector<128x48xf32>
      %234 = tpu.matmul %231, %233, %cst_125 {dimension_numbers = #tpu.dot_dimension_numbers<[1], [0], [0], [1], [0, 0, 1, 1], [], []>} : vector<128x24xbf16>, vector<24x48xbf16>, vector<128x48xf32> -> vector<128x48xf32>
      %235 = arith.addf %230, %234 : vector<128x48xf32>
      %236 = vector.extract_strided_slice %220 {offsets = [48, 0], sizes = [128, 24], strides = [1, 1]} : vector<208x24xbf16> to vector<128x24xbf16>
      %c8 = arith.constant 8 : index
      %c0_126 = arith.constant 0 : index
      %c0_127 = arith.constant 0 : index
      %237 = vector.load %arg4[%c8, %c0_126, %c0_127] : memref<25x24x48xbf16, #tpu.memory_space<vmem>>, vector<1x24x48xbf16>
      %238 = vector.shape_cast %237 : vector<1x24x48xbf16> to vector<24x48xbf16>
      %cst_128 = arith.constant dense<0.000000e+00> : vector<128x48xf32>
      %239 = tpu.matmul %236, %238, %cst_128 {dimension_numbers = #tpu.dot_dimension_numbers<[1], [0], [0], [1], [0, 0, 1, 1], [], []>} : vector<128x24xbf16>, vector<24x48xbf16>, vector<128x48xf32> -> vector<128x48xf32>
      %240 = arith.addf %235, %239 : vector<128x48xf32>
      %241 = vector.extract_strided_slice %220 {offsets = [64, 0], sizes = [128, 24], strides = [1, 1]} : vector<208x24xbf16> to vector<128x24xbf16>
      %c9 = arith.constant 9 : index
      %c0_129 = arith.constant 0 : index
      %c0_130 = arith.constant 0 : index
      %242 = vector.load %arg4[%c9, %c0_129, %c0_130] : memref<25x24x48xbf16, #tpu.memory_space<vmem>>, vector<1x24x48xbf16>
      %243 = vector.shape_cast %242 : vector<1x24x48xbf16> to vector<24x48xbf16>
      %cst_131 = arith.constant dense<0.000000e+00> : vector<128x48xf32>
      %244 = tpu.matmul %241, %243, %cst_131 {dimension_numbers = #tpu.dot_dimension_numbers<[1], [0], [0], [1], [0, 0, 1, 1], [], []>} : vector<128x24xbf16>, vector<24x48xbf16>, vector<128x48xf32> -> vector<128x48xf32>
      %245 = arith.addf %240, %244 : vector<128x48xf32>
      %c2_i32 = arith.constant 2 : i32
      %246 = arith.addi %186, %c2_i32 : i32
      %247 = arith.index_cast %246 : i32 to index
      %c0_132 = arith.constant 0 : index
      %c0_133 = arith.constant 0 : index
      %248 = vector.load %arg15[%247, %c0_132, %c0_133] : memref<13x208x24xbf16, #tpu.memory_space<vmem>>, vector<1x208x24xbf16>
      %249 = vector.shape_cast %248 : vector<1x208x24xbf16> to vector<208x24xbf16>
      %250 = vector.extract_strided_slice %249 {offsets = [0, 0], sizes = [128, 24], strides = [1, 1]} : vector<208x24xbf16> to vector<128x24xbf16>
      %c10 = arith.constant 10 : index
      %c0_134 = arith.constant 0 : index
      %c0_135 = arith.constant 0 : index
      %251 = vector.load %arg4[%c10, %c0_134, %c0_135] : memref<25x24x48xbf16, #tpu.memory_space<vmem>>, vector<1x24x48xbf16>
      %252 = vector.shape_cast %251 : vector<1x24x48xbf16> to vector<24x48xbf16>
      %cst_136 = arith.constant dense<0.000000e+00> : vector<128x48xf32>
      %253 = tpu.matmul %250, %252, %cst_136 {dimension_numbers = #tpu.dot_dimension_numbers<[1], [0], [0], [1], [0, 0, 1, 1], [], []>} : vector<128x24xbf16>, vector<24x48xbf16>, vector<128x48xf32> -> vector<128x48xf32>
      %254 = arith.addf %245, %253 : vector<128x48xf32>
      %255 = vector.extract_strided_slice %249 {offsets = [16, 0], sizes = [128, 24], strides = [1, 1]} : vector<208x24xbf16> to vector<128x24xbf16>
      %c11 = arith.constant 11 : index
      %c0_137 = arith.constant 0 : index
      %c0_138 = arith.constant 0 : index
      %256 = vector.load %arg4[%c11, %c0_137, %c0_138] : memref<25x24x48xbf16, #tpu.memory_space<vmem>>, vector<1x24x48xbf16>
      %257 = vector.shape_cast %256 : vector<1x24x48xbf16> to vector<24x48xbf16>
      %cst_139 = arith.constant dense<0.000000e+00> : vector<128x48xf32>
      %258 = tpu.matmul %255, %257, %cst_139 {dimension_numbers = #tpu.dot_dimension_numbers<[1], [0], [0], [1], [0, 0, 1, 1], [], []>} : vector<128x24xbf16>, vector<24x48xbf16>, vector<128x48xf32> -> vector<128x48xf32>
      %259 = arith.addf %254, %258 : vector<128x48xf32>
      %260 = vector.extract_strided_slice %249 {offsets = [32, 0], sizes = [128, 24], strides = [1, 1]} : vector<208x24xbf16> to vector<128x24xbf16>
      %c12 = arith.constant 12 : index
      %c0_140 = arith.constant 0 : index
      %c0_141 = arith.constant 0 : index
      %261 = vector.load %arg4[%c12, %c0_140, %c0_141] : memref<25x24x48xbf16, #tpu.memory_space<vmem>>, vector<1x24x48xbf16>
      %262 = vector.shape_cast %261 : vector<1x24x48xbf16> to vector<24x48xbf16>
      %cst_142 = arith.constant dense<0.000000e+00> : vector<128x48xf32>
      %263 = tpu.matmul %260, %262, %cst_142 {dimension_numbers = #tpu.dot_dimension_numbers<[1], [0], [0], [1], [0, 0, 1, 1], [], []>} : vector<128x24xbf16>, vector<24x48xbf16>, vector<128x48xf32> -> vector<128x48xf32>
      %264 = arith.addf %259, %263 : vector<128x48xf32>
      %265 = vector.extract_strided_slice %249 {offsets = [48, 0], sizes = [128, 24], strides = [1, 1]} : vector<208x24xbf16> to vector<128x24xbf16>
      %c13 = arith.constant 13 : index
      %c0_143 = arith.constant 0 : index
      %c0_144 = arith.constant 0 : index
      %266 = vector.load %arg4[%c13, %c0_143, %c0_144] : memref<25x24x48xbf16, #tpu.memory_space<vmem>>, vector<1x24x48xbf16>
      %267 = vector.shape_cast %266 : vector<1x24x48xbf16> to vector<24x48xbf16>
      %cst_145 = arith.constant dense<0.000000e+00> : vector<128x48xf32>
      %268 = tpu.matmul %265, %267, %cst_145 {dimension_numbers = #tpu.dot_dimension_numbers<[1], [0], [0], [1], [0, 0, 1, 1], [], []>} : vector<128x24xbf16>, vector<24x48xbf16>, vector<128x48xf32> -> vector<128x48xf32>
      %269 = arith.addf %264, %268 : vector<128x48xf32>
      %270 = vector.extract_strided_slice %249 {offsets = [64, 0], sizes = [128, 24], strides = [1, 1]} : vector<208x24xbf16> to vector<128x24xbf16>
      %c14 = arith.constant 14 : index
      %c0_146 = arith.constant 0 : index
      %c0_147 = arith.constant 0 : index
      %271 = vector.load %arg4[%c14, %c0_146, %c0_147] : memref<25x24x48xbf16, #tpu.memory_space<vmem>>, vector<1x24x48xbf16>
      %272 = vector.shape_cast %271 : vector<1x24x48xbf16> to vector<24x48xbf16>
      %cst_148 = arith.constant dense<0.000000e+00> : vector<128x48xf32>
      %273 = tpu.matmul %270, %272, %cst_148 {dimension_numbers = #tpu.dot_dimension_numbers<[1], [0], [0], [1], [0, 0, 1, 1], [], []>} : vector<128x24xbf16>, vector<24x48xbf16>, vector<128x48xf32> -> vector<128x48xf32>
      %274 = arith.addf %269, %273 : vector<128x48xf32>
      %c3_i32 = arith.constant 3 : i32
      %275 = arith.addi %186, %c3_i32 : i32
      %276 = arith.index_cast %275 : i32 to index
      %c0_149 = arith.constant 0 : index
      %c0_150 = arith.constant 0 : index
      %277 = vector.load %arg15[%276, %c0_149, %c0_150] : memref<13x208x24xbf16, #tpu.memory_space<vmem>>, vector<1x208x24xbf16>
      %278 = vector.shape_cast %277 : vector<1x208x24xbf16> to vector<208x24xbf16>
      %279 = vector.extract_strided_slice %278 {offsets = [0, 0], sizes = [128, 24], strides = [1, 1]} : vector<208x24xbf16> to vector<128x24xbf16>
      %c15 = arith.constant 15 : index
      %c0_151 = arith.constant 0 : index
      %c0_152 = arith.constant 0 : index
      %280 = vector.load %arg4[%c15, %c0_151, %c0_152] : memref<25x24x48xbf16, #tpu.memory_space<vmem>>, vector<1x24x48xbf16>
      %281 = vector.shape_cast %280 : vector<1x24x48xbf16> to vector<24x48xbf16>
      %cst_153 = arith.constant dense<0.000000e+00> : vector<128x48xf32>
      %282 = tpu.matmul %279, %281, %cst_153 {dimension_numbers = #tpu.dot_dimension_numbers<[1], [0], [0], [1], [0, 0, 1, 1], [], []>} : vector<128x24xbf16>, vector<24x48xbf16>, vector<128x48xf32> -> vector<128x48xf32>
      %283 = arith.addf %274, %282 : vector<128x48xf32>
      %284 = vector.extract_strided_slice %278 {offsets = [16, 0], sizes = [128, 24], strides = [1, 1]} : vector<208x24xbf16> to vector<128x24xbf16>
      %c16 = arith.constant 16 : index
      %c0_154 = arith.constant 0 : index
      %c0_155 = arith.constant 0 : index
      %285 = vector.load %arg4[%c16, %c0_154, %c0_155] : memref<25x24x48xbf16, #tpu.memory_space<vmem>>, vector<1x24x48xbf16>
      %286 = vector.shape_cast %285 : vector<1x24x48xbf16> to vector<24x48xbf16>
      %cst_156 = arith.constant dense<0.000000e+00> : vector<128x48xf32>
      %287 = tpu.matmul %284, %286, %cst_156 {dimension_numbers = #tpu.dot_dimension_numbers<[1], [0], [0], [1], [0, 0, 1, 1], [], []>} : vector<128x24xbf16>, vector<24x48xbf16>, vector<128x48xf32> -> vector<128x48xf32>
      %288 = arith.addf %283, %287 : vector<128x48xf32>
      %289 = vector.extract_strided_slice %278 {offsets = [32, 0], sizes = [128, 24], strides = [1, 1]} : vector<208x24xbf16> to vector<128x24xbf16>
      %c17 = arith.constant 17 : index
      %c0_157 = arith.constant 0 : index
      %c0_158 = arith.constant 0 : index
      %290 = vector.load %arg4[%c17, %c0_157, %c0_158] : memref<25x24x48xbf16, #tpu.memory_space<vmem>>, vector<1x24x48xbf16>
      %291 = vector.shape_cast %290 : vector<1x24x48xbf16> to vector<24x48xbf16>
      %cst_159 = arith.constant dense<0.000000e+00> : vector<128x48xf32>
      %292 = tpu.matmul %289, %291, %cst_159 {dimension_numbers = #tpu.dot_dimension_numbers<[1], [0], [0], [1], [0, 0, 1, 1], [], []>} : vector<128x24xbf16>, vector<24x48xbf16>, vector<128x48xf32> -> vector<128x48xf32>
      %293 = arith.addf %288, %292 : vector<128x48xf32>
      %294 = vector.extract_strided_slice %278 {offsets = [48, 0], sizes = [128, 24], strides = [1, 1]} : vector<208x24xbf16> to vector<128x24xbf16>
      %c18 = arith.constant 18 : index
      %c0_160 = arith.constant 0 : index
      %c0_161 = arith.constant 0 : index
      %295 = vector.load %arg4[%c18, %c0_160, %c0_161] : memref<25x24x48xbf16, #tpu.memory_space<vmem>>, vector<1x24x48xbf16>
      %296 = vector.shape_cast %295 : vector<1x24x48xbf16> to vector<24x48xbf16>
      %cst_162 = arith.constant dense<0.000000e+00> : vector<128x48xf32>
      %297 = tpu.matmul %294, %296, %cst_162 {dimension_numbers = #tpu.dot_dimension_numbers<[1], [0], [0], [1], [0, 0, 1, 1], [], []>} : vector<128x24xbf16>, vector<24x48xbf16>, vector<128x48xf32> -> vector<128x48xf32>
      %298 = arith.addf %293, %297 : vector<128x48xf32>
      %299 = vector.extract_strided_slice %278 {offsets = [64, 0], sizes = [128, 24], strides = [1, 1]} : vector<208x24xbf16> to vector<128x24xbf16>
      %c19 = arith.constant 19 : index
      %c0_163 = arith.constant 0 : index
      %c0_164 = arith.constant 0 : index
      %300 = vector.load %arg4[%c19, %c0_163, %c0_164] : memref<25x24x48xbf16, #tpu.memory_space<vmem>>, vector<1x24x48xbf16>
      %301 = vector.shape_cast %300 : vector<1x24x48xbf16> to vector<24x48xbf16>
      %cst_165 = arith.constant dense<0.000000e+00> : vector<128x48xf32>
      %302 = tpu.matmul %299, %301, %cst_165 {dimension_numbers = #tpu.dot_dimension_numbers<[1], [0], [0], [1], [0, 0, 1, 1], [], []>} : vector<128x24xbf16>, vector<24x48xbf16>, vector<128x48xf32> -> vector<128x48xf32>
      %303 = arith.addf %298, %302 : vector<128x48xf32>
      %c4_i32 = arith.constant 4 : i32
      %304 = arith.addi %186, %c4_i32 : i32
      %305 = arith.index_cast %304 : i32 to index
      %c0_166 = arith.constant 0 : index
      %c0_167 = arith.constant 0 : index
      %306 = vector.load %arg15[%305, %c0_166, %c0_167] : memref<13x208x24xbf16, #tpu.memory_space<vmem>>, vector<1x208x24xbf16>
      %307 = vector.shape_cast %306 : vector<1x208x24xbf16> to vector<208x24xbf16>
      %308 = vector.extract_strided_slice %307 {offsets = [0, 0], sizes = [128, 24], strides = [1, 1]} : vector<208x24xbf16> to vector<128x24xbf16>
      %c20 = arith.constant 20 : index
      %c0_168 = arith.constant 0 : index
      %c0_169 = arith.constant 0 : index
      %309 = vector.load %arg4[%c20, %c0_168, %c0_169] : memref<25x24x48xbf16, #tpu.memory_space<vmem>>, vector<1x24x48xbf16>
      %310 = vector.shape_cast %309 : vector<1x24x48xbf16> to vector<24x48xbf16>
      %cst_170 = arith.constant dense<0.000000e+00> : vector<128x48xf32>
      %311 = tpu.matmul %308, %310, %cst_170 {dimension_numbers = #tpu.dot_dimension_numbers<[1], [0], [0], [1], [0, 0, 1, 1], [], []>} : vector<128x24xbf16>, vector<24x48xbf16>, vector<128x48xf32> -> vector<128x48xf32>
      %312 = arith.addf %303, %311 : vector<128x48xf32>
      %313 = vector.extract_strided_slice %307 {offsets = [16, 0], sizes = [128, 24], strides = [1, 1]} : vector<208x24xbf16> to vector<128x24xbf16>
      %c21 = arith.constant 21 : index
      %c0_171 = arith.constant 0 : index
      %c0_172 = arith.constant 0 : index
      %314 = vector.load %arg4[%c21, %c0_171, %c0_172] : memref<25x24x48xbf16, #tpu.memory_space<vmem>>, vector<1x24x48xbf16>
      %315 = vector.shape_cast %314 : vector<1x24x48xbf16> to vector<24x48xbf16>
      %cst_173 = arith.constant dense<0.000000e+00> : vector<128x48xf32>
      %316 = tpu.matmul %313, %315, %cst_173 {dimension_numbers = #tpu.dot_dimension_numbers<[1], [0], [0], [1], [0, 0, 1, 1], [], []>} : vector<128x24xbf16>, vector<24x48xbf16>, vector<128x48xf32> -> vector<128x48xf32>
      %317 = arith.addf %312, %316 : vector<128x48xf32>
      %318 = vector.extract_strided_slice %307 {offsets = [32, 0], sizes = [128, 24], strides = [1, 1]} : vector<208x24xbf16> to vector<128x24xbf16>
      %c22 = arith.constant 22 : index
      %c0_174 = arith.constant 0 : index
      %c0_175 = arith.constant 0 : index
      %319 = vector.load %arg4[%c22, %c0_174, %c0_175] : memref<25x24x48xbf16, #tpu.memory_space<vmem>>, vector<1x24x48xbf16>
      %320 = vector.shape_cast %319 : vector<1x24x48xbf16> to vector<24x48xbf16>
      %cst_176 = arith.constant dense<0.000000e+00> : vector<128x48xf32>
      %321 = tpu.matmul %318, %320, %cst_176 {dimension_numbers = #tpu.dot_dimension_numbers<[1], [0], [0], [1], [0, 0, 1, 1], [], []>} : vector<128x24xbf16>, vector<24x48xbf16>, vector<128x48xf32> -> vector<128x48xf32>
      %322 = arith.addf %317, %321 : vector<128x48xf32>
      %323 = vector.extract_strided_slice %307 {offsets = [48, 0], sizes = [128, 24], strides = [1, 1]} : vector<208x24xbf16> to vector<128x24xbf16>
      %c23 = arith.constant 23 : index
      %c0_177 = arith.constant 0 : index
      %c0_178 = arith.constant 0 : index
      %324 = vector.load %arg4[%c23, %c0_177, %c0_178] : memref<25x24x48xbf16, #tpu.memory_space<vmem>>, vector<1x24x48xbf16>
      %325 = vector.shape_cast %324 : vector<1x24x48xbf16> to vector<24x48xbf16>
      %cst_179 = arith.constant dense<0.000000e+00> : vector<128x48xf32>
      %326 = tpu.matmul %323, %325, %cst_179 {dimension_numbers = #tpu.dot_dimension_numbers<[1], [0], [0], [1], [0, 0, 1, 1], [], []>} : vector<128x24xbf16>, vector<24x48xbf16>, vector<128x48xf32> -> vector<128x48xf32>
      %327 = arith.addf %322, %326 : vector<128x48xf32>
      %328 = vector.extract_strided_slice %307 {offsets = [64, 0], sizes = [128, 24], strides = [1, 1]} : vector<208x24xbf16> to vector<128x24xbf16>
      %c24 = arith.constant 24 : index
      %c0_180 = arith.constant 0 : index
      %c0_181 = arith.constant 0 : index
      %329 = vector.load %arg4[%c24, %c0_180, %c0_181] : memref<25x24x48xbf16, #tpu.memory_space<vmem>>, vector<1x24x48xbf16>
      %330 = vector.shape_cast %329 : vector<1x24x48xbf16> to vector<24x48xbf16>
      %cst_182 = arith.constant dense<0.000000e+00> : vector<128x48xf32>
      %331 = tpu.matmul %328, %330, %cst_182 {dimension_numbers = #tpu.dot_dimension_numbers<[1], [0], [0], [1], [0, 0, 1, 1], [], []>} : vector<128x24xbf16>, vector<24x48xbf16>, vector<128x48xf32> -> vector<128x48xf32>
      %332 = arith.addf %327, %331 : vector<128x48xf32>
      %333 = arith.index_cast %186 : i32 to index
      %c0_183 = arith.constant 0 : index
      %c0_184 = arith.constant 0 : index
      %334 = vector.load %arg16[%333, %c0_183, %c0_184] : memref<8x128x48xf32, #tpu.memory_space<vmem>>, vector<1x128x48xf32>
      %335 = vector.shape_cast %334 : vector<1x128x48xf32> to vector<128x48xf32>
      %336 = vector.shape_cast %332 : vector<128x48xf32> to vector<1x128x48xf32>
      tpu.vector_store %arg16[%333, %c0_183, %c0_184], %336 {strides = array<i32>} : memref<8x128x48xf32, #tpu.memory_space<vmem>>, vector<1x128x48xf32>,
    }
    %c8_i32_6 = arith.constant 8 : i32
    %c0_7 = arith.constant 0 : index
    %c0_8 = arith.constant 0 : index
    %4 = vector.load %arg5[%c0_7, %c0_8] : memref<1x48xf32, #tpu.memory_space<vmem>>, vector<1x48xf32>
    %c0_9 = arith.constant 0 : index
    %c0_10 = arith.constant 0 : index
    %c0_11 = arith.constant 0 : index
    %5 = vector.load %arg16[%c0_9, %c0_10, %c0_11] : memref<8x128x48xf32, #tpu.memory_space<vmem>>, vector<1x128x48xf32>
    %6 = vector.shape_cast %5 : vector<1x128x48xf32> to vector<128x48xf32>
    %c1 = arith.constant 1 : index
    %c0_12 = arith.constant 0 : index
    %c0_13 = arith.constant 0 : index
    %7 = vector.load %arg16[%c1, %c0_12, %c0_13] : memref<8x128x48xf32, #tpu.memory_space<vmem>>, vector<1x128x48xf32>
    %8 = vector.shape_cast %7 : vector<1x128x48xf32> to vector<128x48xf32>
    %9 = arith.maximumf %6, %8 : vector<128x48xf32>
    %10 = vector.extract_strided_slice %9 {offsets = [0, 0], sizes = [16, 48], strides = [1, 1]} : vector<128x48xf32> to vector<16x48xf32>
    %11 = vector.extract_strided_slice %9 {offsets = [16, 0], sizes = [16, 48], strides = [1, 1]} : vector<128x48xf32> to vector<16x48xf32>
    %12 = arith.maximumf %10, %11 : vector<16x48xf32>
    %13 = vector.broadcast %4 : vector<1x48xf32> to vector<16x48xf32>
    %14 = arith.addf %12, %13 : vector<16x48xf32>
    %cst = arith.constant 0.000000e+00 : f32
    %15 = vector.broadcast %cst : f32 to vector<16x48xf32>
    %16 = arith.maximumf %14, %15 : vector<16x48xf32>
    %c0_14 = arith.constant 0 : index
    %c0_15 = arith.constant 0 : index
    %17 = vector.load %arg17[%c0_14, %c0_15] : memref<16x768xf32, #tpu.memory_space<vmem>>, vector<16x48xf32>
    tpu.vector_store %arg17[%c0_14, %c0_15], %16 {strides = array<i32>} : memref<16x768xf32, #tpu.memory_space<vmem>>, vector<16x48xf32>,
    %18 = vector.extract_strided_slice %9 {offsets = [32, 0], sizes = [16, 48], strides = [1, 1]} : vector<128x48xf32> to vector<16x48xf32>
    %19 = vector.extract_strided_slice %9 {offsets = [48, 0], sizes = [16, 48], strides = [1, 1]} : vector<128x48xf32> to vector<16x48xf32>
    %20 = arith.maximumf %18, %19 : vector<16x48xf32>
    %21 = vector.broadcast %4 : vector<1x48xf32> to vector<16x48xf32>
    %22 = arith.addf %20, %21 : vector<16x48xf32>
    %cst_16 = arith.constant 0.000000e+00 : f32
    %23 = vector.broadcast %cst_16 : f32 to vector<16x48xf32>
    %24 = arith.maximumf %22, %23 : vector<16x48xf32>
    %c0_17 = arith.constant 0 : index
    %c48 = arith.constant 48 : index
    %25 = vector.load %arg17[%c0_17, %c48] : memref<16x768xf32, #tpu.memory_space<vmem>>, vector<16x48xf32>
    tpu.vector_store %arg17[%c0_17, %c48], %24 {strides = array<i32>} : memref<16x768xf32, #tpu.memory_space<vmem>>, vector<16x48xf32>,
    %26 = vector.extract_strided_slice %9 {offsets = [64, 0], sizes = [16, 48], strides = [1, 1]} : vector<128x48xf32> to vector<16x48xf32>
    %27 = vector.extract_strided_slice %9 {offsets = [80, 0], sizes = [16, 48], strides = [1, 1]} : vector<128x48xf32> to vector<16x48xf32>
    %28 = arith.maximumf %26, %27 : vector<16x48xf32>
    %29 = vector.broadcast %4 : vector<1x48xf32> to vector<16x48xf32>
    %30 = arith.addf %28, %29 : vector<16x48xf32>
    %cst_18 = arith.constant 0.000000e+00 : f32
    %31 = vector.broadcast %cst_18 : f32 to vector<16x48xf32>
    %32 = arith.maximumf %30, %31 : vector<16x48xf32>
    %c0_19 = arith.constant 0 : index
    %c96 = arith.constant 96 : index
    %33 = vector.load %arg17[%c0_19, %c96] : memref<16x768xf32, #tpu.memory_space<vmem>>, vector<16x48xf32>
    tpu.vector_store %arg17[%c0_19, %c96], %32 {strides = array<i32>} : memref<16x768xf32, #tpu.memory_space<vmem>>, vector<16x48xf32>,
    %34 = vector.extract_strided_slice %9 {offsets = [96, 0], sizes = [16, 48], strides = [1, 1]} : vector<128x48xf32> to vector<16x48xf32>
    %35 = vector.extract_strided_slice %9 {offsets = [112, 0], sizes = [16, 48], strides = [1, 1]} : vector<128x48xf32> to vector<16x48xf32>
    %36 = arith.maximumf %34, %35 : vector<16x48xf32>
    %37 = vector.broadcast %4 : vector<1x48xf32> to vector<16x48xf32>
    %38 = arith.addf %36, %37 : vector<16x48xf32>
    %cst_20 = arith.constant 0.000000e+00 : f32
    %39 = vector.broadcast %cst_20 : f32 to vector<16x48xf32>
    %40 = arith.maximumf %38, %39 : vector<16x48xf32>
    %c0_21 = arith.constant 0 : index
    %c144 = arith.constant 144 : index
    %41 = vector.load %arg17[%c0_21, %c144] : memref<16x768xf32, #tpu.memory_space<vmem>>, vector<16x48xf32>
    tpu.vector_store %arg17[%c0_21, %c144], %40 {strides = array<i32>} : memref<16x768xf32, #tpu.memory_space<vmem>>, vector<16x48xf32>,
    %c2 = arith.constant 2 : index
    %c0_22 = arith.constant 0 : index
    %c0_23 = arith.constant 0 : index
    %42 = vector.load %arg16[%c2, %c0_22, %c0_23] : memref<8x128x48xf32, #tpu.memory_space<vmem>>, vector<1x128x48xf32>
    %43 = vector.shape_cast %42 : vector<1x128x48xf32> to vector<128x48xf32>
    %c3 = arith.constant 3 : index
    %c0_24 = arith.constant 0 : index
    %c0_25 = arith.constant 0 : index
    %44 = vector.load %arg16[%c3, %c0_24, %c0_25] : memref<8x128x48xf32, #tpu.memory_space<vmem>>, vector<1x128x48xf32>
    %45 = vector.shape_cast %44 : vector<1x128x48xf32> to vector<128x48xf32>
    %46 = arith.maximumf %43, %45 : vector<128x48xf32>
    %47 = vector.extract_strided_slice %46 {offsets = [0, 0], sizes = [16, 48], strides = [1, 1]} : vector<128x48xf32> to vector<16x48xf32>
    %48 = vector.extract_strided_slice %46 {offsets = [16, 0], sizes = [16, 48], strides = [1, 1]} : vector<128x48xf32> to vector<16x48xf32>
    %49 = arith.maximumf %47, %48 : vector<16x48xf32>
    %50 = vector.broadcast %4 : vector<1x48xf32> to vector<16x48xf32>
    %51 = arith.addf %49, %50 : vector<16x48xf32>
    %cst_26 = arith.constant 0.000000e+00 : f32
    %52 = vector.broadcast %cst_26 : f32 to vector<16x48xf32>
    %53 = arith.maximumf %51, %52 : vector<16x48xf32>
    %c0_27 = arith.constant 0 : index
    %c192 = arith.constant 192 : index
    %54 = vector.load %arg17[%c0_27, %c192] : memref<16x768xf32, #tpu.memory_space<vmem>>, vector<16x48xf32>
    tpu.vector_store %arg17[%c0_27, %c192], %53 {strides = array<i32>} : memref<16x768xf32, #tpu.memory_space<vmem>>, vector<16x48xf32>,
    %55 = vector.extract_strided_slice %46 {offsets = [32, 0], sizes = [16, 48], strides = [1, 1]} : vector<128x48xf32> to vector<16x48xf32>
    %56 = vector.extract_strided_slice %46 {offsets = [48, 0], sizes = [16, 48], strides = [1, 1]} : vector<128x48xf32> to vector<16x48xf32>
    %57 = arith.maximumf %55, %56 : vector<16x48xf32>
    %58 = vector.broadcast %4 : vector<1x48xf32> to vector<16x48xf32>
    %59 = arith.addf %57, %58 : vector<16x48xf32>
    %cst_28 = arith.constant 0.000000e+00 : f32
    %60 = vector.broadcast %cst_28 : f32 to vector<16x48xf32>
    %61 = arith.maximumf %59, %60 : vector<16x48xf32>
    %c0_29 = arith.constant 0 : index
    %c240 = arith.constant 240 : index
    %62 = vector.load %arg17[%c0_29, %c240] : memref<16x768xf32, #tpu.memory_space<vmem>>, vector<16x48xf32>
    tpu.vector_store %arg17[%c0_29, %c240], %61 {strides = array<i32>} : memref<16x768xf32, #tpu.memory_space<vmem>>, vector<16x48xf32>,
    %63 = vector.extract_strided_slice %46 {offsets = [64, 0], sizes = [16, 48], strides = [1, 1]} : vector<128x48xf32> to vector<16x48xf32>
    %64 = vector.extract_strided_slice %46 {offsets = [80, 0], sizes = [16, 48], strides = [1, 1]} : vector<128x48xf32> to vector<16x48xf32>
    %65 = arith.maximumf %63, %64 : vector<16x48xf32>
    %66 = vector.broadcast %4 : vector<1x48xf32> to vector<16x48xf32>
    %67 = arith.addf %65, %66 : vector<16x48xf32>
    %cst_30 = arith.constant 0.000000e+00 : f32
    %68 = vector.broadcast %cst_30 : f32 to vector<16x48xf32>
    %69 = arith.maximumf %67, %68 : vector<16x48xf32>
    %c0_31 = arith.constant 0 : index
    %c288 = arith.constant 288 : index
    %70 = vector.load %arg17[%c0_31, %c288] : memref<16x768xf32, #tpu.memory_space<vmem>>, vector<16x48xf32>
    tpu.vector_store %arg17[%c0_31, %c288], %69 {strides = array<i32>} : memref<16x768xf32, #tpu.memory_space<vmem>>, vector<16x48xf32>,
    %71 = vector.extract_strided_slice %46 {offsets = [96, 0], sizes = [16, 48], strides = [1, 1]} : vector<128x48xf32> to vector<16x48xf32>
    %72 = vector.extract_strided_slice %46 {offsets = [112, 0], sizes = [16, 48], strides = [1, 1]} : vector<128x48xf32> to vector<16x48xf32>
    %73 = arith.maximumf %71, %72 : vector<16x48xf32>
    %74 = vector.broadcast %4 : vector<1x48xf32> to vector<16x48xf32>
    %75 = arith.addf %73, %74 : vector<16x48xf32>
    %cst_32 = arith.constant 0.000000e+00 : f32
    %76 = vector.broadcast %cst_32 : f32 to vector<16x48xf32>
    %77 = arith.maximumf %75, %76 : vector<16x48xf32>
    %c0_33 = arith.constant 0 : index
    %c336 = arith.constant 336 : index
    %78 = vector.load %arg17[%c0_33, %c336] : memref<16x768xf32, #tpu.memory_space<vmem>>, vector<16x48xf32>
    tpu.vector_store %arg17[%c0_33, %c336], %77 {strides = array<i32>} : memref<16x768xf32, #tpu.memory_space<vmem>>, vector<16x48xf32>,
    %c4 = arith.constant 4 : index
    %c0_34 = arith.constant 0 : index
    %c0_35 = arith.constant 0 : index
    %79 = vector.load %arg16[%c4, %c0_34, %c0_35] : memref<8x128x48xf32, #tpu.memory_space<vmem>>, vector<1x128x48xf32>
    %80 = vector.shape_cast %79 : vector<1x128x48xf32> to vector<128x48xf32>
    %c5 = arith.constant 5 : index
    %c0_36 = arith.constant 0 : index
    %c0_37 = arith.constant 0 : index
    %81 = vector.load %arg16[%c5, %c0_36, %c0_37] : memref<8x128x48xf32, #tpu.memory_space<vmem>>, vector<1x128x48xf32>
    %82 = vector.shape_cast %81 : vector<1x128x48xf32> to vector<128x48xf32>
    %83 = arith.maximumf %80, %82 : vector<128x48xf32>
    %84 = vector.extract_strided_slice %83 {offsets = [0, 0], sizes = [16, 48], strides = [1, 1]} : vector<128x48xf32> to vector<16x48xf32>
    %85 = vector.extract_strided_slice %83 {offsets = [16, 0], sizes = [16, 48], strides = [1, 1]} : vector<128x48xf32> to vector<16x48xf32>
    %86 = arith.maximumf %84, %85 : vector<16x48xf32>
    %87 = vector.broadcast %4 : vector<1x48xf32> to vector<16x48xf32>
    %88 = arith.addf %86, %87 : vector<16x48xf32>
    %cst_38 = arith.constant 0.000000e+00 : f32
    %89 = vector.broadcast %cst_38 : f32 to vector<16x48xf32>
    %90 = arith.maximumf %88, %89 : vector<16x48xf32>
    %c0_39 = arith.constant 0 : index
    %c384 = arith.constant 384 : index
    %91 = vector.load %arg17[%c0_39, %c384] : memref<16x768xf32, #tpu.memory_space<vmem>>, vector<16x48xf32>
    tpu.vector_store %arg17[%c0_39, %c384], %90 {strides = array<i32>} : memref<16x768xf32, #tpu.memory_space<vmem>>, vector<16x48xf32>,
    %92 = vector.extract_strided_slice %83 {offsets = [32, 0], sizes = [16, 48], strides = [1, 1]} : vector<128x48xf32> to vector<16x48xf32>
    %93 = vector.extract_strided_slice %83 {offsets = [48, 0], sizes = [16, 48], strides = [1, 1]} : vector<128x48xf32> to vector<16x48xf32>
    %94 = arith.maximumf %92, %93 : vector<16x48xf32>
    %95 = vector.broadcast %4 : vector<1x48xf32> to vector<16x48xf32>
    %96 = arith.addf %94, %95 : vector<16x48xf32>
    %cst_40 = arith.constant 0.000000e+00 : f32
    %97 = vector.broadcast %cst_40 : f32 to vector<16x48xf32>
    %98 = arith.maximumf %96, %97 : vector<16x48xf32>
    %c0_41 = arith.constant 0 : index
    %c432 = arith.constant 432 : index
    %99 = vector.load %arg17[%c0_41, %c432] : memref<16x768xf32, #tpu.memory_space<vmem>>, vector<16x48xf32>
    tpu.vector_store %arg17[%c0_41, %c432], %98 {strides = array<i32>} : memref<16x768xf32, #tpu.memory_space<vmem>>, vector<16x48xf32>,
    %100 = vector.extract_strided_slice %83 {offsets = [64, 0], sizes = [16, 48], strides = [1, 1]} : vector<128x48xf32> to vector<16x48xf32>
    %101 = vector.extract_strided_slice %83 {offsets = [80, 0], sizes = [16, 48], strides = [1, 1]} : vector<128x48xf32> to vector<16x48xf32>
    %102 = arith.maximumf %100, %101 : vector<16x48xf32>
    %103 = vector.broadcast %4 : vector<1x48xf32> to vector<16x48xf32>
    %104 = arith.addf %102, %103 : vector<16x48xf32>
    %cst_42 = arith.constant 0.000000e+00 : f32
    %105 = vector.broadcast %cst_42 : f32 to vector<16x48xf32>
    %106 = arith.maximumf %104, %105 : vector<16x48xf32>
    %c0_43 = arith.constant 0 : index
    %c480 = arith.constant 480 : index
    %107 = vector.load %arg17[%c0_43, %c480] : memref<16x768xf32, #tpu.memory_space<vmem>>, vector<16x48xf32>
    tpu.vector_store %arg17[%c0_43, %c480], %106 {strides = array<i32>} : memref<16x768xf32, #tpu.memory_space<vmem>>, vector<16x48xf32>,
    %108 = vector.extract_strided_slice %83 {offsets = [96, 0], sizes = [16, 48], strides = [1, 1]} : vector<128x48xf32> to vector<16x48xf32>
    %109 = vector.extract_strided_slice %83 {offsets = [112, 0], sizes = [16, 48], strides = [1, 1]} : vector<128x48xf32> to vector<16x48xf32>
    %110 = arith.maximumf %108, %109 : vector<16x48xf32>
    %111 = vector.broadcast %4 : vector<1x48xf32> to vector<16x48xf32>
    %112 = arith.addf %110, %111 : vector<16x48xf32>
    %cst_44 = arith.constant 0.000000e+00 : f32
    %113 = vector.broadcast %cst_44 : f32 to vector<16x48xf32>
    %114 = arith.maximumf %112, %113 : vector<16x48xf32>
    %c0_45 = arith.constant 0 : index
    %c528 = arith.constant 528 : index
    %115 = vector.load %arg17[%c0_45, %c528] : memref<16x768xf32, #tpu.memory_space<vmem>>, vector<16x48xf32>
    tpu.vector_store %arg17[%c0_45, %c528], %114 {strides = array<i32>} : memref<16x768xf32, #tpu.memory_space<vmem>>, vector<16x48xf32>,
    %c6 = arith.constant 6 : index
    %c0_46 = arith.constant 0 : index
    %c0_47 = arith.constant 0 : index
    %116 = vector.load %arg16[%c6, %c0_46, %c0_47] : memref<8x128x48xf32, #tpu.memory_space<vmem>>, vector<1x128x48xf32>
    %117 = vector.shape_cast %116 : vector<1x128x48xf32> to vector<128x48xf32>
    %c7 = arith.constant 7 : index
    %c0_48 = arith.constant 0 : index
    %c0_49 = arith.constant 0 : index
    %118 = vector.load %arg16[%c7, %c0_48, %c0_49] : memref<8x128x48xf32, #tpu.memory_space<vmem>>, vector<1x128x48xf32>
    %119 = vector.shape_cast %118 : vector<1x128x48xf32> to vector<128x48xf32>
    %120 = arith.maximumf %117, %119 : vector<128x48xf32>
    %121 = vector.extract_strided_slice %120 {offsets = [0, 0], sizes = [16, 48], strides = [1, 1]} : vector<128x48xf32> to vector<16x48xf32>
    %122 = vector.extract_strided_slice %120 {offsets = [16, 0], sizes = [16, 48], strides = [1, 1]} : vector<128x48xf32> to vector<16x48xf32>
    %123 = arith.maximumf %121, %122 : vector<16x48xf32>
    %124 = vector.broadcast %4 : vector<1x48xf32> to vector<16x48xf32>
    %125 = arith.addf %123, %124 : vector<16x48xf32>
    %cst_50 = arith.constant 0.000000e+00 : f32
    %126 = vector.broadcast %cst_50 : f32 to vector<16x48xf32>
    %127 = arith.maximumf %125, %126 : vector<16x48xf32>
    %c0_51 = arith.constant 0 : index
    %c576 = arith.constant 576 : index
    %128 = vector.load %arg17[%c0_51, %c576] : memref<16x768xf32, #tpu.memory_space<vmem>>, vector<16x48xf32>
    tpu.vector_store %arg17[%c0_51, %c576], %127 {strides = array<i32>} : memref<16x768xf32, #tpu.memory_space<vmem>>, vector<16x48xf32>,
    %129 = vector.extract_strided_slice %120 {offsets = [32, 0], sizes = [16, 48], strides = [1, 1]} : vector<128x48xf32> to vector<16x48xf32>
    %130 = vector.extract_strided_slice %120 {offsets = [48, 0], sizes = [16, 48], strides = [1, 1]} : vector<128x48xf32> to vector<16x48xf32>
    %131 = arith.maximumf %129, %130 : vector<16x48xf32>
    %132 = vector.broadcast %4 : vector<1x48xf32> to vector<16x48xf32>
    %133 = arith.addf %131, %132 : vector<16x48xf32>
    %cst_52 = arith.constant 0.000000e+00 : f32
    %134 = vector.broadcast %cst_52 : f32 to vector<16x48xf32>
    %135 = arith.maximumf %133, %134 : vector<16x48xf32>
    %c0_53 = arith.constant 0 : index
    %c624 = arith.constant 624 : index
    %136 = vector.load %arg17[%c0_53, %c624] : memref<16x768xf32, #tpu.memory_space<vmem>>, vector<16x48xf32>
    tpu.vector_store %arg17[%c0_53, %c624], %135 {strides = array<i32>} : memref<16x768xf32, #tpu.memory_space<vmem>>, vector<16x48xf32>,
    %137 = vector.extract_strided_slice %120 {offsets = [64, 0], sizes = [16, 48], strides = [1, 1]} : vector<128x48xf32> to vector<16x48xf32>
    %138 = vector.extract_strided_slice %120 {offsets = [80, 0], sizes = [16, 48], strides = [1, 1]} : vector<128x48xf32> to vector<16x48xf32>
    %139 = arith.maximumf %137, %138 : vector<16x48xf32>
    %140 = vector.broadcast %4 : vector<1x48xf32> to vector<16x48xf32>
    %141 = arith.addf %139, %140 : vector<16x48xf32>
    %cst_54 = arith.constant 0.000000e+00 : f32
    %142 = vector.broadcast %cst_54 : f32 to vector<16x48xf32>
    %143 = arith.maximumf %141, %142 : vector<16x48xf32>
    %c0_55 = arith.constant 0 : index
    %c672 = arith.constant 672 : index
    %144 = vector.load %arg17[%c0_55, %c672] : memref<16x768xf32, #tpu.memory_space<vmem>>, vector<16x48xf32>
    tpu.vector_store %arg17[%c0_55, %c672], %143 {strides = array<i32>} : memref<16x768xf32, #tpu.memory_space<vmem>>, vector<16x48xf32>,
    %145 = vector.extract_strided_slice %120 {offsets = [96, 0], sizes = [16, 48], strides = [1, 1]} : vector<128x48xf32> to vector<16x48xf32>
    %146 = vector.extract_strided_slice %120 {offsets = [112, 0], sizes = [16, 48], strides = [1, 1]} : vector<128x48xf32> to vector<16x48xf32>
    %147 = arith.maximumf %145, %146 : vector<16x48xf32>
    %148 = vector.broadcast %4 : vector<1x48xf32> to vector<16x48xf32>
    %149 = arith.addf %147, %148 : vector<16x48xf32>
    %cst_56 = arith.constant 0.000000e+00 : f32
    %150 = vector.broadcast %cst_56 : f32 to vector<16x48xf32>
    %151 = arith.maximumf %149, %150 : vector<16x48xf32>
    %c0_57 = arith.constant 0 : index
    %c720 = arith.constant 720 : index
    %152 = vector.load %arg17[%c0_57, %c720] : memref<16x768xf32, #tpu.memory_space<vmem>>, vector<16x48xf32>
    tpu.vector_store %arg17[%c0_57, %c720], %151 {strides = array<i32>} : memref<16x768xf32, #tpu.memory_space<vmem>>, vector<16x48xf32>,
    %c0_58 = arith.constant 0 : index
    %c0_59 = arith.constant 0 : index
    %153 = vector.load %arg17[%c0_58, %c0_59] : memref<16x768xf32, #tpu.memory_space<vmem>>, vector<16x768xf32>
    %154 = arith.truncf %153 : vector<16x768xf32> to vector<16x768xbf16>
    %c0_60 = arith.constant 0 : index
    %c0_61 = arith.constant 0 : index
    %155 = vector.load %arg6[%c0_60, %c0_61] : memref<768x400xbf16, #tpu.memory_space<vmem>>, vector<768x400xbf16>
    %cst_62 = arith.constant dense<0.000000e+00> : vector<16x400xf32>
    %156 = tpu.matmul %154, %155, %cst_62 {dimension_numbers = #tpu.dot_dimension_numbers<[1], [0], [0], [1], [0, 0, 1, 1], [], []>} : vector<16x768xbf16>, vector<768x400xbf16>, vector<16x400xf32> -> vector<16x400xf32>
    %c0_63 = arith.constant 0 : index
    %c0_64 = arith.constant 0 : index
    %157 = vector.load %arg7[%c0_63, %c0_64] : memref<1x400xf32, #tpu.memory_space<vmem>>, vector<1x400xf32>
    %158 = vector.broadcast %157 : vector<1x400xf32> to vector<16x400xf32>
    %159 = arith.addf %156, %158 : vector<16x400xf32>
    %cst_65 = arith.constant 0.000000e+00 : f32
    %160 = vector.broadcast %cst_65 : f32 to vector<16x400xf32>
    %161 = arith.maximumf %159, %160 : vector<16x400xf32>
    %162 = arith.truncf %161 : vector<16x400xf32> to vector<16x400xbf16>
    %c0_66 = arith.constant 0 : index
    %c0_67 = arith.constant 0 : index
    %163 = vector.load %arg8[%c0_66, %c0_67] : memref<400x120xbf16, #tpu.memory_space<vmem>>, vector<400x120xbf16>
    %cst_68 = arith.constant dense<0.000000e+00> : vector<16x120xf32>
    %164 = tpu.matmul %162, %163, %cst_68 {dimension_numbers = #tpu.dot_dimension_numbers<[1], [0], [0], [1], [0, 0, 1, 1], [], []>} : vector<16x400xbf16>, vector<400x120xbf16>, vector<16x120xf32> -> vector<16x120xf32>
    %c0_69 = arith.constant 0 : index
    %c0_70 = arith.constant 0 : index
    %165 = vector.load %arg9[%c0_69, %c0_70] : memref<1x120xf32, #tpu.memory_space<vmem>>, vector<1x120xf32>
    %166 = vector.broadcast %165 : vector<1x120xf32> to vector<16x120xf32>
    %167 = arith.addf %164, %166 : vector<16x120xf32>
    %cst_71 = arith.constant 0.000000e+00 : f32
    %168 = vector.broadcast %cst_71 : f32 to vector<16x120xf32>
    %169 = arith.maximumf %167, %168 : vector<16x120xf32>
    %170 = arith.truncf %169 : vector<16x120xf32> to vector<16x120xbf16>
    %c0_72 = arith.constant 0 : index
    %c0_73 = arith.constant 0 : index
    %171 = vector.load %arg10[%c0_72, %c0_73] : memref<120x60xbf16, #tpu.memory_space<vmem>>, vector<120x60xbf16>
    %cst_74 = arith.constant dense<0.000000e+00> : vector<16x60xf32>
    %172 = tpu.matmul %170, %171, %cst_74 {dimension_numbers = #tpu.dot_dimension_numbers<[1], [0], [0], [1], [0, 0, 1, 1], [], []>} : vector<16x120xbf16>, vector<120x60xbf16>, vector<16x60xf32> -> vector<16x60xf32>
    %c0_75 = arith.constant 0 : index
    %c0_76 = arith.constant 0 : index
    %173 = vector.load %arg11[%c0_75, %c0_76] : memref<1x60xf32, #tpu.memory_space<vmem>>, vector<1x60xf32>
    %174 = vector.broadcast %173 : vector<1x60xf32> to vector<16x60xf32>
    %175 = arith.addf %172, %174 : vector<16x60xf32>
    %cst_77 = arith.constant 0.000000e+00 : f32
    %176 = vector.broadcast %cst_77 : f32 to vector<16x60xf32>
    %177 = arith.maximumf %175, %176 : vector<16x60xf32>
    %178 = arith.truncf %177 : vector<16x60xf32> to vector<16x60xbf16>
    %c0_78 = arith.constant 0 : index
    %c0_79 = arith.constant 0 : index
    %179 = vector.load %arg12[%c0_78, %c0_79] : memref<60x10xbf16, #tpu.memory_space<vmem>>, vector<60x10xbf16>
    %cst_80 = arith.constant dense<0.000000e+00> : vector<16x10xf32>
    %180 = tpu.matmul %178, %179, %cst_80 {dimension_numbers = #tpu.dot_dimension_numbers<[1], [0], [0], [1], [0, 0, 1, 1], [], []>} : vector<16x60xbf16>, vector<60x10xbf16>, vector<16x10xf32> -> vector<16x10xf32>
    %c0_81 = arith.constant 0 : index
    %c0_82 = arith.constant 0 : index
    %181 = vector.load %arg13[%c0_81, %c0_82] : memref<1x10xf32, #tpu.memory_space<vmem>>, vector<1x10xf32>
    %182 = vector.broadcast %181 : vector<1x10xf32> to vector<16x10xf32>
    %183 = arith.addf %180, %182 : vector<16x10xf32>
    %c0_83 = arith.constant 0 : index
    %c0_84 = arith.constant 0 : index
    %184 = vector.load %arg14[%c0_83, %c0_84] : memref<16x10xf32, #tpu.memory_space<vmem>>, vector<16x10xf32>
    tpu.vector_store %arg14[%c0_83, %c0_84], %183 {strides = array<i32>} : memref<16x10xf32, #tpu.memory_space<vmem>>, vector<16x10xf32>,
    return
  }
  func.func @transform_0(%arg0: i32) -> (i32, i32, i32) {
    %c0_i32 = arith.constant 0 : i32
    %c0_i32_0 = arith.constant 0 : i32
    %c0_i32_1 = arith.constant 0 : i32
    return %arg0, %c0_i32, %c0_i32_0 : i32, i32, i32
  }
  func.func @transform_1(%arg0: i32) -> (i32, i32) {
    %c0_i32 = arith.constant 0 : i32
    %c0_i32_0 = arith.constant 0 : i32
    %c0_i32_1 = arith.constant 0 : i32
    return %c0_i32, %c0_i32_0 : i32, i32
  }
  func.func @transform_2(%arg0: i32) -> (i32, i32) {
    %c0_i32 = arith.constant 0 : i32
    %c0_i32_0 = arith.constant 0 : i32
    %c0_i32_1 = arith.constant 0 : i32
    return %c0_i32, %c0_i32_0 : i32, i32
  }
  func.func @transform_3(%arg0: i32) -> (i32, i32, i32) {
    %c0_i32 = arith.constant 0 : i32
    %c0_i32_0 = arith.constant 0 : i32
    %c0_i32_1 = arith.constant 0 : i32
    %c0_i32_2 = arith.constant 0 : i32
    return %c0_i32, %c0_i32_0, %c0_i32_1 : i32, i32, i32
  }
  func.func @transform_4(%arg0: i32) -> (i32, i32) {
    %c0_i32 = arith.constant 0 : i32
    %c0_i32_0 = arith.constant 0 : i32
    %c0_i32_1 = arith.constant 0 : i32
    return %c0_i32, %c0_i32_0 : i32, i32
  }
  func.func @transform_5(%arg0: i32) -> (i32, i32) {
    %c0_i32 = arith.constant 0 : i32
    %c0_i32_0 = arith.constant 0 : i32
    %c0_i32_1 = arith.constant 0 : i32
    return %c0_i32, %c0_i32_0 : i32, i32
  }
  func.func @transform_6(%arg0: i32) -> (i32, i32) {
    %c0_i32 = arith.constant 0 : i32
    %c0_i32_0 = arith.constant 0 : i32
    %c0_i32_1 = arith.constant 0 : i32
    return %c0_i32, %c0_i32_0 : i32, i32
  }
  func.func @transform_7(%arg0: i32) -> (i32, i32) {
    %c0_i32 = arith.constant 0 : i32
    %c0_i32_0 = arith.constant 0 : i32
    %c0_i32_1 = arith.constant 0 : i32
    return %c0_i32, %c0_i32_0 : i32, i32
  }
  func.func @transform_8(%arg0: i32) -> (i32, i32) {
    %c0_i32 = arith.constant 0 : i32
    %c0_i32_0 = arith.constant 0 : i32
    %c0_i32_1 = arith.constant 0 : i32
    return %c0_i32, %c0_i32_0 : i32, i32
  }
  func.func @transform_9(%arg0: i32) -> (i32, i32) {
    %c0_i32 = arith.constant 0 : i32
    %c0_i32_0 = arith.constant 0 : i32
    %c0_i32_1 = arith.constant 0 : i32
    return %c0_i32, %c0_i32_0 : i32, i32
  }
  func.func @transform_10(%arg0: i32) -> (i32, i32) {
    %c0_i32 = arith.constant 0 : i32
    %c0_i32_0 = arith.constant 0 : i32
    %c0_i32_1 = arith.constant 0 : i32
    return %c0_i32, %c0_i32_0 : i32, i32
  }
  func.func @transform_11(%arg0: i32) -> (i32, i32) {
    %c0_i32 = arith.constant 0 : i32
    %c0_i32_0 = arith.constant 0 : i32
    %c0_i32_1 = arith.constant 0 : i32
    return %c0_i32, %c0_i32_0 : i32, i32
  }
  func.func @transform_12(%arg0: i32) -> (i32, i32) {
    %c0_i32 = arith.constant 0 : i32
    %c0_i32_0 = arith.constant 0 : i32
    %c0_i32_1 = arith.constant 0 : i32
    return %c0_i32, %c0_i32_0 : i32, i32
  }
  func.func @transform_13(%arg0: i32) -> (i32, i32) {
    %c0_i32 = arith.constant 0 : i32
    %c0_i32_0 = arith.constant 0 : i32
    return %arg0, %c0_i32 : i32, i32
  }
}

</mosaic_0001>

<llo_original>
// kernel: network_forward.1
$region0: #{network_forward.1}
  #allocation0 [shape = 'u32[]', space=smem, size = 0x4, offset = 0x4, fixed_abs, tag = 'smem constant byte address 0x4 - core index']
  #allocation1 [shape = 'u32[144,128]{1,0:T(1,128)}', space=vmem, size = 0x12000, scoped, tag = 'internal scratch']
  #allocation2 [shape = 'bf16[13,208,24]{2,1,0:T(16,128)(2,1)}', space=vmem, size = 0xa9000, scoped, tag = 'scratch operand']
  #allocation3 [shape = 'f32[8,128,48]{2,1,0:T(8,128)}', space=vmem, size = 0x80000, scoped, tag = 'scratch operand']
  #allocation4 [shape = 'f32[16,768]{1,0:T(8,128)}', space=vmem, size = 0xc000, scoped, tag = 'scratch operand']
  %s0 = inlined_call_operand.vmem [shape: bf16[52,416,9], index: 0, kind: input, shape index: {}]
  %s1 = inlined_call_operand.vmem [shape: bf16[9,24], index: 1, kind: input, shape index: {}]
  %s2 = inlined_call_operand.vmem [shape: f32[1,24], index: 2, kind: input, shape index: {}]
  %s3 = inlined_call_operand.vmem [shape: bf16[25,24,48], index: 3, kind: input, shape index: {}]
  %s4 = inlined_call_operand.vmem [shape: f32[1,48], index: 4, kind: input, shape index: {}]
  %s5 = inlined_call_operand.vmem [shape: bf16[768,400], index: 5, kind: input, shape index: {}]
  %s6 = inlined_call_operand.vmem [shape: f32[1,400], index: 6, kind: input, shape index: {}]
  %s7 = inlined_call_operand.vmem [shape: bf16[400,120], index: 7, kind: input, shape index: {}]
  %s8 = inlined_call_operand.vmem [shape: f32[1,120], index: 8, kind: input, shape index: {}]
  %s9 = inlined_call_operand.vmem [shape: bf16[120,60], index: 9, kind: input, shape index: {}]
  %s10 = inlined_call_operand.vmem [shape: f32[1,60], index: 10, kind: input, shape index: {}]
  %s11 = inlined_call_operand.vmem [shape: bf16[60,10], index: 11, kind: input, shape index: {}]
  %s12 = inlined_call_operand.vmem [shape: f32[1,10], index: 12, kind: input, shape index: {}]
  %s13 = inlined_call_operand.vmem [shape: f32[32,10], index: 13, kind: output, shape index: {}]
  %s14 = sld [smem:[#allocation0]]
  $region99: #{network_forward.1} parent=0
    _
  %s16 = ssub.s32 1, %s14
  %s17 = scalar_select 0, %s16, %s14
  loop: start=0, step=1, limit=4
  $region2: #{network_forward.1} parent=0 // loop_pre_header
    _
  $region3: #{network_forward.1} parent=0 // loop_header
    %s19 = sphi 0, %s23
    %p20 = scmp.ge.s32.totalorder %s19, 4
    %s29 = sphi 0, %s31
    %s32 = sphi 0, %s29
    %s33 = sphi 0, %s32
    %s49 = sphi 0, %s33
    %s53 = sphi 0, %s53
    %s55 = sphi 0, %s53
    %s56 = sphi 0, %s55
    %s70 = sphi 0, %s56
    %s74 = sphi 0, %s74
    %s76 = sphi 0, %s74
    %s77 = sphi 0, %s76
    %s91 = sphi 0, %s77
    %s95 = sphi 0, %s95
    %s97 = sphi 0, %s95
    %s98 = sphi 0, %s97
    %s112 = sphi 0, %s98
    %s116 = sphi 0, %s116
    %s118 = sphi 0, %s116
    %s119 = sphi 0, %s118
    %s133 = sphi 0, %s119
    %s137 = sphi 0, %s137
    %s139 = sphi 0, %s137
    %s140 = sphi 0, %s139
    %s154 = sphi 0, %s140
    %s158 = sphi 0, %s158
    %s160 = sphi 0, %s158
    %s161 = sphi 0, %s160
    %s175 = sphi 0, %s161
    %s179 = sphi 0, %s179
    %s181 = sphi 0, %s179
    %s182 = sphi 0, %s181
    %s196 = sphi 0, %s182
    %s200 = sphi 0, %s200
    %s202 = sphi 0, %s200
    %s203 = sphi 0, %s202
    %s217 = sphi 0, %s203
    %s221 = sphi 0, %s221
    %s223 = sphi 0, %s221
    %s224 = sphi 0, %s223
    %s238 = sphi 0, %s224
    %s242 = sphi 0, %s242
    %s244 = sphi 0, %s242
    %s245 = sphi 0, %s244
    %s259 = sphi 0, %s245
    %s263 = sphi 0, %s263
    %s265 = sphi 0, %s263
    %s266 = sphi 0, %s265
    %s280 = sphi 0, %s266
    %s284 = sphi 0, %s284
    %s286 = sphi 0, %s284
    %s287 = sphi 0, %s286
    %s301 = sphi 0, %s287
    %s307 = sphi 0, %s309
    %s310 = sphi 0, %s307
    %s311 = sphi 0, %s310
    %s327 = sphi 0, %s311
  $region4: #{network_forward.1} parent=0 // loop_header_branch
    %22 = sbr.rel (%p20) target = $region8
  $region5: #{network_forward.1} parent=0 // loop_body
    %s24 = ssub.s32 %s19, 1
    %s25 = ssub.s32 %s19, 2
    %s26 = sadd.s32 %s19, 1
    %s27 = ssub.s32 %s19, %s26
    %p28 = scmp.eq.s32.totalorder %s27, 0
    %s30 = sadd.s32 %s29, 1
    %s31 = scalar_select %p28, %s29, %s30
    %p34 = pneg %p28
    %p35 = scmp.eq.s32.totalorder %s19, 1
    %p36 = por %p34, %p35
    %p37 = scmp.ne.s32.totalorder %s29, %s32
    %p38 = scmp.eq.s32.totalorder %s19, 0
    %p39 = por %p37, %p38
    %p40 = scmp.ne.s32.totalorder %s29, %s32
    %p41 = scmp.eq.s32.totalorder %s24, 1
    %p42 = por %p40, %p41
    %p43 = scmp.ne.s32.totalorder %s32, %s33
    %p44 = scmp.eq.s32.totalorder %s24, 0
    %p45 = por %p43, %p44
    %p46 = scmp.ne.s32.totalorder %s32, %s33
    %p47 = scmp.eq.s32.totalorder %s25, 1
    %p48 = por %p46, %p47
    %p50 = scmp.ne.s32.totalorder %s33, %s49
    %p51 = scmp.eq.s32.totalorder %s25, 0
    %p52 = por %p50, %p51
    %s54 = sadd.s32 %s53, 1
    %p57 = scmp.eq.s32.totalorder %s19, 1
    %p58 = scmp.ne.s32.totalorder %s53, %s55
    %p59 = scmp.eq.s32.totalorder %s19, 0
    %p60 = por %p58, %p59
    %p61 = scmp.ne.s32.totalorder %s53, %s55
    %p62 = scmp.eq.s32.totalorder %s24, 1
    %p63 = por %p61, %p62
    %p64 = scmp.ne.s32.totalorder %s55, %s56
    %p65 = scmp.eq.s32.totalorder %s24, 0
    %p66 = por %p64, %p65
    %p67 = scmp.ne.s32.totalorder %s55, %s56
    %p68 = scmp.eq.s32.totalorder %s25, 1
    %p69 = por %p67, %p68
    %p71 = scmp.ne.s32.totalorder %s56, %s70
    %p72 = scmp.eq.s32.totalorder %s25, 0
    %p73 = por %p71, %p72
    %s75 = sadd.s32 %s74, 1
    %p78 = scmp.eq.s32.totalorder %s19, 1
    %p79 = scmp.ne.s32.totalorder %s74, %s76
    %p80 = scmp.eq.s32.totalorder %s19, 0
    %p81 = por %p79, %p80
    %p82 = scmp.ne.s32.totalorder %s74, %s76
    %p83 = scmp.eq.s32.totalorder %s24, 1
    %p84 = por %p82, %p83
    %p85 = scmp.ne.s32.totalorder %s76, %s77
    %p86 = scmp.eq.s32.totalorder %s24, 0
    %p87 = por %p85, %p86
    %p88 = scmp.ne.s32.totalorder %s76, %s77
    %p89 = scmp.eq.s32.totalorder %s25, 1
    %p90 = por %p88, %p89
    %p92 = scmp.ne.s32.totalorder %s77, %s91
    %p93 = scmp.eq.s32.totalorder %s25, 0
    %p94 = por %p92, %p93
    %s96 = sadd.s32 %s95, 1
    %p99 = scmp.eq.s32.totalorder %s19, 1
    %p100 = scmp.ne.s32.totalorder %s95, %s97
    %p101 = scmp.eq.s32.totalorder %s19, 0
    %p102 = por %p100, %p101
    %p103 = scmp.ne.s32.totalorder %s95, %s97
    %p104 = scmp.eq.s32.totalorder %s24, 1
    %p105 = por %p103, %p104
    %p106 = scmp.ne.s32.totalorder %s97, %s98
    %p107 = scmp.eq.s32.totalorder %s24, 0
    %p108 = por %p106, %p107
    %p109 = scmp.ne.s32.totalorder %s97, %s98
    %p110 = scmp.eq.s32.totalorder %s25, 1
    %p111 = por %p109, %p110
    %p113 = scmp.ne.s32.totalorder %s98, %s112
    %p114 = scmp.eq.s32.totalorder %s25, 0
    %p115 = por %p113, %p114
    %s117 = sadd.s32 %s116, 1
    %p120 = scmp.eq.s32.totalorder %s19, 1
    %p121 = scmp.ne.s32.totalorder %s116, %s118
    %p122 = scmp.eq.s32.totalorder %s19, 0
    %p123 = por %p121, %p122
    %p124 = scmp.ne.s32.totalorder %s116, %s118
    %p125 = scmp.eq.s32.totalorder %s24, 1
    %p126 = por %p124, %p125
    %p127 = scmp.ne.s32.totalorder %s118, %s119
    %p128 = scmp.eq.s32.totalorder %s24, 0
    %p129 = por %p127, %p128
    %p130 = scmp.ne.s32.totalorder %s118, %s119
    %p131 = scmp.eq.s32.totalorder %s25, 1
    %p132 = por %p130, %p131
    %p134 = scmp.ne.s32.totalorder %s119, %s133
    %p135 = scmp.eq.s32.totalorder %s25, 0
    %p136 = por %p134, %p135
    %s138 = sadd.s32 %s137, 1
    %p141 = scmp.eq.s32.totalorder %s19, 1
    %p142 = scmp.ne.s32.totalorder %s137, %s139
    %p143 = scmp.eq.s32.totalorder %s19, 0
    %p144 = por %p142, %p143
    %p145 = scmp.ne.s32.totalorder %s137, %s139
    %p146 = scmp.eq.s32.totalorder %s24, 1
    %p147 = por %p145, %p146
    %p148 = scmp.ne.s32.totalorder %s139, %s140
    %p149 = scmp.eq.s32.totalorder %s24, 0
    %p150 = por %p148, %p149
    %p151 = scmp.ne.s32.totalorder %s139, %s140
    %p152 = scmp.eq.s32.totalorder %s25, 1
    %p153 = por %p151, %p152
    %p155 = scmp.ne.s32.totalorder %s140, %s154
    %p156 = scmp.eq.s32.totalorder %s25, 0
    %p157 = por %p155, %p156
    %s159 = sadd.s32 %s158, 1
    %p162 = scmp.eq.s32.totalorder %s19, 1
    %p163 = scmp.ne.s32.totalorder %s158, %s160
    %p164 = scmp.eq.s32.totalorder %s19, 0
    %p165 = por %p163, %p164
    %p166 = scmp.ne.s32.totalorder %s158, %s160
    %p167 = scmp.eq.s32.totalorder %s24, 1
    %p168 = por %p166, %p167
    %p169 = scmp.ne.s32.totalorder %s160, %s161
    %p170 = scmp.eq.s32.totalorder %s24, 0
    %p171 = por %p169, %p170
    %p172 = scmp.ne.s32.totalorder %s160, %s161
    %p173 = scmp.eq.s32.totalorder %s25, 1
    %p174 = por %p172, %p173
    %p176 = scmp.ne.s32.totalorder %s161, %s175
    %p177 = scmp.eq.s32.totalorder %s25, 0
    %p178 = por %p176, %p177
    %s180 = sadd.s32 %s179, 1
    %p183 = scmp.eq.s32.totalorder %s19, 1
    %p184 = scmp.ne.s32.totalorder %s179, %s181
    %p185 = scmp.eq.s32.totalorder %s19, 0
    %p186 = por %p184, %p185
    %p187 = scmp.ne.s32.totalorder %s179, %s181
    %p188 = scmp.eq.s32.totalorder %s24, 1
    %p189 = por %p187, %p188
    %p190 = scmp.ne.s32.totalorder %s181, %s182
    %p191 = scmp.eq.s32.totalorder %s24, 0
    %p192 = por %p190, %p191
    %p193 = scmp.ne.s32.totalorder %s181, %s182
    %p194 = scmp.eq.s32.totalorder %s25, 1
    %p195 = por %p193, %p194
    %p197 = scmp.ne.s32.totalorder %s182, %s196
    %p198 = scmp.eq.s32.totalorder %s25, 0
    %p199 = por %p197, %p198
    %s201 = sadd.s32 %s200, 1
    %p204 = scmp.eq.s32.totalorder %s19, 1
    %p205 = scmp.ne.s32.totalorder %s200, %s202
    %p206 = scmp.eq.s32.totalorder %s19, 0
    %p207 = por %p205, %p206
    %p208 = scmp.ne.s32.totalorder %s200, %s202
    %p209 = scmp.eq.s32.totalorder %s24, 1
    %p210 = por %p208, %p209
    %p211 = scmp.ne.s32.totalorder %s202, %s203
    %p212 = scmp.eq.s32.totalorder %s24, 0
    %p213 = por %p211, %p212
    %p214 = scmp.ne.s32.totalorder %s202, %s203
    %p215 = scmp.eq.s32.totalorder %s25, 1
    %p216 = por %p214, %p215
    %p218 = scmp.ne.s32.totalorder %s203, %s217
    %p219 = scmp.eq.s32.totalorder %s25, 0
    %p220 = por %p218, %p219
    %s222 = sadd.s32 %s221, 1
    %p225 = scmp.eq.s32.totalorder %s19, 1
    %p226 = scmp.ne.s32.totalorder %s221, %s223
    %p227 = scmp.eq.s32.totalorder %s19, 0
    %p228 = por %p226, %p227
    %p229 = scmp.ne.s32.totalorder %s221, %s223
    %p230 = scmp.eq.s32.totalorder %s24, 1
    %p231 = por %p229, %p230
    %p232 = scmp.ne.s32.totalorder %s223, %s224
    %p233 = scmp.eq.s32.totalorder %s24, 0
    %p234 = por %p232, %p233
    %p235 = scmp.ne.s32.totalorder %s223, %s224
    %p236 = scmp.eq.s32.totalorder %s25, 1
    %p237 = por %p235, %p236
    %p239 = scmp.ne.s32.totalorder %s224, %s238
    %p240 = scmp.eq.s32.totalorder %s25, 0
    %p241 = por %p239, %p240
    %s243 = sadd.s32 %s242, 1
    %p246 = scmp.eq.s32.totalorder %s19, 1
    %p247 = scmp.ne.s32.totalorder %s242, %s244
    %p248 = scmp.eq.s32.totalorder %s19, 0
    %p249 = por %p247, %p248
    %p250 = scmp.ne.s32.totalorder %s242, %s244
    %p251 = scmp.eq.s32.totalorder %s24, 1
    %p252 = por %p250, %p251
    %p253 = scmp.ne.s32.totalorder %s244, %s245
    %p254 = scmp.eq.s32.totalorder %s24, 0
    %p255 = por %p253, %p254
    %p256 = scmp.ne.s32.totalorder %s244, %s245
    %p257 = scmp.eq.s32.totalorder %s25, 1
    %p258 = por %p256, %p257
    %p260 = scmp.ne.s32.totalorder %s245, %s259
    %p261 = scmp.eq.s32.totalorder %s25, 0
    %p262 = por %p260, %p261
    %s264 = sadd.s32 %s263, 1
    %p267 = scmp.eq.s32.totalorder %s19, 1
    %p268 = scmp.ne.s32.totalorder %s263, %s265
    %p269 = scmp.eq.s32.totalorder %s19, 0
    %p270 = por %p268, %p269
    %p271 = scmp.ne.s32.totalorder %s263, %s265
    %p272 = scmp.eq.s32.totalorder %s24, 1
    %p273 = por %p271, %p272
    %p274 = scmp.ne.s32.totalorder %s265, %s266
    %p275 = scmp.eq.s32.totalorder %s24, 0
    %p276 = por %p274, %p275
    %p277 = scmp.ne.s32.totalorder %s265, %s266
    %p278 = scmp.eq.s32.totalorder %s25, 1
    %p279 = por %p277, %p278
    %p281 = scmp.ne.s32.totalorder %s266, %s280
    %p282 = scmp.eq.s32.totalorder %s25, 0
    %p283 = por %p281, %p282
    %s285 = sadd.s32 %s284, 1
    %p288 = scmp.eq.s32.totalorder %s19, 1
    %p289 = scmp.ne.s32.totalorder %s284, %s286
    %p290 = scmp.eq.s32.totalorder %s19, 0
    %p291 = por %p289, %p290
    %p292 = scmp.ne.s32.totalorder %s284, %s286
    %p293 = scmp.eq.s32.totalorder %s24, 1
    %p294 = por %p292, %p293
    %p295 = scmp.ne.s32.totalorder %s286, %s287
    %p296 = scmp.eq.s32.totalorder %s24, 0
    %p297 = por %p295, %p296
    %p298 = scmp.ne.s32.totalorder %s286, %s287
    %p299 = scmp.eq.s32.totalorder %s25, 1
    %p300 = por %p298, %p299
    %p302 = scmp.ne.s32.totalorder %s287, %s301
    %p303 = scmp.eq.s32.totalorder %s25, 0
    %p304 = por %p302, %p303
    %s305 = ssub.s32 %s19, %s26
    %p306 = scmp.eq.s32.totalorder %s305, 0
    %s308 = sadd.s32 %s307, 1
    %s309 = scalar_select %p306, %s307, %s308
    %p312 = pneg %p306
    %p313 = scmp.eq.s32.totalorder %s19, 1
    %p314 = por %p312, %p313
    %p315 = scmp.ne.s32.totalorder %s307, %s310
    %p316 = scmp.eq.s32.totalorder %s19, 0
    %p317 = por %p315, %p316
    %p318 = scmp.ne.s32.totalorder %s307, %s310
    %p319 = scmp.eq.s32.totalorder %s24, 1
    %p320 = por %p318, %p319
    %p321 = scmp.ne.s32.totalorder %s310, %s311
    %p322 = scmp.eq.s32.totalorder %s24, 0
    %p323 = por %p321, %p322
    %p324 = scmp.ne.s32.totalorder %s310, %s311
    %p325 = scmp.eq.s32.totalorder %s25, 1
    %p326 = por %p324, %p325
    %p328 = scmp.ne.s32.totalorder %s311, %s327
    %p329 = scmp.eq.s32.totalorder %s25, 0
    %p330 = por %p328, %p329
    %p331 = scmp.le.s32.totalorder 1, %s19
    %p332 = scmp.lt.s32.totalorder %s19, 3
    %p333 = pnand %p331, %p332
    %p334 = pneg %p333
    // Predicated region
    $region9: #{network_forward.1} parent=5 // pred_check
      _
    $region10: #{network_forward.1} parent=5 // pred_check_branch
      %336 = sbr.rel (%p333) target = $region12
    $region11: #{network_forward.1} parent=5 // pred_region
      %s337 = ssub.s32 %s19, 1
      // Predicated region
      $region13: #{network_forward.1} parent=11 // pred_check
        %p338 = pneg %p66
      $region14: #{network_forward.1} parent=11 // pred_check_branch
        %340 = sbr.rel (%p338) target = $region16
      $region15: #{network_forward.1} parent=11 // pred_region
        _
      $region16: #{network_forward.1} parent=11 // pred_fallthru
        _
      // Predicated region
      $region17: #{network_forward.1} parent=11 // pred_check
        %p341 = pneg %p87
      $region18: #{network_forward.1} parent=11 // pred_check_branch
        %343 = sbr.rel (%p341) target = $region20
      $region19: #{network_forward.1} parent=11 // pred_region
        _
      $region20: #{network_forward.1} parent=11 // pred_fallthru
        _
      // Predicated region
      $region21: #{network_forward.1} parent=11 // pred_check
        %p344 = pneg %p108
      $region22: #{network_forward.1} parent=11 // pred_check_branch
        %346 = sbr.rel (%p344) target = $region24
      $region23: #{network_forward.1} parent=11 // pred_region
        _
      $region24: #{network_forward.1} parent=11 // pred_fallthru
        _
      // Predicated region
      $region25: #{network_forward.1} parent=11 // pred_check
        %p347 = pneg %p129
      $region26: #{network_forward.1} parent=11 // pred_check_branch
        %349 = sbr.rel (%p347) target = $region28
      $region27: #{network_forward.1} parent=11 // pred_region
        _
      $region28: #{network_forward.1} parent=11 // pred_fallthru
        _
      // Predicated region
      $region29: #{network_forward.1} parent=11 // pred_check
        %p350 = pneg %p150
      $region30: #{network_forward.1} parent=11 // pred_check_branch
        %352 = sbr.rel (%p350) target = $region32
      $region31: #{network_forward.1} parent=11 // pred_region
        _
      $region32: #{network_forward.1} parent=11 // pred_fallthru
        _
      // Predicated region
      $region33: #{network_forward.1} parent=11 // pred_check
        %p353 = pneg %p171
      $region34: #{network_forward.1} parent=11 // pred_check_branch
        %355 = sbr.rel (%p353) target = $region36
      $region35: #{network_forward.1} parent=11 // pred_region
        _
      $region36: #{network_forward.1} parent=11 // pred_fallthru
        _
      // Predicated region
      $region37: #{network_forward.1} parent=11 // pred_check
        %p356 = pneg %p192
      $region38: #{network_forward.1} parent=11 // pred_check_branch
        %358 = sbr.rel (%p356) target = $region40
      $region39: #{network_forward.1} parent=11 // pred_region
        _
      $region40: #{network_forward.1} parent=11 // pred_fallthru
        _
      // Predicated region
      $region41: #{network_forward.1} parent=11 // pred_check
        %p359 = pneg %p213
      $region42: #{network_forward.1} parent=11 // pred_check_branch
        %361 = sbr.rel (%p359) target = $region44
      $region43: #{network_forward.1} parent=11 // pred_region
        _
      $region44: #{network_forward.1} parent=11 // pred_fallthru
        _
      // Predicated region
      $region45: #{network_forward.1} parent=11 // pred_check
        %p362 = pneg %p234
      $region46: #{network_forward.1} parent=11 // pred_check_branch
        %364 = sbr.rel (%p362) target = $region48
      $region47: #{network_forward.1} parent=11 // pred_region
        _
      $region48: #{network_forward.1} parent=11 // pred_fallthru
        _
      // Predicated region
      $region49: #{network_forward.1} parent=11 // pred_check
        %p365 = pneg %p255
      $region50: #{network_forward.1} parent=11 // pred_check_branch
        %367 = sbr.rel (%p365) target = $region52
      $region51: #{network_forward.1} parent=11 // pred_region
        _
      $region52: #{network_forward.1} parent=11 // pred_fallthru
        _
      // Predicated region
      $region53: #{network_forward.1} parent=11 // pred_check
        %p368 = pneg %p276
      $region54: #{network_forward.1} parent=11 // pred_check_branch
        %370 = sbr.rel (%p368) target = $region56
      $region55: #{network_forward.1} parent=11 // pred_region
        _
      $region56: #{network_forward.1} parent=11 // pred_fallthru
        _
      // Predicated region
      $region57: #{network_forward.1} parent=11 // pred_check
        %p371 = pneg %p297
      $region58: #{network_forward.1} parent=11 // pred_check_branch
        %373 = sbr.rel (%p371) target = $region60
      $region59: #{network_forward.1} parent=11 // pred_region
        _
      $region60: #{network_forward.1} parent=11 // pred_fallthru
        _
    $region12: #{network_forward.1} parent=5 // pred_fallthru
      _
    %p374 = scmp.lt.s32.totalorder %s19, 2
    // Predicated region
    $region61: #{network_forward.1} parent=5 // pred_check
      %p375 = pneg %p374
    $region62: #{network_forward.1} parent=5 // pred_check_branch
      %377 = sbr.rel (%p375) target = $region64
    $region63: #{network_forward.1} parent=5 // pred_region
      // Predicated region
      $region65: #{network_forward.1} parent=63 // pred_check
        %p378 = pneg %p39
      $region66: #{network_forward.1} parent=63 // pred_check_branch
        %380 = sbr.rel (%p378) target = $region68
      $region67: #{network_forward.1} parent=63 // pred_region
        %s381 = smul.u32 26, %s19
        %p382 = scmp.lt.s32.totalorder %s381, 51
        %s383 = scalar_select %p382, %s381, 51
        %s384 = smul.addr %s383, 52
        %s385 = smul.addr %s384, 4
        %s386 = scalar_lea.vmem %s0, %s385
        %s387 = smul.u32 26, %s19
      $region68: #{network_forward.1} parent=63 // pred_fallthru
        _
    $region64: #{network_forward.1} parent=5 // pred_fallthru
      _
    %p388 = scmp.le.s32.totalorder 1, %s19
    %p389 = scmp.lt.s32.totalorder %s19, 3
    %p390 = pnand %p388, %p389
    %p391 = pneg %p390
    // Predicated region
    $region69: #{network_forward.1} parent=5 // pred_check
      _
    $region70: #{network_forward.1} parent=5 // pred_check_branch
      %393 = sbr.rel (%p390) target = $region72
    $region71: #{network_forward.1} parent=5 // pred_region
      %s394 = ssub.s32 %s19, 1
      %s395 = smul.u32 26, %s24
      %p396 = scmp.lt.s32.totalorder %s395, 51
      %s397 = scalar_select %p396, %s395, 51
      %s398 = smul.addr %s397, 52
      %s399 = smul.addr %s398, 4
      %s400 = scalar_lea.vmem %s0, %s399
      %p401 = pneg %p45
      %p402 = pneg %p42
      %p403 = pneg %p66
      %p404 = pneg %p63
      %p405 = pneg %p87
      %p406 = pneg %p84
      %p407 = pneg %p108
      %p408 = pneg %p105
      %p409 = pneg %p129
      %p410 = pneg %p126
      %p411 = pneg %p150
      %p412 = pneg %p147
      %p413 = pneg %p171
      %p414 = pneg %p168
      %p415 = pneg %p192
      %p416 = pneg %p189
      %p417 = pneg %p213
      %p418 = pneg %p210
      %p419 = pneg %p234
      %p420 = pneg %p231
      %p421 = pneg %p255
      %p422 = pneg %p252
      %p423 = pneg %p276
      %p424 = pneg %p273
      %p425 = pneg %p297
      %p426 = pneg %p294
      %p427 = pneg %p323
      %p428 = pneg %p320
      %s429 = smul.u32 2, %s24
      %p430 = scmp.lt.s32.totalorder %s429, 3
      %s431 = scalar_select %p430, %s429, 3
      %s432 = smul.addr %s431, 8
      %s433 = scalar_lea.vmem %s13, %s432
      %s434 = smul.u32 26, %s24
      %p435 = scmp.lt.s32.totalorder %s434, 51
      %s436 = scalar_select %p435, %s434, 51
      %s437 = smul.addr %s436, 52
      %s438 = smul.addr %s437, 4
      %s439 = scalar_lea.vmem %s0, %s438
      %s440 = smul.u32 26, %s24
      %s441 = smul.u32 2, %s24
      %p442 = scmp.lt.s32.totalorder %s441, 3
      %s443 = scalar_select %p442, %s441, 3
      %s444 = smul.addr %s443, 8
      %s445 = scalar_lea.vmem %s13, %s444
      %s446 = smul.u32 2, %s24
      %v448 = vld [vmem:[%s1] sm:$0xf]
      %v449 = vld [vmem:[%s1 + $0x4] sm:$0x1]
      %v450 = vld [vmem:[%s2] sm:$0x1]
      loop: start=0, step=1, limit=13
      $region73: #{network_forward.1} parent=71 // loop_pre_header
        _
      $region74: #{network_forward.1} parent=71 // loop_header
        %s452 = sphi 0, %s456
        %p453 = scmp.ge.s32.totalorder %s452, 13
      $region75: #{network_forward.1} parent=71 // loop_header_branch
        %455 = sbr.rel (%p453) target = $region79
      $region76: #{network_forward.1} parent=71 // loop_body
        %s457 = smul.u32 %s452, 2
        %s458 = smul.u32 %s457, 52
        %s459 = smul.addr %s458, 4
        %s460 = scalar_lea.vmem %s439, %s459
        %v461 = vld [vmem:[%s460] sm:$0xf]
        %v462 = vld [vmem:[%s460 + $0x4] sm:$0xf]
        %v463 = vld [vmem:[%s460 + $0x8] sm:$0xf]
        %v464 = vld [vmem:[%s460 + $0xc] sm:$0xf]
        %v465 = vld [vmem:[%s460 + $0x10] sm:$0xf]
        %v466 = vld [vmem:[%s460 + $0x14] sm:$0xf]
        %v467 = vld [vmem:[%s460 + $0x18] sm:$0xf]
        %v468 = vld [vmem:[%s460 + $0x1c] sm:$0xf]
        %v469 = vld [vmem:[%s460 + $0x20] sm:$0xf]
        %v470 = vld [vmem:[%s460 + $0x24] sm:$0xf]
        %v471 = vld [vmem:[%s460 + $0x28] sm:$0xf]
        %v472 = vld [vmem:[%s460 + $0x2c] sm:$0xf]
        %v473 = vld [vmem:[%s460 + $0x30] sm:$0xf]
        %v474 = vld [vmem:[%s460 + $0x34] sm:$0xf]
        %v475 = vld [vmem:[%s460 + $0x38] sm:$0xf]
        %v476 = vld [vmem:[%s460 + $0x3c] sm:$0xf]
        %v477 = vld [vmem:[%s460 + $0x40] sm:$0xf]
        %v478 = vld [vmem:[%s460 + $0x44] sm:$0xf]
        %v479 = vld [vmem:[%s460 + $0x48] sm:$0xf]
        %v480 = vld [vmem:[%s460 + $0x4c] sm:$0xf]
        %v481 = vld [vmem:[%s460 + $0x50] sm:$0xf]
        %v482 = vld [vmem:[%s460 + $0x54] sm:$0xf]
        %v483 = vld [vmem:[%s460 + $0x58] sm:$0xf]
        %v484 = vld [vmem:[%s460 + $0x5c] sm:$0xf]
        %v485 = vld [vmem:[%s460 + $0x60] sm:$0xf]
        %v486 = vld [vmem:[%s460 + $0x64] sm:$0xf]
        %v487 = vld [vmem:[%s460 + $0x68] sm:$0xf]
        %v488 = vld [vmem:[%s460 + $0x6c] sm:$0xf]
        %s489 = sadd.s32 %s457, 1
        %s490 = smul.u32 %s489, 52
        %s491 = smul.addr %s490, 4
        %s492 = scalar_lea.vmem %s439, %s491
        %v493 = vld [vmem:[%s492] sm:$0xf]
        %v494 = vld [vmem:[%s492 + $0x4] sm:$0xf]
        %v495 = vld [vmem:[%s492 + $0x8] sm:$0xf]
        %v496 = vld [vmem:[%s492 + $0xc] sm:$0xf]
        %v497 = vld [vmem:[%s492 + $0x10] sm:$0xf]
        %v498 = vld [vmem:[%s492 + $0x14] sm:$0xf]
        %v499 = vld [vmem:[%s492 + $0x18] sm:$0xf]
        %v500 = vld [vmem:[%s492 + $0x1c] sm:$0xf]
        %v501 = vld [vmem:[%s492 + $0x20] sm:$0xf]
        %v502 = vld [vmem:[%s492 + $0x24] sm:$0xf]
        %v503 = vld [vmem:[%s492 + $0x28] sm:$0xf]
        %v504 = vld [vmem:[%s492 + $0x2c] sm:$0xf]
        %v505 = vld [vmem:[%s492 + $0x30] sm:$0xf]
        %v506 = vld [vmem:[%s492 + $0x34] sm:$0xf]
        %v507 = vld [vmem:[%s492 + $0x38] sm:$0xf]
        %v508 = vld [vmem:[%s492 + $0x3c] sm:$0xf]
        %v509 = vld [vmem:[%s492 + $0x40] sm:$0xf]
        %v510 = vld [vmem:[%s492 + $0x44] sm:$0xf]
        %v511 = vld [vmem:[%s492 + $0x48] sm:$0xf]
        %v512 = vld [vmem:[%s492 + $0x4c] sm:$0xf]
        %v513 = vld [vmem:[%s492 + $0x50] sm:$0xf]
        %v514 = vld [vmem:[%s492 + $0x54] sm:$0xf]
        %v515 = vld [vmem:[%s492 + $0x58] sm:$0xf]
        %v516 = vld [vmem:[%s492 + $0x5c] sm:$0xf]
        %v517 = vld [vmem:[%s492 + $0x60] sm:$0xf]
        %v518 = vld [vmem:[%s492 + $0x64] sm:$0xf]
        %v519 = vld [vmem:[%s492 + $0x68] sm:$0xf]
        %v520 = vld [vmem:[%s492 + $0x6c] sm:$0xf]
        %v549 = vunpack.c.l.b16 %v461
        %v550 = vunpack.c.l.b16 %v462
        %v551 = vunpack.c.l.b16 %v463
        %v552 = vunpack.c.l.b16 %v464
        %v553 = vunpack.c.l.b16 %v465
        %v554 = vunpack.c.l.b16 %v466
        %v555 = vunpack.c.l.b16 %v467
        %v556 = vunpack.c.l.b16 %v468
        %v557 = vunpack.c.l.b16 %v469
        %v558 = vunpack.c.l.b16 %v470
        %v559 = vunpack.c.l.b16 %v471
        %v560 = vunpack.c.l.b16 %v472
        %v561 = vunpack.c.l.b16 %v473
        %v562 = vunpack.c.l.b16 %v474
        %v563 = vunpack.c.l.b16 %v475
        %v564 = vunpack.c.l.b16 %v476
        %v565 = vunpack.c.l.b16 %v477
        %v566 = vunpack.c.l.b16 %v478
        %v567 = vunpack.c.l.b16 %v479
        %v568 = vunpack.c.l.b16 %v480
        %v569 = vunpack.c.l.b16 %v481
        %v570 = vunpack.c.l.b16 %v482
        %v571 = vunpack.c.l.b16 %v483
        %v572 = vunpack.c.l.b16 %v484
        %v573 = vunpack.c.l.b16 %v485
        %v574 = vunpack.c.l.b16 %v486
        %v575 = vunpack.c.l.b16 %v487
        %v576 = vunpack.c.l.b16 %v488
        %v577 = vpack.c.b16 %v550, %v549
        %v578 = vpack.c.b16 %v552, %v551
        %v579 = vpack.c.b16 %v554, %v553
        %v580 = vpack.c.b16 %v556, %v555
        %v581 = vpack.c.b16 %v558, %v557
        %v582 = vpack.c.b16 %v560, %v559
        %v583 = vpack.c.b16 %v562, %v561
        %v584 = vpack.c.b16 %v564, %v563
        %v585 = vpack.c.b16 %v566, %v565
        %v586 = vpack.c.b16 %v568, %v567
        %v587 = vpack.c.b16 %v570, %v569
        %v588 = vpack.c.b16 %v572, %v571
        %v589 = vpack.c.b16 %v574, %v573
        %v590 = vpack.c.b16 %v576, %v575
        %v593 = vunpack.c.l.b16 %v448
        %v594 = vunpack.c.l.b16 %v449
        %v595 = vpack.c.b16 %v594, %v593
        %vm596 = vcmask 72704
        %v598 = vsel %vm596, %v577, 0
        %v601 = vsel %vm596, %v578, 0
        %v604 = vsel %vm596, %v579, 0
        %v607 = vsel %vm596, %v580, 0
        %v610 = vsel %vm596, %v581, 0
        %v613 = vsel %vm596, %v582, 0
        %v616 = vsel %vm596, %v583, 0
        %v619 = vsel %vm596, %v584, 0
        %v622 = vsel %vm596, %v585, 0
        %v625 = vsel %vm596, %v586, 0
        %v628 = vsel %vm596, %v587, 0
        %v631 = vsel %vm596, %v588, 0
        %v634 = vsel %vm596, %v589, 0
        %v637 = vsel %vm596, %v590, 0
        %vm639 = vcmask 1043456
        %vm640 = vcmask 1044480
        %v641 = vsel %vm639, 4294967295, 65535
        %v642 = vsel %vm640, %v641, 0
        %v644 = vand.u32 %v595, %v642
        %646 = vmatprep.subr.bf16.mxu0 0
        %647 = vmatpush1.bf16.msra.mxu0 %v644
        %648 = vmatprep.subr.bf16.mxu0 0
        %649 = vmatpush1.bf16.msra.mxu0 0
        %650 = vmatprep.subr.bf16.mxu0 0
        %651 = vmatpush1.bf16.msra.mxu0 0
        %652 = vmatprep.subr.bf16.mxu0 0
        %653 = vmatpush1.bf16.msra.mxu0 0
        %654 = vmatprep.subr.bf16.mxu0 0
        %655 = vmatpush1.bf16.msra.mxu0 0
        %656 = vmatprep.subr.bf16.mxu0 0
        %657 = vmatpush1.bf16.msra.mxu0 0
        %658 = vmatprep.subr.bf16.mxu0 0
        %659 = vmatpush1.bf16.msra.mxu0 0
        %660 = vmatprep.subr.bf16.mxu0 0
        %661 = vmatpush1.bf16.msra.mxu0 0
        %662 = vmatprep.subr.bf16.mxu0 0
        %663 = vmatpush1.bf16.msra.mxu0 0
        %664 = vmatprep.subr.bf16.mxu0 0
        %665 = vmatpush1.bf16.msra.mxu0 0
        %666 = vmatprep.subr.bf16.mxu0 0
        %667 = vmatpush1.bf16.msra.mxu0 0
        %668 = vmatprep.subr.bf16.mxu0 0
        %669 = vmatpush1.bf16.msra.mxu0 0
        %670 = vmatprep.subr.bf16.mxu0 0
        %671 = vmatpush1.bf16.msra.mxu0 0
        %672 = vmatprep.subr.bf16.mxu0 0
        %673 = vmatpush1.bf16.msra.mxu0 0
        %674 = vmatprep.subr.bf16.mxu0 0
        %675 = vmatpush1.bf16.msra.mxu0 0
        %676 = vmatprep.subr.bf16.mxu0 0
        %677 = vmatpush1.bf16.msra.mxu0 0
        %678 = vmatprep.mubr.bf16.mxu0 0
        %679 = vmatmul.mubr.bf16.gmra.mrb[0].mxu0 %v598
        %v680 = vpop.f32.mrb[0].mxu0
        %v681 = vadd.f32 0.0, %v680
        %v682 = vpop.f32.mrb[0].mxu0
        %v683 = vpop.f32.mrb[0].mxu0
        %v684 = vadd.f32 0.0, %v683
        %v685 = vpop.f32.mrb[0].mxu0
        %686 = vmatprep.mubr.bf16.mxu0 0
        %687 = vmatmul.mubr.bf16.gmra.mrb[0].mxu0 %v601
        %v688 = vpop.f32.mrb[0].mxu0
        %v689 = vadd.f32 0.0, %v688
        %v690 = vpop.f32.mrb[0].mxu0
        %v691 = vpop.f32.mrb[0].mxu0
        %v692 = vadd.f32 0.0, %v691
        %v693 = vpop.f32.mrb[0].mxu0
        %694 = vmatprep.mubr.bf16.mxu0 0
        %695 = vmatmul.mubr.bf16.gmra.mrb[0].mxu0 %v604
        %v696 = vpop.f32.mrb[0].mxu0
        %v697 = vadd.f32 0.0, %v696
        %v698 = vpop.f32.mrb[0].mxu0
        %v699 = vpop.f32.mrb[0].mxu0
        %v700 = vadd.f32 0.0, %v699
        %v701 = vpop.f32.mrb[0].mxu0
        %702 = vmatprep.mubr.bf16.mxu0 0
        %703 = vmatmul.mubr.bf16.gmra.mrb[0].mxu0 %v607
        %v704 = vpop.f32.mrb[0].mxu0
        %v705 = vadd.f32 0.0, %v704
        %v706 = vpop.f32.mrb[0].mxu0
        %v707 = vpop.f32.mrb[0].mxu0
        %v708 = vadd.f32 0.0, %v707
        %v709 = vpop.f32.mrb[0].mxu0
        %710 = vmatprep.mubr.bf16.mxu0 0
        %711 = vmatmul.mubr.bf16.gmra.mrb[0].mxu0 %v610
        %v712 = vpop.f32.mrb[0].mxu0
        %v713 = vadd.f32 0.0, %v712
        %v714 = vpop.f32.mrb[0].mxu0
        %v715 = vpop.f32.mrb[0].mxu0
        %v716 = vadd.f32 0.0, %v715
        %v717 = vpop.f32.mrb[0].mxu0
        %718 = vmatprep.mubr.bf16.mxu0 0
        %719 = vmatmul.mubr.bf16.gmra.mrb[0].mxu0 %v613
        %v720 = vpop.f32.mrb[0].mxu0
        %v721 = vadd.f32 0.0, %v720
        %v722 = vpop.f32.mrb[0].mxu0
        %v723 = vpop.f32.mrb[0].mxu0
        %v724 = vadd.f32 0.0, %v723
        %v725 = vpop.f32.mrb[0].mxu0
        %726 = vmatprep.mubr.bf16.mxu0 0
        %727 = vmatmul.mubr.bf16.gmra.mrb[0].mxu0 %v616
        %v728 = vpop.f32.mrb[0].mxu0
        %v729 = vadd.f32 0.0, %v728
        %v730 = vpop.f32.mrb[0].mxu0
        %v731 = vpop.f32.mrb[0].mxu0
        %v732 = vadd.f32 0.0, %v731
        %v733 = vpop.f32.mrb[0].mxu0
        %734 = vmatprep.mubr.bf16.mxu0 0
        %735 = vmatmul.mubr.bf16.gmra.mrb[0].mxu0 %v619
        %v736 = vpop.f32.mrb[0].mxu0
        %v737 = vadd.f32 0.0, %v736
        %v738 = vpop.f32.mrb[0].mxu0
        %v739 = vpop.f32.mrb[0].mxu0
        %v740 = vadd.f32 0.0, %v739
        %v741 = vpop.f32.mrb[0].mxu0
        %742 = vmatprep.mubr.bf16.mxu0 0
        %743 = vmatmul.mubr.bf16.gmra.mrb[0].mxu0 %v622
        %v744 = vpop.f32.mrb[0].mxu0
        %v745 = vadd.f32 0.0, %v744
        %v746 = vpop.f32.mrb[0].mxu0
        %v747 = vpop.f32.mrb[0].mxu0
        %v748 = vadd.f32 0.0, %v747
        %v749 = vpop.f32.mrb[0].mxu0
        %750 = vmatprep.mubr.bf16.mxu0 0
        %751 = vmatmul.mubr.bf16.gmra.mrb[0].mxu0 %v625
        %v752 = vpop.f32.mrb[0].mxu0
        %v753 = vadd.f32 0.0, %v752
        %v754 = vpop.f32.mrb[0].mxu0
        %v755 = vpop.f32.mrb[0].mxu0
        %v756 = vadd.f32 0.0, %v755
        %v757 = vpop.f32.mrb[0].mxu0
        %758 = vmatprep.mubr.bf16.mxu0 0
        %759 = vmatmul.mubr.bf16.gmra.mrb[0].mxu0 %v628
        %v760 = vpop.f32.mrb[0].mxu0
        %v761 = vadd.f32 0.0, %v760
        %v762 = vpop.f32.mrb[0].mxu0
        %v763 = vpop.f32.mrb[0].mxu0
        %v764 = vadd.f32 0.0, %v763
        %v765 = vpop.f32.mrb[0].mxu0
        %766 = vmatprep.mubr.bf16.mxu0 0
        %767 = vmatmul.mubr.bf16.gmra.mrb[0].mxu0 %v631
        %v768 = vpop.f32.mrb[0].mxu0
        %v769 = vadd.f32 0.0, %v768
        %v770 = vpop.f32.mrb[0].mxu0
        %v771 = vpop.f32.mrb[0].mxu0
        %v772 = vadd.f32 0.0, %v771
        %v773 = vpop.f32.mrb[0].mxu0
        %774 = vmatprep.mubr.bf16.mxu0 0
        %775 = vmatmul.mubr.bf16.gmra.mrb[0].mxu0 %v634
        %v776 = vpop.f32.mrb[0].mxu0
        %v777 = vadd.f32 0.0, %v776
        %v778 = vpop.f32.mrb[0].mxu0
        %v779 = vpop.f32.mrb[0].mxu0
        %v780 = vadd.f32 0.0, %v779
        %v781 = vpop.f32.mrb[0].mxu0
        %782 = vmatprep.mubr.bf16.mxu0 0
        %783 = vmatmul.mubr.bf16.gmra.mrb[0].mxu0 %v637
        %v784 = vpop.f32.mrb[0].mxu0
        %v785 = vadd.f32 0.0, %v784
        %v786 = vpop.f32.mrb[0].mxu0
        %v787 = vpop.f32.mrb[0].mxu0
        %v788 = vadd.f32 0.0, %v787
        %v789 = vpop.f32.mrb[0].mxu0
        %790 = vdwg.mxu0
        %v819 = vunpack.c.l.b16 %v493
        %v820 = vunpack.c.l.b16 %v494
        %v821 = vunpack.c.l.b16 %v495
        %v822 = vunpack.c.l.b16 %v496
        %v823 = vunpack.c.l.b16 %v497
        %v824 = vunpack.c.l.b16 %v498
        %v825 = vunpack.c.l.b16 %v499
        %v826 = vunpack.c.l.b16 %v500
        %v827 = vunpack.c.l.b16 %v501
        %v828 = vunpack.c.l.b16 %v502
        %v829 = vunpack.c.l.b16 %v503
        %v830 = vunpack.c.l.b16 %v504
        %v831 = vunpack.c.l.b16 %v505
        %v832 = vunpack.c.l.b16 %v506
        %v833 = vunpack.c.l.b16 %v507
        %v834 = vunpack.c.l.b16 %v508
        %v835 = vunpack.c.l.b16 %v509
        %v836 = vunpack.c.l.b16 %v510
        %v837 = vunpack.c.l.b16 %v511
        %v838 = vunpack.c.l.b16 %v512
        %v839 = vunpack.c.l.b16 %v513
        %v840 = vunpack.c.l.b16 %v514
        %v841 = vunpack.c.l.b16 %v515
        %v842 = vunpack.c.l.b16 %v516
        %v843 = vunpack.c.l.b16 %v517
        %v844 = vunpack.c.l.b16 %v518
        %v845 = vunpack.c.l.b16 %v519
        %v846 = vunpack.c.l.b16 %v520
        %v847 = vpack.c.b16 %v820, %v819
        %v848 = vpack.c.b16 %v822, %v821
        %v849 = vpack.c.b16 %v824, %v823
        %v850 = vpack.c.b16 %v826, %v825
        %v851 = vpack.c.b16 %v828, %v827
        %v852 = vpack.c.b16 %v830, %v829
        %v853 = vpack.c.b16 %v832, %v831
        %v854 = vpack.c.b16 %v834, %v833
        %v855 = vpack.c.b16 %v836, %v835
        %v856 = vpack.c.b16 %v838, %v837
        %v857 = vpack.c.b16 %v840, %v839
        %v858 = vpack.c.b16 %v842, %v841
        %v859 = vpack.c.b16 %v844, %v843
        %v860 = vpack.c.b16 %v846, %v845
        %v862 = vsel %vm596, %v847, 0
        %v865 = vsel %vm596, %v848, 0
        %v868 = vsel %vm596, %v849, 0
        %v871 = vsel %vm596, %v850, 0
        %v874 = vsel %vm596, %v851, 0
        %v877 = vsel %vm596, %v852, 0
        %v880 = vsel %vm596, %v853, 0
        %v883 = vsel %vm596, %v854, 0
        %v886 = vsel %vm596, %v855, 0
        %v889 = vsel %vm596, %v856, 0
        %v892 = vsel %vm596, %v857, 0
        %v895 = vsel %vm596, %v858, 0
        %v898 = vsel %vm596, %v859, 0
        %v901 = vsel %vm596, %v860, 0
        %903 = vmatprep.subr.bf16.mxu0 0
        %904 = vmatpush1.bf16.msra.mxu0 %v644
        %905 = vmatprep.subr.bf16.mxu0 0
        %906 = vmatpush1.bf16.msra.mxu0 0
        %907 = vmatprep.subr.bf16.mxu0 0
        %908 = vmatpush1.bf16.msra.mxu0 0
        %909 = vmatprep.subr.bf16.mxu0 0
        %910 = vmatpush1.bf16.msra.mxu0 0
        %911 = vmatprep.subr.bf16.mxu0 0
        %912 = vmatpush1.bf16.msra.mxu0 0
        %913 = vmatprep.subr.bf16.mxu0 0
        %914 = vmatpush1.bf16.msra.mxu0 0
        %915 = vmatprep.subr.bf16.mxu0 0
        %916 = vmatpush1.bf16.msra.mxu0 0
        %917 = vmatprep.subr.bf16.mxu0 0
        %918 = vmatpush1.bf16.msra.mxu0 0
        %919 = vmatprep.subr.bf16.mxu0 0
        %920 = vmatpush1.bf16.msra.mxu0 0
        %921 = vmatprep.subr.bf16.mxu0 0
        %922 = vmatpush1.bf16.msra.mxu0 0
        %923 = vmatprep.subr.bf16.mxu0 0
        %924 = vmatpush1.bf16.msra.mxu0 0
        %925 = vmatprep.subr.bf16.mxu0 0
        %926 = vmatpush1.bf16.msra.mxu0 0
        %927 = vmatprep.subr.bf16.mxu0 0
        %928 = vmatpush1.bf16.msra.mxu0 0
        %929 = vmatprep.subr.bf16.mxu0 0
        %930 = vmatpush1.bf16.msra.mxu0 0
        %931 = vmatprep.subr.bf16.mxu0 0
        %932 = vmatpush1.bf16.msra.mxu0 0
        %933 = vmatprep.subr.bf16.mxu0 0
        %934 = vmatpush1.bf16.msra.mxu0 0
        %935 = vmatprep.mubr.bf16.mxu0 0
        %936 = vmatmul.mubr.bf16.gmra.mrb[0].mxu0 %v862
        %v937 = vpop.f32.mrb[0].mxu0
        %v938 = vadd.f32 0.0, %v937
        %v939 = vpop.f32.mrb[0].mxu0
        %v940 = vpop.f32.mrb[0].mxu0
        %v941 = vadd.f32 0.0, %v940
        %v942 = vpop.f32.mrb[0].mxu0
        %943 = vmatprep.mubr.bf16.mxu0 0
        %944 = vmatmul.mubr.bf16.gmra.mrb[0].mxu0 %v865
        %v945 = vpop.f32.mrb[0].mxu0
        %v946 = vadd.f32 0.0, %v945
        %v947 = vpop.f32.mrb[0].mxu0
        %v948 = vpop.f32.mrb[0].mxu0
        %v949 = vadd.f32 0.0, %v948
        %v950 = vpop.f32.mrb[0].mxu0
        %951 = vmatprep.mubr.bf16.mxu0 0
        %952 = vmatmul.mubr.bf16.gmra.mrb[0].mxu0 %v868
        %v953 = vpop.f32.mrb[0].mxu0
        %v954 = vadd.f32 0.0, %v953
        %v955 = vpop.f32.mrb[0].mxu0
        %v956 = vpop.f32.mrb[0].mxu0
        %v957 = vadd.f32 0.0, %v956
        %v958 = vpop.f32.mrb[0].mxu0
        %959 = vmatprep.mubr.bf16.mxu0 0
        %960 = vmatmul.mubr.bf16.gmra.mrb[0].mxu0 %v871
        %v961 = vpop.f32.mrb[0].mxu0
        %v962 = vadd.f32 0.0, %v961
        %v963 = vpop.f32.mrb[0].mxu0
        %v964 = vpop.f32.mrb[0].mxu0
        %v965 = vadd.f32 0.0, %v964
        %v966 = vpop.f32.mrb[0].mxu0
        %967 = vmatprep.mubr.bf16.mxu0 0
        %968 = vmatmul.mubr.bf16.gmra.mrb[0].mxu0 %v874
        %v969 = vpop.f32.mrb[0].mxu0
        %v970 = vadd.f32 0.0, %v969
        %v971 = vpop.f32.mrb[0].mxu0
        %v972 = vpop.f32.mrb[0].mxu0
        %v973 = vadd.f32 0.0, %v972
        %v974 = vpop.f32.mrb[0].mxu0
        %975 = vmatprep.mubr.bf16.mxu0 0
        %976 = vmatmul.mubr.bf16.gmra.mrb[0].mxu0 %v877
        %v977 = vpop.f32.mrb[0].mxu0
        %v978 = vadd.f32 0.0, %v977
        %v979 = vpop.f32.mrb[0].mxu0
        %v980 = vpop.f32.mrb[0].mxu0
        %v981 = vadd.f32 0.0, %v980
        %v982 = vpop.f32.mrb[0].mxu0
        %983 = vmatprep.mubr.bf16.mxu0 0
        %984 = vmatmul.mubr.bf16.gmra.mrb[0].mxu0 %v880
        %v985 = vpop.f32.mrb[0].mxu0
        %v986 = vadd.f32 0.0, %v985
        %v987 = vpop.f32.mrb[0].mxu0
        %v988 = vpop.f32.mrb[0].mxu0
        %v989 = vadd.f32 0.0, %v988
        %v990 = vpop.f32.mrb[0].mxu0
        %991 = vmatprep.mubr.bf16.mxu0 0
        %992 = vmatmul.mubr.bf16.gmra.mrb[0].mxu0 %v883
        %v993 = vpop.f32.mrb[0].mxu0
        %v994 = vadd.f32 0.0, %v993
        %v995 = vpop.f32.mrb[0].mxu0
        %v996 = vpop.f32.mrb[0].mxu0
        %v997 = vadd.f32 0.0, %v996
        %v998 = vpop.f32.mrb[0].mxu0
        %999 = vmatprep.mubr.bf16.mxu0 0
        %1000 = vmatmul.mubr.bf16.gmra.mrb[0].mxu0 %v886
        %v1001 = vpop.f32.mrb[0].mxu0
        %v1002 = vadd.f32 0.0, %v1001
        %v1003 = vpop.f32.mrb[0].mxu0
        %v1004 = vpop.f32.mrb[0].mxu0
        %v1005 = vadd.f32 0.0, %v1004
        %v1006 = vpop.f32.mrb[0].mxu0
        %1007 = vmatprep.mubr.bf16.mxu0 0
        %1008 = vmatmul.mubr.bf16.gmra.mrb[0].mxu0 %v889
        %v1009 = vpop.f32.mrb[0].mxu0
        %v1010 = vadd.f32 0.0, %v1009
        %v1011 = vpop.f32.mrb[0].mxu0
        %v1012 = vpop.f32.mrb[0].mxu0
        %v1013 = vadd.f32 0.0, %v1012
        %v1014 = vpop.f32.mrb[0].mxu0
        %1015 = vmatprep.mubr.bf16.mxu0 0
        %1016 = vmatmul.mubr.bf16.gmra.mrb[0].mxu0 %v892
        %v1017 = vpop.f32.mrb[0].mxu0
        %v1018 = vadd.f32 0.0, %v1017
        %v1019 = vpop.f32.mrb[0].mxu0
        %v1020 = vpop.f32.mrb[0].mxu0
        %v1021 = vadd.f32 0.0, %v1020
        %v1022 = vpop.f32.mrb[0].mxu0
        %1023 = vmatprep.mubr.bf16.mxu0 0
        %1024 = vmatmul.mubr.bf16.gmra.mrb[0].mxu0 %v895
        %v1025 = vpop.f32.mrb[0].mxu0
        %v1026 = vadd.f32 0.0, %v1025
        %v1027 = vpop.f32.mrb[0].mxu0
        %v1028 = vpop.f32.mrb[0].mxu0
        %v1029 = vadd.f32 0.0, %v1028
        %v1030 = vpop.f32.mrb[0].mxu0
        %1031 = vmatprep.mubr.bf16.mxu0 0
        %1032 = vmatmul.mubr.bf16.gmra.mrb[0].mxu0 %v898
        %v1033 = vpop.f32.mrb[0].mxu0
        %v1034 = vadd.f32 0.0, %v1033
        %v1035 = vpop.f32.mrb[0].mxu0
        %v1036 = vpop.f32.mrb[0].mxu0
        %v1037 = vadd.f32 0.0, %v1036
        %v1038 = vpop.f32.mrb[0].mxu0
        %1039 = vmatprep.mubr.bf16.mxu0 0
        %1040 = vmatmul.mubr.bf16.gmra.mrb[0].mxu0 %v901
        %v1041 = vpop.f32.mrb[0].mxu0
        %v1042 = vadd.f32 0.0, %v1041
        %v1043 = vpop.f32.mrb[0].mxu0
        %v1044 = vpop.f32.mrb[0].mxu0
        %v1045 = vadd.f32 0.0, %v1044
        %v1046 = vpop.f32.mrb[0].mxu0
        %1047 = vdwg.mxu0
        %v1048 = vmax.f32 %v681, %v938
        %v1049 = vmax.f32 %v684, %v941
        %v1050 = vmax.f32 %v689, %v946
        %v1051 = vmax.f32 %v692, %v949
        %v1052 = vmax.f32 %v697, %v954
        %v1053 = vmax.f32 %v700, %v957
        %v1054 = vmax.f32 %v705, %v962
        %v1055 = vmax.f32 %v708, %v965
        %v1056 = vmax.f32 %v713, %v970
        %v1057 = vmax.f32 %v716, %v973
        %v1058 = vmax.f32 %v721, %v978
        %v1059 = vmax.f32 %v724, %v981
        %v1060 = vmax.f32 %v729, %v986
        %v1061 = vmax.f32 %v732, %v989
        %v1062 = vmax.f32 %v737, %v994
        %v1063 = vmax.f32 %v740, %v997
        %v1064 = vmax.f32 %v745, %v1002
        %v1065 = vmax.f32 %v748, %v1005
        %v1066 = vmax.f32 %v753, %v1010
        %v1067 = vmax.f32 %v756, %v1013
        %v1068 = vmax.f32 %v761, %v1018
        %v1069 = vmax.f32 %v764, %v1021
        %v1070 = vmax.f32 %v769, %v1026
        %v1071 = vmax.f32 %v772, %v1029
        %v1072 = vmax.f32 %v777, %v1034
        %v1073 = vmax.f32 %v780, %v1037
        %v1074 = vmax.f32 %v785, %v1042
        %v1075 = vmax.f32 %v788, %v1045
        %v1076 = vmax.f32 %v1048, %v1050
        %v1077 = vmax.f32 %v1049, %v1051
        %v1079 = vlaneseq
        %v1080 = vshrl.u32 %v1079, 7
        %v1081 = vsub.s32 0, %v1080
        %v1082 = vrot.slane %v450, %v1081
        %v1084 = vadd.f32 %v1076, %v1082
        %v1085 = vadd.f32 %v1077, %v1082
        %v1086 = vmax.f32 %v1084, 0.0
        %v1087 = vmax.f32 %v1085, 0.0
        %v1088 = vpack.c.bf16 %v1087, %v1086
        %s1089 = smul.u32 %s452, 13
        %s1090 = smul.addr %s1089, 8
        %s1091 = scalar_lea.vmem [#allocation2], %s1090
        %vm1092 = vcmask 195584
        %1093 = vst.msk [vmem:[%s1091] sm:$0xff] %vm1092, %v1088
        %v1094 = vmax.f32 %v1052, %v1054
        %v1095 = vmax.f32 %v1053, %v1055
        %v1096 = vadd.f32 %v1094, %v1082
        %v1097 = vadd.f32 %v1095, %v1082
        %v1098 = vmax.f32 %v1096, 0.0
        %v1099 = vmax.f32 %v1097, 0.0
        %v1100 = vpack.c.bf16 %v1099, %v1098
        %1101 = vst.msk [vmem:[%s1091 + $0x8] sm:$0xff] %vm1092, %v1100
        %v1102 = vmax.f32 %v1056, %v1058
        %v1103 = vmax.f32 %v1057, %v1059
        %v1104 = vadd.f32 %v1102, %v1082
        %v1105 = vadd.f32 %v1103, %v1082
        %v1106 = vmax.f32 %v1104, 0.0
        %v1107 = vmax.f32 %v1105, 0.0
        %v1108 = vpack.c.bf16 %v1107, %v1106
        %1109 = vst.msk [vmem:[%s1091 + $0x10] sm:$0xff] %vm1092, %v1108
        %v1110 = vmax.f32 %v1060, %v1062
        %v1111 = vmax.f32 %v1061, %v1063
        %v1112 = vadd.f32 %v1110, %v1082
        %v1113 = vadd.f32 %v1111, %v1082
        %v1114 = vmax.f32 %v1112, 0.0
        %v1115 = vmax.f32 %v1113, 0.0
        %v1116 = vpack.c.bf16 %v1115, %v1114
        %1117 = vst.msk [vmem:[%s1091 + $0x18] sm:$0xff] %vm1092, %v1116
        %v1118 = vmax.f32 %v1064, %v1066
        %v1119 = vmax.f32 %v1065, %v1067
        %v1120 = vadd.f32 %v1118, %v1082
        %v1121 = vadd.f32 %v1119, %v1082
        %v1122 = vmax.f32 %v1120, 0.0
        %v1123 = vmax.f32 %v1121, 0.0
        %v1124 = vpack.c.bf16 %v1123, %v1122
        %1125 = vst.msk [vmem:[%s1091 + $0x20] sm:$0xff] %vm1092, %v1124
        %v1126 = vmax.f32 %v1068, %v1070
        %v1127 = vmax.f32 %v1069, %v1071
        %v1128 = vadd.f32 %v1126, %v1082
        %v1129 = vadd.f32 %v1127, %v1082
        %v1130 = vmax.f32 %v1128, 0.0
        %v1131 = vmax.f32 %v1129, 0.0
        %v1132 = vpack.c.bf16 %v1131, %v1130
        %1133 = vst.msk [vmem:[%s1091 + $0x28] sm:$0xff] %vm1092, %v1132
        %v1134 = vmax.f32 %v1072, %v1074
        %v1135 = vmax.f32 %v1073, %v1075
        %v1136 = vadd.f32 %v1134, %v1082
        %v1137 = vadd.f32 %v1135, %v1082
        %v1138 = vmax.f32 %v1136, 0.0
        %v1139 = vmax.f32 %v1137, 0.0
        %v1140 = vpack.c.bf16 %v1139, %v1138
        %1141 = vst.msk [vmem:[%s1091 + $0x30] sm:$0xff] %vm1092, %v1140
        %v1142 = vld [vmem:[%s460 + $0x70] sm:$0xf]
        %v1143 = vld [vmem:[%s460 + $0x74] sm:$0xf]
        %v1144 = vld [vmem:[%s460 + $0x78] sm:$0xf]
        %v1145 = vld [vmem:[%s460 + $0x7c] sm:$0xf]
        %v1146 = vld [vmem:[%s460 + $0x80] sm:$0xf]
        %v1147 = vld [vmem:[%s460 + $0x84] sm:$0xf]
        %v1148 = vld [vmem:[%s460 + $0x88] sm:$0xf]
        %v1149 = vld [vmem:[%s460 + $0x8c] sm:$0xf]
        %v1150 = vld [vmem:[%s460 + $0x90] sm:$0xf]
        %v1151 = vld [vmem:[%s460 + $0x94] sm:$0xf]
        %v1152 = vld [vmem:[%s460 + $0x98] sm:$0xf]
        %v1153 = vld [vmem:[%s460 + $0x9c] sm:$0xf]
        %v1154 = vld [vmem:[%s460 + $0xa0] sm:$0xf]
        %v1155 = vld [vmem:[%s460 + $0xa4] sm:$0xf]
        %v1156 = vld [vmem:[%s460 + $0xa8] sm:$0xf]
        %v1157 = vld [vmem:[%s460 + $0xac] sm:$0xf]
        %v1158 = vld [vmem:[%s460 + $0xb0] sm:$0xf]
        %v1159 = vld [vmem:[%s460 + $0xb4] sm:$0xf]
        %v1160 = vld [vmem:[%s460 + $0xb8] sm:$0xf]
        %v1161 = vld [vmem:[%s460 + $0xbc] sm:$0xf]
        %v1162 = vld [vmem:[%s460 + $0xc0] sm:$0xf]
        %v1163 = vld [vmem:[%s460 + $0xc4] sm:$0xf]
        %v1164 = vld [vmem:[%s460 + $0xc8] sm:$0xf]
        %v1165 = vld [vmem:[%s460 + $0xcc] sm:$0xf]
        %v1166 = vld [vmem:[%s492 + $0x70] sm:$0xf]
        %v1167 = vld [vmem:[%s492 + $0x74] sm:$0xf]
        %v1168 = vld [vmem:[%s492 + $0x78] sm:$0xf]
        %v1169 = vld [vmem:[%s492 + $0x7c] sm:$0xf]
        %v1170 = vld [vmem:[%s492 + $0x80] sm:$0xf]
        %v1171 = vld [vmem:[%s492 + $0x84] sm:$0xf]
        %v1172 = vld [vmem:[%s492 + $0x88] sm:$0xf]
        %v1173 = vld [vmem:[%s492 + $0x8c] sm:$0xf]
        %v1174 = vld [vmem:[%s492 + $0x90] sm:$0xf]
        %v1175 = vld [vmem:[%s492 + $0x94] sm:$0xf]
        %v1176 = vld [vmem:[%s492 + $0x98] sm:$0xf]
        %v1177 = vld [vmem:[%s492 + $0x9c] sm:$0xf]
        %v1178 = vld [vmem:[%s492 + $0xa0] sm:$0xf]
        %v1179 = vld [vmem:[%s492 + $0xa4] sm:$0xf]
        %v1180 = vld [vmem:[%s492 + $0xa8] sm:$0xf]
        %v1181 = vld [vmem:[%s492 + $0xac] sm:$0xf]
        %v1182 = vld [vmem:[%s492 + $0xb0] sm:$0xf]
        %v1183 = vld [vmem:[%s492 + $0xb4] sm:$0xf]
        %v1184 = vld [vmem:[%s492 + $0xb8] sm:$0xf]
        %v1185 = vld [vmem:[%s492 + $0xbc] sm:$0xf]
        %v1186 = vld [vmem:[%s492 + $0xc0] sm:$0xf]
        %v1187 = vld [vmem:[%s492 + $0xc4] sm:$0xf]
        %v1188 = vld [vmem:[%s492 + $0xc8] sm:$0xf]
        %v1189 = vld [vmem:[%s492 + $0xcc] sm:$0xf]
        %v1214 = vunpack.c.l.b16 %v1142
        %v1215 = vunpack.c.l.b16 %v1143
        %v1216 = vunpack.c.l.b16 %v1144
        %v1217 = vunpack.c.l.b16 %v1145
        %v1218 = vunpack.c.l.b16 %v1146
        %v1219 = vunpack.c.l.b16 %v1147
        %v1220 = vunpack.c.l.b16 %v1148
        %v1221 = vunpack.c.l.b16 %v1149
        %v1222 = vunpack.c.l.b16 %v1150
        %v1223 = vunpack.c.l.b16 %v1151
        %v1224 = vunpack.c.l.b16 %v1152
        %v1225 = vunpack.c.l.b16 %v1153
        %v1226 = vunpack.c.l.b16 %v1154
        %v1227 = vunpack.c.l.b16 %v1155
        %v1228 = vunpack.c.l.b16 %v1156
        %v1229 = vunpack.c.l.b16 %v1157
        %v1230 = vunpack.c.l.b16 %v1158
        %v1231 = vunpack.c.l.b16 %v1159
        %v1232 = vunpack.c.l.b16 %v1160
        %v1233 = vunpack.c.l.b16 %v1161
        %v1234 = vunpack.c.l.b16 %v1162
        %v1235 = vunpack.c.l.b16 %v1163
        %v1236 = vunpack.c.l.b16 %v1164
        %v1237 = vunpack.c.l.b16 %v1165
        %v1238 = vpack.c.b16 %v1215, %v1214
        %v1239 = vpack.c.b16 %v1217, %v1216
        %v1240 = vpack.c.b16 %v1219, %v1218
        %v1241 = vpack.c.b16 %v1221, %v1220
        %v1242 = vpack.c.b16 %v1223, %v1222
        %v1243 = vpack.c.b16 %v1225, %v1224
        %v1244 = vpack.c.b16 %v1227, %v1226
        %v1245 = vpack.c.b16 %v1229, %v1228
        %v1246 = vpack.c.b16 %v1231, %v1230
        %v1247 = vpack.c.b16 %v1233, %v1232
        %v1248 = vpack.c.b16 %v1235, %v1234
        %v1249 = vpack.c.b16 %v1237, %v1236
        %v1251 = vsel %vm596, %v1238, 0
        %v1254 = vsel %vm596, %v1239, 0
        %v1257 = vsel %vm596, %v1240, 0
        %v1260 = vsel %vm596, %v1241, 0
        %v1263 = vsel %vm596, %v1242, 0
        %v1266 = vsel %vm596, %v1243, 0
        %v1269 = vsel %vm596, %v1244, 0
        %v1272 = vsel %vm596, %v1245, 0
        %v1275 = vsel %vm596, %v1246, 0
        %v1278 = vsel %vm596, %v1247, 0
        %v1281 = vsel %vm596, %v1248, 0
        %v1284 = vsel %vm596, %v1249, 0
        %1286 = vmatprep.subr.bf16.mxu0 0
        %1287 = vmatpush1.bf16.msra.mxu0 %v644
        %1288 = vmatprep.subr.bf16.mxu0 0
        %1289 = vmatpush1.bf16.msra.mxu0 0
        %1290 = vmatprep.subr.bf16.mxu0 0
        %1291 = vmatpush1.bf16.msra.mxu0 0
        %1292 = vmatprep.subr.bf16.mxu0 0
        %1293 = vmatpush1.bf16.msra.mxu0 0
        %1294 = vmatprep.subr.bf16.mxu0 0
        %1295 = vmatpush1.bf16.msra.mxu0 0
        %1296 = vmatprep.subr.bf16.mxu0 0
        %1297 = vmatpush1.bf16.msra.mxu0 0
        %1298 = vmatprep.subr.bf16.mxu0 0
        %1299 = vmatpush1.bf16.msra.mxu0 0
        %1300 = vmatprep.subr.bf16.mxu0 0
        %1301 = vmatpush1.bf16.msra.mxu0 0
        %1302 = vmatprep.subr.bf16.mxu0 0
        %1303 = vmatpush1.bf16.msra.mxu0 0
        %1304 = vmatprep.subr.bf16.mxu0 0
        %1305 = vmatpush1.bf16.msra.mxu0 0
        %1306 = vmatprep.subr.bf16.mxu0 0
        %1307 = vmatpush1.bf16.msra.mxu0 0
        %1308 = vmatprep.subr.bf16.mxu0 0
        %1309 = vmatpush1.bf16.msra.mxu0 0
        %1310 = vmatprep.subr.bf16.mxu0 0
        %1311 = vmatpush1.bf16.msra.mxu0 0
        %1312 = vmatprep.subr.bf16.mxu0 0
        %1313 = vmatpush1.bf16.msra.mxu0 0
        %1314 = vmatprep.subr.bf16.mxu0 0
        %1315 = vmatpush1.bf16.msra.mxu0 0
        %1316 = vmatprep.subr.bf16.mxu0 0
        %1317 = vmatpush1.bf16.msra.mxu0 0
        %1318 = vmatprep.mubr.bf16.mxu0 0
        %1319 = vmatmul.mubr.bf16.gmra.mrb[0].mxu0 %v1251
        %v1320 = vpop.f32.mrb[0].mxu0
        %v1321 = vadd.f32 0.0, %v1320
        %v1322 = vpop.f32.mrb[0].mxu0
        %v1323 = vpop.f32.mrb[0].mxu0
        %v1324 = vadd.f32 0.0, %v1323
        %v1325 = vpop.f32.mrb[0].mxu0
        %1326 = vmatprep.mubr.bf16.mxu0 0
        %1327 = vmatmul.mubr.bf16.gmra.mrb[0].mxu0 %v1254
        %v1328 = vpop.f32.mrb[0].mxu0
        %v1329 = vadd.f32 0.0, %v1328
        %v1330 = vpop.f32.mrb[0].mxu0
        %v1331 = vpop.f32.mrb[0].mxu0
        %v1332 = vadd.f32 0.0, %v1331
        %v1333 = vpop.f32.mrb[0].mxu0
        %1334 = vmatprep.mubr.bf16.mxu0 0
        %1335 = vmatmul.mubr.bf16.gmra.mrb[0].mxu0 %v1257
        %v1336 = vpop.f32.mrb[0].mxu0
        %v1337 = vadd.f32 0.0, %v1336
        %v1338 = vpop.f32.mrb[0].mxu0
        %v1339 = vpop.f32.mrb[0].mxu0
        %v1340 = vadd.f32 0.0, %v1339
        %v1341 = vpop.f32.mrb[0].mxu0
        %1342 = vmatprep.mubr.bf16.mxu0 0
        %1343 = vmatmul.mubr.bf16.gmra.mrb[0].mxu0 %v1260
        %v1344 = vpop.f32.mrb[0].mxu0
        %v1345 = vadd.f32 0.0, %v1344
        %v1346 = vpop.f32.mrb[0].mxu0
        %v1347 = vpop.f32.mrb[0].mxu0
        %v1348 = vadd.f32 0.0, %v1347
        %v1349 = vpop.f32.mrb[0].mxu0
        %1350 = vmatprep.mubr.bf16.mxu0 0
        %1351 = vmatmul.mubr.bf16.gmra.mrb[0].mxu0 %v1263
        %v1352 = vpop.f32.mrb[0].mxu0
        %v1353 = vadd.f32 0.0, %v1352
        %v1354 = vpop.f32.mrb[0].mxu0
        %v1355 = vpop.f32.mrb[0].mxu0
        %v1356 = vadd.f32 0.0, %v1355
        %v1357 = vpop.f32.mrb[0].mxu0
        %1358 = vmatprep.mubr.bf16.mxu0 0
        %1359 = vmatmul.mubr.bf16.gmra.mrb[0].mxu0 %v1266
        %v1360 = vpop.f32.mrb[0].mxu0
        %v1361 = vadd.f32 0.0, %v1360
        %v1362 = vpop.f32.mrb[0].mxu0
        %v1363 = vpop.f32.mrb[0].mxu0
        %v1364 = vadd.f32 0.0, %v1363
        %v1365 = vpop.f32.mrb[0].mxu0
        %1366 = vmatprep.mubr.bf16.mxu0 0
        %1367 = vmatmul.mubr.bf16.gmra.mrb[0].mxu0 %v1269
        %v1368 = vpop.f32.mrb[0].mxu0
        %v1369 = vadd.f32 0.0, %v1368
        %v1370 = vpop.f32.mrb[0].mxu0
        %v1371 = vpop.f32.mrb[0].mxu0
        %v1372 = vadd.f32 0.0, %v1371
        %v1373 = vpop.f32.mrb[0].mxu0
        %1374 = vmatprep.mubr.bf16.mxu0 0
        %1375 = vmatmul.mubr.bf16.gmra.mrb[0].mxu0 %v1272
        %v1376 = vpop.f32.mrb[0].mxu0
        %v1377 = vadd.f32 0.0, %v1376
        %v1378 = vpop.f32.mrb[0].mxu0
        %v1379 = vpop.f32.mrb[0].mxu0
        %v1380 = vadd.f32 0.0, %v1379
        %v1381 = vpop.f32.mrb[0].mxu0
        %1382 = vmatprep.mubr.bf16.mxu0 0
        %1383 = vmatmul.mubr.bf16.gmra.mrb[0].mxu0 %v1275
        %v1384 = vpop.f32.mrb[0].mxu0
        %v1385 = vadd.f32 0.0, %v1384
        %v1386 = vpop.f32.mrb[0].mxu0
        %v1387 = vpop.f32.mrb[0].mxu0
        %v1388 = vadd.f32 0.0, %v1387
        %v1389 = vpop.f32.mrb[0].mxu0
        %1390 = vmatprep.mubr.bf16.mxu0 0
        %1391 = vmatmul.mubr.bf16.gmra.mrb[0].mxu0 %v1278
        %v1392 = vpop.f32.mrb[0].mxu0
        %v1393 = vadd.f32 0.0, %v1392
        %v1394 = vpop.f32.mrb[0].mxu0
        %v1395 = vpop.f32.mrb[0].mxu0
        %v1396 = vadd.f32 0.0, %v1395
        %v1397 = vpop.f32.mrb[0].mxu0
        %1398 = vmatprep.mubr.bf16.mxu0 0
        %1399 = vmatmul.mubr.bf16.gmra.mrb[0].mxu0 %v1281
        %v1400 = vpop.f32.mrb[0].mxu0
        %v1401 = vadd.f32 0.0, %v1400
        %v1402 = vpop.f32.mrb[0].mxu0
        %v1403 = vpop.f32.mrb[0].mxu0
        %v1404 = vadd.f32 0.0, %v1403
        %v1405 = vpop.f32.mrb[0].mxu0
        %1406 = vmatprep.mubr.bf16.mxu0 0
        %1407 = vmatmul.mubr.bf16.gmra.mrb[0].mxu0 %v1284
        %v1408 = vpop.f32.mrb[0].mxu0
        %v1409 = vadd.f32 0.0, %v1408
        %v1410 = vpop.f32.mrb[0].mxu0
        %v1411 = vpop.f32.mrb[0].mxu0
        %v1412 = vadd.f32 0.0, %v1411
        %v1413 = vpop.f32.mrb[0].mxu0
        %1414 = vdwg.mxu0
        %v1439 = vunpack.c.l.b16 %v1166
        %v1440 = vunpack.c.l.b16 %v1167
        %v1441 = vunpack.c.l.b16 %v1168
        %v1442 = vunpack.c.l.b16 %v1169
        %v1443 = vunpack.c.l.b16 %v1170
        %v1444 = vunpack.c.l.b16 %v1171
        %v1445 = vunpack.c.l.b16 %v1172
        %v1446 = vunpack.c.l.b16 %v1173
        %v1447 = vunpack.c.l.b16 %v1174
        %v1448 = vunpack.c.l.b16 %v1175
        %v1449 = vunpack.c.l.b16 %v1176
        %v1450 = vunpack.c.l.b16 %v1177
        %v1451 = vunpack.c.l.b16 %v1178
        %v1452 = vunpack.c.l.b16 %v1179
        %v1453 = vunpack.c.l.b16 %v1180
        %v1454 = vunpack.c.l.b16 %v1181
        %v1455 = vunpack.c.l.b16 %v1182
        %v1456 = vunpack.c.l.b16 %v1183
        %v1457 = vunpack.c.l.b16 %v1184
        %v1458 = vunpack.c.l.b16 %v1185
        %v1459 = vunpack.c.l.b16 %v1186
        %v1460 = vunpack.c.l.b16 %v1187
        %v1461 = vunpack.c.l.b16 %v1188
        %v1462 = vunpack.c.l.b16 %v1189
        %v1463 = vpack.c.b16 %v1440, %v1439
        %v1464 = vpack.c.b16 %v1442, %v1441
        %v1465 = vpack.c.b16 %v1444, %v1443
        %v1466 = vpack.c.b16 %v1446, %v1445
        %v1467 = vpack.c.b16 %v1448, %v1447
        %v1468 = vpack.c.b16 %v1450, %v1449
        %v1469 = vpack.c.b16 %v1452, %v1451
        %v1470 = vpack.c.b16 %v1454, %v1453
        %v1471 = vpack.c.b16 %v1456, %v1455
        %v1472 = vpack.c.b16 %v1458, %v1457
        %v1473 = vpack.c.b16 %v1460, %v1459
        %v1474 = vpack.c.b16 %v1462, %v1461
        %v1476 = vsel %vm596, %v1463, 0
        %v1479 = vsel %vm596, %v1464, 0
        %v1482 = vsel %vm596, %v1465, 0
        %v1485 = vsel %vm596, %v1466, 0
        %v1488 = vsel %vm596, %v1467, 0
        %v1491 = vsel %vm596, %v1468, 0
        %v1494 = vsel %vm596, %v1469, 0
        %v1497 = vsel %vm596, %v1470, 0
        %v1500 = vsel %vm596, %v1471, 0
        %v1503 = vsel %vm596, %v1472, 0
        %v1506 = vsel %vm596, %v1473, 0
        %v1509 = vsel %vm596, %v1474, 0
        %1511 = vmatprep.subr.bf16.mxu0 0
        %1512 = vmatpush1.bf16.msra.mxu0 %v644
        %1513 = vmatprep.subr.bf16.mxu0 0
        %1514 = vmatpush1.bf16.msra.mxu0 0
        %1515 = vmatprep.subr.bf16.mxu0 0
        %1516 = vmatpush1.bf16.msra.mxu0 0
        %1517 = vmatprep.subr.bf16.mxu0 0
        %1518 = vmatpush1.bf16.msra.mxu0 0
        %1519 = vmatprep.subr.bf16.mxu0 0
        %1520 = vmatpush1.bf16.msra.mxu0 0
        %1521 = vmatprep.subr.bf16.mxu0 0
        %1522 = vmatpush1.bf16.msra.mxu0 0
        %1523 = vmatprep.subr.bf16.mxu0 0
        %1524 = vmatpush1.bf16.msra.mxu0 0
        %1525 = vmatprep.subr.bf16.mxu0 0
        %1526 = vmatpush1.bf16.msra.mxu0 0
        %1527 = vmatprep.subr.bf16.mxu0 0
        %1528 = vmatpush1.bf16.msra.mxu0 0
        %1529 = vmatprep.subr.bf16.mxu0 0
        %1530 = vmatpush1.bf16.msra.mxu0 0
        %1531 = vmatprep.subr.bf16.mxu0 0
        %1532 = vmatpush1.bf16.msra.mxu0 0
        %1533 = vmatprep.subr.bf16.mxu0 0
        %1534 = vmatpush1.bf16.msra.mxu0 0
        %1535 = vmatprep.subr.bf16.mxu0 0
        %1536 = vmatpush1.bf16.msra.mxu0 0
        %1537 = vmatprep.subr.bf16.mxu0 0
        %1538 = vmatpush1.bf16.msra.mxu0 0
        %1539 = vmatprep.subr.bf16.mxu0 0
        %1540 = vmatpush1.bf16.msra.mxu0 0
        %1541 = vmatprep.subr.bf16.mxu0 0
        %1542 = vmatpush1.bf16.msra.mxu0 0
        %1543 = vmatprep.mubr.bf16.mxu0 0
        %1544 = vmatmul.mubr.bf16.gmra.mrb[0].mxu0 %v1476
        %v1545 = vpop.f32.mrb[0].mxu0
        %v1546 = vadd.f32 0.0, %v1545
        %v1547 = vpop.f32.mrb[0].mxu0
        %v1548 = vpop.f32.mrb[0].mxu0
        %v1549 = vadd.f32 0.0, %v1548
        %v1550 = vpop.f32.mrb[0].mxu0
        %1551 = vmatprep.mubr.bf16.mxu0 0
        %1552 = vmatmul.mubr.bf16.gmra.mrb[0].mxu0 %v1479
        %v1553 = vpop.f32.mrb[0].mxu0
        %v1554 = vadd.f32 0.0, %v1553
        %v1555 = vpop.f32.mrb[0].mxu0
        %v1556 = vpop.f32.mrb[0].mxu0
        %v1557 = vadd.f32 0.0, %v1556
        %v1558 = vpop.f32.mrb[0].mxu0
        %1559 = vmatprep.mubr.bf16.mxu0 0
        %1560 = vmatmul.mubr.bf16.gmra.mrb[0].mxu0 %v1482
        %v1561 = vpop.f32.mrb[0].mxu0
        %v1562 = vadd.f32 0.0, %v1561
        %v1563 = vpop.f32.mrb[0].mxu0
        %v1564 = vpop.f32.mrb[0].mxu0
        %v1565 = vadd.f32 0.0, %v1564
        %v1566 = vpop.f32.mrb[0].mxu0
        %1567 = vmatprep.mubr.bf16.mxu0 0
        %1568 = vmatmul.mubr.bf16.gmra.mrb[0].mxu0 %v1485
        %v1569 = vpop.f32.mrb[0].mxu0
        %v1570 = vadd.f32 0.0, %v1569
        %v1571 = vpop.f32.mrb[0].mxu0
        %v1572 = vpop.f32.mrb[0].mxu0
        %v1573 = vadd.f32 0.0, %v1572
        %v1574 = vpop.f32.mrb[0].mxu0
        %1575 = vmatprep.mubr.bf16.mxu0 0
        %1576 = vmatmul.mubr.bf16.gmra.mrb[0].mxu0 %v1488
        %v1577 = vpop.f32.mrb[0].mxu0
        %v1578 = vadd.f32 0.0, %v1577
        %v1579 = vpop.f32.mrb[0].mxu0
        %v1580 = vpop.f32.mrb[0].mxu0
        %v1581 = vadd.f32 0.0, %v1580
        %v1582 = vpop.f32.mrb[0].mxu0
        %1583 = vmatprep.mubr.bf16.mxu0 0
        %1584 = vmatmul.mubr.bf16.gmra.mrb[0].mxu0 %v1491
        %v1585 = vpop.f32.mrb[0].mxu0
        %v1586 = vadd.f32 0.0, %v1585
        %v1587 = vpop.f32.mrb[0].mxu0
        %v1588 = vpop.f32.mrb[0].mxu0
        %v1589 = vadd.f32 0.0, %v1588
        %v1590 = vpop.f32.mrb[0].mxu0
        %1591 = vmatprep.mubr.bf16.mxu0 0
        %1592 = vmatmul.mubr.bf16.gmra.mrb[0].mxu0 %v1494
        %v1593 = vpop.f32.mrb[0].mxu0
        %v1594 = vadd.f32 0.0, %v1593
        %v1595 = vpop.f32.mrb[0].mxu0
        %v1596 = vpop.f32.mrb[0].mxu0
        %v1597 = vadd.f32 0.0, %v1596
        %v1598 = vpop.f32.mrb[0].mxu0
        %1599 = vmatprep.mubr.bf16.mxu0 0
        %1600 = vmatmul.mubr.bf16.gmra.mrb[0].mxu0 %v1497
        %v1601 = vpop.f32.mrb[0].mxu0
        %v1602 = vadd.f32 0.0, %v1601
        %v1603 = vpop.f32.mrb[0].mxu0
        %v1604 = vpop.f32.mrb[0].mxu0
        %v1605 = vadd.f32 0.0, %v1604
        %v1606 = vpop.f32.mrb[0].mxu0
        %1607 = vmatprep.mubr.bf16.mxu0 0
        %1608 = vmatmul.mubr.bf16.gmra.mrb[0].mxu0 %v1500
        %v1609 = vpop.f32.mrb[0].mxu0
        %v1610 = vadd.f32 0.0, %v1609
        %v1611 = vpop.f32.mrb[0].mxu0
        %v1612 = vpop.f32.mrb[0].mxu0
        %v1613 = vadd.f32 0.0, %v1612
        %v1614 = vpop.f32.mrb[0].mxu0
        %1615 = vmatprep.mubr.bf16.mxu0 0
        %1616 = vmatmul.mubr.bf16.gmra.mrb[0].mxu0 %v1503
        %v1617 = vpop.f32.mrb[0].mxu0
        %v1618 = vadd.f32 0.0, %v1617
        %v1619 = vpop.f32.mrb[0].mxu0
        %v1620 = vpop.f32.mrb[0].mxu0
        %v1621 = vadd.f32 0.0, %v1620
        %v1622 = vpop.f32.mrb[0].mxu0
        %1623 = vmatprep.mubr.bf16.mxu0 0
        %1624 = vmatmul.mubr.bf16.gmra.mrb[0].mxu0 %v1506
        %v1625 = vpop.f32.mrb[0].mxu0
        %v1626 = vadd.f32 0.0, %v1625
        %v1627 = vpop.f32.mrb[0].mxu0
        %v1628 = vpop.f32.mrb[0].mxu0
        %v1629 = vadd.f32 0.0, %v1628
        %v1630 = vpop.f32.mrb[0].mxu0
        %1631 = vmatprep.mubr.bf16.mxu0 0
        %1632 = vmatmul.mubr.bf16.gmra.mrb[0].mxu0 %v1509
        %v1633 = vpop.f32.mrb[0].mxu0
        %v1634 = vadd.f32 0.0, %v1633
        %v1635 = vpop.f32.mrb[0].mxu0
        %v1636 = vpop.f32.mrb[0].mxu0
        %v1637 = vadd.f32 0.0, %v1636
        %v1638 = vpop.f32.mrb[0].mxu0
        %1639 = vdwg.mxu0
        %v1640 = vmax.f32 %v1321, %v1546
        %v1641 = vmax.f32 %v1324, %v1549
        %v1642 = vmax.f32 %v1329, %v1554
        %v1643 = vmax.f32 %v1332, %v1557
        %v1644 = vmax.f32 %v1337, %v1562
        %v1645 = vmax.f32 %v1340, %v1565
        %v1646 = vmax.f32 %v1345, %v1570
        %v1647 = vmax.f32 %v1348, %v1573
        %v1648 = vmax.f32 %v1353, %v1578
        %v1649 = vmax.f32 %v1356, %v1581
        %v1650 = vmax.f32 %v1361, %v1586
        %v1651 = vmax.f32 %v1364, %v1589
        %v1652 = vmax.f32 %v1369, %v1594
        %v1653 = vmax.f32 %v1372, %v1597
        %v1654 = vmax.f32 %v1377, %v1602
        %v1655 = vmax.f32 %v1380, %v1605
        %v1656 = vmax.f32 %v1385, %v1610
        %v1657 = vmax.f32 %v1388, %v1613
        %v1658 = vmax.f32 %v1393, %v1618
        %v1659 = vmax.f32 %v1396, %v1621
        %v1660 = vmax.f32 %v1401, %v1626
        %v1661 = vmax.f32 %v1404, %v1629
        %v1662 = vmax.f32 %v1409, %v1634
        %v1663 = vmax.f32 %v1412, %v1637
        %v1664 = vmax.f32 %v1640, %v1642
        %v1665 = vmax.f32 %v1641, %v1643
        %v1666 = vadd.f32 %v1664, %v1082
        %v1667 = vadd.f32 %v1665, %v1082
        %v1668 = vmax.f32 %v1666, 0.0
        %v1669 = vmax.f32 %v1667, 0.0
        %v1670 = vpack.c.bf16 %v1669, %v1668
        %1671 = vst.msk [vmem:[%s1091 + $0x38] sm:$0xff] %vm1092, %v1670
        %v1672 = vmax.f32 %v1644, %v1646
        %v1673 = vmax.f32 %v1645, %v1647
        %v1674 = vadd.f32 %v1672, %v1082
        %v1675 = vadd.f32 %v1673, %v1082
        %v1676 = vmax.f32 %v1674, 0.0
        %v1677 = vmax.f32 %v1675, 0.0
        %v1678 = vpack.c.bf16 %v1677, %v1676
        %1679 = vst.msk [vmem:[%s1091 + $0x40] sm:$0xff] %vm1092, %v1678
        %v1680 = vmax.f32 %v1648, %v1650
        %v1681 = vmax.f32 %v1649, %v1651
        %v1682 = vadd.f32 %v1680, %v1082
        %v1683 = vadd.f32 %v1681, %v1082
        %v1684 = vmax.f32 %v1682, 0.0
        %v1685 = vmax.f32 %v1683, 0.0
        %v1686 = vpack.c.bf16 %v1685, %v1684
        %1687 = vst.msk [vmem:[%s1091 + $0x48] sm:$0xff] %vm1092, %v1686
        %v1688 = vmax.f32 %v1652, %v1654
        %v1689 = vmax.f32 %v1653, %v1655
        %v1690 = vadd.f32 %v1688, %v1082
        %v1691 = vadd.f32 %v1689, %v1082
        %v1692 = vmax.f32 %v1690, 0.0
        %v1693 = vmax.f32 %v1691, 0.0
        %v1694 = vpack.c.bf16 %v1693, %v1692
        %1695 = vst.msk [vmem:[%s1091 + $0x50] sm:$0xff] %vm1092, %v1694
        %v1696 = vmax.f32 %v1656, %v1658
        %v1697 = vmax.f32 %v1657, %v1659
        %v1698 = vadd.f32 %v1696, %v1082
        %v1699 = vadd.f32 %v1697, %v1082
        %v1700 = vmax.f32 %v1698, 0.0
        %v1701 = vmax.f32 %v1699, 0.0
        %v1702 = vpack.c.bf16 %v1701, %v1700
        %1703 = vst.msk [vmem:[%s1091 + $0x58] sm:$0xff] %vm1092, %v1702
        %v1704 = vmax.f32 %v1660, %v1662
        %v1705 = vmax.f32 %v1661, %v1663
        %v1706 = vadd.f32 %v1704, %v1082
        %v1707 = vadd.f32 %v1705, %v1082
        %v1708 = vmax.f32 %v1706, 0.0
        %v1709 = vmax.f32 %v1707, 0.0
        %v1710 = vpack.c.bf16 %v1709, %v1708
        %1711 = vst.msk [vmem:[%s1091 + $0x60] sm:$0xff] %vm1092, %v1710
      $region77: #{network_forward.1} parent=71 // loop_footer
        %s456 = sadd.s32 1, %s452
      $region78: #{network_forward.1} parent=71 // loop_footer_branch
        %451 = sbr.rel target = $region74
      $region79: #{network_forward.1} parent=71 // loop_exit
        _
      loop: start=0, step=1, limit=8
      $region80: #{network_forward.1} parent=71 // loop_pre_header
        _
      $region81: #{network_forward.1} parent=71 // loop_header
        %s1713 = sphi 0, %s1717
        %p1714 = scmp.ge.s32.totalorder %s1713, 8
      $region82: #{network_forward.1} parent=71 // loop_header_branch
        %1716 = sbr.rel (%p1714) target = $region86
      $region83: #{network_forward.1} parent=71 // loop_body
        %s1718 = smul.u32 %s1713, 13
        %s1719 = smul.addr %s1718, 8
        %s1720 = scalar_lea.vmem [#allocation2], %s1719
        %v1721 = vld [vmem:[%s1720] sm:$0xff]
        %v1722 = vld [vmem:[%s1720 + $0x8] sm:$0xff]
        %v1723 = vld [vmem:[%s1720 + $0x10] sm:$0xff]
        %v1724 = vld [vmem:[%s1720 + $0x18] sm:$0xff]
        %v1725 = vld [vmem:[%s1720 + $0x20] sm:$0xff]
        %v1726 = vld [vmem:[%s1720 + $0x28] sm:$0xff]
        %v1727 = vld [vmem:[%s1720 + $0x30] sm:$0xff]
        %v1728 = vld [vmem:[%s1720 + $0x38] sm:$0xff]
        %v1729 = vld [vmem:[%s1720 + $0x40] sm:$0xff]
        %v1730 = vld [vmem:[%s1720 + $0x48] sm:$0xff]
        %v1731 = vld [vmem:[%s1720 + $0x50] sm:$0xff]
        %v1732 = vld [vmem:[%s1720 + $0x58] sm:$0xff]
        %v1733 = vld [vmem:[%s3] sm:$0xf]
        %v1734 = vld [vmem:[%s3 + $0x4] sm:$0xf]
        %v1735 = vld [vmem:[%s3 + $0x8] sm:$0xf]
        %s1736 = scalar_lea.vmem %s3, 12
        %v1737 = vld [vmem:[%s1736] sm:$0xf]
        %v1738 = vld [vmem:[%s1736 + $0x4] sm:$0xf]
        %v1739 = vld [vmem:[%s1736 + $0x8] sm:$0xf]
        %v1743 = vunpack.c.l.b16 %v1737
        %v1744 = vunpack.c.l.b16 %v1738
        %v1745 = vunpack.c.l.b16 %v1739
        %v1746 = vpack.c.b16 %v1744, %v1743
        %v1747 = vpack.c.b16 %v1745, %v1745
        %vm1749 = vcmask 195584
        %v1751 = vsel %vm1749, %v1722, 0
        %v1754 = vsel %vm1749, %v1723, 0
        %v1757 = vsel %vm1749, %v1724, 0
        %v1760 = vsel %vm1749, %v1725, 0
        %v1763 = vsel %vm1749, %v1726, 0
        %v1766 = vsel %vm1749, %v1727, 0
        %v1769 = vsel %vm1749, %v1728, 0
        %v1772 = vsel %vm1749, %v1729, 0
        %vm1774 = vcmask 1043456
        %v1776 = vsel %vm1774, %v1747, 0
        %1778 = vmatprep.subr.bf16.mxu0 0
        %1779 = vmatpush1.bf16.msra.mxu0 %v1746
        %1780 = vmatprep.subr.bf16.mxu0 0
        %1781 = vmatpush1.bf16.msra.mxu0 %v1776
        %1782 = vmatprep.subr.bf16.mxu0 0
        %1783 = vmatpush1.bf16.msra.mxu0 0
        %1784 = vmatprep.subr.bf16.mxu0 0
        %1785 = vmatpush1.bf16.msra.mxu0 0
        %1786 = vmatprep.subr.bf16.mxu0 0
        %1787 = vmatpush1.bf16.msra.mxu0 0
        %1788 = vmatprep.subr.bf16.mxu0 0
        %1789 = vmatpush1.bf16.msra.mxu0 0
        %1790 = vmatprep.subr.bf16.mxu0 0
        %1791 = vmatpush1.bf16.msra.mxu0 0
        %1792 = vmatprep.subr.bf16.mxu0 0
        %1793 = vmatpush1.bf16.msra.mxu0 0
        %1794 = vmatprep.subr.bf16.mxu0 0
        %1795 = vmatpush1.bf16.msra.mxu0 0
        %1796 = vmatprep.subr.bf16.mxu0 0
        %1797 = vmatpush1.bf16.msra.mxu0 0
        %1798 = vmatprep.subr.bf16.mxu0 0
        %1799 = vmatpush1.bf16.msra.mxu0 0
        %1800 = vmatprep.subr.bf16.mxu0 0
        %1801 = vmatpush1.bf16.msra.mxu0 0
        %1802 = vmatprep.subr.bf16.mxu0 0
        %1803 = vmatpush1.bf16.msra.mxu0 0
        %1804 = vmatprep.subr.bf16.mxu0 0
        %1805 = vmatpush1.bf16.msra.mxu0 0
        %1806 = vmatprep.subr.bf16.mxu0 0
        %1807 = vmatpush1.bf16.msra.mxu0 0
        %1808 = vmatprep.subr.bf16.mxu0 0
        %1809 = vmatpush1.bf16.msra.mxu0 0
        %1810 = vmatprep.mubr.bf16.mxu0 0
        %1811 = vmatmul.mubr.bf16.gmra.mrb[0].mxu0 %v1751
        %v1812 = vpop.f32.mrb[0].mxu0
        %v1813 = vadd.f32 0.0, %v1812
        %v1814 = vpop.f32.mrb[0].mxu0
        %v1815 = vpop.f32.mrb[0].mxu0
        %v1816 = vadd.f32 0.0, %v1815
        %v1817 = vpop.f32.mrb[0].mxu0
        %1818 = vmatprep.mubr.bf16.mxu0 0
        %1819 = vmatmul.mubr.bf16.gmra.mrb[0].mxu0 %v1754
        %v1820 = vpop.f32.mrb[0].mxu0
        %v1821 = vadd.f32 0.0, %v1820
        %v1822 = vpop.f32.mrb[0].mxu0
        %v1823 = vpop.f32.mrb[0].mxu0
        %v1824 = vadd.f32 0.0, %v1823
        %v1825 = vpop.f32.mrb[0].mxu0
        %1826 = vmatprep.mubr.bf16.mxu0 0
        %1827 = vmatmul.mubr.bf16.gmra.mrb[0].mxu0 %v1757
        %v1828 = vpop.f32.mrb[0].mxu0
        %v1829 = vadd.f32 0.0, %v1828
        %v1830 = vpop.f32.mrb[0].mxu0
        %v1831 = vpop.f32.mrb[0].mxu0
        %v1832 = vadd.f32 0.0, %v1831
        %v1833 = vpop.f32.mrb[0].mxu0
        %1834 = vmatprep.mubr.bf16.mxu0 0
        %1835 = vmatmul.mubr.bf16.gmra.mrb[0].mxu0 %v1760
        %v1836 = vpop.f32.mrb[0].mxu0
        %v1837 = vadd.f32 0.0, %v1836
        %v1838 = vpop.f32.mrb[0].mxu0
        %v1839 = vpop.f32.mrb[0].mxu0
        %v1840 = vadd.f32 0.0, %v1839
        %v1841 = vpop.f32.mrb[0].mxu0
        %1842 = vmatprep.mubr.bf16.mxu0 0
        %1843 = vmatmul.mubr.bf16.gmra.mrb[0].mxu0 %v1763
        %v1844 = vpop.f32.mrb[0].mxu0
        %v1845 = vadd.f32 0.0, %v1844
        %v1846 = vpop.f32.mrb[0].mxu0
        %v1847 = vpop.f32.mrb[0].mxu0
        %v1848 = vadd.f32 0.0, %v1847
        %v1849 = vpop.f32.mrb[0].mxu0
        %1850 = vmatprep.mubr.bf16.mxu0 0
        %1851 = vmatmul.mubr.bf16.gmra.mrb[0].mxu0 %v1766
        %v1852 = vpop.f32.mrb[0].mxu0
        %v1853 = vadd.f32 0.0, %v1852
        %v1854 = vpop.f32.mrb[0].mxu0
        %v1855 = vpop.f32.mrb[0].mxu0
        %v1856 = vadd.f32 0.0, %v1855
        %v1857 = vpop.f32.mrb[0].mxu0
        %1858 = vmatprep.mubr.bf16.mxu0 0
        %1859 = vmatmul.mubr.bf16.gmra.mrb[0].mxu0 %v1769
        %v1860 = vpop.f32.mrb[0].mxu0
        %v1861 = vadd.f32 0.0, %v1860
        %v1862 = vpop.f32.mrb[0].mxu0
        %v1863 = vpop.f32.mrb[0].mxu0
        %v1864 = vadd.f32 0.0, %v1863
        %v1865 = vpop.f32.mrb[0].mxu0
        %1866 = vmatprep.mubr.bf16.mxu0 0
        %1867 = vmatmul.mubr.bf16.gmra.mrb[0].mxu0 %v1772
        %v1868 = vpop.f32.mrb[0].mxu0
        %v1869 = vadd.f32 0.0, %v1868
        %v1870 = vpop.f32.mrb[0].mxu0
        %v1871 = vpop.f32.mrb[0].mxu0
        %v1872 = vadd.f32 0.0, %v1871
        %v1873 = vpop.f32.mrb[0].mxu0
        %1874 = vdwg.mxu0
        %v1878 = vunpack.c.l.b16 %v1733
        %v1879 = vunpack.c.l.b16 %v1734
        %v1880 = vunpack.c.l.b16 %v1735
        %v1881 = vpack.c.b16 %v1879, %v1878
        %v1882 = vpack.c.b16 %v1880, %v1880
        %v1885 = vsel %vm1749, %v1721, 0
        %v1888 = vsel %vm1774, %v1882, 0
        %1890 = vmatprep.subr.bf16.mxu0 0
        %1891 = vmatpush1.bf16.msra.mxu0 %v1881
        %1892 = vmatprep.subr.bf16.mxu0 0
        %1893 = vmatpush1.bf16.msra.mxu0 %v1888
        %1894 = vmatprep.subr.bf16.mxu0 0
        %1895 = vmatpush1.bf16.msra.mxu0 0
        %1896 = vmatprep.subr.bf16.mxu0 0
        %1897 = vmatpush1.bf16.msra.mxu0 0
        %1898 = vmatprep.subr.bf16.mxu0 0
        %1899 = vmatpush1.bf16.msra.mxu0 0
        %1900 = vmatprep.subr.bf16.mxu0 0
        %1901 = vmatpush1.bf16.msra.mxu0 0
        %1902 = vmatprep.subr.bf16.mxu0 0
        %1903 = vmatpush1.bf16.msra.mxu0 0
        %1904 = vmatprep.subr.bf16.mxu0 0
        %1905 = vmatpush1.bf16.msra.mxu0 0
        %1906 = vmatprep.subr.bf16.mxu0 0
        %1907 = vmatpush1.bf16.msra.mxu0 0
        %1908 = vmatprep.subr.bf16.mxu0 0
        %1909 = vmatpush1.bf16.msra.mxu0 0
        %1910 = vmatprep.subr.bf16.mxu0 0
        %1911 = vmatpush1.bf16.msra.mxu0 0
        %1912 = vmatprep.subr.bf16.mxu0 0
        %1913 = vmatpush1.bf16.msra.mxu0 0
        %1914 = vmatprep.subr.bf16.mxu0 0
        %1915 = vmatpush1.bf16.msra.mxu0 0
        %1916 = vmatprep.subr.bf16.mxu0 0
        %1917 = vmatpush1.bf16.msra.mxu0 0
        %1918 = vmatprep.subr.bf16.mxu0 0
        %1919 = vmatpush1.bf16.msra.mxu0 0
        %1920 = vmatprep.subr.bf16.mxu0 0
        %1921 = vmatpush1.bf16.msra.mxu0 0
        %1922 = vmatprep.mubr.bf16.mxu0 0
        %1923 = vmatmul.mubr.bf16.gmra.mrb[0].mxu0 %v1885
        %v1924 = vpop.f32.mrb[0].mxu0
        %v1925 = vadd.f32 %v1813, %v1924
        %v1926 = vpop.f32.mrb[0].mxu0
        %v1927 = vpop.f32.mrb[0].mxu0
        %v1928 = vadd.f32 %v1816, %v1927
        %v1929 = vpop.f32.mrb[0].mxu0
        %1930 = vmatprep.mubr.bf16.mxu0 0
        %1931 = vmatmul.mubr.bf16.gmra.mrb[0].mxu0 %v1751
        %v1932 = vpop.f32.mrb[0].mxu0
        %v1933 = vadd.f32 %v1821, %v1932
        %v1934 = vpop.f32.mrb[0].mxu0
        %v1935 = vpop.f32.mrb[0].mxu0
        %v1936 = vadd.f32 %v1824, %v1935
        %v1937 = vpop.f32.mrb[0].mxu0
        %1938 = vmatprep.mubr.bf16.mxu0 0
        %1939 = vmatmul.mubr.bf16.gmra.mrb[0].mxu0 %v1754
        %v1940 = vpop.f32.mrb[0].mxu0
        %v1941 = vadd.f32 %v1829, %v1940
        %v1942 = vpop.f32.mrb[0].mxu0
        %v1943 = vpop.f32.mrb[0].mxu0
        %v1944 = vadd.f32 %v1832, %v1943
        %v1945 = vpop.f32.mrb[0].mxu0
        %1946 = vmatprep.mubr.bf16.mxu0 0
        %1947 = vmatmul.mubr.bf16.gmra.mrb[0].mxu0 %v1757
        %v1948 = vpop.f32.mrb[0].mxu0
        %v1949 = vadd.f32 %v1837, %v1948
        %v1950 = vpop.f32.mrb[0].mxu0
        %v1951 = vpop.f32.mrb[0].mxu0
        %v1952 = vadd.f32 %v1840, %v1951
        %v1953 = vpop.f32.mrb[0].mxu0
        %1954 = vmatprep.mubr.bf16.mxu0 0
        %1955 = vmatmul.mubr.bf16.gmra.mrb[0].mxu0 %v1760
        %v1956 = vpop.f32.mrb[0].mxu0
        %v1957 = vadd.f32 %v1845, %v1956
        %v1958 = vpop.f32.mrb[0].mxu0
        %v1959 = vpop.f32.mrb[0].mxu0
        %v1960 = vadd.f32 %v1848, %v1959
        %v1961 = vpop.f32.mrb[0].mxu0
        %1962 = vmatprep.mubr.bf16.mxu0 0
        %1963 = vmatmul.mubr.bf16.gmra.mrb[0].mxu0 %v1763
        %v1964 = vpop.f32.mrb[0].mxu0
        %v1965 = vadd.f32 %v1853, %v1964
        %v1966 = vpop.f32.mrb[0].mxu0
        %v1967 = vpop.f32.mrb[0].mxu0
        %v1968 = vadd.f32 %v1856, %v1967
        %v1969 = vpop.f32.mrb[0].mxu0
        %1970 = vmatprep.mubr.bf16.mxu0 0
        %1971 = vmatmul.mubr.bf16.gmra.mrb[0].mxu0 %v1766
        %v1972 = vpop.f32.mrb[0].mxu0
        %v1973 = vadd.f32 %v1861, %v1972
        %v1974 = vpop.f32.mrb[0].mxu0
        %v1975 = vpop.f32.mrb[0].mxu0
        %v1976 = vadd.f32 %v1864, %v1975
        %v1977 = vpop.f32.mrb[0].mxu0
        %1978 = vmatprep.mubr.bf16.mxu0 0
        %1979 = vmatmul.mubr.bf16.gmra.mrb[0].mxu0 %v1769
        %v1980 = vpop.f32.mrb[0].mxu0
        %v1981 = vadd.f32 %v1869, %v1980
        %v1982 = vpop.f32.mrb[0].mxu0
        %v1983 = vpop.f32.mrb[0].mxu0
        %v1984 = vadd.f32 %v1872, %v1983
        %v1985 = vpop.f32.mrb[0].mxu0
        %1986 = vdwg.mxu0
        %s1987 = scalar_lea.vmem %s3, 24
        %v1988 = vld [vmem:[%s1987] sm:$0xf]
        %v1989 = vld [vmem:[%s1987 + $0x4] sm:$0xf]
        %v1990 = vld [vmem:[%s1987 + $0x8] sm:$0xf]
        %v1994 = vunpack.c.l.b16 %v1988
        %v1995 = vunpack.c.l.b16 %v1989
        %v1996 = vunpack.c.l.b16 %v1990
        %v1997 = vpack.c.b16 %v1995, %v1994
        %v1998 = vpack.c.b16 %v1996, %v1996
        %v2001 = vsel %vm1749, %v1730, 0
        %v2004 = vsel %vm1774, %v1998, 0
        %2006 = vmatprep.subr.bf16.mxu0 0
        %2007 = vmatpush1.bf16.msra.mxu0 %v1997
        %2008 = vmatprep.subr.bf16.mxu0 0
        %2009 = vmatpush1.bf16.msra.mxu0 %v2004
        %2010 = vmatprep.subr.bf16.mxu0 0
        %2011 = vmatpush1.bf16.msra.mxu0 0
        %2012 = vmatprep.subr.bf16.mxu0 0
        %2013 = vmatpush1.bf16.msra.mxu0 0
        %2014 = vmatprep.subr.bf16.mxu0 0
        %2015 = vmatpush1.bf16.msra.mxu0 0
        %2016 = vmatprep.subr.bf16.mxu0 0
        %2017 = vmatpush1.bf16.msra.mxu0 0
        %2018 = vmatprep.subr.bf16.mxu0 0
        %2019 = vmatpush1.bf16.msra.mxu0 0
        %2020 = vmatprep.subr.bf16.mxu0 0
        %2021 = vmatpush1.bf16.msra.mxu0 0
        %2022 = vmatprep.subr.bf16.mxu0 0
        %2023 = vmatpush1.bf16.msra.mxu0 0
        %2024 = vmatprep.subr.bf16.mxu0 0
        %2025 = vmatpush1.bf16.msra.mxu0 0
        %2026 = vmatprep.subr.bf16.mxu0 0
        %2027 = vmatpush1.bf16.msra.mxu0 0
        %2028 = vmatprep.subr.bf16.mxu0 0
        %2029 = vmatpush1.bf16.msra.mxu0 0
        %2030 = vmatprep.subr.bf16.mxu0 0
        %2031 = vmatpush1.bf16.msra.mxu0 0
        %2032 = vmatprep.subr.bf16.mxu0 0
        %2033 = vmatpush1.bf16.msra.mxu0 0
        %2034 = vmatprep.subr.bf16.mxu0 0
        %2035 = vmatpush1.bf16.msra.mxu0 0
        %2036 = vmatprep.subr.bf16.mxu0 0
        %2037 = vmatpush1.bf16.msra.mxu0 0
        %2038 = vmatprep.mubr.bf16.mxu0 0
        %2039 = vmatmul.mubr.bf16.gmra.mrb[0].mxu0 %v1754
        %v2040 = vpop.f32.mrb[0].mxu0
        %v2041 = vadd.f32 0.0, %v2040
        %v2042 = vpop.f32.mrb[0].mxu0
        %v2043 = vpop.f32.mrb[0].mxu0
        %v2044 = vadd.f32 0.0, %v2043
        %v2045 = vpop.f32.mrb[0].mxu0
        %2046 = vmatprep.mubr.bf16.mxu0 0
        %2047 = vmatmul.mubr.bf16.gmra.mrb[0].mxu0 %v1757
        %v2048 = vpop.f32.mrb[0].mxu0
        %v2049 = vadd.f32 0.0, %v2048
        %v2050 = vpop.f32.mrb[0].mxu0
        %v2051 = vpop.f32.mrb[0].mxu0
        %v2052 = vadd.f32 0.0, %v2051
        %v2053 = vpop.f32.mrb[0].mxu0
        %2054 = vmatprep.mubr.bf16.mxu0 0
        %2055 = vmatmul.mubr.bf16.gmra.mrb[0].mxu0 %v1760
        %v2056 = vpop.f32.mrb[0].mxu0
        %v2057 = vadd.f32 0.0, %v2056
        %v2058 = vpop.f32.mrb[0].mxu0
        %v2059 = vpop.f32.mrb[0].mxu0
        %v2060 = vadd.f32 0.0, %v2059
        %v2061 = vpop.f32.mrb[0].mxu0
        %2062 = vmatprep.mubr.bf16.mxu0 0
        %2063 = vmatmul.mubr.bf16.gmra.mrb[0].mxu0 %v1763
        %v2064 = vpop.f32.mrb[0].mxu0
        %v2065 = vadd.f32 0.0, %v2064
        %v2066 = vpop.f32.mrb[0].mxu0
        %v2067 = vpop.f32.mrb[0].mxu0
        %v2068 = vadd.f32 0.0, %v2067
        %v2069 = vpop.f32.mrb[0].mxu0
        %2070 = vmatprep.mubr.bf16.mxu0 0
        %2071 = vmatmul.mubr.bf16.gmra.mrb[0].mxu0 %v1766
        %v2072 = vpop.f32.mrb[0].mxu0
        %v2073 = vadd.f32 0.0, %v2072
        %v2074 = vpop.f32.mrb[0].mxu0
        %v2075 = vpop.f32.mrb[0].mxu0
        %v2076 = vadd.f32 0.0, %v2075
        %v2077 = vpop.f32.mrb[0].mxu0
        %2078 = vmatprep.mubr.bf16.mxu0 0
        %2079 = vmatmul.mubr.bf16.gmra.mrb[0].mxu0 %v1769
        %v2080 = vpop.f32.mrb[0].mxu0
        %v2081 = vadd.f32 0.0, %v2080
        %v2082 = vpop.f32.mrb[0].mxu0
        %v2083 = vpop.f32.mrb[0].mxu0
        %v2084 = vadd.f32 0.0, %v2083
        %v2085 = vpop.f32.mrb[0].mxu0
        %2086 = vmatprep.mubr.bf16.mxu0 0
        %2087 = vmatmul.mubr.bf16.gmra.mrb[0].mxu0 %v1772
        %v2088 = vpop.f32.mrb[0].mxu0
        %v2089 = vadd.f32 0.0, %v2088
        %v2090 = vpop.f32.mrb[0].mxu0
        %v2091 = vpop.f32.mrb[0].mxu0
        %v2092 = vadd.f32 0.0, %v2091
        %v2093 = vpop.f32.mrb[0].mxu0
        %2094 = vmatprep.mubr.bf16.mxu0 0
        %2095 = vmatmul.mubr.bf16.gmra.mrb[0].mxu0 %v2001
        %v2096 = vpop.f32.mrb[0].mxu0
        %v2097 = vadd.f32 0.0, %v2096
        %v2098 = vpop.f32.mrb[0].mxu0
        %v2099 = vpop.f32.mrb[0].mxu0
        %v2100 = vadd.f32 0.0, %v2099
        %v2101 = vpop.f32.mrb[0].mxu0
        %2102 = vdwg.mxu0
        %v2103 = vadd.f32 %v1925, %v2041
        %v2104 = vadd.f32 %v1928, %v2044
        %v2105 = vadd.f32 %v1933, %v2049
        %v2106 = vadd.f32 %v1936, %v2052
        %v2107 = vadd.f32 %v1941, %v2057
        %v2108 = vadd.f32 %v1944, %v2060
        %v2109 = vadd.f32 %v1949, %v2065
        %v2110 = vadd.f32 %v1952, %v2068
        %v2111 = vadd.f32 %v1957, %v2073
        %v2112 = vadd.f32 %v1960, %v2076
        %v2113 = vadd.f32 %v1965, %v2081
        %v2114 = vadd.f32 %v1968, %v2084
        %v2115 = vadd.f32 %v1973, %v2089
        %v2116 = vadd.f32 %v1976, %v2092
        %v2117 = vadd.f32 %v1981, %v2097
        %v2118 = vadd.f32 %v1984, %v2100
        %s2119 = scalar_lea.vmem %s3, 36
        %v2120 = vld [vmem:[%s2119] sm:$0xf]
        %v2121 = vld [vmem:[%s2119 + $0x4] sm:$0xf]
        %v2122 = vld [vmem:[%s2119 + $0x8] sm:$0xf]
        %v2126 = vunpack.c.l.b16 %v2120
        %v2127 = vunpack.c.l.b16 %v2121
        %v2128 = vunpack.c.l.b16 %v2122
        %v2129 = vpack.c.b16 %v2127, %v2126
        %v2130 = vpack.c.b16 %v2128, %v2128
        %v2133 = vsel %vm1749, %v1731, 0
        %v2136 = vsel %vm1774, %v2130, 0
        %2138 = vmatprep.subr.bf16.mxu0 0
        %2139 = vmatpush1.bf16.msra.mxu0 %v2129
        %2140 = vmatprep.subr.bf16.mxu0 0
        %2141 = vmatpush1.bf16.msra.mxu0 %v2136
        %2142 = vmatprep.subr.bf16.mxu0 0
        %2143 = vmatpush1.bf16.msra.mxu0 0
        %2144 = vmatprep.subr.bf16.mxu0 0
        %2145 = vmatpush1.bf16.msra.mxu0 0
        %2146 = vmatprep.subr.bf16.mxu0 0
        %2147 = vmatpush1.bf16.msra.mxu0 0
        %2148 = vmatprep.subr.bf16.mxu0 0
        %2149 = vmatpush1.bf16.msra.mxu0 0
        %2150 = vmatprep.subr.bf16.mxu0 0
        %2151 = vmatpush1.bf16.msra.mxu0 0
        %2152 = vmatprep.subr.bf16.mxu0 0
        %2153 = vmatpush1.bf16.msra.mxu0 0
        %2154 = vmatprep.subr.bf16.mxu0 0
        %2155 = vmatpush1.bf16.msra.mxu0 0
        %2156 = vmatprep.subr.bf16.mxu0 0
        %2157 = vmatpush1.bf16.msra.mxu0 0
        %2158 = vmatprep.subr.bf16.mxu0 0
        %2159 = vmatpush1.bf16.msra.mxu0 0
        %2160 = vmatprep.subr.bf16.mxu0 0
        %2161 = vmatpush1.bf16.msra.mxu0 0
        %2162 = vmatprep.subr.bf16.mxu0 0
        %2163 = vmatpush1.bf16.msra.mxu0 0
        %2164 = vmatprep.subr.bf16.mxu0 0
        %2165 = vmatpush1.bf16.msra.mxu0 0
        %2166 = vmatprep.subr.bf16.mxu0 0
        %2167 = vmatpush1.bf16.msra.mxu0 0
        %2168 = vmatprep.subr.bf16.mxu0 0
        %2169 = vmatpush1.bf16.msra.mxu0 0
        %2170 = vmatprep.mubr.bf16.mxu0 0
        %2171 = vmatmul.mubr.bf16.gmra.mrb[0].mxu0 %v1757
        %v2172 = vpop.f32.mrb[0].mxu0
        %v2173 = vadd.f32 0.0, %v2172
        %v2174 = vpop.f32.mrb[0].mxu0
        %v2175 = vpop.f32.mrb[0].mxu0
        %v2176 = vadd.f32 0.0, %v2175
        %v2177 = vpop.f32.mrb[0].mxu0
        %2178 = vmatprep.mubr.bf16.mxu0 0
        %2179 = vmatmul.mubr.bf16.gmra.mrb[0].mxu0 %v1760
        %v2180 = vpop.f32.mrb[0].mxu0
        %v2181 = vadd.f32 0.0, %v2180
        %v2182 = vpop.f32.mrb[0].mxu0
        %v2183 = vpop.f32.mrb[0].mxu0
        %v2184 = vadd.f32 0.0, %v2183
        %v2185 = vpop.f32.mrb[0].mxu0
        %2186 = vmatprep.mubr.bf16.mxu0 0
        %2187 = vmatmul.mubr.bf16.gmra.mrb[0].mxu0 %v1763
        %v2188 = vpop.f32.mrb[0].mxu0
        %v2189 = vadd.f32 0.0, %v2188
        %v2190 = vpop.f32.mrb[0].mxu0
        %v2191 = vpop.f32.mrb[0].mxu0
        %v2192 = vadd.f32 0.0, %v2191
        %v2193 = vpop.f32.mrb[0].mxu0
        %2194 = vmatprep.mubr.bf16.mxu0 0
        %2195 = vmatmul.mubr.bf16.gmra.mrb[0].mxu0 %v1766
        %v2196 = vpop.f32.mrb[0].mxu0
        %v2197 = vadd.f32 0.0, %v2196
        %v2198 = vpop.f32.mrb[0].mxu0
        %v2199 = vpop.f32.mrb[0].mxu0
        %v2200 = vadd.f32 0.0, %v2199
        %v2201 = vpop.f32.mrb[0].mxu0
        %2202 = vmatprep.mubr.bf16.mxu0 0
        %2203 = vmatmul.mubr.bf16.gmra.mrb[0].mxu0 %v1769
        %v2204 = vpop.f32.mrb[0].mxu0
        %v2205 = vadd.f32 0.0, %v2204
        %v2206 = vpop.f32.mrb[0].mxu0
        %v2207 = vpop.f32.mrb[0].mxu0
        %v2208 = vadd.f32 0.0, %v2207
        %v2209 = vpop.f32.mrb[0].mxu0
        %2210 = vmatprep.mubr.bf16.mxu0 0
        %2211 = vmatmul.mubr.bf16.gmra.mrb[0].mxu0 %v1772
        %v2212 = vpop.f32.mrb[0].mxu0
        %v2213 = vadd.f32 0.0, %v2212
        %v2214 = vpop.f32.mrb[0].mxu0
        %v2215 = vpop.f32.mrb[0].mxu0
        %v2216 = vadd.f32 0.0, %v2215
        %v2217 = vpop.f32.mrb[0].mxu0
        %2218 = vmatprep.mubr.bf16.mxu0 0
        %2219 = vmatmul.mubr.bf16.gmra.mrb[0].mxu0 %v2001
        %v2220 = vpop.f32.mrb[0].mxu0
        %v2221 = vadd.f32 0.0, %v2220
        %v2222 = vpop.f32.mrb[0].mxu0
        %v2223 = vpop.f32.mrb[0].mxu0
        %v2224 = vadd.f32 0.0, %v2223
        %v2225 = vpop.f32.mrb[0].mxu0
        %2226 = vmatprep.mubr.bf16.mxu0 0
        %2227 = vmatmul.mubr.bf16.gmra.mrb[0].mxu0 %v2133
        %v2228 = vpop.f32.mrb[0].mxu0
        %v2229 = vadd.f32 0.0, %v2228
        %v2230 = vpop.f32.mrb[0].mxu0
        %v2231 = vpop.f32.mrb[0].mxu0
        %v2232 = vadd.f32 0.0, %v2231
        %v2233 = vpop.f32.mrb[0].mxu0
        %2234 = vdwg.mxu0
        %v2235 = vadd.f32 %v2103, %v2173
        %v2236 = vadd.f32 %v2104, %v2176
        %v2237 = vadd.f32 %v2105, %v2181
        %v2238 = vadd.f32 %v2106, %v2184
        %v2239 = vadd.f32 %v2107, %v2189
        %v2240 = vadd.f32 %v2108, %v2192
        %v2241 = vadd.f32 %v2109, %v2197
        %v2242 = vadd.f32 %v2110, %v2200
        %v2243 = vadd.f32 %v2111, %v2205
        %v2244 = vadd.f32 %v2112, %v2208
        %v2245 = vadd.f32 %v2113, %v2213
        %v2246 = vadd.f32 %v2114, %v2216
        %v2247 = vadd.f32 %v2115, %v2221
        %v2248 = vadd.f32 %v2116, %v2224
        %v2249 = vadd.f32 %v2117, %v2229
        %v2250 = vadd.f32 %v2118, %v2232
        %s2251 = scalar_lea.vmem %s3, 48
        %v2252 = vld [vmem:[%s2251] sm:$0xf]
        %v2253 = vld [vmem:[%s2251 + $0x4] sm:$0xf]
        %v2254 = vld [vmem:[%s2251 + $0x8] sm:$0xf]
        %v2258 = vunpack.c.l.b16 %v2252
        %v2259 = vunpack.c.l.b16 %v2253
        %v2260 = vunpack.c.l.b16 %v2254
        %v2261 = vpack.c.b16 %v2259, %v2258
        %v2262 = vpack.c.b16 %v2260, %v2260
        %v2265 = vsel %vm1749, %v1732, 0
        %v2268 = vsel %vm1774, %v2262, 0
        %2270 = vmatprep.subr.bf16.mxu0 0
        %2271 = vmatpush1.bf16.msra.mxu0 %v2261
        %2272 = vmatprep.subr.bf16.mxu0 0
        %2273 = vmatpush1.bf16.msra.mxu0 %v2268
        %2274 = vmatprep.subr.bf16.mxu0 0
        %2275 = vmatpush1.bf16.msra.mxu0 0
        %2276 = vmatprep.subr.bf16.mxu0 0
        %2277 = vmatpush1.bf16.msra.mxu0 0
        %2278 = vmatprep.subr.bf16.mxu0 0
        %2279 = vmatpush1.bf16.msra.mxu0 0
        %2280 = vmatprep.subr.bf16.mxu0 0
        %2281 = vmatpush1.bf16.msra.mxu0 0
        %2282 = vmatprep.subr.bf16.mxu0 0
        %2283 = vmatpush1.bf16.msra.mxu0 0
        %2284 = vmatprep.subr.bf16.mxu0 0
        %2285 = vmatpush1.bf16.msra.mxu0 0
        %2286 = vmatprep.subr.bf16.mxu0 0
        %2287 = vmatpush1.bf16.msra.mxu0 0
        %2288 = vmatprep.subr.bf16.mxu0 0
        %2289 = vmatpush1.bf16.msra.mxu0 0
        %2290 = vmatprep.subr.bf16.mxu0 0
        %2291 = vmatpush1.bf16.msra.mxu0 0
        %2292 = vmatprep.subr.bf16.mxu0 0
        %2293 = vmatpush1.bf16.msra.mxu0 0
        %2294 = vmatprep.subr.bf16.mxu0 0
        %2295 = vmatpush1.bf16.msra.mxu0 0
        %2296 = vmatprep.subr.bf16.mxu0 0
        %2297 = vmatpush1.bf16.msra.mxu0 0
        %2298 = vmatprep.subr.bf16.mxu0 0
        %2299 = vmatpush1.bf16.msra.mxu0 0
        %2300 = vmatprep.subr.bf16.mxu0 0
        %2301 = vmatpush1.bf16.msra.mxu0 0
        %2302 = vmatprep.mubr.bf16.mxu0 0
        %2303 = vmatmul.mubr.bf16.gmra.mrb[0].mxu0 %v1760
        %v2304 = vpop.f32.mrb[0].mxu0
        %v2305 = vadd.f32 0.0, %v2304
        %v2306 = vpop.f32.mrb[0].mxu0
        %v2307 = vpop.f32.mrb[0].mxu0
        %v2308 = vadd.f32 0.0, %v2307
        %v2309 = vpop.f32.mrb[0].mxu0
        %2310 = vmatprep.mubr.bf16.mxu0 0
        %2311 = vmatmul.mubr.bf16.gmra.mrb[0].mxu0 %v1763
        %v2312 = vpop.f32.mrb[0].mxu0
        %v2313 = vadd.f32 0.0, %v2312
        %v2314 = vpop.f32.mrb[0].mxu0
        %v2315 = vpop.f32.mrb[0].mxu0
        %v2316 = vadd.f32 0.0, %v2315
        %v2317 = vpop.f32.mrb[0].mxu0
        %2318 = vmatprep.mubr.bf16.mxu0 0
        %2319 = vmatmul.mubr.bf16.gmra.mrb[0].mxu0 %v1766
        %v2320 = vpop.f32.mrb[0].mxu0
        %v2321 = vadd.f32 0.0, %v2320
        %v2322 = vpop.f32.mrb[0].mxu0
        %v2323 = vpop.f32.mrb[0].mxu0
        %v2324 = vadd.f32 0.0, %v2323
        %v2325 = vpop.f32.mrb[0].mxu0
        %2326 = vmatprep.mubr.bf16.mxu0 0
        %2327 = vmatmul.mubr.bf16.gmra.mrb[0].mxu0 %v1769
        %v2328 = vpop.f32.mrb[0].mxu0
        %v2329 = vadd.f32 0.0, %v2328
        %v2330 = vpop.f32.mrb[0].mxu0
        %v2331 = vpop.f32.mrb[0].mxu0
        %v2332 = vadd.f32 0.0, %v2331
        %v2333 = vpop.f32.mrb[0].mxu0
        %2334 = vmatprep.mubr.bf16.mxu0 0
        %2335 = vmatmul.mubr.bf16.gmra.mrb[0].mxu0 %v1772
        %v2336 = vpop.f32.mrb[0].mxu0
        %v2337 = vadd.f32 0.0, %v2336
        %v2338 = vpop.f32.mrb[0].mxu0
        %v2339 = vpop.f32.mrb[0].mxu0
        %v2340 = vadd.f32 0.0, %v2339
        %v2341 = vpop.f32.mrb[0].mxu0
        %2342 = vmatprep.mubr.bf16.mxu0 0
        %2343 = vmatmul.mubr.bf16.gmra.mrb[0].mxu0 %v2001
        %v2344 = vpop.f32.mrb[0].mxu0
        %v2345 = vadd.f32 0.0, %v2344
        %v2346 = vpop.f32.mrb[0].mxu0
        %v2347 = vpop.f32.mrb[0].mxu0
        %v2348 = vadd.f32 0.0, %v2347
        %v2349 = vpop.f32.mrb[0].mxu0
        %2350 = vmatprep.mubr.bf16.mxu0 0
        %2351 = vmatmul.mubr.bf16.gmra.mrb[0].mxu0 %v2133
        %v2352 = vpop.f32.mrb[0].mxu0
        %v2353 = vadd.f32 0.0, %v2352
        %v2354 = vpop.f32.mrb[0].mxu0
        %v2355 = vpop.f32.mrb[0].mxu0
        %v2356 = vadd.f32 0.0, %v2355
        %v2357 = vpop.f32.mrb[0].mxu0
        %2358 = vmatprep.mubr.bf16.mxu0 0
        %2359 = vmatmul.mubr.bf16.gmra.mrb[0].mxu0 %v2265
        %v2360 = vpop.f32.mrb[0].mxu0
        %v2361 = vadd.f32 0.0, %v2360
        %v2362 = vpop.f32.mrb[0].mxu0
        %v2363 = vpop.f32.mrb[0].mxu0
        %v2364 = vadd.f32 0.0, %v2363
        %v2365 = vpop.f32.mrb[0].mxu0
        %2366 = vdwg.mxu0
        %v2367 = vadd.f32 %v2235, %v2305
        %v2368 = vadd.f32 %v2236, %v2308
        %v2369 = vadd.f32 %v2237, %v2313
        %v2370 = vadd.f32 %v2238, %v2316
        %v2371 = vadd.f32 %v2239, %v2321
        %v2372 = vadd.f32 %v2240, %v2324
        %v2373 = vadd.f32 %v2241, %v2329
        %v2374 = vadd.f32 %v2242, %v2332
        %v2375 = vadd.f32 %v2243, %v2337
        %v2376 = vadd.f32 %v2244, %v2340
        %v2377 = vadd.f32 %v2245, %v2345
        %v2378 = vadd.f32 %v2246, %v2348
        %v2379 = vadd.f32 %v2247, %v2353
        %v2380 = vadd.f32 %v2248, %v2356
        %v2381 = vadd.f32 %v2249, %v2361
        %v2382 = vadd.f32 %v2250, %v2364
        %s2383 = sadd.s32 %s1713, 1
        %s2384 = smul.u32 %s2383, 13
        %s2385 = smul.addr %s2384, 8
        %s2386 = scalar_lea.vmem [#allocation2], %s2385
        %v2387 = vld [vmem:[%s2386] sm:$0xff]
        %v2388 = vld [vmem:[%s2386 + $0x8] sm:$0xff]
        %v2389 = vld [vmem:[%s2386 + $0x10] sm:$0xff]
        %v2390 = vld [vmem:[%s2386 + $0x18] sm:$0xff]
        %v2391 = vld [vmem:[%s2386 + $0x20] sm:$0xff]
        %v2392 = vld [vmem:[%s2386 + $0x28] sm:$0xff]
        %v2393 = vld [vmem:[%s2386 + $0x30] sm:$0xff]
        %v2394 = vld [vmem:[%s2386 + $0x38] sm:$0xff]
        %v2395 = vld [vmem:[%s2386 + $0x40] sm:$0xff]
        %v2396 = vld [vmem:[%s2386 + $0x48] sm:$0xff]
        %v2397 = vld [vmem:[%s2386 + $0x50] sm:$0xff]
        %v2398 = vld [vmem:[%s2386 + $0x58] sm:$0xff]
        %s2399 = scalar_lea.vmem %s3, 60
        %v2400 = vld [vmem:[%s2399] sm:$0xf]
        %v2401 = vld [vmem:[%s2399 + $0x4] sm:$0xf]
        %v2402 = vld [vmem:[%s2399 + $0x8] sm:$0xf]
        %v2406 = vunpack.c.l.b16 %v2400
        %v2407 = vunpack.c.l.b16 %v2401
        %v2408 = vunpack.c.l.b16 %v2402
        %v2409 = vpack.c.b16 %v2407, %v2406
        %v2410 = vpack.c.b16 %v2408, %v2408
        %v2413 = vsel %vm1749, %v2387, 0
        %v2416 = vsel %vm1749, %v2388, 0
        %v2419 = vsel %vm1749, %v2389, 0
        %v2422 = vsel %vm1749, %v2390, 0
        %v2425 = vsel %vm1749, %v2391, 0
        %v2428 = vsel %vm1749, %v2392, 0
        %v2431 = vsel %vm1749, %v2393, 0
        %v2434 = vsel %vm1749, %v2394, 0
        %v2437 = vsel %vm1774, %v2410, 0
        %2439 = vmatprep.subr.bf16.mxu0 0
        %2440 = vmatpush1.bf16.msra.mxu0 %v2409
        %2441 = vmatprep.subr.bf16.mxu0 0
        %2442 = vmatpush1.bf16.msra.mxu0 %v2437
        %2443 = vmatprep.subr.bf16.mxu0 0
        %2444 = vmatpush1.bf16.msra.mxu0 0
        %2445 = vmatprep.subr.bf16.mxu0 0
        %2446 = vmatpush1.bf16.msra.mxu0 0
        %2447 = vmatprep.subr.bf16.mxu0 0
        %2448 = vmatpush1.bf16.msra.mxu0 0
        %2449 = vmatprep.subr.bf16.mxu0 0
        %2450 = vmatpush1.bf16.msra.mxu0 0
        %2451 = vmatprep.subr.bf16.mxu0 0
        %2452 = vmatpush1.bf16.msra.mxu0 0
        %2453 = vmatprep.subr.bf16.mxu0 0
        %2454 = vmatpush1.bf16.msra.mxu0 0
        %2455 = vmatprep.subr.bf16.mxu0 0
        %2456 = vmatpush1.bf16.msra.mxu0 0
        %2457 = vmatprep.subr.bf16.mxu0 0
        %2458 = vmatpush1.bf16.msra.mxu0 0
        %2459 = vmatprep.subr.bf16.mxu0 0
        %2460 = vmatpush1.bf16.msra.mxu0 0
        %2461 = vmatprep.subr.bf16.mxu0 0
        %2462 = vmatpush1.bf16.msra.mxu0 0
        %2463 = vmatprep.subr.bf16.mxu0 0
        %2464 = vmatpush1.bf16.msra.mxu0 0
        %2465 = vmatprep.subr.bf16.mxu0 0
        %2466 = vmatpush1.bf16.msra.mxu0 0
        %2467 = vmatprep.subr.bf16.mxu0 0
        %2468 = vmatpush1.bf16.msra.mxu0 0
        %2469 = vmatprep.subr.bf16.mxu0 0
        %2470 = vmatpush1.bf16.msra.mxu0 0
        %2471 = vmatprep.mubr.bf16.mxu0 0
        %2472 = vmatmul.mubr.bf16.gmra.mrb[0].mxu0 %v2413
        %v2473 = vpop.f32.mrb[0].mxu0
        %v2474 = vadd.f32 0.0, %v2473
        %v2475 = vpop.f32.mrb[0].mxu0
        %v2476 = vpop.f32.mrb[0].mxu0
        %v2477 = vadd.f32 0.0, %v2476
        %v2478 = vpop.f32.mrb[0].mxu0
        %2479 = vmatprep.mubr.bf16.mxu0 0
        %2480 = vmatmul.mubr.bf16.gmra.mrb[0].mxu0 %v2416
        %v2481 = vpop.f32.mrb[0].mxu0
        %v2482 = vadd.f32 0.0, %v2481
        %v2483 = vpop.f32.mrb[0].mxu0
        %v2484 = vpop.f32.mrb[0].mxu0
        %v2485 = vadd.f32 0.0, %v2484
        %v2486 = vpop.f32.mrb[0].mxu0
        %2487 = vmatprep.mubr.bf16.mxu0 0
        %2488 = vmatmul.mubr.bf16.gmra.mrb[0].mxu0 %v2419
        %v2489 = vpop.f32.mrb[0].mxu0
        %v2490 = vadd.f32 0.0, %v2489
        %v2491 = vpop.f32.mrb[0].mxu0
        %v2492 = vpop.f32.mrb[0].mxu0
        %v2493 = vadd.f32 0.0, %v2492
        %v2494 = vpop.f32.mrb[0].mxu0
        %2495 = vmatprep.mubr.bf16.mxu0 0
        %2496 = vmatmul.mubr.bf16.gmra.mrb[0].mxu0 %v2422
        %v2497 = vpop.f32.mrb[0].mxu0
        %v2498 = vadd.f32 0.0, %v2497
        %v2499 = vpop.f32.mrb[0].mxu0
        %v2500 = vpop.f32.mrb[0].mxu0
        %v2501 = vadd.f32 0.0, %v2500
        %v2502 = vpop.f32.mrb[0].mxu0
        %2503 = vmatprep.mubr.bf16.mxu0 0
        %2504 = vmatmul.mubr.bf16.gmra.mrb[0].mxu0 %v2425
        %v2505 = vpop.f32.mrb[0].mxu0
        %v2506 = vadd.f32 0.0, %v2505
        %v2507 = vpop.f32.mrb[0].mxu0
        %v2508 = vpop.f32.mrb[0].mxu0
        %v2509 = vadd.f32 0.0, %v2508
        %v2510 = vpop.f32.mrb[0].mxu0
        %2511 = vmatprep.mubr.bf16.mxu0 0
        %2512 = vmatmul.mubr.bf16.gmra.mrb[0].mxu0 %v2428
        %v2513 = vpop.f32.mrb[0].mxu0
        %v2514 = vadd.f32 0.0, %v2513
        %v2515 = vpop.f32.mrb[0].mxu0
        %v2516 = vpop.f32.mrb[0].mxu0
        %v2517 = vadd.f32 0.0, %v2516
        %v2518 = vpop.f32.mrb[0].mxu0
        %2519 = vmatprep.mubr.bf16.mxu0 0
        %2520 = vmatmul.mubr.bf16.gmra.mrb[0].mxu0 %v2431
        %v2521 = vpop.f32.mrb[0].mxu0
        %v2522 = vadd.f32 0.0, %v2521
        %v2523 = vpop.f32.mrb[0].mxu0
        %v2524 = vpop.f32.mrb[0].mxu0
        %v2525 = vadd.f32 0.0, %v2524
        %v2526 = vpop.f32.mrb[0].mxu0
        %2527 = vmatprep.mubr.bf16.mxu0 0
        %2528 = vmatmul.mubr.bf16.gmra.mrb[0].mxu0 %v2434
        %v2529 = vpop.f32.mrb[0].mxu0
        %v2530 = vadd.f32 0.0, %v2529
        %v2531 = vpop.f32.mrb[0].mxu0
        %v2532 = vpop.f32.mrb[0].mxu0
        %v2533 = vadd.f32 0.0, %v2532
        %v2534 = vpop.f32.mrb[0].mxu0
        %2535 = vdwg.mxu0
        %v2536 = vadd.f32 %v2367, %v2474
        %v2537 = vadd.f32 %v2368, %v2477
        %v2538 = vadd.f32 %v2369, %v2482
        %v2539 = vadd.f32 %v2370, %v2485
        %v2540 = vadd.f32 %v2371, %v2490
        %v2541 = vadd.f32 %v2372, %v2493
        %v2542 = vadd.f32 %v2373, %v2498
        %v2543 = vadd.f32 %v2374, %v2501
        %v2544 = vadd.f32 %v2375, %v2506
        %v2545 = vadd.f32 %v2376, %v2509
        %v2546 = vadd.f32 %v2377, %v2514
        %v2547 = vadd.f32 %v2378, %v2517
        %v2548 = vadd.f32 %v2379, %v2522
        %v2549 = vadd.f32 %v2380, %v2525
        %v2550 = vadd.f32 %v2381, %v2530
        %v2551 = vadd.f32 %v2382, %v2533
        %s2552 = scalar_lea.vmem %s3, 72
        %v2553 = vld [vmem:[%s2552] sm:$0xf]
        %v2554 = vld [vmem:[%s2552 + $0x4] sm:$0xf]
        %v2555 = vld [vmem:[%s2552 + $0x8] sm:$0xf]
        %v2559 = vunpack.c.l.b16 %v2553
        %v2560 = vunpack.c.l.b16 %v2554
        %v2561 = vunpack.c.l.b16 %v2555
        %v2562 = vpack.c.b16 %v2560, %v2559
        %v2563 = vpack.c.b16 %v2561, %v2561
        %v2566 = vsel %vm1749, %v2395, 0
        %v2569 = vsel %vm1774, %v2563, 0
        %2571 = vmatprep.subr.bf16.mxu0 0
        %2572 = vmatpush1.bf16.msra.mxu0 %v2562
        %2573 = vmatprep.subr.bf16.mxu0 0
        %2574 = vmatpush1.bf16.msra.mxu0 %v2569
        %2575 = vmatprep.subr.bf16.mxu0 0
        %2576 = vmatpush1.bf16.msra.mxu0 0
        %2577 = vmatprep.subr.bf16.mxu0 0
        %2578 = vmatpush1.bf16.msra.mxu0 0
        %2579 = vmatprep.subr.bf16.mxu0 0
        %2580 = vmatpush1.bf16.msra.mxu0 0
        %2581 = vmatprep.subr.bf16.mxu0 0
        %2582 = vmatpush1.bf16.msra.mxu0 0
        %2583 = vmatprep.subr.bf16.mxu0 0
        %2584 = vmatpush1.bf16.msra.mxu0 0
        %2585 = vmatprep.subr.bf16.mxu0 0
        %2586 = vmatpush1.bf16.msra.mxu0 0
        %2587 = vmatprep.subr.bf16.mxu0 0
        %2588 = vmatpush1.bf16.msra.mxu0 0
        %2589 = vmatprep.subr.bf16.mxu0 0
        %2590 = vmatpush1.bf16.msra.mxu0 0
        %2591 = vmatprep.subr.bf16.mxu0 0
        %2592 = vmatpush1.bf16.msra.mxu0 0
        %2593 = vmatprep.subr.bf16.mxu0 0
        %2594 = vmatpush1.bf16.msra.mxu0 0
        %2595 = vmatprep.subr.bf16.mxu0 0
        %2596 = vmatpush1.bf16.msra.mxu0 0
        %2597 = vmatprep.subr.bf16.mxu0 0
        %2598 = vmatpush1.bf16.msra.mxu0 0
        %2599 = vmatprep.subr.bf16.mxu0 0
        %2600 = vmatpush1.bf16.msra.mxu0 0
        %2601 = vmatprep.subr.bf16.mxu0 0
        %2602 = vmatpush1.bf16.msra.mxu0 0
        %2603 = vmatprep.mubr.bf16.mxu0 0
        %2604 = vmatmul.mubr.bf16.gmra.mrb[0].mxu0 %v2416
        %v2605 = vpop.f32.mrb[0].mxu0
        %v2606 = vadd.f32 0.0, %v2605
        %v2607 = vpop.f32.mrb[0].mxu0
        %v2608 = vpop.f32.mrb[0].mxu0
        %v2609 = vadd.f32 0.0, %v2608
        %v2610 = vpop.f32.mrb[0].mxu0
        %2611 = vmatprep.mubr.bf16.mxu0 0
        %2612 = vmatmul.mubr.bf16.gmra.mrb[0].mxu0 %v2419
        %v2613 = vpop.f32.mrb[0].mxu0
        %v2614 = vadd.f32 0.0, %v2613
        %v2615 = vpop.f32.mrb[0].mxu0
        %v2616 = vpop.f32.mrb[0].mxu0
        %v2617 = vadd.f32 0.0, %v2616
        %v2618 = vpop.f32.mrb[0].mxu0
        %2619 = vmatprep.mubr.bf16.mxu0 0
        %2620 = vmatmul.mubr.bf16.gmra.mrb[0].mxu0 %v2422
        %v2621 = vpop.f32.mrb[0].mxu0
        %v2622 = vadd.f32 0.0, %v2621
        %v2623 = vpop.f32.mrb[0].mxu0
        %v2624 = vpop.f32.mrb[0].mxu0
        %v2625 = vadd.f32 0.0, %v2624
        %v2626 = vpop.f32.mrb[0].mxu0
        %2627 = vmatprep.mubr.bf16.mxu0 0
        %2628 = vmatmul.mubr.bf16.gmra.mrb[0].mxu0 %v2425
        %v2629 = vpop.f32.mrb[0].mxu0
        %v2630 = vadd.f32 0.0, %v2629
        %v2631 = vpop.f32.mrb[0].mxu0
        %v2632 = vpop.f32.mrb[0].mxu0
        %v2633 = vadd.f32 0.0, %v2632
        %v2634 = vpop.f32.mrb[0].mxu0
        %2635 = vmatprep.mubr.bf16.mxu0 0
        %2636 = vmatmul.mubr.bf16.gmra.mrb[0].mxu0 %v2428
        %v2637 = vpop.f32.mrb[0].mxu0
        %v2638 = vadd.f32 0.0, %v2637
        %v2639 = vpop.f32.mrb[0].mxu0
        %v2640 = vpop.f32.mrb[0].mxu0
        %v2641 = vadd.f32 0.0, %v2640
        %v2642 = vpop.f32.mrb[0].mxu0
        %2643 = vmatprep.mubr.bf16.mxu0 0
        %2644 = vmatmul.mubr.bf16.gmra.mrb[0].mxu0 %v2431
        %v2645 = vpop.f32.mrb[0].mxu0
        %v2646 = vadd.f32 0.0, %v2645
        %v2647 = vpop.f32.mrb[0].mxu0
        %v2648 = vpop.f32.mrb[0].mxu0
        %v2649 = vadd.f32 0.0, %v2648
        %v2650 = vpop.f32.mrb[0].mxu0
        %2651 = vmatprep.mubr.bf16.mxu0 0
        %2652 = vmatmul.mubr.bf16.gmra.mrb[0].mxu0 %v2434
        %v2653 = vpop.f32.mrb[0].mxu0
        %v2654 = vadd.f32 0.0, %v2653
        %v2655 = vpop.f32.mrb[0].mxu0
        %v2656 = vpop.f32.mrb[0].mxu0
        %v2657 = vadd.f32 0.0, %v2656
        %v2658 = vpop.f32.mrb[0].mxu0
        %2659 = vmatprep.mubr.bf16.mxu0 0
        %2660 = vmatmul.mubr.bf16.gmra.mrb[0].mxu0 %v2566
        %v2661 = vpop.f32.mrb[0].mxu0
        %v2662 = vadd.f32 0.0, %v2661
        %v2663 = vpop.f32.mrb[0].mxu0
        %v2664 = vpop.f32.mrb[0].mxu0
        %v2665 = vadd.f32 0.0, %v2664
        %v2666 = vpop.f32.mrb[0].mxu0
        %2667 = vdwg.mxu0
        %v2668 = vadd.f32 %v2536, %v2606
        %v2669 = vadd.f32 %v2537, %v2609
        %v2670 = vadd.f32 %v2538, %v2614
        %v2671 = vadd.f32 %v2539, %v2617
        %v2672 = vadd.f32 %v2540, %v2622
        %v2673 = vadd.f32 %v2541, %v2625
        %v2674 = vadd.f32 %v2542, %v2630
        %v2675 = vadd.f32 %v2543, %v2633
        %v2676 = vadd.f32 %v2544, %v2638
        %v2677 = vadd.f32 %v2545, %v2641
        %v2678 = vadd.f32 %v2546, %v2646
        %v2679 = vadd.f32 %v2547, %v2649
        %v2680 = vadd.f32 %v2548, %v2654
        %v2681 = vadd.f32 %v2549, %v2657
        %v2682 = vadd.f32 %v2550, %v2662
        %v2683 = vadd.f32 %v2551, %v2665
        %s2684 = scalar_lea.vmem %s3, 84
        %v2685 = vld [vmem:[%s2684] sm:$0xf]
        %v2686 = vld [vmem:[%s2684 + $0x4] sm:$0xf]
        %v2687 = vld [vmem:[%s2684 + $0x8] sm:$0xf]
        %v2691 = vunpack.c.l.b16 %v2685
        %v2692 = vunpack.c.l.b16 %v2686
        %v2693 = vunpack.c.l.b16 %v2687
        %v2694 = vpack.c.b16 %v2692, %v2691
        %v2695 = vpack.c.b16 %v2693, %v2693
        %v2698 = vsel %vm1749, %v2396, 0
        %v2701 = vsel %vm1774, %v2695, 0
        %2703 = vmatprep.subr.bf16.mxu0 0
        %2704 = vmatpush1.bf16.msra.mxu0 %v2694
        %2705 = vmatprep.subr.bf16.mxu0 0
        %2706 = vmatpush1.bf16.msra.mxu0 %v2701
        %2707 = vmatprep.subr.bf16.mxu0 0
        %2708 = vmatpush1.bf16.msra.mxu0 0
        %2709 = vmatprep.subr.bf16.mxu0 0
        %2710 = vmatpush1.bf16.msra.mxu0 0
        %2711 = vmatprep.subr.bf16.mxu0 0
        %2712 = vmatpush1.bf16.msra.mxu0 0
        %2713 = vmatprep.subr.bf16.mxu0 0
        %2714 = vmatpush1.bf16.msra.mxu0 0
        %2715 = vmatprep.subr.bf16.mxu0 0
        %2716 = vmatpush1.bf16.msra.mxu0 0
        %2717 = vmatprep.subr.bf16.mxu0 0
        %2718 = vmatpush1.bf16.msra.mxu0 0
        %2719 = vmatprep.subr.bf16.mxu0 0
        %2720 = vmatpush1.bf16.msra.mxu0 0
        %2721 = vmatprep.subr.bf16.mxu0 0
        %2722 = vmatpush1.bf16.msra.mxu0 0
        %2723 = vmatprep.subr.bf16.mxu0 0
        %2724 = vmatpush1.bf16.msra.mxu0 0
        %2725 = vmatprep.subr.bf16.mxu0 0
        %2726 = vmatpush1.bf16.msra.mxu0 0
        %2727 = vmatprep.subr.bf16.mxu0 0
        %2728 = vmatpush1.bf16.msra.mxu0 0
        %2729 = vmatprep.subr.bf16.mxu0 0
        %2730 = vmatpush1.bf16.msra.mxu0 0
        %2731 = vmatprep.subr.bf16.mxu0 0
        %2732 = vmatpush1.bf16.msra.mxu0 0
        %2733 = vmatprep.subr.bf16.mxu0 0
        %2734 = vmatpush1.bf16.msra.mxu0 0
        %2735 = vmatprep.mubr.bf16.mxu0 0
        %2736 = vmatmul.mubr.bf16.gmra.mrb[0].mxu0 %v2419
        %v2737 = vpop.f32.mrb[0].mxu0
        %v2738 = vadd.f32 0.0, %v2737
        %v2739 = vpop.f32.mrb[0].mxu0
        %v2740 = vpop.f32.mrb[0].mxu0
        %v2741 = vadd.f32 0.0, %v2740
        %v2742 = vpop.f32.mrb[0].mxu0
        %2743 = vmatprep.mubr.bf16.mxu0 0
        %2744 = vmatmul.mubr.bf16.gmra.mrb[0].mxu0 %v2422
        %v2745 = vpop.f32.mrb[0].mxu0
        %v2746 = vadd.f32 0.0, %v2745
        %v2747 = vpop.f32.mrb[0].mxu0
        %v2748 = vpop.f32.mrb[0].mxu0
        %v2749 = vadd.f32 0.0, %v2748
        %v2750 = vpop.f32.mrb[0].mxu0
        %2751 = vmatprep.mubr.bf16.mxu0 0
        %2752 = vmatmul.mubr.bf16.gmra.mrb[0].mxu0 %v2425
        %v2753 = vpop.f32.mrb[0].mxu0
        %v2754 = vadd.f32 0.0, %v2753
        %v2755 = vpop.f32.mrb[0].mxu0
        %v2756 = vpop.f32.mrb[0].mxu0
        %v2757 = vadd.f32 0.0, %v2756
        %v2758 = vpop.f32.mrb[0].mxu0
        %2759 = vmatprep.mubr.bf16.mxu0 0
        %2760 = vmatmul.mubr.bf16.gmra.mrb[0].mxu0 %v2428
        %v2761 = vpop.f32.mrb[0].mxu0
        %v2762 = vadd.f32 0.0, %v2761
        %v2763 = vpop.f32.mrb[0].mxu0
        %v2764 = vpop.f32.mrb[0].mxu0
        %v2765 = vadd.f32 0.0, %v2764
        %v2766 = vpop.f32.mrb[0].mxu0
        %2767 = vmatprep.mubr.bf16.mxu0 0
        %2768 = vmatmul.mubr.bf16.gmra.mrb[0].mxu0 %v2431
        %v2769 = vpop.f32.mrb[0].mxu0
        %v2770 = vadd.f32 0.0, %v2769
        %v2771 = vpop.f32.mrb[0].mxu0
        %v2772 = vpop.f32.mrb[0].mxu0
        %v2773 = vadd.f32 0.0, %v2772
        %v2774 = vpop.f32.mrb[0].mxu0
        %2775 = vmatprep.mubr.bf16.mxu0 0
        %2776 = vmatmul.mubr.bf16.gmra.mrb[0].mxu0 %v2434
        %v2777 = vpop.f32.mrb[0].mxu0
        %v2778 = vadd.f32 0.0, %v2777
        %v2779 = vpop.f32.mrb[0].mxu0
        %v2780 = vpop.f32.mrb[0].mxu0
        %v2781 = vadd.f32 0.0, %v2780
        %v2782 = vpop.f32.mrb[0].mxu0
        %2783 = vmatprep.mubr.bf16.mxu0 0
        %2784 = vmatmul.mubr.bf16.gmra.mrb[0].mxu0 %v2566
        %v2785 = vpop.f32.mrb[0].mxu0
        %v2786 = vadd.f32 0.0, %v2785
        %v2787 = vpop.f32.mrb[0].mxu0
        %v2788 = vpop.f32.mrb[0].mxu0
        %v2789 = vadd.f32 0.0, %v2788
        %v2790 = vpop.f32.mrb[0].mxu0
        %2791 = vmatprep.mubr.bf16.mxu0 0
        %2792 = vmatmul.mubr.bf16.gmra.mrb[0].mxu0 %v2698
        %v2793 = vpop.f32.mrb[0].mxu0
        %v2794 = vadd.f32 0.0, %v2793
        %v2795 = vpop.f32.mrb[0].mxu0
        %v2796 = vpop.f32.mrb[0].mxu0
        %v2797 = vadd.f32 0.0, %v2796
        %v2798 = vpop.f32.mrb[0].mxu0
        %2799 = vdwg.mxu0
        %v2800 = vadd.f32 %v2668, %v2738
        %v2801 = vadd.f32 %v2669, %v2741
        %v2802 = vadd.f32 %v2670, %v2746
        %v2803 = vadd.f32 %v2671, %v2749
        %v2804 = vadd.f32 %v2672, %v2754
        %v2805 = vadd.f32 %v2673, %v2757
        %v2806 = vadd.f32 %v2674, %v2762
        %v2807 = vadd.f32 %v2675, %v2765
        %v2808 = vadd.f32 %v2676, %v2770
        %v2809 = vadd.f32 %v2677, %v2773
        %v2810 = vadd.f32 %v2678, %v2778
        %v2811 = vadd.f32 %v2679, %v2781
        %v2812 = vadd.f32 %v2680, %v2786
        %v2813 = vadd.f32 %v2681, %v2789
        %v2814 = vadd.f32 %v2682, %v2794
        %v2815 = vadd.f32 %v2683, %v2797
        %s2816 = scalar_lea.vmem %s3, 96
        %v2817 = vld [vmem:[%s2816] sm:$0xf]
        %v2818 = vld [vmem:[%s2816 + $0x4] sm:$0xf]
        %v2819 = vld [vmem:[%s2816 + $0x8] sm:$0xf]
        %v2823 = vunpack.c.l.b16 %v2817
        %v2824 = vunpack.c.l.b16 %v2818
        %v2825 = vunpack.c.l.b16 %v2819
        %v2826 = vpack.c.b16 %v2824, %v2823
        %v2827 = vpack.c.b16 %v2825, %v2825
        %v2830 = vsel %vm1749, %v2397, 0
        %v2833 = vsel %vm1774, %v2827, 0
        %2835 = vmatprep.subr.bf16.mxu0 0
        %2836 = vmatpush1.bf16.msra.mxu0 %v2826
        %2837 = vmatprep.subr.bf16.mxu0 0
        %2838 = vmatpush1.bf16.msra.mxu0 %v2833
        %2839 = vmatprep.subr.bf16.mxu0 0
        %2840 = vmatpush1.bf16.msra.mxu0 0
        %2841 = vmatprep.subr.bf16.mxu0 0
        %2842 = vmatpush1.bf16.msra.mxu0 0
        %2843 = vmatprep.subr.bf16.mxu0 0
        %2844 = vmatpush1.bf16.msra.mxu0 0
        %2845 = vmatprep.subr.bf16.mxu0 0
        %2846 = vmatpush1.bf16.msra.mxu0 0
        %2847 = vmatprep.subr.bf16.mxu0 0
        %2848 = vmatpush1.bf16.msra.mxu0 0
        %2849 = vmatprep.subr.bf16.mxu0 0
        %2850 = vmatpush1.bf16.msra.mxu0 0
        %2851 = vmatprep.subr.bf16.mxu0 0
        %2852 = vmatpush1.bf16.msra.mxu0 0
        %2853 = vmatprep.subr.bf16.mxu0 0
        %2854 = vmatpush1.bf16.msra.mxu0 0
        %2855 = vmatprep.subr.bf16.mxu0 0
        %2856 = vmatpush1.bf16.msra.mxu0 0
        %2857 = vmatprep.subr.bf16.mxu0 0
        %2858 = vmatpush1.bf16.msra.mxu0 0
        %2859 = vmatprep.subr.bf16.mxu0 0
        %2860 = vmatpush1.bf16.msra.mxu0 0
        %2861 = vmatprep.subr.bf16.mxu0 0
        %2862 = vmatpush1.bf16.msra.mxu0 0
        %2863 = vmatprep.subr.bf16.mxu0 0
        %2864 = vmatpush1.bf16.msra.mxu0 0
        %2865 = vmatprep.subr.bf16.mxu0 0
        %2866 = vmatpush1.bf16.msra.mxu0 0
        %2867 = vmatprep.mubr.bf16.mxu0 0
        %2868 = vmatmul.mubr.bf16.gmra.mrb[0].mxu0 %v2422
        %v2869 = vpop.f32.mrb[0].mxu0
        %v2870 = vadd.f32 0.0, %v2869
        %v2871 = vpop.f32.mrb[0].mxu0
        %v2872 = vpop.f32.mrb[0].mxu0
        %v2873 = vadd.f32 0.0, %v2872
        %v2874 = vpop.f32.mrb[0].mxu0
        %2875 = vmatprep.mubr.bf16.mxu0 0
        %2876 = vmatmul.mubr.bf16.gmra.mrb[0].mxu0 %v2425
        %v2877 = vpop.f32.mrb[0].mxu0
        %v2878 = vadd.f32 0.0, %v2877
        %v2879 = vpop.f32.mrb[0].mxu0
        %v2880 = vpop.f32.mrb[0].mxu0
        %v2881 = vadd.f32 0.0, %v2880
        %v2882 = vpop.f32.mrb[0].mxu0
        %2883 = vmatprep.mubr.bf16.mxu0 0
        %2884 = vmatmul.mubr.bf16.gmra.mrb[0].mxu0 %v2428
        %v2885 = vpop.f32.mrb[0].mxu0
        %v2886 = vadd.f32 0.0, %v2885
        %v2887 = vpop.f32.mrb[0].mxu0
        %v2888 = vpop.f32.mrb[0].mxu0
        %v2889 = vadd.f32 0.0, %v2888
        %v2890 = vpop.f32.mrb[0].mxu0
        %2891 = vmatprep.mubr.bf16.mxu0 0
        %2892 = vmatmul.mubr.bf16.gmra.mrb[0].mxu0 %v2431
        %v2893 = vpop.f32.mrb[0].mxu0
        %v2894 = vadd.f32 0.0, %v2893
        %v2895 = vpop.f32.mrb[0].mxu0
        %v2896 = vpop.f32.mrb[0].mxu0
        %v2897 = vadd.f32 0.0, %v2896
        %v2898 = vpop.f32.mrb[0].mxu0
        %2899 = vmatprep.mubr.bf16.mxu0 0
        %2900 = vmatmul.mubr.bf16.gmra.mrb[0].mxu0 %v2434
        %v2901 = vpop.f32.mrb[0].mxu0
        %v2902 = vadd.f32 0.0, %v2901
        %v2903 = vpop.f32.mrb[0].mxu0
        %v2904 = vpop.f32.mrb[0].mxu0
        %v2905 = vadd.f32 0.0, %v2904
        %v2906 = vpop.f32.mrb[0].mxu0
        %2907 = vmatprep.mubr.bf16.mxu0 0
        %2908 = vmatmul.mubr.bf16.gmra.mrb[0].mxu0 %v2566
        %v2909 = vpop.f32.mrb[0].mxu0
        %v2910 = vadd.f32 0.0, %v2909
        %v2911 = vpop.f32.mrb[0].mxu0
        %v2912 = vpop.f32.mrb[0].mxu0
        %v2913 = vadd.f32 0.0, %v2912
        %v2914 = vpop.f32.mrb[0].mxu0
        %2915 = vmatprep.mubr.bf16.mxu0 0
        %2916 = vmatmul.mubr.bf16.gmra.mrb[0].mxu0 %v2698
        %v2917 = vpop.f32.mrb[0].mxu0
        %v2918 = vadd.f32 0.0, %v2917
        %v2919 = vpop.f32.mrb[0].mxu0
        %v2920 = vpop.f32.mrb[0].mxu0
        %v2921 = vadd.f32 0.0, %v2920
        %v2922 = vpop.f32.mrb[0].mxu0
        %2923 = vmatprep.mubr.bf16.mxu0 0
        %2924 = vmatmul.mubr.bf16.gmra.mrb[0].mxu0 %v2830
        %v2925 = vpop.f32.mrb[0].mxu0
        %v2926 = vadd.f32 0.0, %v2925
        %v2927 = vpop.f32.mrb[0].mxu0
        %v2928 = vpop.f32.mrb[0].mxu0
        %v2929 = vadd.f32 0.0, %v2928
        %v2930 = vpop.f32.mrb[0].mxu0
        %2931 = vdwg.mxu0
        %v2932 = vadd.f32 %v2800, %v2870
        %v2933 = vadd.f32 %v2801, %v2873
        %v2934 = vadd.f32 %v2802, %v2878
        %v2935 = vadd.f32 %v2803, %v2881
        %v2936 = vadd.f32 %v2804, %v2886
        %v2937 = vadd.f32 %v2805, %v2889
        %v2938 = vadd.f32 %v2806, %v2894
        %v2939 = vadd.f32 %v2807, %v2897
        %v2940 = vadd.f32 %v2808, %v2902
        %v2941 = vadd.f32 %v2809, %v2905
        %v2942 = vadd.f32 %v2810, %v2910
        %v2943 = vadd.f32 %v2811, %v2913
        %v2944 = vadd.f32 %v2812, %v2918
        %v2945 = vadd.f32 %v2813, %v2921
        %v2946 = vadd.f32 %v2814, %v2926
        %v2947 = vadd.f32 %v2815, %v2929
        %s2948 = scalar_lea.vmem %s3, 108
        %v2949 = vld [vmem:[%s2948] sm:$0xf]
        %v2950 = vld [vmem:[%s2948 + $0x4] sm:$0xf]
        %v2951 = vld [vmem:[%s2948 + $0x8] sm:$0xf]
        %v2955 = vunpack.c.l.b16 %v2949
        %v2956 = vunpack.c.l.b16 %v2950
        %v2957 = vunpack.c.l.b16 %v2951
        %v2958 = vpack.c.b16 %v2956, %v2955
        %v2959 = vpack.c.b16 %v2957, %v2957
        %v2962 = vsel %vm1749, %v2398, 0
        %v2965 = vsel %vm1774, %v2959, 0
        %2967 = vmatprep.subr.bf16.mxu0 0
        %2968 = vmatpush1.bf16.msra.mxu0 %v2958
        %2969 = vmatprep.subr.bf16.mxu0 0
        %2970 = vmatpush1.bf16.msra.mxu0 %v2965
        %2971 = vmatprep.subr.bf16.mxu0 0
        %2972 = vmatpush1.bf16.msra.mxu0 0
        %2973 = vmatprep.subr.bf16.mxu0 0
        %2974 = vmatpush1.bf16.msra.mxu0 0
        %2975 = vmatprep.subr.bf16.mxu0 0
        %2976 = vmatpush1.bf16.msra.mxu0 0
        %2977 = vmatprep.subr.bf16.mxu0 0
        %2978 = vmatpush1.bf16.msra.mxu0 0
        %2979 = vmatprep.subr.bf16.mxu0 0
        %2980 = vmatpush1.bf16.msra.mxu0 0
        %2981 = vmatprep.subr.bf16.mxu0 0
        %2982 = vmatpush1.bf16.msra.mxu0 0
        %2983 = vmatprep.subr.bf16.mxu0 0
        %2984 = vmatpush1.bf16.msra.mxu0 0
        %2985 = vmatprep.subr.bf16.mxu0 0
        %2986 = vmatpush1.bf16.msra.mxu0 0
        %2987 = vmatprep.subr.bf16.mxu0 0
        %2988 = vmatpush1.bf16.msra.mxu0 0
        %2989 = vmatprep.subr.bf16.mxu0 0
        %2990 = vmatpush1.bf16.msra.mxu0 0
        %2991 = vmatprep.subr.bf16.mxu0 0
        %2992 = vmatpush1.bf16.msra.mxu0 0
        %2993 = vmatprep.subr.bf16.mxu0 0
        %2994 = vmatpush1.bf16.msra.mxu0 0
        %2995 = vmatprep.subr.bf16.mxu0 0
        %2996 = vmatpush1.bf16.msra.mxu0 0
        %2997 = vmatprep.subr.bf16.mxu0 0
        %2998 = vmatpush1.bf16.msra.mxu0 0
        %2999 = vmatprep.mubr.bf16.mxu0 0
        %3000 = vmatmul.mubr.bf16.gmra.mrb[0].mxu0 %v2425
        %v3001 = vpop.f32.mrb[0].mxu0
        %v3002 = vadd.f32 0.0, %v3001
        %v3003 = vpop.f32.mrb[0].mxu0
        %v3004 = vpop.f32.mrb[0].mxu0
        %v3005 = vadd.f32 0.0, %v3004
        %v3006 = vpop.f32.mrb[0].mxu0
        %3007 = vmatprep.mubr.bf16.mxu0 0
        %3008 = vmatmul.mubr.bf16.gmra.mrb[0].mxu0 %v2428
        %v3009 = vpop.f32.mrb[0].mxu0
        %v3010 = vadd.f32 0.0, %v3009
        %v3011 = vpop.f32.mrb[0].mxu0
        %v3012 = vpop.f32.mrb[0].mxu0
        %v3013 = vadd.f32 0.0, %v3012
        %v3014 = vpop.f32.mrb[0].mxu0
        %3015 = vmatprep.mubr.bf16.mxu0 0
        %3016 = vmatmul.mubr.bf16.gmra.mrb[0].mxu0 %v2431
        %v3017 = vpop.f32.mrb[0].mxu0
        %v3018 = vadd.f32 0.0, %v3017
        %v3019 = vpop.f32.mrb[0].mxu0
        %v3020 = vpop.f32.mrb[0].mxu0
        %v3021 = vadd.f32 0.0, %v3020
        %v3022 = vpop.f32.mrb[0].mxu0
        %3023 = vmatprep.mubr.bf16.mxu0 0
        %3024 = vmatmul.mubr.bf16.gmra.mrb[0].mxu0 %v2434
        %v3025 = vpop.f32.mrb[0].mxu0
        %v3026 = vadd.f32 0.0, %v3025
        %v3027 = vpop.f32.mrb[0].mxu0
        %v3028 = vpop.f32.mrb[0].mxu0
        %v3029 = vadd.f32 0.0, %v3028
        %v3030 = vpop.f32.mrb[0].mxu0
        %3031 = vmatprep.mubr.bf16.mxu0 0
        %3032 = vmatmul.mubr.bf16.gmra.mrb[0].mxu0 %v2566
        %v3033 = vpop.f32.mrb[0].mxu0
        %v3034 = vadd.f32 0.0, %v3033
        %v3035 = vpop.f32.mrb[0].mxu0
        %v3036 = vpop.f32.mrb[0].mxu0
        %v3037 = vadd.f32 0.0, %v3036
        %v3038 = vpop.f32.mrb[0].mxu0
        %3039 = vmatprep.mubr.bf16.mxu0 0
        %3040 = vmatmul.mubr.bf16.gmra.mrb[0].mxu0 %v2698
        %v3041 = vpop.f32.mrb[0].mxu0
        %v3042 = vadd.f32 0.0, %v3041
        %v3043 = vpop.f32.mrb[0].mxu0
        %v3044 = vpop.f32.mrb[0].mxu0
        %v3045 = vadd.f32 0.0, %v3044
        %v3046 = vpop.f32.mrb[0].mxu0
        %3047 = vmatprep.mubr.bf16.mxu0 0
        %3048 = vmatmul.mubr.bf16.gmra.mrb[0].mxu0 %v2830
        %v3049 = vpop.f32.mrb[0].mxu0
        %v3050 = vadd.f32 0.0, %v3049
        %v3051 = vpop.f32.mrb[0].mxu0
        %v3052 = vpop.f32.mrb[0].mxu0
        %v3053 = vadd.f32 0.0, %v3052
        %v3054 = vpop.f32.mrb[0].mxu0
        %3055 = vmatprep.mubr.bf16.mxu0 0
        %3056 = vmatmul.mubr.bf16.gmra.mrb[0].mxu0 %v2962
        %v3057 = vpop.f32.mrb[0].mxu0
        %v3058 = vadd.f32 0.0, %v3057
        %v3059 = vpop.f32.mrb[0].mxu0
        %v3060 = vpop.f32.mrb[0].mxu0
        %v3061 = vadd.f32 0.0, %v3060
        %v3062 = vpop.f32.mrb[0].mxu0
        %3063 = vdwg.mxu0
        %v3064 = vadd.f32 %v2932, %v3002
        %v3065 = vadd.f32 %v2933, %v3005
        %v3066 = vadd.f32 %v2934, %v3010
        %v3067 = vadd.f32 %v2935, %v3013
        %v3068 = vadd.f32 %v2936, %v3018
        %v3069 = vadd.f32 %v2937, %v3021
        %v3070 = vadd.f32 %v2938, %v3026
        %v3071 = vadd.f32 %v2939, %v3029
        %v3072 = vadd.f32 %v2940, %v3034
        %v3073 = vadd.f32 %v2941, %v3037
        %v3074 = vadd.f32 %v2942, %v3042
        %v3075 = vadd.f32 %v2943, %v3045
        %v3076 = vadd.f32 %v2944, %v3050
        %v3077 = vadd.f32 %v2945, %v3053
        %v3078 = vadd.f32 %v2946, %v3058
        %v3079 = vadd.f32 %v2947, %v3061
        %s3080 = sadd.s32 %s1713, 2
        %s3081 = smul.u32 %s3080, 13
        %s3082 = smul.addr %s3081, 8
        %s3083 = scalar_lea.vmem [#allocation2], %s3082
        %v3084 = vld [vmem:[%s3083] sm:$0xff]
        %v3085 = vld [vmem:[%s3083 + $0x8] sm:$0xff]
        %v3086 = vld [vmem:[%s3083 + $0x10] sm:$0xff]
        %v3087 = vld [vmem:[%s3083 + $0x18] sm:$0xff]
        %v3088 = vld [vmem:[%s3083 + $0x20] sm:$0xff]
        %v3089 = vld [vmem:[%s3083 + $0x28] sm:$0xff]
        %v3090 = vld [vmem:[%s3083 + $0x30] sm:$0xff]
        %v3091 = vld [vmem:[%s3083 + $0x38] sm:$0xff]
        %v3092 = vld [vmem:[%s3083 + $0x40] sm:$0xff]
        %v3093 = vld [vmem:[%s3083 + $0x48] sm:$0xff]
        %v3094 = vld [vmem:[%s3083 + $0x50] sm:$0xff]
        %v3095 = vld [vmem:[%s3083 + $0x58] sm:$0xff]
        %s3096 = scalar_lea.vmem %s3, 120
        %v3097 = vld [vmem:[%s3096] sm:$0xf]
        %v3098 = vld [vmem:[%s3096 + $0x4] sm:$0xf]
        %v3099 = vld [vmem:[%s3096 + $0x8] sm:$0xf]
        %v3103 = vunpack.c.l.b16 %v3097
        %v3104 = vunpack.c.l.b16 %v3098
        %v3105 = vunpack.c.l.b16 %v3099
        %v3106 = vpack.c.b16 %v3104, %v3103
        %v3107 = vpack.c.b16 %v3105, %v3105
        %v3110 = vsel %vm1749, %v3084, 0
        %v3113 = vsel %vm1749, %v3085, 0
        %v3116 = vsel %vm1749, %v3086, 0
        %v3119 = vsel %vm1749, %v3087, 0
        %v3122 = vsel %vm1749, %v3088, 0
        %v3125 = vsel %vm1749, %v3089, 0
        %v3128 = vsel %vm1749, %v3090, 0
        %v3131 = vsel %vm1749, %v3091, 0
        %v3134 = vsel %vm1774, %v3107, 0
        %3136 = vmatprep.subr.bf16.mxu0 0
        %3137 = vmatpush1.bf16.msra.mxu0 %v3106
        %3138 = vmatprep.subr.bf16.mxu0 0
        %3139 = vmatpush1.bf16.msra.mxu0 %v3134
        %3140 = vmatprep.subr.bf16.mxu0 0
        %3141 = vmatpush1.bf16.msra.mxu0 0
        %3142 = vmatprep.subr.bf16.mxu0 0
        %3143 = vmatpush1.bf16.msra.mxu0 0
        %3144 = vmatprep.subr.bf16.mxu0 0
        %3145 = vmatpush1.bf16.msra.mxu0 0
        %3146 = vmatprep.subr.bf16.mxu0 0
        %3147 = vmatpush1.bf16.msra.mxu0 0
        %3148 = vmatprep.subr.bf16.mxu0 0
        %3149 = vmatpush1.bf16.msra.mxu0 0
        %3150 = vmatprep.subr.bf16.mxu0 0
        %3151 = vmatpush1.bf16.msra.mxu0 0
        %3152 = vmatprep.subr.bf16.mxu0 0
        %3153 = vmatpush1.bf16.msra.mxu0 0
        %3154 = vmatprep.subr.bf16.mxu0 0
        %3155 = vmatpush1.bf16.msra.mxu0 0
        %3156 = vmatprep.subr.bf16.mxu0 0
        %3157 = vmatpush1.bf16.msra.mxu0 0
        %3158 = vmatprep.subr.bf16.mxu0 0
        %3159 = vmatpush1.bf16.msra.mxu0 0
        %3160 = vmatprep.subr.bf16.mxu0 0
        %3161 = vmatpush1.bf16.msra.mxu0 0
        %3162 = vmatprep.subr.bf16.mxu0 0
        %3163 = vmatpush1.bf16.msra.mxu0 0
        %3164 = vmatprep.subr.bf16.mxu0 0
        %3165 = vmatpush1.bf16.msra.mxu0 0
        %3166 = vmatprep.subr.bf16.mxu0 0
        %3167 = vmatpush1.bf16.msra.mxu0 0
        %3168 = vmatprep.mubr.bf16.mxu0 0
        %3169 = vmatmul.mubr.bf16.gmra.mrb[0].mxu0 %v3110
        %v3170 = vpop.f32.mrb[0].mxu0
        %v3171 = vadd.f32 0.0, %v3170
        %v3172 = vpop.f32.mrb[0].mxu0
        %v3173 = vpop.f32.mrb[0].mxu0
        %v3174 = vadd.f32 0.0, %v3173
        %v3175 = vpop.f32.mrb[0].mxu0
        %3176 = vmatprep.mubr.bf16.mxu0 0
        %3177 = vmatmul.mubr.bf16.gmra.mrb[0].mxu0 %v3113
        %v3178 = vpop.f32.mrb[0].mxu0
        %v3179 = vadd.f32 0.0, %v3178
        %v3180 = vpop.f32.mrb[0].mxu0
        %v3181 = vpop.f32.mrb[0].mxu0
        %v3182 = vadd.f32 0.0, %v3181
        %v3183 = vpop.f32.mrb[0].mxu0
        %3184 = vmatprep.mubr.bf16.mxu0 0
        %3185 = vmatmul.mubr.bf16.gmra.mrb[0].mxu0 %v3116
        %v3186 = vpop.f32.mrb[0].mxu0
        %v3187 = vadd.f32 0.0, %v3186
        %v3188 = vpop.f32.mrb[0].mxu0
        %v3189 = vpop.f32.mrb[0].mxu0
        %v3190 = vadd.f32 0.0, %v3189
        %v3191 = vpop.f32.mrb[0].mxu0
        %3192 = vmatprep.mubr.bf16.mxu0 0
        %3193 = vmatmul.mubr.bf16.gmra.mrb[0].mxu0 %v3119
        %v3194 = vpop.f32.mrb[0].mxu0
        %v3195 = vadd.f32 0.0, %v3194
        %v3196 = vpop.f32.mrb[0].mxu0
        %v3197 = vpop.f32.mrb[0].mxu0
        %v3198 = vadd.f32 0.0, %v3197
        %v3199 = vpop.f32.mrb[0].mxu0
        %3200 = vmatprep.mubr.bf16.mxu0 0
        %3201 = vmatmul.mubr.bf16.gmra.mrb[0].mxu0 %v3122
        %v3202 = vpop.f32.mrb[0].mxu0
        %v3203 = vadd.f32 0.0, %v3202
        %v3204 = vpop.f32.mrb[0].mxu0
        %v3205 = vpop.f32.mrb[0].mxu0
        %v3206 = vadd.f32 0.0, %v3205
        %v3207 = vpop.f32.mrb[0].mxu0
        %3208 = vmatprep.mubr.bf16.mxu0 0
        %3209 = vmatmul.mubr.bf16.gmra.mrb[0].mxu0 %v3125
        %v3210 = vpop.f32.mrb[0].mxu0
        %v3211 = vadd.f32 0.0, %v3210
        %v3212 = vpop.f32.mrb[0].mxu0
        %v3213 = vpop.f32.mrb[0].mxu0
        %v3214 = vadd.f32 0.0, %v3213
        %v3215 = vpop.f32.mrb[0].mxu0
        %3216 = vmatprep.mubr.bf16.mxu0 0
        %3217 = vmatmul.mubr.bf16.gmra.mrb[0].mxu0 %v3128
        %v3218 = vpop.f32.mrb[0].mxu0
        %v3219 = vadd.f32 0.0, %v3218
        %v3220 = vpop.f32.mrb[0].mxu0
        %v3221 = vpop.f32.mrb[0].mxu0
        %v3222 = vadd.f32 0.0, %v3221
        %v3223 = vpop.f32.mrb[0].mxu0
        %3224 = vmatprep.mubr.bf16.mxu0 0
        %3225 = vmatmul.mubr.bf16.gmra.mrb[0].mxu0 %v3131
        %v3226 = vpop.f32.mrb[0].mxu0
        %v3227 = vadd.f32 0.0, %v3226
        %v3228 = vpop.f32.mrb[0].mxu0
        %v3229 = vpop.f32.mrb[0].mxu0
        %v3230 = vadd.f32 0.0, %v3229
        %v3231 = vpop.f32.mrb[0].mxu0
        %3232 = vdwg.mxu0
        %v3233 = vadd.f32 %v3064, %v3171
        %v3234 = vadd.f32 %v3065, %v3174
        %v3235 = vadd.f32 %v3066, %v3179
        %v3236 = vadd.f32 %v3067, %v3182
        %v3237 = vadd.f32 %v3068, %v3187
        %v3238 = vadd.f32 %v3069, %v3190
        %v3239 = vadd.f32 %v3070, %v3195
        %v3240 = vadd.f32 %v3071, %v3198
        %v3241 = vadd.f32 %v3072, %v3203
        %v3242 = vadd.f32 %v3073, %v3206
        %v3243 = vadd.f32 %v3074, %v3211
        %v3244 = vadd.f32 %v3075, %v3214
        %v3245 = vadd.f32 %v3076, %v3219
        %v3246 = vadd.f32 %v3077, %v3222
        %v3247 = vadd.f32 %v3078, %v3227
        %v3248 = vadd.f32 %v3079, %v3230
        %s3249 = scalar_lea.vmem %s3, 132
        %v3250 = vld [vmem:[%s3249] sm:$0xf]
        %v3251 = vld [vmem:[%s3249 + $0x4] sm:$0xf]
        %v3252 = vld [vmem:[%s3249 + $0x8] sm:$0xf]
        %v3256 = vunpack.c.l.b16 %v3250
        %v3257 = vunpack.c.l.b16 %v3251
        %v3258 = vunpack.c.l.b16 %v3252
        %v3259 = vpack.c.b16 %v3257, %v3256
        %v3260 = vpack.c.b16 %v3258, %v3258
        %v3263 = vsel %vm1749, %v3092, 0
        %v3266 = vsel %vm1774, %v3260, 0
        %3268 = vmatprep.subr.bf16.mxu0 0
        %3269 = vmatpush1.bf16.msra.mxu0 %v3259
        %3270 = vmatprep.subr.bf16.mxu0 0
        %3271 = vmatpush1.bf16.msra.mxu0 %v3266
        %3272 = vmatprep.subr.bf16.mxu0 0
        %3273 = vmatpush1.bf16.msra.mxu0 0
        %3274 = vmatprep.subr.bf16.mxu0 0
        %3275 = vmatpush1.bf16.msra.mxu0 0
        %3276 = vmatprep.subr.bf16.mxu0 0
        %3277 = vmatpush1.bf16.msra.mxu0 0
        %3278 = vmatprep.subr.bf16.mxu0 0
        %3279 = vmatpush1.bf16.msra.mxu0 0
        %3280 = vmatprep.subr.bf16.mxu0 0
        %3281 = vmatpush1.bf16.msra.mxu0 0
        %3282 = vmatprep.subr.bf16.mxu0 0
        %3283 = vmatpush1.bf16.msra.mxu0 0
        %3284 = vmatprep.subr.bf16.mxu0 0
        %3285 = vmatpush1.bf16.msra.mxu0 0
        %3286 = vmatprep.subr.bf16.mxu0 0
        %3287 = vmatpush1.bf16.msra.mxu0 0
        %3288 = vmatprep.subr.bf16.mxu0 0
        %3289 = vmatpush1.bf16.msra.mxu0 0
        %3290 = vmatprep.subr.bf16.mxu0 0
        %3291 = vmatpush1.bf16.msra.mxu0 0
        %3292 = vmatprep.subr.bf16.mxu0 0
        %3293 = vmatpush1.bf16.msra.mxu0 0
        %3294 = vmatprep.subr.bf16.mxu0 0
        %3295 = vmatpush1.bf16.msra.mxu0 0
        %3296 = vmatprep.subr.bf16.mxu0 0
        %3297 = vmatpush1.bf16.msra.mxu0 0
        %3298 = vmatprep.subr.bf16.mxu0 0
        %3299 = vmatpush1.bf16.msra.mxu0 0
        %3300 = vmatprep.mubr.bf16.mxu0 0
        %3301 = vmatmul.mubr.bf16.gmra.mrb[0].mxu0 %v3113
        %v3302 = vpop.f32.mrb[0].mxu0
        %v3303 = vadd.f32 0.0, %v3302
        %v3304 = vpop.f32.mrb[0].mxu0
        %v3305 = vpop.f32.mrb[0].mxu0
        %v3306 = vadd.f32 0.0, %v3305
        %v3307 = vpop.f32.mrb[0].mxu0
        %3308 = vmatprep.mubr.bf16.mxu0 0
        %3309 = vmatmul.mubr.bf16.gmra.mrb[0].mxu0 %v3116
        %v3310 = vpop.f32.mrb[0].mxu0
        %v3311 = vadd.f32 0.0, %v3310
        %v3312 = vpop.f32.mrb[0].mxu0
        %v3313 = vpop.f32.mrb[0].mxu0
        %v3314 = vadd.f32 0.0, %v3313
        %v3315 = vpop.f32.mrb[0].mxu0
        %3316 = vmatprep.mubr.bf16.mxu0 0
        %3317 = vmatmul.mubr.bf16.gmra.mrb[0].mxu0 %v3119
        %v3318 = vpop.f32.mrb[0].mxu0
        %v3319 = vadd.f32 0.0, %v3318
        %v3320 = vpop.f32.mrb[0].mxu0
        %v3321 = vpop.f32.mrb[0].mxu0
        %v3322 = vadd.f32 0.0, %v3321
        %v3323 = vpop.f32.mrb[0].mxu0
        %3324 = vmatprep.mubr.bf16.mxu0 0
        %3325 = vmatmul.mubr.bf16.gmra.mrb[0].mxu0 %v3122
        %v3326 = vpop.f32.mrb[0].mxu0
        %v3327 = vadd.f32 0.0, %v3326
        %v3328 = vpop.f32.mrb[0].mxu0
        %v3329 = vpop.f32.mrb[0].mxu0
        %v3330 = vadd.f32 0.0, %v3329
        %v3331 = vpop.f32.mrb[0].mxu0
        %3332 = vmatprep.mubr.bf16.mxu0 0
        %3333 = vmatmul.mubr.bf16.gmra.mrb[0].mxu0 %v3125
        %v3334 = vpop.f32.mrb[0].mxu0
        %v3335 = vadd.f32 0.0, %v3334
        %v3336 = vpop.f32.mrb[0].mxu0
        %v3337 = vpop.f32.mrb[0].mxu0
        %v3338 = vadd.f32 0.0, %v3337
        %v3339 = vpop.f32.mrb[0].mxu0
        %3340 = vmatprep.mubr.bf16.mxu0 0
        %3341 = vmatmul.mubr.bf16.gmra.mrb[0].mxu0 %v3128
        %v3342 = vpop.f32.mrb[0].mxu0
        %v3343 = vadd.f32 0.0, %v3342
        %v3344 = vpop.f32.mrb[0].mxu0
        %v3345 = vpop.f32.mrb[0].mxu0
        %v3346 = vadd.f32 0.0, %v3345
        %v3347 = vpop.f32.mrb[0].mxu0
        %3348 = vmatprep.mubr.bf16.mxu0 0
        %3349 = vmatmul.mubr.bf16.gmra.mrb[0].mxu0 %v3131
        %v3350 = vpop.f32.mrb[0].mxu0
        %v3351 = vadd.f32 0.0, %v3350
        %v3352 = vpop.f32.mrb[0].mxu0
        %v3353 = vpop.f32.mrb[0].mxu0
        %v3354 = vadd.f32 0.0, %v3353
        %v3355 = vpop.f32.mrb[0].mxu0
        %3356 = vmatprep.mubr.bf16.mxu0 0
        %3357 = vmatmul.mubr.bf16.gmra.mrb[0].mxu0 %v3263
        %v3358 = vpop.f32.mrb[0].mxu0
        %v3359 = vadd.f32 0.0, %v3358
        %v3360 = vpop.f32.mrb[0].mxu0
        %v3361 = vpop.f32.mrb[0].mxu0
        %v3362 = vadd.f32 0.0, %v3361
        %v3363 = vpop.f32.mrb[0].mxu0
        %3364 = vdwg.mxu0
        %v3365 = vadd.f32 %v3233, %v3303
        %v3366 = vadd.f32 %v3234, %v3306
        %v3367 = vadd.f32 %v3235, %v3311
        %v3368 = vadd.f32 %v3236, %v3314
        %v3369 = vadd.f32 %v3237, %v3319
        %v3370 = vadd.f32 %v3238, %v3322
        %v3371 = vadd.f32 %v3239, %v3327
        %v3372 = vadd.f32 %v3240, %v3330
        %v3373 = vadd.f32 %v3241, %v3335
        %v3374 = vadd.f32 %v3242, %v3338
        %v3375 = vadd.f32 %v3243, %v3343
        %v3376 = vadd.f32 %v3244, %v3346
        %v3377 = vadd.f32 %v3245, %v3351
        %v3378 = vadd.f32 %v3246, %v3354
        %v3379 = vadd.f32 %v3247, %v3359
        %v3380 = vadd.f32 %v3248, %v3362
        %s3381 = scalar_lea.vmem %s3, 144
        %v3382 = vld [vmem:[%s3381] sm:$0xf]
        %v3383 = vld [vmem:[%s3381 + $0x4] sm:$0xf]
        %v3384 = vld [vmem:[%s3381 + $0x8] sm:$0xf]
        %v3388 = vunpack.c.l.b16 %v3382
        %v3389 = vunpack.c.l.b16 %v3383
        %v3390 = vunpack.c.l.b16 %v3384
        %v3391 = vpack.c.b16 %v3389, %v3388
        %v3392 = vpack.c.b16 %v3390, %v3390
        %v3395 = vsel %vm1749, %v3093, 0
        %v3398 = vsel %vm1774, %v3392, 0
        %3400 = vmatprep.subr.bf16.mxu0 0
        %3401 = vmatpush1.bf16.msra.mxu0 %v3391
        %3402 = vmatprep.subr.bf16.mxu0 0
        %3403 = vmatpush1.bf16.msra.mxu0 %v3398
        %3404 = vmatprep.subr.bf16.mxu0 0
        %3405 = vmatpush1.bf16.msra.mxu0 0
        %3406 = vmatprep.subr.bf16.mxu0 0
        %3407 = vmatpush1.bf16.msra.mxu0 0
        %3408 = vmatprep.subr.bf16.mxu0 0
        %3409 = vmatpush1.bf16.msra.mxu0 0
        %3410 = vmatprep.subr.bf16.mxu0 0
        %3411 = vmatpush1.bf16.msra.mxu0 0
        %3412 = vmatprep.subr.bf16.mxu0 0
        %3413 = vmatpush1.bf16.msra.mxu0 0
        %3414 = vmatprep.subr.bf16.mxu0 0
        %3415 = vmatpush1.bf16.msra.mxu0 0
        %3416 = vmatprep.subr.bf16.mxu0 0
        %3417 = vmatpush1.bf16.msra.mxu0 0
        %3418 = vmatprep.subr.bf16.mxu0 0
        %3419 = vmatpush1.bf16.msra.mxu0 0
        %3420 = vmatprep.subr.bf16.mxu0 0
        %3421 = vmatpush1.bf16.msra.mxu0 0
        %3422 = vmatprep.subr.bf16.mxu0 0
        %3423 = vmatpush1.bf16.msra.mxu0 0
        %3424 = vmatprep.subr.bf16.mxu0 0
        %3425 = vmatpush1.bf16.msra.mxu0 0
        %3426 = vmatprep.subr.bf16.mxu0 0
        %3427 = vmatpush1.bf16.msra.mxu0 0
        %3428 = vmatprep.subr.bf16.mxu0 0
        %3429 = vmatpush1.bf16.msra.mxu0 0
        %3430 = vmatprep.subr.bf16.mxu0 0
        %3431 = vmatpush1.bf16.msra.mxu0 0
        %3432 = vmatprep.mubr.bf16.mxu0 0
        %3433 = vmatmul.mubr.bf16.gmra.mrb[0].mxu0 %v3116
        %v3434 = vpop.f32.mrb[0].mxu0
        %v3435 = vadd.f32 0.0, %v3434
        %v3436 = vpop.f32.mrb[0].mxu0
        %v3437 = vpop.f32.mrb[0].mxu0
        %v3438 = vadd.f32 0.0, %v3437
        %v3439 = vpop.f32.mrb[0].mxu0
        %3440 = vmatprep.mubr.bf16.mxu0 0
        %3441 = vmatmul.mubr.bf16.gmra.mrb[0].mxu0 %v3119
        %v3442 = vpop.f32.mrb[0].mxu0
        %v3443 = vadd.f32 0.0, %v3442
        %v3444 = vpop.f32.mrb[0].mxu0
        %v3445 = vpop.f32.mrb[0].mxu0
        %v3446 = vadd.f32 0.0, %v3445
        %v3447 = vpop.f32.mrb[0].mxu0
        %3448 = vmatprep.mubr.bf16.mxu0 0
        %3449 = vmatmul.mubr.bf16.gmra.mrb[0].mxu0 %v3122
        %v3450 = vpop.f32.mrb[0].mxu0
        %v3451 = vadd.f32 0.0, %v3450
        %v3452 = vpop.f32.mrb[0].mxu0
        %v3453 = vpop.f32.mrb[0].mxu0
        %v3454 = vadd.f32 0.0, %v3453
        %v3455 = vpop.f32.mrb[0].mxu0
        %3456 = vmatprep.mubr.bf16.mxu0 0
        %3457 = vmatmul.mubr.bf16.gmra.mrb[0].mxu0 %v3125
        %v3458 = vpop.f32.mrb[0].mxu0
        %v3459 = vadd.f32 0.0, %v3458
        %v3460 = vpop.f32.mrb[0].mxu0
        %v3461 = vpop.f32.mrb[0].mxu0
        %v3462 = vadd.f32 0.0, %v3461
        %v3463 = vpop.f32.mrb[0].mxu0
        %3464 = vmatprep.mubr.bf16.mxu0 0
        %3465 = vmatmul.mubr.bf16.gmra.mrb[0].mxu0 %v3128
        %v3466 = vpop.f32.mrb[0].mxu0
        %v3467 = vadd.f32 0.0, %v3466
        %v3468 = vpop.f32.mrb[0].mxu0
        %v3469 = vpop.f32.mrb[0].mxu0
        %v3470 = vadd.f32 0.0, %v3469
        %v3471 = vpop.f32.mrb[0].mxu0
        %3472 = vmatprep.mubr.bf16.mxu0 0
        %3473 = vmatmul.mubr.bf16.gmra.mrb[0].mxu0 %v3131
        %v3474 = vpop.f32.mrb[0].mxu0
        %v3475 = vadd.f32 0.0, %v3474
        %v3476 = vpop.f32.mrb[0].mxu0
        %v3477 = vpop.f32.mrb[0].mxu0
        %v3478 = vadd.f32 0.0, %v3477
        %v3479 = vpop.f32.mrb[0].mxu0
        %3480 = vmatprep.mubr.bf16.mxu0 0
        %3481 = vmatmul.mubr.bf16.gmra.mrb[0].mxu0 %v3263
        %v3482 = vpop.f32.mrb[0].mxu0
        %v3483 = vadd.f32 0.0, %v3482
        %v3484 = vpop.f32.mrb[0].mxu0
        %v3485 = vpop.f32.mrb[0].mxu0
        %v3486 = vadd.f32 0.0, %v3485
        %v3487 = vpop.f32.mrb[0].mxu0
        %3488 = vmatprep.mubr.bf16.mxu0 0
        %3489 = vmatmul.mubr.bf16.gmra.mrb[0].mxu0 %v3395
        %v3490 = vpop.f32.mrb[0].mxu0
        %v3491 = vadd.f32 0.0, %v3490
        %v3492 = vpop.f32.mrb[0].mxu0
        %v3493 = vpop.f32.mrb[0].mxu0
        %v3494 = vadd.f32 0.0, %v3493
        %v3495 = vpop.f32.mrb[0].mxu0
        %3496 = vdwg.mxu0
        %v3497 = vadd.f32 %v3365, %v3435
        %v3498 = vadd.f32 %v3366, %v3438
        %v3499 = vadd.f32 %v3367, %v3443
        %v3500 = vadd.f32 %v3368, %v3446
        %v3501 = vadd.f32 %v3369, %v3451
        %v3502 = vadd.f32 %v3370, %v3454
        %v3503 = vadd.f32 %v3371, %v3459
        %v3504 = vadd.f32 %v3372, %v3462
        %v3505 = vadd.f32 %v3373, %v3467
        %v3506 = vadd.f32 %v3374, %v3470
        %v3507 = vadd.f32 %v3375, %v3475
        %v3508 = vadd.f32 %v3376, %v3478
        %v3509 = vadd.f32 %v3377, %v3483
        %v3510 = vadd.f32 %v3378, %v3486
        %v3511 = vadd.f32 %v3379, %v3491
        %v3512 = vadd.f32 %v3380, %v3494
        %s3513 = scalar_lea.vmem %s3, 156
        %v3514 = vld [vmem:[%s3513] sm:$0xf]
        %v3515 = vld [vmem:[%s3513 + $0x4] sm:$0xf]
        %v3516 = vld [vmem:[%s3513 + $0x8] sm:$0xf]
        %v3520 = vunpack.c.l.b16 %v3514
        %v3521 = vunpack.c.l.b16 %v3515
        %v3522 = vunpack.c.l.b16 %v3516
        %v3523 = vpack.c.b16 %v3521, %v3520
        %v3524 = vpack.c.b16 %v3522, %v3522
        %v3527 = vsel %vm1749, %v3094, 0
        %v3530 = vsel %vm1774, %v3524, 0
        %3532 = vmatprep.subr.bf16.mxu0 0
        %3533 = vmatpush1.bf16.msra.mxu0 %v3523
        %3534 = vmatprep.subr.bf16.mxu0 0
        %3535 = vmatpush1.bf16.msra.mxu0 %v3530
        %3536 = vmatprep.subr.bf16.mxu0 0
        %3537 = vmatpush1.bf16.msra.mxu0 0
        %3538 = vmatprep.subr.bf16.mxu0 0
        %3539 = vmatpush1.bf16.msra.mxu0 0
        %3540 = vmatprep.subr.bf16.mxu0 0
        %3541 = vmatpush1.bf16.msra.mxu0 0
        %3542 = vmatprep.subr.bf16.mxu0 0
        %3543 = vmatpush1.bf16.msra.mxu0 0
        %3544 = vmatprep.subr.bf16.mxu0 0
        %3545 = vmatpush1.bf16.msra.mxu0 0
        %3546 = vmatprep.subr.bf16.mxu0 0
        %3547 = vmatpush1.bf16.msra.mxu0 0
        %3548 = vmatprep.subr.bf16.mxu0 0
        %3549 = vmatpush1.bf16.msra.mxu0 0
        %3550 = vmatprep.subr.bf16.mxu0 0
        %3551 = vmatpush1.bf16.msra.mxu0 0
        %3552 = vmatprep.subr.bf16.mxu0 0
        %3553 = vmatpush1.bf16.msra.mxu0 0
        %3554 = vmatprep.subr.bf16.mxu0 0
        %3555 = vmatpush1.bf16.msra.mxu0 0
        %3556 = vmatprep.subr.bf16.mxu0 0
        %3557 = vmatpush1.bf16.msra.mxu0 0
        %3558 = vmatprep.subr.bf16.mxu0 0
        %3559 = vmatpush1.bf16.msra.mxu0 0
        %3560 = vmatprep.subr.bf16.mxu0 0
        %3561 = vmatpush1.bf16.msra.mxu0 0
        %3562 = vmatprep.subr.bf16.mxu0 0
        %3563 = vmatpush1.bf16.msra.mxu0 0
        %3564 = vmatprep.mubr.bf16.mxu0 0
        %3565 = vmatmul.mubr.bf16.gmra.mrb[0].mxu0 %v3119
        %v3566 = vpop.f32.mrb[0].mxu0
        %v3567 = vadd.f32 0.0, %v3566
        %v3568 = vpop.f32.mrb[0].mxu0
        %v3569 = vpop.f32.mrb[0].mxu0
        %v3570 = vadd.f32 0.0, %v3569
        %v3571 = vpop.f32.mrb[0].mxu0
        %3572 = vmatprep.mubr.bf16.mxu0 0
        %3573 = vmatmul.mubr.bf16.gmra.mrb[0].mxu0 %v3122
        %v3574 = vpop.f32.mrb[0].mxu0
        %v3575 = vadd.f32 0.0, %v3574
        %v3576 = vpop.f32.mrb[0].mxu0
        %v3577 = vpop.f32.mrb[0].mxu0
        %v3578 = vadd.f32 0.0, %v3577
        %v3579 = vpop.f32.mrb[0].mxu0
        %3580 = vmatprep.mubr.bf16.mxu0 0
        %3581 = vmatmul.mubr.bf16.gmra.mrb[0].mxu0 %v3125
        %v3582 = vpop.f32.mrb[0].mxu0
        %v3583 = vadd.f32 0.0, %v3582
        %v3584 = vpop.f32.mrb[0].mxu0
        %v3585 = vpop.f32.mrb[0].mxu0
        %v3586 = vadd.f32 0.0, %v3585
        %v3587 = vpop.f32.mrb[0].mxu0
        %3588 = vmatprep.mubr.bf16.mxu0 0
        %3589 = vmatmul.mubr.bf16.gmra.mrb[0].mxu0 %v3128
        %v3590 = vpop.f32.mrb[0].mxu0
        %v3591 = vadd.f32 0.0, %v3590
        %v3592 = vpop.f32.mrb[0].mxu0
        %v3593 = vpop.f32.mrb[0].mxu0
        %v3594 = vadd.f32 0.0, %v3593
        %v3595 = vpop.f32.mrb[0].mxu0
        %3596 = vmatprep.mubr.bf16.mxu0 0
        %3597 = vmatmul.mubr.bf16.gmra.mrb[0].mxu0 %v3131
        %v3598 = vpop.f32.mrb[0].mxu0
        %v3599 = vadd.f32 0.0, %v3598
        %v3600 = vpop.f32.mrb[0].mxu0
        %v3601 = vpop.f32.mrb[0].mxu0
        %v3602 = vadd.f32 0.0, %v3601
        %v3603 = vpop.f32.mrb[0].mxu0
        %3604 = vmatprep.mubr.bf16.mxu0 0
        %3605 = vmatmul.mubr.bf16.gmra.mrb[0].mxu0 %v3263
        %v3606 = vpop.f32.mrb[0].mxu0
        %v3607 = vadd.f32 0.0, %v3606
        %v3608 = vpop.f32.mrb[0].mxu0
        %v3609 = vpop.f32.mrb[0].mxu0
        %v3610 = vadd.f32 0.0, %v3609
        %v3611 = vpop.f32.mrb[0].mxu0
        %3612 = vmatprep.mubr.bf16.mxu0 0
        %3613 = vmatmul.mubr.bf16.gmra.mrb[0].mxu0 %v3395
        %v3614 = vpop.f32.mrb[0].mxu0
        %v3615 = vadd.f32 0.0, %v3614
        %v3616 = vpop.f32.mrb[0].mxu0
        %v3617 = vpop.f32.mrb[0].mxu0
        %v3618 = vadd.f32 0.0, %v3617
        %v3619 = vpop.f32.mrb[0].mxu0
        %3620 = vmatprep.mubr.bf16.mxu0 0
        %3621 = vmatmul.mubr.bf16.gmra.mrb[0].mxu0 %v3527
        %v3622 = vpop.f32.mrb[0].mxu0
        %v3623 = vadd.f32 0.0, %v3622
        %v3624 = vpop.f32.mrb[0].mxu0
        %v3625 = vpop.f32.mrb[0].mxu0
        %v3626 = vadd.f32 0.0, %v3625
        %v3627 = vpop.f32.mrb[0].mxu0
        %3628 = vdwg.mxu0
        %v3629 = vadd.f32 %v3497, %v3567
        %v3630 = vadd.f32 %v3498, %v3570
        %v3631 = vadd.f32 %v3499, %v3575
        %v3632 = vadd.f32 %v3500, %v3578
        %v3633 = vadd.f32 %v3501, %v3583
        %v3634 = vadd.f32 %v3502, %v3586
        %v3635 = vadd.f32 %v3503, %v3591
        %v3636 = vadd.f32 %v3504, %v3594
        %v3637 = vadd.f32 %v3505, %v3599
        %v3638 = vadd.f32 %v3506, %v3602
        %v3639 = vadd.f32 %v3507, %v3607
        %v3640 = vadd.f32 %v3508, %v3610
        %v3641 = vadd.f32 %v3509, %v3615
        %v3642 = vadd.f32 %v3510, %v3618
        %v3643 = vadd.f32 %v3511, %v3623
        %v3644 = vadd.f32 %v3512, %v3626
        %s3645 = scalar_lea.vmem %s3, 168
        %v3646 = vld [vmem:[%s3645] sm:$0xf]
        %v3647 = vld [vmem:[%s3645 + $0x4] sm:$0xf]
        %v3648 = vld [vmem:[%s3645 + $0x8] sm:$0xf]
        %v3652 = vunpack.c.l.b16 %v3646
        %v3653 = vunpack.c.l.b16 %v3647
        %v3654 = vunpack.c.l.b16 %v3648
        %v3655 = vpack.c.b16 %v3653, %v3652
        %v3656 = vpack.c.b16 %v3654, %v3654
        %v3659 = vsel %vm1749, %v3095, 0
        %v3662 = vsel %vm1774, %v3656, 0
        %3664 = vmatprep.subr.bf16.mxu0 0
        %3665 = vmatpush1.bf16.msra.mxu0 %v3655
        %3666 = vmatprep.subr.bf16.mxu0 0
        %3667 = vmatpush1.bf16.msra.mxu0 %v3662
        %3668 = vmatprep.subr.bf16.mxu0 0
        %3669 = vmatpush1.bf16.msra.mxu0 0
        %3670 = vmatprep.subr.bf16.mxu0 0
        %3671 = vmatpush1.bf16.msra.mxu0 0
        %3672 = vmatprep.subr.bf16.mxu0 0
        %3673 = vmatpush1.bf16.msra.mxu0 0
        %3674 = vmatprep.subr.bf16.mxu0 0
        %3675 = vmatpush1.bf16.msra.mxu0 0
        %3676 = vmatprep.subr.bf16.mxu0 0
        %3677 = vmatpush1.bf16.msra.mxu0 0
        %3678 = vmatprep.subr.bf16.mxu0 0
        %3679 = vmatpush1.bf16.msra.mxu0 0
        %3680 = vmatprep.subr.bf16.mxu0 0
        %3681 = vmatpush1.bf16.msra.mxu0 0
        %3682 = vmatprep.subr.bf16.mxu0 0
        %3683 = vmatpush1.bf16.msra.mxu0 0
        %3684 = vmatprep.subr.bf16.mxu0 0
        %3685 = vmatpush1.bf16.msra.mxu0 0
        %3686 = vmatprep.subr.bf16.mxu0 0
        %3687 = vmatpush1.bf16.msra.mxu0 0
        %3688 = vmatprep.subr.bf16.mxu0 0
        %3689 = vmatpush1.bf16.msra.mxu0 0
        %3690 = vmatprep.subr.bf16.mxu0 0
        %3691 = vmatpush1.bf16.msra.mxu0 0
        %3692 = vmatprep.subr.bf16.mxu0 0
        %3693 = vmatpush1.bf16.msra.mxu0 0
        %3694 = vmatprep.subr.bf16.mxu0 0
        %3695 = vmatpush1.bf16.msra.mxu0 0
        %3696 = vmatprep.mubr.bf16.mxu0 0
        %3697 = vmatmul.mubr.bf16.gmra.mrb[0].mxu0 %v3122
        %v3698 = vpop.f32.mrb[0].mxu0
        %v3699 = vadd.f32 0.0, %v3698
        %v3700 = vpop.f32.mrb[0].mxu0
        %v3701 = vpop.f32.mrb[0].mxu0
        %v3702 = vadd.f32 0.0, %v3701
        %v3703 = vpop.f32.mrb[0].mxu0
        %3704 = vmatprep.mubr.bf16.mxu0 0
        %3705 = vmatmul.mubr.bf16.gmra.mrb[0].mxu0 %v3125
        %v3706 = vpop.f32.mrb[0].mxu0
        %v3707 = vadd.f32 0.0, %v3706
        %v3708 = vpop.f32.mrb[0].mxu0
        %v3709 = vpop.f32.mrb[0].mxu0
        %v3710 = vadd.f32 0.0, %v3709
        %v3711 = vpop.f32.mrb[0].mxu0
        %3712 = vmatprep.mubr.bf16.mxu0 0
        %3713 = vmatmul.mubr.bf16.gmra.mrb[0].mxu0 %v3128
        %v3714 = vpop.f32.mrb[0].mxu0
        %v3715 = vadd.f32 0.0, %v3714
        %v3716 = vpop.f32.mrb[0].mxu0
        %v3717 = vpop.f32.mrb[0].mxu0
        %v3718 = vadd.f32 0.0, %v3717
        %v3719 = vpop.f32.mrb[0].mxu0
        %3720 = vmatprep.mubr.bf16.mxu0 0
        %3721 = vmatmul.mubr.bf16.gmra.mrb[0].mxu0 %v3131
        %v3722 = vpop.f32.mrb[0].mxu0
        %v3723 = vadd.f32 0.0, %v3722
        %v3724 = vpop.f32.mrb[0].mxu0
        %v3725 = vpop.f32.mrb[0].mxu0
        %v3726 = vadd.f32 0.0, %v3725
        %v3727 = vpop.f32.mrb[0].mxu0
        %3728 = vmatprep.mubr.bf16.mxu0 0
        %3729 = vmatmul.mubr.bf16.gmra.mrb[0].mxu0 %v3263
        %v3730 = vpop.f32.mrb[0].mxu0
        %v3731 = vadd.f32 0.0, %v3730
        %v3732 = vpop.f32.mrb[0].mxu0
        %v3733 = vpop.f32.mrb[0].mxu0
        %v3734 = vadd.f32 0.0, %v3733
        %v3735 = vpop.f32.mrb[0].mxu0
        %3736 = vmatprep.mubr.bf16.mxu0 0
        %3737 = vmatmul.mubr.bf16.gmra.mrb[0].mxu0 %v3395
        %v3738 = vpop.f32.mrb[0].mxu0
        %v3739 = vadd.f32 0.0, %v3738
        %v3740 = vpop.f32.mrb[0].mxu0
        %v3741 = vpop.f32.mrb[0].mxu0
        %v3742 = vadd.f32 0.0, %v3741
        %v3743 = vpop.f32.mrb[0].mxu0
        %3744 = vmatprep.mubr.bf16.mxu0 0
        %3745 = vmatmul.mubr.bf16.gmra.mrb[0].mxu0 %v3527
        %v3746 = vpop.f32.mrb[0].mxu0
        %v3747 = vadd.f32 0.0, %v3746
        %v3748 = vpop.f32.mrb[0].mxu0
        %v3749 = vpop.f32.mrb[0].mxu0
        %v3750 = vadd.f32 0.0, %v3749
        %v3751 = vpop.f32.mrb[0].mxu0
        %3752 = vmatprep.mubr.bf16.mxu0 0
        %3753 = vmatmul.mubr.bf16.gmra.mrb[0].mxu0 %v3659
        %v3754 = vpop.f32.mrb[0].mxu0
        %v3755 = vadd.f32 0.0, %v3754
        %v3756 = vpop.f32.mrb[0].mxu0
        %v3757 = vpop.f32.mrb[0].mxu0
        %v3758 = vadd.f32 0.0, %v3757
        %v3759 = vpop.f32.mrb[0].mxu0
        %3760 = vdwg.mxu0
        %v3761 = vadd.f32 %v3629, %v3699
        %v3762 = vadd.f32 %v3630, %v3702
        %v3763 = vadd.f32 %v3631, %v3707
        %v3764 = vadd.f32 %v3632, %v3710
        %v3765 = vadd.f32 %v3633, %v3715
        %v3766 = vadd.f32 %v3634, %v3718
        %v3767 = vadd.f32 %v3635, %v3723
        %v3768 = vadd.f32 %v3636, %v3726
        %v3769 = vadd.f32 %v3637, %v3731
        %v3770 = vadd.f32 %v3638, %v3734
        %v3771 = vadd.f32 %v3639, %v3739
        %v3772 = vadd.f32 %v3640, %v3742
        %v3773 = vadd.f32 %v3641, %v3747
        %v3774 = vadd.f32 %v3642, %v3750
        %v3775 = vadd.f32 %v3643, %v3755
        %v3776 = vadd.f32 %v3644, %v3758
        %s3777 = sadd.s32 %s1713, 3
        %s3778 = smul.u32 %s3777, 13
        %s3779 = smul.addr %s3778, 8
        %s3780 = scalar_lea.vmem [#allocation2], %s3779
        %v3781 = vld [vmem:[%s3780] sm:$0xff]
        %v3782 = vld [vmem:[%s3780 + $0x8] sm:$0xff]
        %v3783 = vld [vmem:[%s3780 + $0x10] sm:$0xff]
        %v3784 = vld [vmem:[%s3780 + $0x18] sm:$0xff]
        %v3785 = vld [vmem:[%s3780 + $0x20] sm:$0xff]
        %v3786 = vld [vmem:[%s3780 + $0x28] sm:$0xff]
        %v3787 = vld [vmem:[%s3780 + $0x30] sm:$0xff]
        %v3788 = vld [vmem:[%s3780 + $0x38] sm:$0xff]
        %v3789 = vld [vmem:[%s3780 + $0x40] sm:$0xff]
        %v3790 = vld [vmem:[%s3780 + $0x48] sm:$0xff]
        %v3791 = vld [vmem:[%s3780 + $0x50] sm:$0xff]
        %v3792 = vld [vmem:[%s3780 + $0x58] sm:$0xff]
        %s3793 = scalar_lea.vmem %s3, 180
        %v3794 = vld [vmem:[%s3793] sm:$0xf]
        %v3795 = vld [vmem:[%s3793 + $0x4] sm:$0xf]
        %v3796 = vld [vmem:[%s3793 + $0x8] sm:$0xf]
        %v3800 = vunpack.c.l.b16 %v3794
        %v3801 = vunpack.c.l.b16 %v3795
        %v3802 = vunpack.c.l.b16 %v3796
        %v3803 = vpack.c.b16 %v3801, %v3800
        %v3804 = vpack.c.b16 %v3802, %v3802
        %v3807 = vsel %vm1749, %v3781, 0
        %v3810 = vsel %vm1749, %v3782, 0
        %v3813 = vsel %vm1749, %v3783, 0
        %v3816 = vsel %vm1749, %v3784, 0
        %v3819 = vsel %vm1749, %v3785, 0
        %v3822 = vsel %vm1749, %v3786, 0
        %v3825 = vsel %vm1749, %v3787, 0
        %v3828 = vsel %vm1749, %v3788, 0
        %v3831 = vsel %vm1774, %v3804, 0
        %3833 = vmatprep.subr.bf16.mxu0 0
        %3834 = vmatpush1.bf16.msra.mxu0 %v3803
        %3835 = vmatprep.subr.bf16.mxu0 0
        %3836 = vmatpush1.bf16.msra.mxu0 %v3831
        %3837 = vmatprep.subr.bf16.mxu0 0
        %3838 = vmatpush1.bf16.msra.mxu0 0
        %3839 = vmatprep.subr.bf16.mxu0 0
        %3840 = vmatpush1.bf16.msra.mxu0 0
        %3841 = vmatprep.subr.bf16.mxu0 0
        %3842 = vmatpush1.bf16.msra.mxu0 0
        %3843 = vmatprep.subr.bf16.mxu0 0
        %3844 = vmatpush1.bf16.msra.mxu0 0
        %3845 = vmatprep.subr.bf16.mxu0 0
        %3846 = vmatpush1.bf16.msra.mxu0 0
        %3847 = vmatprep.subr.bf16.mxu0 0
        %3848 = vmatpush1.bf16.msra.mxu0 0
        %3849 = vmatprep.subr.bf16.mxu0 0
        %3850 = vmatpush1.bf16.msra.mxu0 0
        %3851 = vmatprep.subr.bf16.mxu0 0
        %3852 = vmatpush1.bf16.msra.mxu0 0
        %3853 = vmatprep.subr.bf16.mxu0 0
        %3854 = vmatpush1.bf16.msra.mxu0 0
        %3855 = vmatprep.subr.bf16.mxu0 0
        %3856 = vmatpush1.bf16.msra.mxu0 0
        %3857 = vmatprep.subr.bf16.mxu0 0
        %3858 = vmatpush1.bf16.msra.mxu0 0
        %3859 = vmatprep.subr.bf16.mxu0 0
        %3860 = vmatpush1.bf16.msra.mxu0 0
        %3861 = vmatprep.subr.bf16.mxu0 0
        %3862 = vmatpush1.bf16.msra.mxu0 0
        %3863 = vmatprep.subr.bf16.mxu0 0
        %3864 = vmatpush1.bf16.msra.mxu0 0
        %3865 = vmatprep.mubr.bf16.mxu0 0
        %3866 = vmatmul.mubr.bf16.gmra.mrb[0].mxu0 %v3807
        %v3867 = vpop.f32.mrb[0].mxu0
        %v3868 = vadd.f32 0.0, %v3867
        %v3869 = vpop.f32.mrb[0].mxu0
        %v3870 = vpop.f32.mrb[0].mxu0
        %v3871 = vadd.f32 0.0, %v3870
        %v3872 = vpop.f32.mrb[0].mxu0
        %3873 = vmatprep.mubr.bf16.mxu0 0
        %3874 = vmatmul.mubr.bf16.gmra.mrb[0].mxu0 %v3810
        %v3875 = vpop.f32.mrb[0].mxu0
        %v3876 = vadd.f32 0.0, %v3875
        %v3877 = vpop.f32.mrb[0].mxu0
        %v3878 = vpop.f32.mrb[0].mxu0
        %v3879 = vadd.f32 0.0, %v3878
        %v3880 = vpop.f32.mrb[0].mxu0
        %3881 = vmatprep.mubr.bf16.mxu0 0
        %3882 = vmatmul.mubr.bf16.gmra.mrb[0].mxu0 %v3813
        %v3883 = vpop.f32.mrb[0].mxu0
        %v3884 = vadd.f32 0.0, %v3883
        %v3885 = vpop.f32.mrb[0].mxu0
        %v3886 = vpop.f32.mrb[0].mxu0
        %v3887 = vadd.f32 0.0, %v3886
        %v3888 = vpop.f32.mrb[0].mxu0
        %3889 = vmatprep.mubr.bf16.mxu0 0
        %3890 = vmatmul.mubr.bf16.gmra.mrb[0].mxu0 %v3816
        %v3891 = vpop.f32.mrb[0].mxu0
        %v3892 = vadd.f32 0.0, %v3891
        %v3893 = vpop.f32.mrb[0].mxu0
        %v3894 = vpop.f32.mrb[0].mxu0
        %v3895 = vadd.f32 0.0, %v3894
        %v3896 = vpop.f32.mrb[0].mxu0
        %3897 = vmatprep.mubr.bf16.mxu0 0
        %3898 = vmatmul.mubr.bf16.gmra.mrb[0].mxu0 %v3819
        %v3899 = vpop.f32.mrb[0].mxu0
        %v3900 = vadd.f32 0.0, %v3899
        %v3901 = vpop.f32.mrb[0].mxu0
        %v3902 = vpop.f32.mrb[0].mxu0
        %v3903 = vadd.f32 0.0, %v3902
        %v3904 = vpop.f32.mrb[0].mxu0
        %3905 = vmatprep.mubr.bf16.mxu0 0
        %3906 = vmatmul.mubr.bf16.gmra.mrb[0].mxu0 %v3822
        %v3907 = vpop.f32.mrb[0].mxu0
        %v3908 = vadd.f32 0.0, %v3907
        %v3909 = vpop.f32.mrb[0].mxu0
        %v3910 = vpop.f32.mrb[0].mxu0
        %v3911 = vadd.f32 0.0, %v3910
        %v3912 = vpop.f32.mrb[0].mxu0
        %3913 = vmatprep.mubr.bf16.mxu0 0
        %3914 = vmatmul.mubr.bf16.gmra.mrb[0].mxu0 %v3825
        %v3915 = vpop.f32.mrb[0].mxu0
        %v3916 = vadd.f32 0.0, %v3915
        %v3917 = vpop.f32.mrb[0].mxu0
        %v3918 = vpop.f32.mrb[0].mxu0
        %v3919 = vadd.f32 0.0, %v3918
        %v3920 = vpop.f32.mrb[0].mxu0
        %3921 = vmatprep.mubr.bf16.mxu0 0
        %3922 = vmatmul.mubr.bf16.gmra.mrb[0].mxu0 %v3828
        %v3923 = vpop.f32.mrb[0].mxu0
        %v3924 = vadd.f32 0.0, %v3923
        %v3925 = vpop.f32.mrb[0].mxu0
        %v3926 = vpop.f32.mrb[0].mxu0
        %v3927 = vadd.f32 0.0, %v3926
        %v3928 = vpop.f32.mrb[0].mxu0
        %3929 = vdwg.mxu0
        %v3930 = vadd.f32 %v3761, %v3868
        %v3931 = vadd.f32 %v3762, %v3871
        %v3932 = vadd.f32 %v3763, %v3876
        %v3933 = vadd.f32 %v3764, %v3879
        %v3934 = vadd.f32 %v3765, %v3884
        %v3935 = vadd.f32 %v3766, %v3887
        %v3936 = vadd.f32 %v3767, %v3892
        %v3937 = vadd.f32 %v3768, %v3895
        %v3938 = vadd.f32 %v3769, %v3900
        %v3939 = vadd.f32 %v3770, %v3903
        %v3940 = vadd.f32 %v3771, %v3908
        %v3941 = vadd.f32 %v3772, %v3911
        %v3942 = vadd.f32 %v3773, %v3916
        %v3943 = vadd.f32 %v3774, %v3919
        %v3944 = vadd.f32 %v3775, %v3924
        %v3945 = vadd.f32 %v3776, %v3927
        %s3946 = scalar_lea.vmem %s3, 192
        %v3947 = vld [vmem:[%s3946] sm:$0xf]
        %v3948 = vld [vmem:[%s3946 + $0x4] sm:$0xf]
        %v3949 = vld [vmem:[%s3946 + $0x8] sm:$0xf]
        %v3953 = vunpack.c.l.b16 %v3947
        %v3954 = vunpack.c.l.b16 %v3948
        %v3955 = vunpack.c.l.b16 %v3949
        %v3956 = vpack.c.b16 %v3954, %v3953
        %v3957 = vpack.c.b16 %v3955, %v3955
        %v3960 = vsel %vm1749, %v3789, 0
        %v3963 = vsel %vm1774, %v3957, 0
        %3965 = vmatprep.subr.bf16.mxu0 0
        %3966 = vmatpush1.bf16.msra.mxu0 %v3956
        %3967 = vmatprep.subr.bf16.mxu0 0
        %3968 = vmatpush1.bf16.msra.mxu0 %v3963
        %3969 = vmatprep.subr.bf16.mxu0 0
        %3970 = vmatpush1.bf16.msra.mxu0 0
        %3971 = vmatprep.subr.bf16.mxu0 0
        %3972 = vmatpush1.bf16.msra.mxu0 0
        %3973 = vmatprep.subr.bf16.mxu0 0
        %3974 = vmatpush1.bf16.msra.mxu0 0
        %3975 = vmatprep.subr.bf16.mxu0 0
        %3976 = vmatpush1.bf16.msra.mxu0 0
        %3977 = vmatprep.subr.bf16.mxu0 0
        %3978 = vmatpush1.bf16.msra.mxu0 0
        %3979 = vmatprep.subr.bf16.mxu0 0
        %3980 = vmatpush1.bf16.msra.mxu0 0
        %3981 = vmatprep.subr.bf16.mxu0 0
        %3982 = vmatpush1.bf16.msra.mxu0 0
        %3983 = vmatprep.subr.bf16.mxu0 0
        %3984 = vmatpush1.bf16.msra.mxu0 0
        %3985 = vmatprep.subr.bf16.mxu0 0
        %3986 = vmatpush1.bf16.msra.mxu0 0
        %3987 = vmatprep.subr.bf16.mxu0 0
        %3988 = vmatpush1.bf16.msra.mxu0 0
        %3989 = vmatprep.subr.bf16.mxu0 0
        %3990 = vmatpush1.bf16.msra.mxu0 0
        %3991 = vmatprep.subr.bf16.mxu0 0
        %3992 = vmatpush1.bf16.msra.mxu0 0
        %3993 = vmatprep.subr.bf16.mxu0 0
        %3994 = vmatpush1.bf16.msra.mxu0 0
        %3995 = vmatprep.subr.bf16.mxu0 0
        %3996 = vmatpush1.bf16.msra.mxu0 0
        %3997 = vmatprep.mubr.bf16.mxu0 0
        %3998 = vmatmul.mubr.bf16.gmra.mrb[0].mxu0 %v3810
        %v3999 = vpop.f32.mrb[0].mxu0
        %v4000 = vadd.f32 0.0, %v3999
        %v4001 = vpop.f32.mrb[0].mxu0
        %v4002 = vpop.f32.mrb[0].mxu0
        %v4003 = vadd.f32 0.0, %v4002
        %v4004 = vpop.f32.mrb[0].mxu0
        %4005 = vmatprep.mubr.bf16.mxu0 0
        %4006 = vmatmul.mubr.bf16.gmra.mrb[0].mxu0 %v3813
        %v4007 = vpop.f32.mrb[0].mxu0
        %v4008 = vadd.f32 0.0, %v4007
        %v4009 = vpop.f32.mrb[0].mxu0
        %v4010 = vpop.f32.mrb[0].mxu0
        %v4011 = vadd.f32 0.0, %v4010
        %v4012 = vpop.f32.mrb[0].mxu0
        %4013 = vmatprep.mubr.bf16.mxu0 0
        %4014 = vmatmul.mubr.bf16.gmra.mrb[0].mxu0 %v3816
        %v4015 = vpop.f32.mrb[0].mxu0
        %v4016 = vadd.f32 0.0, %v4015
        %v4017 = vpop.f32.mrb[0].mxu0
        %v4018 = vpop.f32.mrb[0].mxu0
        %v4019 = vadd.f32 0.0, %v4018
        %v4020 = vpop.f32.mrb[0].mxu0
        %4021 = vmatprep.mubr.bf16.mxu0 0
        %4022 = vmatmul.mubr.bf16.gmra.mrb[0].mxu0 %v3819
        %v4023 = vpop.f32.mrb[0].mxu0
        %v4024 = vadd.f32 0.0, %v4023
        %v4025 = vpop.f32.mrb[0].mxu0
        %v4026 = vpop.f32.mrb[0].mxu0
        %v4027 = vadd.f32 0.0, %v4026
        %v4028 = vpop.f32.mrb[0].mxu0
        %4029 = vmatprep.mubr.bf16.mxu0 0
        %4030 = vmatmul.mubr.bf16.gmra.mrb[0].mxu0 %v3822
        %v4031 = vpop.f32.mrb[0].mxu0
        %v4032 = vadd.f32 0.0, %v4031
        %v4033 = vpop.f32.mrb[0].mxu0
        %v4034 = vpop.f32.mrb[0].mxu0
        %v4035 = vadd.f32 0.0, %v4034
        %v4036 = vpop.f32.mrb[0].mxu0
        %4037 = vmatprep.mubr.bf16.mxu0 0
        %4038 = vmatmul.mubr.bf16.gmra.mrb[0].mxu0 %v3825
        %v4039 = vpop.f32.mrb[0].mxu0
        %v4040 = vadd.f32 0.0, %v4039
        %v4041 = vpop.f32.mrb[0].mxu0
        %v4042 = vpop.f32.mrb[0].mxu0
        %v4043 = vadd.f32 0.0, %v4042
        %v4044 = vpop.f32.mrb[0].mxu0
        %4045 = vmatprep.mubr.bf16.mxu0 0
        %4046 = vmatmul.mubr.bf16.gmra.mrb[0].mxu0 %v3828
        %v4047 = vpop.f32.mrb[0].mxu0
        %v4048 = vadd.f32 0.0, %v4047
        %v4049 = vpop.f32.mrb[0].mxu0
        %v4050 = vpop.f32.mrb[0].mxu0
        %v4051 = vadd.f32 0.0, %v4050
        %v4052 = vpop.f32.mrb[0].mxu0
        %4053 = vmatprep.mubr.bf16.mxu0 0
        %4054 = vmatmul.mubr.bf16.gmra.mrb[0].mxu0 %v3960
        %v4055 = vpop.f32.mrb[0].mxu0
        %v4056 = vadd.f32 0.0, %v4055
        %v4057 = vpop.f32.mrb[0].mxu0
        %v4058 = vpop.f32.mrb[0].mxu0
        %v4059 = vadd.f32 0.0, %v4058
        %v4060 = vpop.f32.mrb[0].mxu0
        %4061 = vdwg.mxu0
        %v4062 = vadd.f32 %v3930, %v4000
        %v4063 = vadd.f32 %v3931, %v4003
        %v4064 = vadd.f32 %v3932, %v4008
        %v4065 = vadd.f32 %v3933, %v4011
        %v4066 = vadd.f32 %v3934, %v4016
        %v4067 = vadd.f32 %v3935, %v4019
        %v4068 = vadd.f32 %v3936, %v4024
        %v4069 = vadd.f32 %v3937, %v4027
        %v4070 = vadd.f32 %v3938, %v4032
        %v4071 = vadd.f32 %v3939, %v4035
        %v4072 = vadd.f32 %v3940, %v4040
        %v4073 = vadd.f32 %v3941, %v4043
        %v4074 = vadd.f32 %v3942, %v4048
        %v4075 = vadd.f32 %v3943, %v4051
        %v4076 = vadd.f32 %v3944, %v4056
        %v4077 = vadd.f32 %v3945, %v4059
        %s4078 = scalar_lea.vmem %s3, 204
        %v4079 = vld [vmem:[%s4078] sm:$0xf]
        %v4080 = vld [vmem:[%s4078 + $0x4] sm:$0xf]
        %v4081 = vld [vmem:[%s4078 + $0x8] sm:$0xf]
        %v4085 = vunpack.c.l.b16 %v4079
        %v4086 = vunpack.c.l.b16 %v4080
        %v4087 = vunpack.c.l.b16 %v4081
        %v4088 = vpack.c.b16 %v4086, %v4085
        %v4089 = vpack.c.b16 %v4087, %v4087
        %v4092 = vsel %vm1749, %v3790, 0
        %v4095 = vsel %vm1774, %v4089, 0
        %4097 = vmatprep.subr.bf16.mxu0 0
        %4098 = vmatpush1.bf16.msra.mxu0 %v4088
        %4099 = vmatprep.subr.bf16.mxu0 0
        %4100 = vmatpush1.bf16.msra.mxu0 %v4095
        %4101 = vmatprep.subr.bf16.mxu0 0
        %4102 = vmatpush1.bf16.msra.mxu0 0
        %4103 = vmatprep.subr.bf16.mxu0 0
        %4104 = vmatpush1.bf16.msra.mxu0 0
        %4105 = vmatprep.subr.bf16.mxu0 0
        %4106 = vmatpush1.bf16.msra.mxu0 0
        %4107 = vmatprep.subr.bf16.mxu0 0
        %4108 = vmatpush1.bf16.msra.mxu0 0
        %4109 = vmatprep.subr.bf16.mxu0 0
        %4110 = vmatpush1.bf16.msra.mxu0 0
        %4111 = vmatprep.subr.bf16.mxu0 0
        %4112 = vmatpush1.bf16.msra.mxu0 0
        %4113 = vmatprep.subr.bf16.mxu0 0
        %4114 = vmatpush1.bf16.msra.mxu0 0
        %4115 = vmatprep.subr.bf16.mxu0 0
        %4116 = vmatpush1.bf16.msra.mxu0 0
        %4117 = vmatprep.subr.bf16.mxu0 0
        %4118 = vmatpush1.bf16.msra.mxu0 0
        %4119 = vmatprep.subr.bf16.mxu0 0
        %4120 = vmatpush1.bf16.msra.mxu0 0
        %4121 = vmatprep.subr.bf16.mxu0 0
        %4122 = vmatpush1.bf16.msra.mxu0 0
        %4123 = vmatprep.subr.bf16.mxu0 0
        %4124 = vmatpush1.bf16.msra.mxu0 0
        %4125 = vmatprep.subr.bf16.mxu0 0
        %4126 = vmatpush1.bf16.msra.mxu0 0
        %4127 = vmatprep.subr.bf16.mxu0 0
        %4128 = vmatpush1.bf16.msra.mxu0 0
        %4129 = vmatprep.mubr.bf16.mxu0 0
        %4130 = vmatmul.mubr.bf16.gmra.mrb[0].mxu0 %v3813
        %v4131 = vpop.f32.mrb[0].mxu0
        %v4132 = vadd.f32 0.0, %v4131
        %v4133 = vpop.f32.mrb[0].mxu0
        %v4134 = vpop.f32.mrb[0].mxu0
        %v4135 = vadd.f32 0.0, %v4134
        %v4136 = vpop.f32.mrb[0].mxu0
        %4137 = vmatprep.mubr.bf16.mxu0 0
        %4138 = vmatmul.mubr.bf16.gmra.mrb[0].mxu0 %v3816
        %v4139 = vpop.f32.mrb[0].mxu0
        %v4140 = vadd.f32 0.0, %v4139
        %v4141 = vpop.f32.mrb[0].mxu0
        %v4142 = vpop.f32.mrb[0].mxu0
        %v4143 = vadd.f32 0.0, %v4142
        %v4144 = vpop.f32.mrb[0].mxu0
        %4145 = vmatprep.mubr.bf16.mxu0 0
        %4146 = vmatmul.mubr.bf16.gmra.mrb[0].mxu0 %v3819
        %v4147 = vpop.f32.mrb[0].mxu0
        %v4148 = vadd.f32 0.0, %v4147
        %v4149 = vpop.f32.mrb[0].mxu0
        %v4150 = vpop.f32.mrb[0].mxu0
        %v4151 = vadd.f32 0.0, %v4150
        %v4152 = vpop.f32.mrb[0].mxu0
        %4153 = vmatprep.mubr.bf16.mxu0 0
        %4154 = vmatmul.mubr.bf16.gmra.mrb[0].mxu0 %v3822
        %v4155 = vpop.f32.mrb[0].mxu0
        %v4156 = vadd.f32 0.0, %v4155
        %v4157 = vpop.f32.mrb[0].mxu0
        %v4158 = vpop.f32.mrb[0].mxu0
        %v4159 = vadd.f32 0.0, %v4158
        %v4160 = vpop.f32.mrb[0].mxu0
        %4161 = vmatprep.mubr.bf16.mxu0 0
        %4162 = vmatmul.mubr.bf16.gmra.mrb[0].mxu0 %v3825
        %v4163 = vpop.f32.mrb[0].mxu0
        %v4164 = vadd.f32 0.0, %v4163
        %v4165 = vpop.f32.mrb[0].mxu0
        %v4166 = vpop.f32.mrb[0].mxu0
        %v4167 = vadd.f32 0.0, %v4166
        %v4168 = vpop.f32.mrb[0].mxu0
        %4169 = vmatprep.mubr.bf16.mxu0 0
        %4170 = vmatmul.mubr.bf16.gmra.mrb[0].mxu0 %v3828
        %v4171 = vpop.f32.mrb[0].mxu0
        %v4172 = vadd.f32 0.0, %v4171
        %v4173 = vpop.f32.mrb[0].mxu0
        %v4174 = vpop.f32.mrb[0].mxu0
        %v4175 = vadd.f32 0.0, %v4174
        %v4176 = vpop.f32.mrb[0].mxu0
        %4177 = vmatprep.mubr.bf16.mxu0 0
        %4178 = vmatmul.mubr.bf16.gmra.mrb[0].mxu0 %v3960
        %v4179 = vpop.f32.mrb[0].mxu0
        %v4180 = vadd.f32 0.0, %v4179
        %v4181 = vpop.f32.mrb[0].mxu0
        %v4182 = vpop.f32.mrb[0].mxu0
        %v4183 = vadd.f32 0.0, %v4182
        %v4184 = vpop.f32.mrb[0].mxu0
        %4185 = vmatprep.mubr.bf16.mxu0 0
        %4186 = vmatmul.mubr.bf16.gmra.mrb[0].mxu0 %v4092
        %v4187 = vpop.f32.mrb[0].mxu0
        %v4188 = vadd.f32 0.0, %v4187
        %v4189 = vpop.f32.mrb[0].mxu0
        %v4190 = vpop.f32.mrb[0].mxu0
        %v4191 = vadd.f32 0.0, %v4190
        %v4192 = vpop.f32.mrb[0].mxu0
        %4193 = vdwg.mxu0
        %v4194 = vadd.f32 %v4062, %v4132
        %v4195 = vadd.f32 %v4063, %v4135
        %v4196 = vadd.f32 %v4064, %v4140
        %v4197 = vadd.f32 %v4065, %v4143
        %v4198 = vadd.f32 %v4066, %v4148
        %v4199 = vadd.f32 %v4067, %v4151
        %v4200 = vadd.f32 %v4068, %v4156
        %v4201 = vadd.f32 %v4069, %v4159
        %v4202 = vadd.f32 %v4070, %v4164
        %v4203 = vadd.f32 %v4071, %v4167
        %v4204 = vadd.f32 %v4072, %v4172
        %v4205 = vadd.f32 %v4073, %v4175
        %v4206 = vadd.f32 %v4074, %v4180
        %v4207 = vadd.f32 %v4075, %v4183
        %v4208 = vadd.f32 %v4076, %v4188
        %v4209 = vadd.f32 %v4077, %v4191
        %s4210 = scalar_lea.vmem %s3, 216
        %v4211 = vld [vmem:[%s4210] sm:$0xf]
        %v4212 = vld [vmem:[%s4210 + $0x4] sm:$0xf]
        %v4213 = vld [vmem:[%s4210 + $0x8] sm:$0xf]
        %v4217 = vunpack.c.l.b16 %v4211
        %v4218 = vunpack.c.l.b16 %v4212
        %v4219 = vunpack.c.l.b16 %v4213
        %v4220 = vpack.c.b16 %v4218, %v4217
        %v4221 = vpack.c.b16 %v4219, %v4219
        %v4224 = vsel %vm1749, %v3791, 0
        %v4227 = vsel %vm1774, %v4221, 0
        %4229 = vmatprep.subr.bf16.mxu0 0
        %4230 = vmatpush1.bf16.msra.mxu0 %v4220
        %4231 = vmatprep.subr.bf16.mxu0 0
        %4232 = vmatpush1.bf16.msra.mxu0 %v4227
        %4233 = vmatprep.subr.bf16.mxu0 0
        %4234 = vmatpush1.bf16.msra.mxu0 0
        %4235 = vmatprep.subr.bf16.mxu0 0
        %4236 = vmatpush1.bf16.msra.mxu0 0
        %4237 = vmatprep.subr.bf16.mxu0 0
        %4238 = vmatpush1.bf16.msra.mxu0 0
        %4239 = vmatprep.subr.bf16.mxu0 0
        %4240 = vmatpush1.bf16.msra.mxu0 0
        %4241 = vmatprep.subr.bf16.mxu0 0
        %4242 = vmatpush1.bf16.msra.mxu0 0
        %4243 = vmatprep.subr.bf16.mxu0 0
        %4244 = vmatpush1.bf16.msra.mxu0 0
        %4245 = vmatprep.subr.bf16.mxu0 0
        %4246 = vmatpush1.bf16.msra.mxu0 0
        %4247 = vmatprep.subr.bf16.mxu0 0
        %4248 = vmatpush1.bf16.msra.mxu0 0
        %4249 = vmatprep.subr.bf16.mxu0 0
        %4250 = vmatpush1.bf16.msra.mxu0 0
        %4251 = vmatprep.subr.bf16.mxu0 0
        %4252 = vmatpush1.bf16.msra.mxu0 0
        %4253 = vmatprep.subr.bf16.mxu0 0
        %4254 = vmatpush1.bf16.msra.mxu0 0
        %4255 = vmatprep.subr.bf16.mxu0 0
        %4256 = vmatpush1.bf16.msra.mxu0 0
        %4257 = vmatprep.subr.bf16.mxu0 0
        %4258 = vmatpush1.bf16.msra.mxu0 0
        %4259 = vmatprep.subr.bf16.mxu0 0
        %4260 = vmatpush1.bf16.msra.mxu0 0
        %4261 = vmatprep.mubr.bf16.mxu0 0
        %4262 = vmatmul.mubr.bf16.gmra.mrb[0].mxu0 %v3816
        %v4263 = vpop.f32.mrb[0].mxu0
        %v4264 = vadd.f32 0.0, %v4263
        %v4265 = vpop.f32.mrb[0].mxu0
        %v4266 = vpop.f32.mrb[0].mxu0
        %v4267 = vadd.f32 0.0, %v4266
        %v4268 = vpop.f32.mrb[0].mxu0
        %4269 = vmatprep.mubr.bf16.mxu0 0
        %4270 = vmatmul.mubr.bf16.gmra.mrb[0].mxu0 %v3819
        %v4271 = vpop.f32.mrb[0].mxu0
        %v4272 = vadd.f32 0.0, %v4271
        %v4273 = vpop.f32.mrb[0].mxu0
        %v4274 = vpop.f32.mrb[0].mxu0
        %v4275 = vadd.f32 0.0, %v4274
        %v4276 = vpop.f32.mrb[0].mxu0
        %4277 = vmatprep.mubr.bf16.mxu0 0
        %4278 = vmatmul.mubr.bf16.gmra.mrb[0].mxu0 %v3822
        %v4279 = vpop.f32.mrb[0].mxu0
        %v4280 = vadd.f32 0.0, %v4279
        %v4281 = vpop.f32.mrb[0].mxu0
        %v4282 = vpop.f32.mrb[0].mxu0
        %v4283 = vadd.f32 0.0, %v4282
        %v4284 = vpop.f32.mrb[0].mxu0
        %4285 = vmatprep.mubr.bf16.mxu0 0
        %4286 = vmatmul.mubr.bf16.gmra.mrb[0].mxu0 %v3825
        %v4287 = vpop.f32.mrb[0].mxu0
        %v4288 = vadd.f32 0.0, %v4287
        %v4289 = vpop.f32.mrb[0].mxu0
        %v4290 = vpop.f32.mrb[0].mxu0
        %v4291 = vadd.f32 0.0, %v4290
        %v4292 = vpop.f32.mrb[0].mxu0
        %4293 = vmatprep.mubr.bf16.mxu0 0
        %4294 = vmatmul.mubr.bf16.gmra.mrb[0].mxu0 %v3828
        %v4295 = vpop.f32.mrb[0].mxu0
        %v4296 = vadd.f32 0.0, %v4295
        %v4297 = vpop.f32.mrb[0].mxu0
        %v4298 = vpop.f32.mrb[0].mxu0
        %v4299 = vadd.f32 0.0, %v4298
        %v4300 = vpop.f32.mrb[0].mxu0
        %4301 = vmatprep.mubr.bf16.mxu0 0
        %4302 = vmatmul.mubr.bf16.gmra.mrb[0].mxu0 %v3960
        %v4303 = vpop.f32.mrb[0].mxu0
        %v4304 = vadd.f32 0.0, %v4303
        %v4305 = vpop.f32.mrb[0].mxu0
        %v4306 = vpop.f32.mrb[0].mxu0
        %v4307 = vadd.f32 0.0, %v4306
        %v4308 = vpop.f32.mrb[0].mxu0
        %4309 = vmatprep.mubr.bf16.mxu0 0
        %4310 = vmatmul.mubr.bf16.gmra.mrb[0].mxu0 %v4092
        %v4311 = vpop.f32.mrb[0].mxu0
        %v4312 = vadd.f32 0.0, %v4311
        %v4313 = vpop.f32.mrb[0].mxu0
        %v4314 = vpop.f32.mrb[0].mxu0
        %v4315 = vadd.f32 0.0, %v4314
        %v4316 = vpop.f32.mrb[0].mxu0
        %4317 = vmatprep.mubr.bf16.mxu0 0
        %4318 = vmatmul.mubr.bf16.gmra.mrb[0].mxu0 %v4224
        %v4319 = vpop.f32.mrb[0].mxu0
        %v4320 = vadd.f32 0.0, %v4319
        %v4321 = vpop.f32.mrb[0].mxu0
        %v4322 = vpop.f32.mrb[0].mxu0
        %v4323 = vadd.f32 0.0, %v4322
        %v4324 = vpop.f32.mrb[0].mxu0
        %4325 = vdwg.mxu0
        %v4326 = vadd.f32 %v4194, %v4264
        %v4327 = vadd.f32 %v4195, %v4267
        %v4328 = vadd.f32 %v4196, %v4272
        %v4329 = vadd.f32 %v4197, %v4275
        %v4330 = vadd.f32 %v4198, %v4280
        %v4331 = vadd.f32 %v4199, %v4283
        %v4332 = vadd.f32 %v4200, %v4288
        %v4333 = vadd.f32 %v4201, %v4291
        %v4334 = vadd.f32 %v4202, %v4296
        %v4335 = vadd.f32 %v4203, %v4299
        %v4336 = vadd.f32 %v4204, %v4304
        %v4337 = vadd.f32 %v4205, %v4307
        %v4338 = vadd.f32 %v4206, %v4312
        %v4339 = vadd.f32 %v4207, %v4315
        %v4340 = vadd.f32 %v4208, %v4320
        %v4341 = vadd.f32 %v4209, %v4323
        %s4342 = scalar_lea.vmem %s3, 228
        %v4343 = vld [vmem:[%s4342] sm:$0xf]
        %v4344 = vld [vmem:[%s4342 + $0x4] sm:$0xf]
        %v4345 = vld [vmem:[%s4342 + $0x8] sm:$0xf]
        %v4349 = vunpack.c.l.b16 %v4343
        %v4350 = vunpack.c.l.b16 %v4344
        %v4351 = vunpack.c.l.b16 %v4345
        %v4352 = vpack.c.b16 %v4350, %v4349
        %v4353 = vpack.c.b16 %v4351, %v4351
        %v4356 = vsel %vm1749, %v3792, 0
        %v4359 = vsel %vm1774, %v4353, 0
        %4361 = vmatprep.subr.bf16.mxu0 0
        %4362 = vmatpush1.bf16.msra.mxu0 %v4352
        %4363 = vmatprep.subr.bf16.mxu0 0
        %4364 = vmatpush1.bf16.msra.mxu0 %v4359
        %4365 = vmatprep.subr.bf16.mxu0 0
        %4366 = vmatpush1.bf16.msra.mxu0 0
        %4367 = vmatprep.subr.bf16.mxu0 0
        %4368 = vmatpush1.bf16.msra.mxu0 0
        %4369 = vmatprep.subr.bf16.mxu0 0
        %4370 = vmatpush1.bf16.msra.mxu0 0
        %4371 = vmatprep.subr.bf16.mxu0 0
        %4372 = vmatpush1.bf16.msra.mxu0 0
        %4373 = vmatprep.subr.bf16.mxu0 0
        %4374 = vmatpush1.bf16.msra.mxu0 0
        %4375 = vmatprep.subr.bf16.mxu0 0
        %4376 = vmatpush1.bf16.msra.mxu0 0
        %4377 = vmatprep.subr.bf16.mxu0 0
        %4378 = vmatpush1.bf16.msra.mxu0 0
        %4379 = vmatprep.subr.bf16.mxu0 0
        %4380 = vmatpush1.bf16.msra.mxu0 0
        %4381 = vmatprep.subr.bf16.mxu0 0
        %4382 = vmatpush1.bf16.msra.mxu0 0
        %4383 = vmatprep.subr.bf16.mxu0 0
        %4384 = vmatpush1.bf16.msra.mxu0 0
        %4385 = vmatprep.subr.bf16.mxu0 0
        %4386 = vmatpush1.bf16.msra.mxu0 0
        %4387 = vmatprep.subr.bf16.mxu0 0
        %4388 = vmatpush1.bf16.msra.mxu0 0
        %4389 = vmatprep.subr.bf16.mxu0 0
        %4390 = vmatpush1.bf16.msra.mxu0 0
        %4391 = vmatprep.subr.bf16.mxu0 0
        %4392 = vmatpush1.bf16.msra.mxu0 0
        %4393 = vmatprep.mubr.bf16.mxu0 0
        %4394 = vmatmul.mubr.bf16.gmra.mrb[0].mxu0 %v3819
        %v4395 = vpop.f32.mrb[0].mxu0
        %v4396 = vadd.f32 0.0, %v4395
        %v4397 = vpop.f32.mrb[0].mxu0
        %v4398 = vpop.f32.mrb[0].mxu0
        %v4399 = vadd.f32 0.0, %v4398
        %v4400 = vpop.f32.mrb[0].mxu0
        %4401 = vmatprep.mubr.bf16.mxu0 0
        %4402 = vmatmul.mubr.bf16.gmra.mrb[0].mxu0 %v3822
        %v4403 = vpop.f32.mrb[0].mxu0
        %v4404 = vadd.f32 0.0, %v4403
        %v4405 = vpop.f32.mrb[0].mxu0
        %v4406 = vpop.f32.mrb[0].mxu0
        %v4407 = vadd.f32 0.0, %v4406
        %v4408 = vpop.f32.mrb[0].mxu0
        %4409 = vmatprep.mubr.bf16.mxu0 0
        %4410 = vmatmul.mubr.bf16.gmra.mrb[0].mxu0 %v3825
        %v4411 = vpop.f32.mrb[0].mxu0
        %v4412 = vadd.f32 0.0, %v4411
        %v4413 = vpop.f32.mrb[0].mxu0
        %v4414 = vpop.f32.mrb[0].mxu0
        %v4415 = vadd.f32 0.0, %v4414
        %v4416 = vpop.f32.mrb[0].mxu0
        %4417 = vmatprep.mubr.bf16.mxu0 0
        %4418 = vmatmul.mubr.bf16.gmra.mrb[0].mxu0 %v3828
        %v4419 = vpop.f32.mrb[0].mxu0
        %v4420 = vadd.f32 0.0, %v4419
        %v4421 = vpop.f32.mrb[0].mxu0
        %v4422 = vpop.f32.mrb[0].mxu0
        %v4423 = vadd.f32 0.0, %v4422
        %v4424 = vpop.f32.mrb[0].mxu0
        %4425 = vmatprep.mubr.bf16.mxu0 0
        %4426 = vmatmul.mubr.bf16.gmra.mrb[0].mxu0 %v3960
        %v4427 = vpop.f32.mrb[0].mxu0
        %v4428 = vadd.f32 0.0, %v4427
        %v4429 = vpop.f32.mrb[0].mxu0
        %v4430 = vpop.f32.mrb[0].mxu0
        %v4431 = vadd.f32 0.0, %v4430
        %v4432 = vpop.f32.mrb[0].mxu0
        %4433 = vmatprep.mubr.bf16.mxu0 0
        %4434 = vmatmul.mubr.bf16.gmra.mrb[0].mxu0 %v4092
        %v4435 = vpop.f32.mrb[0].mxu0
        %v4436 = vadd.f32 0.0, %v4435
        %v4437 = vpop.f32.mrb[0].mxu0
        %v4438 = vpop.f32.mrb[0].mxu0
        %v4439 = vadd.f32 0.0, %v4438
        %v4440 = vpop.f32.mrb[0].mxu0
        %4441 = vmatprep.mubr.bf16.mxu0 0
        %4442 = vmatmul.mubr.bf16.gmra.mrb[0].mxu0 %v4224
        %v4443 = vpop.f32.mrb[0].mxu0
        %v4444 = vadd.f32 0.0, %v4443
        %v4445 = vpop.f32.mrb[0].mxu0
        %v4446 = vpop.f32.mrb[0].mxu0
        %v4447 = vadd.f32 0.0, %v4446
        %v4448 = vpop.f32.mrb[0].mxu0
        %4449 = vmatprep.mubr.bf16.mxu0 0
        %4450 = vmatmul.mubr.bf16.gmra.mrb[0].mxu0 %v4356
        %v4451 = vpop.f32.mrb[0].mxu0
        %v4452 = vadd.f32 0.0, %v4451
        %v4453 = vpop.f32.mrb[0].mxu0
        %v4454 = vpop.f32.mrb[0].mxu0
        %v4455 = vadd.f32 0.0, %v4454
        %v4456 = vpop.f32.mrb[0].mxu0
        %4457 = vdwg.mxu0
        %v4458 = vadd.f32 %v4326, %v4396
        %v4459 = vadd.f32 %v4327, %v4399
        %v4460 = vadd.f32 %v4328, %v4404
        %v4461 = vadd.f32 %v4329, %v4407
        %v4462 = vadd.f32 %v4330, %v4412
        %v4463 = vadd.f32 %v4331, %v4415
        %v4464 = vadd.f32 %v4332, %v4420
        %v4465 = vadd.f32 %v4333, %v4423
        %v4466 = vadd.f32 %v4334, %v4428
        %v4467 = vadd.f32 %v4335, %v4431
        %v4468 = vadd.f32 %v4336, %v4436
        %v4469 = vadd.f32 %v4337, %v4439
        %v4470 = vadd.f32 %v4338, %v4444
        %v4471 = vadd.f32 %v4339, %v4447
        %v4472 = vadd.f32 %v4340, %v4452
        %v4473 = vadd.f32 %v4341, %v4455
        %s4474 = sadd.s32 %s1713, 4
        %s4475 = smul.u32 %s4474, 13
        %s4476 = smul.addr %s4475, 8
        %s4477 = scalar_lea.vmem [#allocation2], %s4476
        %v4478 = vld [vmem:[%s4477] sm:$0xff]
        %v4479 = vld [vmem:[%s4477 + $0x8] sm:$0xff]
        %v4480 = vld [vmem:[%s4477 + $0x10] sm:$0xff]
        %v4481 = vld [vmem:[%s4477 + $0x18] sm:$0xff]
        %v4482 = vld [vmem:[%s4477 + $0x20] sm:$0xff]
        %v4483 = vld [vmem:[%s4477 + $0x28] sm:$0xff]
        %v4484 = vld [vmem:[%s4477 + $0x30] sm:$0xff]
        %v4485 = vld [vmem:[%s4477 + $0x38] sm:$0xff]
        %v4486 = vld [vmem:[%s4477 + $0x40] sm:$0xff]
        %v4487 = vld [vmem:[%s4477 + $0x48] sm:$0xff]
        %v4488 = vld [vmem:[%s4477 + $0x50] sm:$0xff]
        %v4489 = vld [vmem:[%s4477 + $0x58] sm:$0xff]
        %s4490 = scalar_lea.vmem %s3, 240
        %v4491 = vld [vmem:[%s4490] sm:$0xf]
        %v4492 = vld [vmem:[%s4490 + $0x4] sm:$0xf]
        %v4493 = vld [vmem:[%s4490 + $0x8] sm:$0xf]
        %v4497 = vunpack.c.l.b16 %v4491
        %v4498 = vunpack.c.l.b16 %v4492
        %v4499 = vunpack.c.l.b16 %v4493
        %v4500 = vpack.c.b16 %v4498, %v4497
        %v4501 = vpack.c.b16 %v4499, %v4499
        %v4504 = vsel %vm1749, %v4478, 0
        %v4507 = vsel %vm1749, %v4479, 0
        %v4510 = vsel %vm1749, %v4480, 0
        %v4513 = vsel %vm1749, %v4481, 0
        %v4516 = vsel %vm1749, %v4482, 0
        %v4519 = vsel %vm1749, %v4483, 0
        %v4522 = vsel %vm1749, %v4484, 0
        %v4525 = vsel %vm1749, %v4485, 0
        %v4528 = vsel %vm1774, %v4501, 0
        %4530 = vmatprep.subr.bf16.mxu0 0
        %4531 = vmatpush1.bf16.msra.mxu0 %v4500
        %4532 = vmatprep.subr.bf16.mxu0 0
        %4533 = vmatpush1.bf16.msra.mxu0 %v4528
        %4534 = vmatprep.subr.bf16.mxu0 0
        %4535 = vmatpush1.bf16.msra.mxu0 0
        %4536 = vmatprep.subr.bf16.mxu0 0
        %4537 = vmatpush1.bf16.msra.mxu0 0
        %4538 = vmatprep.subr.bf16.mxu0 0
        %4539 = vmatpush1.bf16.msra.mxu0 0
        %4540 = vmatprep.subr.bf16.mxu0 0
        %4541 = vmatpush1.bf16.msra.mxu0 0
        %4542 = vmatprep.subr.bf16.mxu0 0
        %4543 = vmatpush1.bf16.msra.mxu0 0
        %4544 = vmatprep.subr.bf16.mxu0 0
        %4545 = vmatpush1.bf16.msra.mxu0 0
        %4546 = vmatprep.subr.bf16.mxu0 0
        %4547 = vmatpush1.bf16.msra.mxu0 0
        %4548 = vmatprep.subr.bf16.mxu0 0
        %4549 = vmatpush1.bf16.msra.mxu0 0
        %4550 = vmatprep.subr.bf16.mxu0 0
        %4551 = vmatpush1.bf16.msra.mxu0 0
        %4552 = vmatprep.subr.bf16.mxu0 0
        %4553 = vmatpush1.bf16.msra.mxu0 0
        %4554 = vmatprep.subr.bf16.mxu0 0
        %4555 = vmatpush1.bf16.msra.mxu0 0
        %4556 = vmatprep.subr.bf16.mxu0 0
        %4557 = vmatpush1.bf16.msra.mxu0 0
        %4558 = vmatprep.subr.bf16.mxu0 0
        %4559 = vmatpush1.bf16.msra.mxu0 0
        %4560 = vmatprep.subr.bf16.mxu0 0
        %4561 = vmatpush1.bf16.msra.mxu0 0
        %4562 = vmatprep.mubr.bf16.mxu0 0
        %4563 = vmatmul.mubr.bf16.gmra.mrb[0].mxu0 %v4504
        %v4564 = vpop.f32.mrb[0].mxu0
        %v4565 = vadd.f32 0.0, %v4564
        %v4566 = vpop.f32.mrb[0].mxu0
        %v4567 = vpop.f32.mrb[0].mxu0
        %v4568 = vadd.f32 0.0, %v4567
        %v4569 = vpop.f32.mrb[0].mxu0
        %4570 = vmatprep.mubr.bf16.mxu0 0
        %4571 = vmatmul.mubr.bf16.gmra.mrb[0].mxu0 %v4507
        %v4572 = vpop.f32.mrb[0].mxu0
        %v4573 = vadd.f32 0.0, %v4572
        %v4574 = vpop.f32.mrb[0].mxu0
        %v4575 = vpop.f32.mrb[0].mxu0
        %v4576 = vadd.f32 0.0, %v4575
        %v4577 = vpop.f32.mrb[0].mxu0
        %4578 = vmatprep.mubr.bf16.mxu0 0
        %4579 = vmatmul.mubr.bf16.gmra.mrb[0].mxu0 %v4510
        %v4580 = vpop.f32.mrb[0].mxu0
        %v4581 = vadd.f32 0.0, %v4580
        %v4582 = vpop.f32.mrb[0].mxu0
        %v4583 = vpop.f32.mrb[0].mxu0
        %v4584 = vadd.f32 0.0, %v4583
        %v4585 = vpop.f32.mrb[0].mxu0
        %4586 = vmatprep.mubr.bf16.mxu0 0
        %4587 = vmatmul.mubr.bf16.gmra.mrb[0].mxu0 %v4513
        %v4588 = vpop.f32.mrb[0].mxu0
        %v4589 = vadd.f32 0.0, %v4588
        %v4590 = vpop.f32.mrb[0].mxu0
        %v4591 = vpop.f32.mrb[0].mxu0
        %v4592 = vadd.f32 0.0, %v4591
        %v4593 = vpop.f32.mrb[0].mxu0
        %4594 = vmatprep.mubr.bf16.mxu0 0
        %4595 = vmatmul.mubr.bf16.gmra.mrb[0].mxu0 %v4516
        %v4596 = vpop.f32.mrb[0].mxu0
        %v4597 = vadd.f32 0.0, %v4596
        %v4598 = vpop.f32.mrb[0].mxu0
        %v4599 = vpop.f32.mrb[0].mxu0
        %v4600 = vadd.f32 0.0, %v4599
        %v4601 = vpop.f32.mrb[0].mxu0
        %4602 = vmatprep.mubr.bf16.mxu0 0
        %4603 = vmatmul.mubr.bf16.gmra.mrb[0].mxu0 %v4519
        %v4604 = vpop.f32.mrb[0].mxu0
        %v4605 = vadd.f32 0.0, %v4604
        %v4606 = vpop.f32.mrb[0].mxu0
        %v4607 = vpop.f32.mrb[0].mxu0
        %v4608 = vadd.f32 0.0, %v4607
        %v4609 = vpop.f32.mrb[0].mxu0
        %4610 = vmatprep.mubr.bf16.mxu0 0
        %4611 = vmatmul.mubr.bf16.gmra.mrb[0].mxu0 %v4522
        %v4612 = vpop.f32.mrb[0].mxu0
        %v4613 = vadd.f32 0.0, %v4612
        %v4614 = vpop.f32.mrb[0].mxu0
        %v4615 = vpop.f32.mrb[0].mxu0
        %v4616 = vadd.f32 0.0, %v4615
        %v4617 = vpop.f32.mrb[0].mxu0
        %4618 = vmatprep.mubr.bf16.mxu0 0
        %4619 = vmatmul.mubr.bf16.gmra.mrb[0].mxu0 %v4525
        %v4620 = vpop.f32.mrb[0].mxu0
        %v4621 = vadd.f32 0.0, %v4620
        %v4622 = vpop.f32.mrb[0].mxu0
        %v4623 = vpop.f32.mrb[0].mxu0
        %v4624 = vadd.f32 0.0, %v4623
        %v4625 = vpop.f32.mrb[0].mxu0
        %4626 = vdwg.mxu0
        %v4627 = vadd.f32 %v4458, %v4565
        %v4628 = vadd.f32 %v4459, %v4568
        %v4629 = vadd.f32 %v4460, %v4573
        %v4630 = vadd.f32 %v4461, %v4576
        %v4631 = vadd.f32 %v4462, %v4581
        %v4632 = vadd.f32 %v4463, %v4584
        %v4633 = vadd.f32 %v4464, %v4589
        %v4634 = vadd.f32 %v4465, %v4592
        %v4635 = vadd.f32 %v4466, %v4597
        %v4636 = vadd.f32 %v4467, %v4600
        %v4637 = vadd.f32 %v4468, %v4605
        %v4638 = vadd.f32 %v4469, %v4608
        %v4639 = vadd.f32 %v4470, %v4613
        %v4640 = vadd.f32 %v4471, %v4616
        %v4641 = vadd.f32 %v4472, %v4621
        %v4642 = vadd.f32 %v4473, %v4624
        %s4643 = scalar_lea.vmem %s3, 252
        %v4644 = vld [vmem:[%s4643] sm:$0xf]
        %v4645 = vld [vmem:[%s4643 + $0x4] sm:$0xf]
        %v4646 = vld [vmem:[%s4643 + $0x8] sm:$0xf]
        %v4650 = vunpack.c.l.b16 %v4644
        %v4651 = vunpack.c.l.b16 %v4645
        %v4652 = vunpack.c.l.b16 %v4646
        %v4653 = vpack.c.b16 %v4651, %v4650
        %v4654 = vpack.c.b16 %v4652, %v4652
        %v4657 = vsel %vm1749, %v4486, 0
        %v4660 = vsel %vm1774, %v4654, 0
        %4662 = vmatprep.subr.bf16.mxu0 0
        %4663 = vmatpush1.bf16.msra.mxu0 %v4653
        %4664 = vmatprep.subr.bf16.mxu0 0
        %4665 = vmatpush1.bf16.msra.mxu0 %v4660
        %4666 = vmatprep.subr.bf16.mxu0 0
        %4667 = vmatpush1.bf16.msra.mxu0 0
        %4668 = vmatprep.subr.bf16.mxu0 0
        %4669 = vmatpush1.bf16.msra.mxu0 0
        %4670 = vmatprep.subr.bf16.mxu0 0
        %4671 = vmatpush1.bf16.msra.mxu0 0
        %4672 = vmatprep.subr.bf16.mxu0 0
        %4673 = vmatpush1.bf16.msra.mxu0 0
        %4674 = vmatprep.subr.bf16.mxu0 0
        %4675 = vmatpush1.bf16.msra.mxu0 0
        %4676 = vmatprep.subr.bf16.mxu0 0
        %4677 = vmatpush1.bf16.msra.mxu0 0
        %4678 = vmatprep.subr.bf16.mxu0 0
        %4679 = vmatpush1.bf16.msra.mxu0 0
        %4680 = vmatprep.subr.bf16.mxu0 0
        %4681 = vmatpush1.bf16.msra.mxu0 0
        %4682 = vmatprep.subr.bf16.mxu0 0
        %4683 = vmatpush1.bf16.msra.mxu0 0
        %4684 = vmatprep.subr.bf16.mxu0 0
        %4685 = vmatpush1.bf16.msra.mxu0 0
        %4686 = vmatprep.subr.bf16.mxu0 0
        %4687 = vmatpush1.bf16.msra.mxu0 0
        %4688 = vmatprep.subr.bf16.mxu0 0
        %4689 = vmatpush1.bf16.msra.mxu0 0
        %4690 = vmatprep.subr.bf16.mxu0 0
        %4691 = vmatpush1.bf16.msra.mxu0 0
        %4692 = vmatprep.subr.bf16.mxu0 0
        %4693 = vmatpush1.bf16.msra.mxu0 0
        %4694 = vmatprep.mubr.bf16.mxu0 0
        %4695 = vmatmul.mubr.bf16.gmra.mrb[0].mxu0 %v4507
        %v4696 = vpop.f32.mrb[0].mxu0
        %v4697 = vadd.f32 0.0, %v4696
        %v4698 = vpop.f32.mrb[0].mxu0
        %v4699 = vpop.f32.mrb[0].mxu0
        %v4700 = vadd.f32 0.0, %v4699
        %v4701 = vpop.f32.mrb[0].mxu0
        %4702 = vmatprep.mubr.bf16.mxu0 0
        %4703 = vmatmul.mubr.bf16.gmra.mrb[0].mxu0 %v4510
        %v4704 = vpop.f32.mrb[0].mxu0
        %v4705 = vadd.f32 0.0, %v4704
        %v4706 = vpop.f32.mrb[0].mxu0
        %v4707 = vpop.f32.mrb[0].mxu0
        %v4708 = vadd.f32 0.0, %v4707
        %v4709 = vpop.f32.mrb[0].mxu0
        %4710 = vmatprep.mubr.bf16.mxu0 0
        %4711 = vmatmul.mubr.bf16.gmra.mrb[0].mxu0 %v4513
        %v4712 = vpop.f32.mrb[0].mxu0
        %v4713 = vadd.f32 0.0, %v4712
        %v4714 = vpop.f32.mrb[0].mxu0
        %v4715 = vpop.f32.mrb[0].mxu0
        %v4716 = vadd.f32 0.0, %v4715
        %v4717 = vpop.f32.mrb[0].mxu0
        %4718 = vmatprep.mubr.bf16.mxu0 0
        %4719 = vmatmul.mubr.bf16.gmra.mrb[0].mxu0 %v4516
        %v4720 = vpop.f32.mrb[0].mxu0
        %v4721 = vadd.f32 0.0, %v4720
        %v4722 = vpop.f32.mrb[0].mxu0
        %v4723 = vpop.f32.mrb[0].mxu0
        %v4724 = vadd.f32 0.0, %v4723
        %v4725 = vpop.f32.mrb[0].mxu0
        %4726 = vmatprep.mubr.bf16.mxu0 0
        %4727 = vmatmul.mubr.bf16.gmra.mrb[0].mxu0 %v4519
        %v4728 = vpop.f32.mrb[0].mxu0
        %v4729 = vadd.f32 0.0, %v4728
        %v4730 = vpop.f32.mrb[0].mxu0
        %v4731 = vpop.f32.mrb[0].mxu0
        %v4732 = vadd.f32 0.0, %v4731
        %v4733 = vpop.f32.mrb[0].mxu0
        %4734 = vmatprep.mubr.bf16.mxu0 0
        %4735 = vmatmul.mubr.bf16.gmra.mrb[0].mxu0 %v4522
        %v4736 = vpop.f32.mrb[0].mxu0
        %v4737 = vadd.f32 0.0, %v4736
        %v4738 = vpop.f32.mrb[0].mxu0
        %v4739 = vpop.f32.mrb[0].mxu0
        %v4740 = vadd.f32 0.0, %v4739
        %v4741 = vpop.f32.mrb[0].mxu0
        %4742 = vmatprep.mubr.bf16.mxu0 0
        %4743 = vmatmul.mubr.bf16.gmra.mrb[0].mxu0 %v4525
        %v4744 = vpop.f32.mrb[0].mxu0
        %v4745 = vadd.f32 0.0, %v4744
        %v4746 = vpop.f32.mrb[0].mxu0
        %v4747 = vpop.f32.mrb[0].mxu0
        %v4748 = vadd.f32 0.0, %v4747
        %v4749 = vpop.f32.mrb[0].mxu0
        %4750 = vmatprep.mubr.bf16.mxu0 0
        %4751 = vmatmul.mubr.bf16.gmra.mrb[0].mxu0 %v4657
        %v4752 = vpop.f32.mrb[0].mxu0
        %v4753 = vadd.f32 0.0, %v4752
        %v4754 = vpop.f32.mrb[0].mxu0
        %v4755 = vpop.f32.mrb[0].mxu0
        %v4756 = vadd.f32 0.0, %v4755
        %v4757 = vpop.f32.mrb[0].mxu0
        %4758 = vdwg.mxu0
        %v4759 = vadd.f32 %v4627, %v4697
        %v4760 = vadd.f32 %v4628, %v4700
        %v4761 = vadd.f32 %v4629, %v4705
        %v4762 = vadd.f32 %v4630, %v4708
        %v4763 = vadd.f32 %v4631, %v4713
        %v4764 = vadd.f32 %v4632, %v4716
        %v4765 = vadd.f32 %v4633, %v4721
        %v4766 = vadd.f32 %v4634, %v4724
        %v4767 = vadd.f32 %v4635, %v4729
        %v4768 = vadd.f32 %v4636, %v4732
        %v4769 = vadd.f32 %v4637, %v4737
        %v4770 = vadd.f32 %v4638, %v4740
        %v4771 = vadd.f32 %v4639, %v4745
        %v4772 = vadd.f32 %v4640, %v4748
        %v4773 = vadd.f32 %v4641, %v4753
        %v4774 = vadd.f32 %v4642, %v4756
        %s4775 = scalar_lea.vmem %s3, 264
        %v4776 = vld [vmem:[%s4775] sm:$0xf]
        %v4777 = vld [vmem:[%s4775 + $0x4] sm:$0xf]
        %v4778 = vld [vmem:[%s4775 + $0x8] sm:$0xf]
        %v4782 = vunpack.c.l.b16 %v4776
        %v4783 = vunpack.c.l.b16 %v4777
        %v4784 = vunpack.c.l.b16 %v4778
        %v4785 = vpack.c.b16 %v4783, %v4782
        %v4786 = vpack.c.b16 %v4784, %v4784
        %v4789 = vsel %vm1749, %v4487, 0
        %v4792 = vsel %vm1774, %v4786, 0
        %4794 = vmatprep.subr.bf16.mxu0 0
        %4795 = vmatpush1.bf16.msra.mxu0 %v4785
        %4796 = vmatprep.subr.bf16.mxu0 0
        %4797 = vmatpush1.bf16.msra.mxu0 %v4792
        %4798 = vmatprep.subr.bf16.mxu0 0
        %4799 = vmatpush1.bf16.msra.mxu0 0
        %4800 = vmatprep.subr.bf16.mxu0 0
        %4801 = vmatpush1.bf16.msra.mxu0 0
        %4802 = vmatprep.subr.bf16.mxu0 0
        %4803 = vmatpush1.bf16.msra.mxu0 0
        %4804 = vmatprep.subr.bf16.mxu0 0
        %4805 = vmatpush1.bf16.msra.mxu0 0
        %4806 = vmatprep.subr.bf16.mxu0 0
        %4807 = vmatpush1.bf16.msra.mxu0 0
        %4808 = vmatprep.subr.bf16.mxu0 0
        %4809 = vmatpush1.bf16.msra.mxu0 0
        %4810 = vmatprep.subr.bf16.mxu0 0
        %4811 = vmatpush1.bf16.msra.mxu0 0
        %4812 = vmatprep.subr.bf16.mxu0 0
        %4813 = vmatpush1.bf16.msra.mxu0 0
        %4814 = vmatprep.subr.bf16.mxu0 0
        %4815 = vmatpush1.bf16.msra.mxu0 0
        %4816 = vmatprep.subr.bf16.mxu0 0
        %4817 = vmatpush1.bf16.msra.mxu0 0
        %4818 = vmatprep.subr.bf16.mxu0 0
        %4819 = vmatpush1.bf16.msra.mxu0 0
        %4820 = vmatprep.subr.bf16.mxu0 0
        %4821 = vmatpush1.bf16.msra.mxu0 0
        %4822 = vmatprep.subr.bf16.mxu0 0
        %4823 = vmatpush1.bf16.msra.mxu0 0
        %4824 = vmatprep.subr.bf16.mxu0 0
        %4825 = vmatpush1.bf16.msra.mxu0 0
        %4826 = vmatprep.mubr.bf16.mxu0 0
        %4827 = vmatmul.mubr.bf16.gmra.mrb[0].mxu0 %v4510
        %v4828 = vpop.f32.mrb[0].mxu0
        %v4829 = vadd.f32 0.0, %v4828
        %v4830 = vpop.f32.mrb[0].mxu0
        %v4831 = vpop.f32.mrb[0].mxu0
        %v4832 = vadd.f32 0.0, %v4831
        %v4833 = vpop.f32.mrb[0].mxu0
        %4834 = vmatprep.mubr.bf16.mxu0 0
        %4835 = vmatmul.mubr.bf16.gmra.mrb[0].mxu0 %v4513
        %v4836 = vpop.f32.mrb[0].mxu0
        %v4837 = vadd.f32 0.0, %v4836
        %v4838 = vpop.f32.mrb[0].mxu0
        %v4839 = vpop.f32.mrb[0].mxu0
        %v4840 = vadd.f32 0.0, %v4839
        %v4841 = vpop.f32.mrb[0].mxu0
        %4842 = vmatprep.mubr.bf16.mxu0 0
        %4843 = vmatmul.mubr.bf16.gmra.mrb[0].mxu0 %v4516
        %v4844 = vpop.f32.mrb[0].mxu0
        %v4845 = vadd.f32 0.0, %v4844
        %v4846 = vpop.f32.mrb[0].mxu0
        %v4847 = vpop.f32.mrb[0].mxu0
        %v4848 = vadd.f32 0.0, %v4847
        %v4849 = vpop.f32.mrb[0].mxu0
        %4850 = vmatprep.mubr.bf16.mxu0 0
        %4851 = vmatmul.mubr.bf16.gmra.mrb[0].mxu0 %v4519
        %v4852 = vpop.f32.mrb[0].mxu0
        %v4853 = vadd.f32 0.0, %v4852
        %v4854 = vpop.f32.mrb[0].mxu0
        %v4855 = vpop.f32.mrb[0].mxu0
        %v4856 = vadd.f32 0.0, %v4855
        %v4857 = vpop.f32.mrb[0].mxu0
        %4858 = vmatprep.mubr.bf16.mxu0 0
        %4859 = vmatmul.mubr.bf16.gmra.mrb[0].mxu0 %v4522
        %v4860 = vpop.f32.mrb[0].mxu0
        %v4861 = vadd.f32 0.0, %v4860
        %v4862 = vpop.f32.mrb[0].mxu0
        %v4863 = vpop.f32.mrb[0].mxu0
        %v4864 = vadd.f32 0.0, %v4863
        %v4865 = vpop.f32.mrb[0].mxu0
        %4866 = vmatprep.mubr.bf16.mxu0 0
        %4867 = vmatmul.mubr.bf16.gmra.mrb[0].mxu0 %v4525
        %v4868 = vpop.f32.mrb[0].mxu0
        %v4869 = vadd.f32 0.0, %v4868
        %v4870 = vpop.f32.mrb[0].mxu0
        %v4871 = vpop.f32.mrb[0].mxu0
        %v4872 = vadd.f32 0.0, %v4871
        %v4873 = vpop.f32.mrb[0].mxu0
        %4874 = vmatprep.mubr.bf16.mxu0 0
        %4875 = vmatmul.mubr.bf16.gmra.mrb[0].mxu0 %v4657
        %v4876 = vpop.f32.mrb[0].mxu0
        %v4877 = vadd.f32 0.0, %v4876
        %v4878 = vpop.f32.mrb[0].mxu0
        %v4879 = vpop.f32.mrb[0].mxu0
        %v4880 = vadd.f32 0.0, %v4879
        %v4881 = vpop.f32.mrb[0].mxu0
        %4882 = vmatprep.mubr.bf16.mxu0 0
        %4883 = vmatmul.mubr.bf16.gmra.mrb[0].mxu0 %v4789
        %v4884 = vpop.f32.mrb[0].mxu0
        %v4885 = vadd.f32 0.0, %v4884
        %v4886 = vpop.f32.mrb[0].mxu0
        %v4887 = vpop.f32.mrb[0].mxu0
        %v4888 = vadd.f32 0.0, %v4887
        %v4889 = vpop.f32.mrb[0].mxu0
        %4890 = vdwg.mxu0
        %v4891 = vadd.f32 %v4759, %v4829
        %v4892 = vadd.f32 %v4760, %v4832
        %v4893 = vadd.f32 %v4761, %v4837
        %v4894 = vadd.f32 %v4762, %v4840
        %v4895 = vadd.f32 %v4763, %v4845
        %v4896 = vadd.f32 %v4764, %v4848
        %v4897 = vadd.f32 %v4765, %v4853
        %v4898 = vadd.f32 %v4766, %v4856
        %v4899 = vadd.f32 %v4767, %v4861
        %v4900 = vadd.f32 %v4768, %v4864
        %v4901 = vadd.f32 %v4769, %v4869
        %v4902 = vadd.f32 %v4770, %v4872
        %v4903 = vadd.f32 %v4771, %v4877
        %v4904 = vadd.f32 %v4772, %v4880
        %v4905 = vadd.f32 %v4773, %v4885
        %v4906 = vadd.f32 %v4774, %v4888
        %s4907 = scalar_lea.vmem %s3, 276
        %v4908 = vld [vmem:[%s4907] sm:$0xf]
        %v4909 = vld [vmem:[%s4907 + $0x4] sm:$0xf]
        %v4910 = vld [vmem:[%s4907 + $0x8] sm:$0xf]
        %v4914 = vunpack.c.l.b16 %v4908
        %v4915 = vunpack.c.l.b16 %v4909
        %v4916 = vunpack.c.l.b16 %v4910
        %v4917 = vpack.c.b16 %v4915, %v4914
        %v4918 = vpack.c.b16 %v4916, %v4916
        %v4921 = vsel %vm1749, %v4488, 0
        %v4924 = vsel %vm1774, %v4918, 0
        %4926 = vmatprep.subr.bf16.mxu0 0
        %4927 = vmatpush1.bf16.msra.mxu0 %v4917
        %4928 = vmatprep.subr.bf16.mxu0 0
        %4929 = vmatpush1.bf16.msra.mxu0 %v4924
        %4930 = vmatprep.subr.bf16.mxu0 0
        %4931 = vmatpush1.bf16.msra.mxu0 0
        %4932 = vmatprep.subr.bf16.mxu0 0
        %4933 = vmatpush1.bf16.msra.mxu0 0
        %4934 = vmatprep.subr.bf16.mxu0 0
        %4935 = vmatpush1.bf16.msra.mxu0 0
        %4936 = vmatprep.subr.bf16.mxu0 0
        %4937 = vmatpush1.bf16.msra.mxu0 0
        %4938 = vmatprep.subr.bf16.mxu0 0
        %4939 = vmatpush1.bf16.msra.mxu0 0
        %4940 = vmatprep.subr.bf16.mxu0 0
        %4941 = vmatpush1.bf16.msra.mxu0 0
        %4942 = vmatprep.subr.bf16.mxu0 0
        %4943 = vmatpush1.bf16.msra.mxu0 0
        %4944 = vmatprep.subr.bf16.mxu0 0
        %4945 = vmatpush1.bf16.msra.mxu0 0
        %4946 = vmatprep.subr.bf16.mxu0 0
        %4947 = vmatpush1.bf16.msra.mxu0 0
        %4948 = vmatprep.subr.bf16.mxu0 0
        %4949 = vmatpush1.bf16.msra.mxu0 0
        %4950 = vmatprep.subr.bf16.mxu0 0
        %4951 = vmatpush1.bf16.msra.mxu0 0
        %4952 = vmatprep.subr.bf16.mxu0 0
        %4953 = vmatpush1.bf16.msra.mxu0 0
        %4954 = vmatprep.subr.bf16.mxu0 0
        %4955 = vmatpush1.bf16.msra.mxu0 0
        %4956 = vmatprep.subr.bf16.mxu0 0
        %4957 = vmatpush1.bf16.msra.mxu0 0
        %4958 = vmatprep.mubr.bf16.mxu0 0
        %4959 = vmatmul.mubr.bf16.gmra.mrb[0].mxu0 %v4513
        %v4960 = vpop.f32.mrb[0].mxu0
        %v4961 = vadd.f32 0.0, %v4960
        %v4962 = vpop.f32.mrb[0].mxu0
        %v4963 = vpop.f32.mrb[0].mxu0
        %v4964 = vadd.f32 0.0, %v4963
        %v4965 = vpop.f32.mrb[0].mxu0
        %4966 = vmatprep.mubr.bf16.mxu0 0
        %4967 = vmatmul.mubr.bf16.gmra.mrb[0].mxu0 %v4516
        %v4968 = vpop.f32.mrb[0].mxu0
        %v4969 = vadd.f32 0.0, %v4968
        %v4970 = vpop.f32.mrb[0].mxu0
        %v4971 = vpop.f32.mrb[0].mxu0
        %v4972 = vadd.f32 0.0, %v4971
        %v4973 = vpop.f32.mrb[0].mxu0
        %4974 = vmatprep.mubr.bf16.mxu0 0
        %4975 = vmatmul.mubr.bf16.gmra.mrb[0].mxu0 %v4519
        %v4976 = vpop.f32.mrb[0].mxu0
        %v4977 = vadd.f32 0.0, %v4976
        %v4978 = vpop.f32.mrb[0].mxu0
        %v4979 = vpop.f32.mrb[0].mxu0
        %v4980 = vadd.f32 0.0, %v4979
        %v4981 = vpop.f32.mrb[0].mxu0
        %4982 = vmatprep.mubr.bf16.mxu0 0
        %4983 = vmatmul.mubr.bf16.gmra.mrb[0].mxu0 %v4522
        %v4984 = vpop.f32.mrb[0].mxu0
        %v4985 = vadd.f32 0.0, %v4984
        %v4986 = vpop.f32.mrb[0].mxu0
        %v4987 = vpop.f32.mrb[0].mxu0
        %v4988 = vadd.f32 0.0, %v4987
        %v4989 = vpop.f32.mrb[0].mxu0
        %4990 = vmatprep.mubr.bf16.mxu0 0
        %4991 = vmatmul.mubr.bf16.gmra.mrb[0].mxu0 %v4525
        %v4992 = vpop.f32.mrb[0].mxu0
        %v4993 = vadd.f32 0.0, %v4992
        %v4994 = vpop.f32.mrb[0].mxu0
        %v4995 = vpop.f32.mrb[0].mxu0
        %v4996 = vadd.f32 0.0, %v4995
        %v4997 = vpop.f32.mrb[0].mxu0
        %4998 = vmatprep.mubr.bf16.mxu0 0
        %4999 = vmatmul.mubr.bf16.gmra.mrb[0].mxu0 %v4657
        %v5000 = vpop.f32.mrb[0].mxu0
        %v5001 = vadd.f32 0.0, %v5000
        %v5002 = vpop.f32.mrb[0].mxu0
        %v5003 = vpop.f32.mrb[0].mxu0
        %v5004 = vadd.f32 0.0, %v5003
        %v5005 = vpop.f32.mrb[0].mxu0
        %5006 = vmatprep.mubr.bf16.mxu0 0
        %5007 = vmatmul.mubr.bf16.gmra.mrb[0].mxu0 %v4789
        %v5008 = vpop.f32.mrb[0].mxu0
        %v5009 = vadd.f32 0.0, %v5008
        %v5010 = vpop.f32.mrb[0].mxu0
        %v5011 = vpop.f32.mrb[0].mxu0
        %v5012 = vadd.f32 0.0, %v5011
        %v5013 = vpop.f32.mrb[0].mxu0
        %5014 = vmatprep.mubr.bf16.mxu0 0
        %5015 = vmatmul.mubr.bf16.gmra.mrb[0].mxu0 %v4921
        %v5016 = vpop.f32.mrb[0].mxu0
        %v5017 = vadd.f32 0.0, %v5016
        %v5018 = vpop.f32.mrb[0].mxu0
        %v5019 = vpop.f32.mrb[0].mxu0
        %v5020 = vadd.f32 0.0, %v5019
        %v5021 = vpop.f32.mrb[0].mxu0
        %5022 = vdwg.mxu0
        %v5023 = vadd.f32 %v4891, %v4961
        %v5024 = vadd.f32 %v4892, %v4964
        %v5025 = vadd.f32 %v4893, %v4969
        %v5026 = vadd.f32 %v4894, %v4972
        %v5027 = vadd.f32 %v4895, %v4977
        %v5028 = vadd.f32 %v4896, %v4980
        %v5029 = vadd.f32 %v4897, %v4985
        %v5030 = vadd.f32 %v4898, %v4988
        %v5031 = vadd.f32 %v4899, %v4993
        %v5032 = vadd.f32 %v4900, %v4996
        %v5033 = vadd.f32 %v4901, %v5001
        %v5034 = vadd.f32 %v4902, %v5004
        %v5035 = vadd.f32 %v4903, %v5009
        %v5036 = vadd.f32 %v4904, %v5012
        %v5037 = vadd.f32 %v4905, %v5017
        %v5038 = vadd.f32 %v4906, %v5020
        %s5039 = scalar_lea.vmem %s3, 288
        %v5040 = vld [vmem:[%s5039] sm:$0xf]
        %v5041 = vld [vmem:[%s5039 + $0x4] sm:$0xf]
        %v5042 = vld [vmem:[%s5039 + $0x8] sm:$0xf]
        %v5046 = vunpack.c.l.b16 %v5040
        %v5047 = vunpack.c.l.b16 %v5041
        %v5048 = vunpack.c.l.b16 %v5042
        %v5049 = vpack.c.b16 %v5047, %v5046
        %v5050 = vpack.c.b16 %v5048, %v5048
        %v5053 = vsel %vm1749, %v4489, 0
        %v5056 = vsel %vm1774, %v5050, 0
        %5058 = vmatprep.subr.bf16.mxu0 0
        %5059 = vmatpush1.bf16.msra.mxu0 %v5049
        %5060 = vmatprep.subr.bf16.mxu0 0
        %5061 = vmatpush1.bf16.msra.mxu0 %v5056
        %5062 = vmatprep.subr.bf16.mxu0 0
        %5063 = vmatpush1.bf16.msra.mxu0 0
        %5064 = vmatprep.subr.bf16.mxu0 0
        %5065 = vmatpush1.bf16.msra.mxu0 0
        %5066 = vmatprep.subr.bf16.mxu0 0
        %5067 = vmatpush1.bf16.msra.mxu0 0
        %5068 = vmatprep.subr.bf16.mxu0 0
        %5069 = vmatpush1.bf16.msra.mxu0 0
        %5070 = vmatprep.subr.bf16.mxu0 0
        %5071 = vmatpush1.bf16.msra.mxu0 0
        %5072 = vmatprep.subr.bf16.mxu0 0
        %5073 = vmatpush1.bf16.msra.mxu0 0
        %5074 = vmatprep.subr.bf16.mxu0 0
        %5075 = vmatpush1.bf16.msra.mxu0 0
        %5076 = vmatprep.subr.bf16.mxu0 0
        %5077 = vmatpush1.bf16.msra.mxu0 0
        %5078 = vmatprep.subr.bf16.mxu0 0
        %5079 = vmatpush1.bf16.msra.mxu0 0
        %5080 = vmatprep.subr.bf16.mxu0 0
        %5081 = vmatpush1.bf16.msra.mxu0 0
        %5082 = vmatprep.subr.bf16.mxu0 0
        %5083 = vmatpush1.bf16.msra.mxu0 0
        %5084 = vmatprep.subr.bf16.mxu0 0
        %5085 = vmatpush1.bf16.msra.mxu0 0
        %5086 = vmatprep.subr.bf16.mxu0 0
        %5087 = vmatpush1.bf16.msra.mxu0 0
        %5088 = vmatprep.subr.bf16.mxu0 0
        %5089 = vmatpush1.bf16.msra.mxu0 0
        %5090 = vmatprep.mubr.bf16.mxu0 0
        %5091 = vmatmul.mubr.bf16.gmra.mrb[0].mxu0 %v4516
        %v5092 = vpop.f32.mrb[0].mxu0
        %v5093 = vadd.f32 0.0, %v5092
        %v5094 = vpop.f32.mrb[0].mxu0
        %v5095 = vpop.f32.mrb[0].mxu0
        %v5096 = vadd.f32 0.0, %v5095
        %v5097 = vpop.f32.mrb[0].mxu0
        %5098 = vmatprep.mubr.bf16.mxu0 0
        %5099 = vmatmul.mubr.bf16.gmra.mrb[0].mxu0 %v4519
        %v5100 = vpop.f32.mrb[0].mxu0
        %v5101 = vadd.f32 0.0, %v5100
        %v5102 = vpop.f32.mrb[0].mxu0
        %v5103 = vpop.f32.mrb[0].mxu0
        %v5104 = vadd.f32 0.0, %v5103
        %v5105 = vpop.f32.mrb[0].mxu0
        %5106 = vmatprep.mubr.bf16.mxu0 0
        %5107 = vmatmul.mubr.bf16.gmra.mrb[0].mxu0 %v4522
        %v5108 = vpop.f32.mrb[0].mxu0
        %v5109 = vadd.f32 0.0, %v5108
        %v5110 = vpop.f32.mrb[0].mxu0
        %v5111 = vpop.f32.mrb[0].mxu0
        %v5112 = vadd.f32 0.0, %v5111
        %v5113 = vpop.f32.mrb[0].mxu0
        %5114 = vmatprep.mubr.bf16.mxu0 0
        %5115 = vmatmul.mubr.bf16.gmra.mrb[0].mxu0 %v4525
        %v5116 = vpop.f32.mrb[0].mxu0
        %v5117 = vadd.f32 0.0, %v5116
        %v5118 = vpop.f32.mrb[0].mxu0
        %v5119 = vpop.f32.mrb[0].mxu0
        %v5120 = vadd.f32 0.0, %v5119
        %v5121 = vpop.f32.mrb[0].mxu0
        %5122 = vmatprep.mubr.bf16.mxu0 0
        %5123 = vmatmul.mubr.bf16.gmra.mrb[0].mxu0 %v4657
        %v5124 = vpop.f32.mrb[0].mxu0
        %v5125 = vadd.f32 0.0, %v5124
        %v5126 = vpop.f32.mrb[0].mxu0
        %v5127 = vpop.f32.mrb[0].mxu0
        %v5128 = vadd.f32 0.0, %v5127
        %v5129 = vpop.f32.mrb[0].mxu0
        %5130 = vmatprep.mubr.bf16.mxu0 0
        %5131 = vmatmul.mubr.bf16.gmra.mrb[0].mxu0 %v4789
        %v5132 = vpop.f32.mrb[0].mxu0
        %v5133 = vadd.f32 0.0, %v5132
        %v5134 = vpop.f32.mrb[0].mxu0
        %v5135 = vpop.f32.mrb[0].mxu0
        %v5136 = vadd.f32 0.0, %v5135
        %v5137 = vpop.f32.mrb[0].mxu0
        %5138 = vmatprep.mubr.bf16.mxu0 0
        %5139 = vmatmul.mubr.bf16.gmra.mrb[0].mxu0 %v4921
        %v5140 = vpop.f32.mrb[0].mxu0
        %v5141 = vadd.f32 0.0, %v5140
        %v5142 = vpop.f32.mrb[0].mxu0
        %v5143 = vpop.f32.mrb[0].mxu0
        %v5144 = vadd.f32 0.0, %v5143
        %v5145 = vpop.f32.mrb[0].mxu0
        %5146 = vmatprep.mubr.bf16.mxu0 0
        %5147 = vmatmul.mubr.bf16.gmra.mrb[0].mxu0 %v5053
        %v5148 = vpop.f32.mrb[0].mxu0
        %v5149 = vadd.f32 0.0, %v5148
        %v5150 = vpop.f32.mrb[0].mxu0
        %v5151 = vpop.f32.mrb[0].mxu0
        %v5152 = vadd.f32 0.0, %v5151
        %v5153 = vpop.f32.mrb[0].mxu0
        %5154 = vdwg.mxu0
        %v5155 = vadd.f32 %v5023, %v5093
        %v5156 = vadd.f32 %v5024, %v5096
        %v5157 = vadd.f32 %v5025, %v5101
        %v5158 = vadd.f32 %v5026, %v5104
        %v5159 = vadd.f32 %v5027, %v5109
        %v5160 = vadd.f32 %v5028, %v5112
        %v5161 = vadd.f32 %v5029, %v5117
        %v5162 = vadd.f32 %v5030, %v5120
        %v5163 = vadd.f32 %v5031, %v5125
        %v5164 = vadd.f32 %v5032, %v5128
        %v5165 = vadd.f32 %v5033, %v5133
        %v5166 = vadd.f32 %v5034, %v5136
        %v5167 = vadd.f32 %v5035, %v5141
        %v5168 = vadd.f32 %v5036, %v5144
        %v5169 = vadd.f32 %v5037, %v5149
        %v5170 = vadd.f32 %v5038, %v5152
        %s5171 = smul.u32 %s1713, 128
        %s5172 = scalar_lea.vmem [#allocation3], %s5171
        %vm5173 = vcmask 392192
        %5174 = vst.msk [vmem:[%s5172] sm:$0xff] %vm5173, %v5155
        %5175 = vst.msk [vmem:[%s5172 + $0x8] sm:$0xff] %vm5173, %v5156
        %5176 = vst.msk [vmem:[%s5172 + $0x10] sm:$0xff] %vm5173, %v5157
        %5177 = vst.msk [vmem:[%s5172 + $0x18] sm:$0xff] %vm5173, %v5158
        %5178 = vst.msk [vmem:[%s5172 + $0x20] sm:$0xff] %vm5173, %v5159
        %5179 = vst.msk [vmem:[%s5172 + $0x28] sm:$0xff] %vm5173, %v5160
        %5180 = vst.msk [vmem:[%s5172 + $0x30] sm:$0xff] %vm5173, %v5161
        %5181 = vst.msk [vmem:[%s5172 + $0x38] sm:$0xff] %vm5173, %v5162
        %5182 = vst.msk [vmem:[%s5172 + $0x40] sm:$0xff] %vm5173, %v5163
        %5183 = vst.msk [vmem:[%s5172 + $0x48] sm:$0xff] %vm5173, %v5164
        %5184 = vst.msk [vmem:[%s5172 + $0x50] sm:$0xff] %vm5173, %v5165
        %5185 = vst.msk [vmem:[%s5172 + $0x58] sm:$0xff] %vm5173, %v5166
        %5186 = vst.msk [vmem:[%s5172 + $0x60] sm:$0xff] %vm5173, %v5167
        %5187 = vst.msk [vmem:[%s5172 + $0x68] sm:$0xff] %vm5173, %v5168
        %5188 = vst.msk [vmem:[%s5172 + $0x70] sm:$0xff] %vm5173, %v5169
        %5189 = vst.msk [vmem:[%s5172 + $0x78] sm:$0xff] %vm5173, %v5170
      $region84: #{network_forward.1} parent=71 // loop_footer
        %s1717 = sadd.s32 1, %s1713
      $region85: #{network_forward.1} parent=71 // loop_footer_branch
        %1712 = sbr.rel target = $region81
      $region86: #{network_forward.1} parent=71 // loop_exit
        _
      %v5190 = vld [vmem:[%s4] sm:$0x1]
      %v5191 = vld [vmem:[#allocation3] sm:$0xff]
      %v5192 = vld [vmem:[#allocation3 + $0x8] sm:$0xff]
      %v5193 = vld [vmem:[#allocation3 + $0x10] sm:$0xff]
      %v5194 = vld [vmem:[#allocation3 + $0x18] sm:$0xff]
      %v5195 = vld [vmem:[#allocation3 + $0x20] sm:$0xff]
      %v5196 = vld [vmem:[#allocation3 + $0x28] sm:$0xff]
      %v5197 = vld [vmem:[#allocation3 + $0x30] sm:$0xff]
      %v5198 = vld [vmem:[#allocation3 + $0x38] sm:$0xff]
      %v5199 = vld [vmem:[#allocation3 + $0x40] sm:$0xff]
      %v5200 = vld [vmem:[#allocation3 + $0x48] sm:$0xff]
      %v5201 = vld [vmem:[#allocation3 + $0x50] sm:$0xff]
      %v5202 = vld [vmem:[#allocation3 + $0x58] sm:$0xff]
      %v5203 = vld [vmem:[#allocation3 + $0x60] sm:$0xff]
      %v5204 = vld [vmem:[#allocation3 + $0x68] sm:$0xff]
      %v5205 = vld [vmem:[#allocation3 + $0x70] sm:$0xff]
      %v5206 = vld [vmem:[#allocation3 + $0x78] sm:$0xff]
      %s5207 = scalar_lea.vmem [#allocation3], 128
      %v5208 = vld [vmem:[%s5207] sm:$0xff]
      %v5209 = vld [vmem:[%s5207 + $0x8] sm:$0xff]
      %v5210 = vld [vmem:[%s5207 + $0x10] sm:$0xff]
      %v5211 = vld [vmem:[%s5207 + $0x18] sm:$0xff]
      %v5212 = vld [vmem:[%s5207 + $0x20] sm:$0xff]
      %v5213 = vld [vmem:[%s5207 + $0x28] sm:$0xff]
      %v5214 = vld [vmem:[%s5207 + $0x30] sm:$0xff]
      %v5215 = vld [vmem:[%s5207 + $0x38] sm:$0xff]
      %v5216 = vld [vmem:[%s5207 + $0x40] sm:$0xff]
      %v5217 = vld [vmem:[%s5207 + $0x48] sm:$0xff]
      %v5218 = vld [vmem:[%s5207 + $0x50] sm:$0xff]
      %v5219 = vld [vmem:[%s5207 + $0x58] sm:$0xff]
      %v5220 = vld [vmem:[%s5207 + $0x60] sm:$0xff]
      %v5221 = vld [vmem:[%s5207 + $0x68] sm:$0xff]
      %v5222 = vld [vmem:[%s5207 + $0x70] sm:$0xff]
      %v5223 = vld [vmem:[%s5207 + $0x78] sm:$0xff]
      %v5224 = vmax.f32 %v5191, %v5208
      %v5225 = vmax.f32 %v5192, %v5209
      %v5226 = vmax.f32 %v5193, %v5210
      %v5227 = vmax.f32 %v5194, %v5211
      %v5228 = vmax.f32 %v5195, %v5212
      %v5229 = vmax.f32 %v5196, %v5213
      %v5230 = vmax.f32 %v5197, %v5214
      %v5231 = vmax.f32 %v5198, %v5215
      %v5232 = vmax.f32 %v5199, %v5216
      %v5233 = vmax.f32 %v5200, %v5217
      %v5234 = vmax.f32 %v5201, %v5218
      %v5235 = vmax.f32 %v5202, %v5219
      %v5236 = vmax.f32 %v5203, %v5220
      %v5237 = vmax.f32 %v5204, %v5221
      %v5238 = vmax.f32 %v5205, %v5222
      %v5239 = vmax.f32 %v5206, %v5223
      %v5240 = vmax.f32 %v5224, %v5226
      %v5241 = vmax.f32 %v5225, %v5227
      %v5243 = vlaneseq
      %v5244 = vshrl.u32 %v5243, 7
      %v5245 = vsub.s32 0, %v5244
      %v5246 = vrot.slane %v5190, %v5245
      %v5248 = vadd.f32 %v5240, %v5246
      %v5249 = vadd.f32 %v5241, %v5246
      %v5250 = vmax.f32 %v5248, 0.0
      %v5251 = vmax.f32 %v5249, 0.0
      %vm5252 = vcmask 392192
      %5253 = vst.msk [vmem:[#allocation4] sm:$0xff] %vm5252, %v5250
      %5254 = vst.msk [vmem:[#allocation4 + $0x30] sm:$0xff] %vm5252, %v5251
      %v5255 = vmax.f32 %v5228, %v5230
      %v5256 = vmax.f32 %v5229, %v5231
      %v5257 = vadd.f32 %v5255, %v5246
      %v5258 = vadd.f32 %v5256, %v5246
      %v5259 = vmax.f32 %v5257, 0.0
      %v5260 = vmax.f32 %v5258, 0.0
      %5263 = vrot.lane.b32.xlu0 %v5259, 48
      %v5264 = vpop.permute.xlu0 %5263
      %5265 = vrot.lane.b32.xlu0 %v5260, 48
      %v5266 = vpop.permute.xlu0 %5265
      %vm5269 = vcmask 785792
      %5270 = vst.msk [vmem:[#allocation4] sm:$0xff] %vm5269, %v5264
      %5271 = vst.msk [vmem:[#allocation4 + $0x30] sm:$0xff] %vm5269, %v5266
      %v5272 = vmax.f32 %v5232, %v5234
      %v5273 = vmax.f32 %v5233, %v5235
      %v5274 = vadd.f32 %v5272, %v5246
      %v5275 = vadd.f32 %v5273, %v5246
      %v5276 = vmax.f32 %v5274, 0.0
      %v5277 = vmax.f32 %v5275, 0.0
      %5280 = vrot.lane.b32.xlu0 %v5276, 96
      %v5281 = vpop.permute.xlu0 %5280
      %5282 = vrot.lane.b32.xlu0 %v5277, 96
      %v5283 = vpop.permute.xlu0 %5282
      %vm5286 = vcmask 1048320
      %5287 = vst.msk [vmem:[#allocation4] sm:$0xff] %vm5286, %v5281
      %vm5288 = vcmask 130048
      %5289 = vst.msk [vmem:[#allocation4 + $0x8] sm:$0xff] %vm5288, %v5281
      %5290 = vst.msk [vmem:[#allocation4 + $0x30] sm:$0xff] %vm5286, %v5283
      %5291 = vst.msk [vmem:[#allocation4 + $0x38] sm:$0xff] %vm5288, %v5283
      %v5292 = vmax.f32 %v5236, %v5238
      %v5293 = vmax.f32 %v5237, %v5239
      %v5294 = vadd.f32 %v5292, %v5246
      %v5295 = vadd.f32 %v5293, %v5246
      %v5296 = vmax.f32 %v5294, 0.0
      %v5297 = vmax.f32 %v5295, 0.0
      %5300 = vrot.lane.b32.xlu0 %v5296, 16
      %v5301 = vpop.permute.xlu0 %5300
      %5302 = vrot.lane.b32.xlu0 %v5297, 16
      %v5303 = vpop.permute.xlu0 %5302
      %vm5306 = vcmask 523392
      %5307 = vst.msk [vmem:[#allocation4 + $0x8] sm:$0xff] %vm5306, %v5301
      %5308 = vst.msk [vmem:[#allocation4 + $0x38] sm:$0xff] %vm5306, %v5303
      %s5309 = scalar_lea.vmem [#allocation3], 256
      %v5310 = vld [vmem:[%s5309] sm:$0xff]
      %v5311 = vld [vmem:[%s5309 + $0x8] sm:$0xff]
      %v5312 = vld [vmem:[%s5309 + $0x10] sm:$0xff]
      %v5313 = vld [vmem:[%s5309 + $0x18] sm:$0xff]
      %v5314 = vld [vmem:[%s5309 + $0x20] sm:$0xff]
      %v5315 = vld [vmem:[%s5309 + $0x28] sm:$0xff]
      %v5316 = vld [vmem:[%s5309 + $0x30] sm:$0xff]
      %v5317 = vld [vmem:[%s5309 + $0x38] sm:$0xff]
      %v5318 = vld [vmem:[%s5309 + $0x40] sm:$0xff]
      %v5319 = vld [vmem:[%s5309 + $0x48] sm:$0xff]
      %v5320 = vld [vmem:[%s5309 + $0x50] sm:$0xff]
      %v5321 = vld [vmem:[%s5309 + $0x58] sm:$0xff]
      %v5322 = vld [vmem:[%s5309 + $0x60] sm:$0xff]
      %v5323 = vld [vmem:[%s5309 + $0x68] sm:$0xff]
      %v5324 = vld [vmem:[%s5309 + $0x70] sm:$0xff]
      %v5325 = vld [vmem:[%s5309 + $0x78] sm:$0xff]
      %s5326 = scalar_lea.vmem [#allocation3], 384
      %v5327 = vld [vmem:[%s5326] sm:$0xff]
      %v5328 = vld [vmem:[%s5326 + $0x8] sm:$0xff]
      %v5329 = vld [vmem:[%s5326 + $0x10] sm:$0xff]
      %v5330 = vld [vmem:[%s5326 + $0x18] sm:$0xff]
      %v5331 = vld [vmem:[%s5326 + $0x20] sm:$0xff]
      %v5332 = vld [vmem:[%s5326 + $0x28] sm:$0xff]
      %v5333 = vld [vmem:[%s5326 + $0x30] sm:$0xff]
      %v5334 = vld [vmem:[%s5326 + $0x38] sm:$0xff]
      %v5335 = vld [vmem:[%s5326 + $0x40] sm:$0xff]
      %v5336 = vld [vmem:[%s5326 + $0x48] sm:$0xff]
      %v5337 = vld [vmem:[%s5326 + $0x50] sm:$0xff]
      %v5338 = vld [vmem:[%s5326 + $0x58] sm:$0xff]
      %v5339 = vld [vmem:[%s5326 + $0x60] sm:$0xff]
      %v5340 = vld [vmem:[%s5326 + $0x68] sm:$0xff]
      %v5341 = vld [vmem:[%s5326 + $0x70] sm:$0xff]
      %v5342 = vld [vmem:[%s5326 + $0x78] sm:$0xff]
      %v5343 = vmax.f32 %v5310, %v5327
      %v5344 = vmax.f32 %v5311, %v5328
      %v5345 = vmax.f32 %v5312, %v5329
      %v5346 = vmax.f32 %v5313, %v5330
      %v5347 = vmax.f32 %v5314, %v5331
      %v5348 = vmax.f32 %v5315, %v5332
      %v5349 = vmax.f32 %v5316, %v5333
      %v5350 = vmax.f32 %v5317, %v5334
      %v5351 = vmax.f32 %v5318, %v5335
      %v5352 = vmax.f32 %v5319, %v5336
      %v5353 = vmax.f32 %v5320, %v5337
      %v5354 = vmax.f32 %v5321, %v5338
      %v5355 = vmax.f32 %v5322, %v5339
      %v5356 = vmax.f32 %v5323, %v5340
      %v5357 = vmax.f32 %v5324, %v5341
      %v5358 = vmax.f32 %v5325, %v5342
      %v5359 = vmax.f32 %v5343, %v5345
      %v5360 = vmax.f32 %v5344, %v5346
      %v5361 = vadd.f32 %v5359, %v5246
      %v5362 = vadd.f32 %v5360, %v5246
      %v5363 = vmax.f32 %v5361, 0.0
      %v5364 = vmax.f32 %v5362, 0.0
      %5367 = vrot.lane.b32.xlu0 %v5363, 64
      %v5368 = vpop.permute.xlu0 %5367
      %5369 = vrot.lane.b32.xlu0 %v5364, 64
      %v5370 = vpop.permute.xlu0 %5369
      %vm5373 = vcmask 916992
      %5374 = vst.msk [vmem:[#allocation4 + $0x8] sm:$0xff] %vm5373, %v5368
      %5375 = vst.msk [vmem:[#allocation4 + $0x38] sm:$0xff] %vm5373, %v5370
      %v5376 = vmax.f32 %v5347, %v5349
      %v5377 = vmax.f32 %v5348, %v5350
      %v5378 = vadd.f32 %v5376, %v5246
      %v5379 = vadd.f32 %v5377, %v5246
      %v5380 = vmax.f32 %v5378, 0.0
      %v5381 = vmax.f32 %v5379, 0.0
      %5384 = vrot.lane.b32.xlu0 %v5380, 112
      %v5385 = vpop.permute.xlu0 %5384
      %5386 = vrot.lane.b32.xlu0 %v5381, 112
      %v5387 = vpop.permute.xlu0 %5386
      %vm5390 = vcmask 1048448
      %5391 = vst.msk [vmem:[#allocation4 + $0x8] sm:$0xff] %vm5390, %v5385
      %vm5392 = vcmask 261120
      %5393 = vst.msk [vmem:[#allocation4 + $0x10] sm:$0xff] %vm5392, %v5385
      %5394 = vst.msk [vmem:[#allocation4 + $0x38] sm:$0xff] %vm5390, %v5387
      %5395 = vst.msk [vmem:[#allocation4 + $0x40] sm:$0xff] %vm5392, %v5387
      %v5396 = vmax.f32 %v5351, %v5353
      %v5397 = vmax.f32 %v5352, %v5354
      %v5398 = vadd.f32 %v5396, %v5246
      %v5399 = vadd.f32 %v5397, %v5246
      %v5400 = vmax.f32 %v5398, 0.0
      %v5401 = vmax.f32 %v5399, 0.0
      %5404 = vrot.lane.b32.xlu0 %v5400, 32
      %v5405 = vpop.permute.xlu0 %5404
      %5406 = vrot.lane.b32.xlu0 %v5401, 32
      %v5407 = vpop.permute.xlu0 %5406
      %vm5410 = vcmask 654592
      %5411 = vst.msk [vmem:[#allocation4 + $0x10] sm:$0xff] %vm5410, %v5405
      %5412 = vst.msk [vmem:[#allocation4 + $0x40] sm:$0xff] %vm5410, %v5407
      %v5413 = vmax.f32 %v5355, %v5357
      %v5414 = vmax.f32 %v5356, %v5358
      %v5415 = vadd.f32 %v5413, %v5246
      %v5416 = vadd.f32 %v5414, %v5246
      %v5417 = vmax.f32 %v5415, 0.0
      %v5418 = vmax.f32 %v5416, 0.0
      %5421 = vrot.lane.b32.xlu0 %v5417, 80
      %v5422 = vpop.permute.xlu0 %5421
      %5423 = vrot.lane.b32.xlu0 %v5418, 80
      %v5424 = vpop.permute.xlu0 %5423
      %vm5427 = vcmask 1048192
      %5428 = vst.msk [vmem:[#allocation4 + $0x10] sm:$0xff] %vm5427, %v5422
      %5429 = vst.msk [vmem:[#allocation4 + $0x40] sm:$0xff] %vm5427, %v5424
      %s5430 = scalar_lea.vmem [#allocation3], 512
      %v5431 = vld [vmem:[%s5430] sm:$0xff]
      %v5432 = vld [vmem:[%s5430 + $0x8] sm:$0xff]
      %v5433 = vld [vmem:[%s5430 + $0x10] sm:$0xff]
      %v5434 = vld [vmem:[%s5430 + $0x18] sm:$0xff]
      %v5435 = vld [vmem:[%s5430 + $0x20] sm:$0xff]
      %v5436 = vld [vmem:[%s5430 + $0x28] sm:$0xff]
      %v5437 = vld [vmem:[%s5430 + $0x30] sm:$0xff]
      %v5438 = vld [vmem:[%s5430 + $0x38] sm:$0xff]
      %v5439 = vld [vmem:[%s5430 + $0x40] sm:$0xff]
      %v5440 = vld [vmem:[%s5430 + $0x48] sm:$0xff]
      %v5441 = vld [vmem:[%s5430 + $0x50] sm:$0xff]
      %v5442 = vld [vmem:[%s5430 + $0x58] sm:$0xff]
      %v5443 = vld [vmem:[%s5430 + $0x60] sm:$0xff]
      %v5444 = vld [vmem:[%s5430 + $0x68] sm:$0xff]
      %v5445 = vld [vmem:[%s5430 + $0x70] sm:$0xff]
      %v5446 = vld [vmem:[%s5430 + $0x78] sm:$0xff]
      %s5447 = scalar_lea.vmem [#allocation3], 640
      %v5448 = vld [vmem:[%s5447] sm:$0xff]
      %v5449 = vld [vmem:[%s5447 + $0x8] sm:$0xff]
      %v5450 = vld [vmem:[%s5447 + $0x10] sm:$0xff]
      %v5451 = vld [vmem:[%s5447 + $0x18] sm:$0xff]
      %v5452 = vld [vmem:[%s5447 + $0x20] sm:$0xff]
      %v5453 = vld [vmem:[%s5447 + $0x28] sm:$0xff]
      %v5454 = vld [vmem:[%s5447 + $0x30] sm:$0xff]
      %v5455 = vld [vmem:[%s5447 + $0x38] sm:$0xff]
      %v5456 = vld [vmem:[%s5447 + $0x40] sm:$0xff]
      %v5457 = vld [vmem:[%s5447 + $0x48] sm:$0xff]
      %v5458 = vld [vmem:[%s5447 + $0x50] sm:$0xff]
      %v5459 = vld [vmem:[%s5447 + $0x58] sm:$0xff]
      %v5460 = vld [vmem:[%s5447 + $0x60] sm:$0xff]
      %v5461 = vld [vmem:[%s5447 + $0x68] sm:$0xff]
      %v5462 = vld [vmem:[%s5447 + $0x70] sm:$0xff]
      %v5463 = vld [vmem:[%s5447 + $0x78] sm:$0xff]
      %v5464 = vmax.f32 %v5431, %v5448
      %v5465 = vmax.f32 %v5432, %v5449
      %v5466 = vmax.f32 %v5433, %v5450
      %v5467 = vmax.f32 %v5434, %v5451
      %v5468 = vmax.f32 %v5435, %v5452
      %v5469 = vmax.f32 %v5436, %v5453
      %v5470 = vmax.f32 %v5437, %v5454
      %v5471 = vmax.f32 %v5438, %v5455
      %v5472 = vmax.f32 %v5439, %v5456
      %v5473 = vmax.f32 %v5440, %v5457
      %v5474 = vmax.f32 %v5441, %v5458
      %v5475 = vmax.f32 %v5442, %v5459
      %v5476 = vmax.f32 %v5443, %v5460
      %v5477 = vmax.f32 %v5444, %v5461
      %v5478 = vmax.f32 %v5445, %v5462
      %v5479 = vmax.f32 %v5446, %v5463
      %v5480 = vmax.f32 %v5464, %v5466
      %v5481 = vmax.f32 %v5465, %v5467
      %v5482 = vadd.f32 %v5480, %v5246
      %v5483 = vadd.f32 %v5481, %v5246
      %v5484 = vmax.f32 %v5482, 0.0
      %v5485 = vmax.f32 %v5483, 0.0
      %5486 = vst.msk [vmem:[#allocation4 + $0x18] sm:$0xff] %vm5252, %v5484
      %5487 = vst.msk [vmem:[#allocation4 + $0x48] sm:$0xff] %vm5252, %v5485
      %v5488 = vmax.f32 %v5468, %v5470
      %v5489 = vmax.f32 %v5469, %v5471
      %v5490 = vadd.f32 %v5488, %v5246
      %v5491 = vadd.f32 %v5489, %v5246
      %v5492 = vmax.f32 %v5490, 0.0
      %v5493 = vmax.f32 %v5491, 0.0
      %5496 = vrot.lane.b32.xlu0 %v5492, 48
      %v5497 = vpop.permute.xlu0 %5496
      %5498 = vrot.lane.b32.xlu0 %v5493, 48
      %v5499 = vpop.permute.xlu0 %5498
      %5502 = vst.msk [vmem:[#allocation4 + $0x18] sm:$0xff] %vm5269, %v5497
      %5503 = vst.msk [vmem:[#allocation4 + $0x48] sm:$0xff] %vm5269, %v5499
      %v5504 = vmax.f32 %v5472, %v5474
      %v5505 = vmax.f32 %v5473, %v5475
      %v5506 = vadd.f32 %v5504, %v5246
      %v5507 = vadd.f32 %v5505, %v5246
      %v5508 = vmax.f32 %v5506, 0.0
      %v5509 = vmax.f32 %v5507, 0.0
      %5512 = vrot.lane.b32.xlu0 %v5508, 96
      %v5513 = vpop.permute.xlu0 %5512
      %5514 = vrot.lane.b32.xlu0 %v5509, 96
      %v5515 = vpop.permute.xlu0 %5514
      %5518 = vst.msk [vmem:[#allocation4 + $0x18] sm:$0xff] %vm5286, %v5513
      %5519 = vst.msk [vmem:[#allocation4 + $0x20] sm:$0xff] %vm5288, %v5513
      %5520 = vst.msk [vmem:[#allocation4 + $0x48] sm:$0xff] %vm5286, %v5515
      %5521 = vst.msk [vmem:[#allocation4 + $0x50] sm:$0xff] %vm5288, %v5515
      %v5522 = vmax.f32 %v5476, %v5478
      %v5523 = vmax.f32 %v5477, %v5479
      %v5524 = vadd.f32 %v5522, %v5246
      %v5525 = vadd.f32 %v5523, %v5246
      %v5526 = vmax.f32 %v5524, 0.0
      %v5527 = vmax.f32 %v5525, 0.0
      %5530 = vrot.lane.b32.xlu0 %v5526, 16
      %v5531 = vpop.permute.xlu0 %5530
      %5532 = vrot.lane.b32.xlu0 %v5527, 16
      %v5533 = vpop.permute.xlu0 %5532
      %5536 = vst.msk [vmem:[#allocation4 + $0x20] sm:$0xff] %vm5306, %v5531
      %5537 = vst.msk [vmem:[#allocation4 + $0x50] sm:$0xff] %vm5306, %v5533
      %s5538 = scalar_lea.vmem [#allocation3], 768
      %v5539 = vld [vmem:[%s5538] sm:$0xff]
      %v5540 = vld [vmem:[%s5538 + $0x8] sm:$0xff]
      %v5541 = vld [vmem:[%s5538 + $0x10] sm:$0xff]
      %v5542 = vld [vmem:[%s5538 + $0x18] sm:$0xff]
      %v5543 = vld [vmem:[%s5538 + $0x20] sm:$0xff]
      %v5544 = vld [vmem:[%s5538 + $0x28] sm:$0xff]
      %v5545 = vld [vmem:[%s5538 + $0x30] sm:$0xff]
      %v5546 = vld [vmem:[%s5538 + $0x38] sm:$0xff]
      %v5547 = vld [vmem:[%s5538 + $0x40] sm:$0xff]
      %v5548 = vld [vmem:[%s5538 + $0x48] sm:$0xff]
      %v5549 = vld [vmem:[%s5538 + $0x50] sm:$0xff]
      %v5550 = vld [vmem:[%s5538 + $0x58] sm:$0xff]
      %v5551 = vld [vmem:[%s5538 + $0x60] sm:$0xff]
      %v5552 = vld [vmem:[%s5538 + $0x68] sm:$0xff]
      %v5553 = vld [vmem:[%s5538 + $0x70] sm:$0xff]
      %v5554 = vld [vmem:[%s5538 + $0x78] sm:$0xff]
      %s5555 = scalar_lea.vmem [#allocation3], 896
      %v5556 = vld [vmem:[%s5555] sm:$0xff]
      %v5557 = vld [vmem:[%s5555 + $0x8] sm:$0xff]
      %v5558 = vld [vmem:[%s5555 + $0x10] sm:$0xff]
      %v5559 = vld [vmem:[%s5555 + $0x18] sm:$0xff]
      %v5560 = vld [vmem:[%s5555 + $0x20] sm:$0xff]
      %v5561 = vld [vmem:[%s5555 + $0x28] sm:$0xff]
      %v5562 = vld [vmem:[%s5555 + $0x30] sm:$0xff]
      %v5563 = vld [vmem:[%s5555 + $0x38] sm:$0xff]
      %v5564 = vld [vmem:[%s5555 + $0x40] sm:$0xff]
      %v5565 = vld [vmem:[%s5555 + $0x48] sm:$0xff]
      %v5566 = vld [vmem:[%s5555 + $0x50] sm:$0xff]
      %v5567 = vld [vmem:[%s5555 + $0x58] sm:$0xff]
      %v5568 = vld [vmem:[%s5555 + $0x60] sm:$0xff]
      %v5569 = vld [vmem:[%s5555 + $0x68] sm:$0xff]
      %v5570 = vld [vmem:[%s5555 + $0x70] sm:$0xff]
      %v5571 = vld [vmem:[%s5555 + $0x78] sm:$0xff]
      %v5572 = vmax.f32 %v5539, %v5556
      %v5573 = vmax.f32 %v5540, %v5557
      %v5574 = vmax.f32 %v5541, %v5558
      %v5575 = vmax.f32 %v5542, %v5559
      %v5576 = vmax.f32 %v5543, %v5560
      %v5577 = vmax.f32 %v5544, %v5561
      %v5578 = vmax.f32 %v5545, %v5562
      %v5579 = vmax.f32 %v5546, %v5563
      %v5580 = vmax.f32 %v5547, %v5564
      %v5581 = vmax.f32 %v5548, %v5565
      %v5582 = vmax.f32 %v5549, %v5566
      %v5583 = vmax.f32 %v5550, %v5567
      %v5584 = vmax.f32 %v5551, %v5568
      %v5585 = vmax.f32 %v5552, %v5569
      %v5586 = vmax.f32 %v5553, %v5570
      %v5587 = vmax.f32 %v5554, %v5571
      %v5588 = vmax.f32 %v5572, %v5574
      %v5589 = vmax.f32 %v5573, %v5575
      %v5590 = vadd.f32 %v5588, %v5246
      %v5591 = vadd.f32 %v5589, %v5246
      %v5592 = vmax.f32 %v5590, 0.0
      %v5593 = vmax.f32 %v5591, 0.0
      %5596 = vrot.lane.b32.xlu0 %v5592, 64
      %v5597 = vpop.permute.xlu0 %5596
      %5598 = vrot.lane.b32.xlu0 %v5593, 64
      %v5599 = vpop.permute.xlu0 %5598
      %5602 = vst.msk [vmem:[#allocation4 + $0x20] sm:$0xff] %vm5373, %v5597
      %5603 = vst.msk [vmem:[#allocation4 + $0x50] sm:$0xff] %vm5373, %v5599
      %v5604 = vmax.f32 %v5576, %v5578
      %v5605 = vmax.f32 %v5577, %v5579
      %v5606 = vadd.f32 %v5604, %v5246
      %v5607 = vadd.f32 %v5605, %v5246
      %v5608 = vmax.f32 %v5606, 0.0
      %v5609 = vmax.f32 %v5607, 0.0
      %5612 = vrot.lane.b32.xlu0 %v5608, 112
      %v5613 = vpop.permute.xlu0 %5612
      %5614 = vrot.lane.b32.xlu0 %v5609, 112
      %v5615 = vpop.permute.xlu0 %5614
      %5618 = vst.msk [vmem:[#allocation4 + $0x20] sm:$0xff] %vm5390, %v5613
      %5619 = vst.msk [vmem:[#allocation4 + $0x28] sm:$0xff] %vm5392, %v5613
      %5620 = vst.msk [vmem:[#allocation4 + $0x50] sm:$0xff] %vm5390, %v5615
      %5621 = vst.msk [vmem:[#allocation4 + $0x58] sm:$0xff] %vm5392, %v5615
      %v5622 = vmax.f32 %v5580, %v5582
      %v5623 = vmax.f32 %v5581, %v5583
      %v5624 = vadd.f32 %v5622, %v5246
      %v5625 = vadd.f32 %v5623, %v5246
      %v5626 = vmax.f32 %v5624, 0.0
      %v5627 = vmax.f32 %v5625, 0.0
      %5630 = vrot.lane.b32.xlu0 %v5626, 32
      %v5631 = vpop.permute.xlu0 %5630
      %5632 = vrot.lane.b32.xlu0 %v5627, 32
      %v5633 = vpop.permute.xlu0 %5632
      %5636 = vst.msk [vmem:[#allocation4 + $0x28] sm:$0xff] %vm5410, %v5631
      %5637 = vst.msk [vmem:[#allocation4 + $0x58] sm:$0xff] %vm5410, %v5633
      %v5638 = vmax.f32 %v5584, %v5586
      %v5639 = vmax.f32 %v5585, %v5587
      %v5640 = vadd.f32 %v5638, %v5246
      %v5641 = vadd.f32 %v5639, %v5246
      %v5642 = vmax.f32 %v5640, 0.0
      %v5643 = vmax.f32 %v5641, 0.0
      %5646 = vrot.lane.b32.xlu0 %v5642, 80
      %v5647 = vpop.permute.xlu0 %5646
      %5648 = vrot.lane.b32.xlu0 %v5643, 80
      %v5649 = vpop.permute.xlu0 %5648
      %5652 = vst.msk [vmem:[#allocation4 + $0x28] sm:$0xff] %vm5427, %v5647
      %5653 = vst.msk [vmem:[#allocation4 + $0x58] sm:$0xff] %vm5427, %v5649
      %v5654 = vld [vmem:[#allocation4] sm:$0xff]
      %v5655 = vld [vmem:[#allocation4 + $0x8] sm:$0xff]
      %v5656 = vld [vmem:[#allocation4 + $0x10] sm:$0xff]
      %v5657 = vld [vmem:[#allocation4 + $0x18] sm:$0xff]
      %v5658 = vld [vmem:[#allocation4 + $0x20] sm:$0xff]
      %v5659 = vld [vmem:[#allocation4 + $0x28] sm:$0xff]
      %v5660 = vld [vmem:[#allocation4 + $0x30] sm:$0xff]
      %v5661 = vld [vmem:[#allocation4 + $0x38] sm:$0xff]
      %v5662 = vld [vmem:[#allocation4 + $0x40] sm:$0xff]
      %v5663 = vld [vmem:[#allocation4 + $0x48] sm:$0xff]
      %v5664 = vld [vmem:[#allocation4 + $0x50] sm:$0xff]
      %v5665 = vld [vmem:[#allocation4 + $0x58] sm:$0xff]
      %v5666 = vpack.c.bf16 %v5660, %v5654
      %v5667 = vpack.c.bf16 %v5661, %v5655
      %v5668 = vpack.c.bf16 %v5662, %v5656
      %v5669 = vpack.c.bf16 %v5663, %v5657
      %v5670 = vpack.c.bf16 %v5664, %v5658
      %v5671 = vpack.c.bf16 %v5665, %v5659
      %v5672 = vld [vmem:[%s5] sm:$0xff]
      %v5673 = vld [vmem:[%s5 + $0x8] sm:$0xff]
      %v5674 = vld [vmem:[%s5 + $0x10] sm:$0xff]
      %v5675 = vld [vmem:[%s5 + $0x18] sm:$0xff]
      %v5676 = vld [vmem:[%s5 + $0x20] sm:$0xff]
      %v5677 = vld [vmem:[%s5 + $0x28] sm:$0xff]
      %v5678 = vld [vmem:[%s5 + $0x30] sm:$0xff]
      %v5679 = vld [vmem:[%s5 + $0x38] sm:$0xff]
      %v5680 = vld [vmem:[%s5 + $0x40] sm:$0xff]
      %v5681 = vld [vmem:[%s5 + $0x48] sm:$0xff]
      %v5682 = vld [vmem:[%s5 + $0x50] sm:$0xff]
      %v5683 = vld [vmem:[%s5 + $0x58] sm:$0xff]
      %v5684 = vld [vmem:[%s5 + $0x60] sm:$0xff]
      %v5685 = vld [vmem:[%s5 + $0x68] sm:$0xff]
      %v5686 = vld [vmem:[%s5 + $0x70] sm:$0xff]
      %v5687 = vld [vmem:[%s5 + $0x78] sm:$0xff]
      %v5688 = vld [vmem:[%s5 + $0x80] sm:$0xff]
      %v5689 = vld [vmem:[%s5 + $0x88] sm:$0xff]
      %v5690 = vld [vmem:[%s5 + $0x90] sm:$0xff]
      %v5691 = vld [vmem:[%s5 + $0x98] sm:$0xff]
      %v5692 = vld [vmem:[%s5 + $0xa0] sm:$0xff]
      %v5693 = vld [vmem:[%s5 + $0xa8] sm:$0xff]
      %v5694 = vld [vmem:[%s5 + $0xb0] sm:$0xff]
      %v5695 = vld [vmem:[%s5 + $0xb8] sm:$0xff]
      %v5696 = vld [vmem:[%s5 + $0xc0] sm:$0xff]
      %v5697 = vld [vmem:[%s5 + $0xc8] sm:$0xff]
      %v5698 = vld [vmem:[%s5 + $0xd0] sm:$0xff]
      %v5699 = vld [vmem:[%s5 + $0xd8] sm:$0xff]
      %v5700 = vld [vmem:[%s5 + $0xe0] sm:$0xff]
      %v5701 = vld [vmem:[%s5 + $0xe8] sm:$0xff]
      %v5702 = vld [vmem:[%s5 + $0xf0] sm:$0xff]
      %v5703 = vld [vmem:[%s5 + $0xf8] sm:$0xff]
      %v5704 = vld [vmem:[%s5 + $0x100] sm:$0xff]
      %v5705 = vld [vmem:[%s5 + $0x108] sm:$0xff]
      %v5706 = vld [vmem:[%s5 + $0x110] sm:$0xff]
      %v5707 = vld [vmem:[%s5 + $0x118] sm:$0xff]
      %v5708 = vld [vmem:[%s5 + $0x120] sm:$0xff]
      %v5709 = vld [vmem:[%s5 + $0x128] sm:$0xff]
      %v5710 = vld [vmem:[%s5 + $0x130] sm:$0xff]
      %v5711 = vld [vmem:[%s5 + $0x138] sm:$0xff]
      %v5712 = vld [vmem:[%s5 + $0x140] sm:$0xff]
      %v5713 = vld [vmem:[%s5 + $0x148] sm:$0xff]
      %v5714 = vld [vmem:[%s5 + $0x150] sm:$0xff]
      %v5715 = vld [vmem:[%s5 + $0x158] sm:$0xff]
      %v5716 = vld [vmem:[%s5 + $0x160] sm:$0xff]
      %v5717 = vld [vmem:[%s5 + $0x168] sm:$0xff]
      %v5718 = vld [vmem:[%s5 + $0x170] sm:$0xff]
      %v5719 = vld [vmem:[%s5 + $0x178] sm:$0xff]
      %v5720 = vld [vmem:[%s5 + $0x180] sm:$0xff]
      %v5721 = vld [vmem:[%s5 + $0x188] sm:$0xff]
      %v5722 = vld [vmem:[%s5 + $0x190] sm:$0xff]
      %v5723 = vld [vmem:[%s5 + $0x198] sm:$0xff]
      %v5724 = vld [vmem:[%s5 + $0x1a0] sm:$0xff]
      %v5725 = vld [vmem:[%s5 + $0x1a8] sm:$0xff]
      %v5726 = vld [vmem:[%s5 + $0x1b0] sm:$0xff]
      %v5727 = vld [vmem:[%s5 + $0x1b8] sm:$0xff]
      %v5728 = vld [vmem:[%s5 + $0x1c0] sm:$0xff]
      %v5729 = vld [vmem:[%s5 + $0x1c8] sm:$0xff]
      %v5730 = vld [vmem:[%s5 + $0x1d0] sm:$0xff]
      %v5731 = vld [vmem:[%s5 + $0x1d8] sm:$0xff]
      %v5732 = vld [vmem:[%s5 + $0x1e0] sm:$0xff]
      %v5733 = vld [vmem:[%s5 + $0x1e8] sm:$0xff]
      %v5734 = vld [vmem:[%s5 + $0x1f0] sm:$0xff]
      %v5735 = vld [vmem:[%s5 + $0x1f8] sm:$0xff]
      %v5736 = vld [vmem:[%s5 + $0x200] sm:$0xff]
      %v5737 = vld [vmem:[%s5 + $0x208] sm:$0xff]
      %v5738 = vld [vmem:[%s5 + $0x210] sm:$0xff]
      %v5739 = vld [vmem:[%s5 + $0x218] sm:$0xff]
      %v5740 = vld [vmem:[%s5 + $0x220] sm:$0xff]
      %v5741 = vld [vmem:[%s5 + $0x228] sm:$0xff]
      %v5742 = vld [vmem:[%s5 + $0x230] sm:$0xff]
      %v5743 = vld [vmem:[%s5 + $0x238] sm:$0xff]
      %v5744 = vld [vmem:[%s5 + $0x240] sm:$0xff]
      %v5745 = vld [vmem:[%s5 + $0x248] sm:$0xff]
      %v5746 = vld [vmem:[%s5 + $0x250] sm:$0xff]
      %v5747 = vld [vmem:[%s5 + $0x258] sm:$0xff]
      %v5748 = vld [vmem:[%s5 + $0x260] sm:$0xff]
      %v5749 = vld [vmem:[%s5 + $0x268] sm:$0xff]
      %v5750 = vld [vmem:[%s5 + $0x270] sm:$0xff]
      %v5751 = vld [vmem:[%s5 + $0x278] sm:$0xff]
      %v5752 = vld [vmem:[%s5 + $0x280] sm:$0xff]
      %v5753 = vld [vmem:[%s5 + $0x288] sm:$0xff]
      %v5754 = vld [vmem:[%s5 + $0x290] sm:$0xff]
      %v5755 = vld [vmem:[%s5 + $0x298] sm:$0xff]
      %v5756 = vld [vmem:[%s5 + $0x2a0] sm:$0xff]
      %v5757 = vld [vmem:[%s5 + $0x2a8] sm:$0xff]
      %v5758 = vld [vmem:[%s5 + $0x2b0] sm:$0xff]
      %v5759 = vld [vmem:[%s5 + $0x2b8] sm:$0xff]
      %v5760 = vld [vmem:[%s5 + $0x2c0] sm:$0xff]
      %v5761 = vld [vmem:[%s5 + $0x2c8] sm:$0xff]
      %v5762 = vld [vmem:[%s5 + $0x2d0] sm:$0xff]
      %v5763 = vld [vmem:[%s5 + $0x2d8] sm:$0xff]
      %v5764 = vld [vmem:[%s5 + $0x2e0] sm:$0xff]
      %v5765 = vld [vmem:[%s5 + $0x2e8] sm:$0xff]
      %v5766 = vld [vmem:[%s5 + $0x2f0] sm:$0xff]
      %v5767 = vld [vmem:[%s5 + $0x2f8] sm:$0xff]
      %v5768 = vld [vmem:[%s5 + $0x300] sm:$0xff]
      %v5769 = vld [vmem:[%s5 + $0x308] sm:$0xff]
      %v5770 = vld [vmem:[%s5 + $0x310] sm:$0xff]
      %v5771 = vld [vmem:[%s5 + $0x318] sm:$0xff]
      %v5772 = vld [vmem:[%s5 + $0x320] sm:$0xff]
      %v5773 = vld [vmem:[%s5 + $0x328] sm:$0xff]
      %v5774 = vld [vmem:[%s5 + $0x330] sm:$0xff]
      %v5775 = vld [vmem:[%s5 + $0x338] sm:$0xff]
      %v5776 = vld [vmem:[%s5 + $0x340] sm:$0xff]
      %v5777 = vld [vmem:[%s5 + $0x348] sm:$0xff]
      %v5778 = vld [vmem:[%s5 + $0x350] sm:$0xff]
      %v5779 = vld [vmem:[%s5 + $0x358] sm:$0xff]
      %v5780 = vld [vmem:[%s5 + $0x360] sm:$0xff]
      %v5781 = vld [vmem:[%s5 + $0x368] sm:$0xff]
      %v5782 = vld [vmem:[%s5 + $0x370] sm:$0xff]
      %v5783 = vld [vmem:[%s5 + $0x378] sm:$0xff]
      %v5784 = vld [vmem:[%s5 + $0x380] sm:$0xff]
      %v5785 = vld [vmem:[%s5 + $0x388] sm:$0xff]
      %v5786 = vld [vmem:[%s5 + $0x390] sm:$0xff]
      %v5787 = vld [vmem:[%s5 + $0x398] sm:$0xff]
      %v5788 = vld [vmem:[%s5 + $0x3a0] sm:$0xff]
      %v5789 = vld [vmem:[%s5 + $0x3a8] sm:$0xff]
      %v5790 = vld [vmem:[%s5 + $0x3b0] sm:$0xff]
      %v5791 = vld [vmem:[%s5 + $0x3b8] sm:$0xff]
      %v5792 = vld [vmem:[%s5 + $0x3c0] sm:$0xff]
      %v5793 = vld [vmem:[%s5 + $0x3c8] sm:$0xff]
      %v5794 = vld [vmem:[%s5 + $0x3d0] sm:$0xff]
      %v5795 = vld [vmem:[%s5 + $0x3d8] sm:$0xff]
      %v5796 = vld [vmem:[%s5 + $0x3e0] sm:$0xff]
      %v5797 = vld [vmem:[%s5 + $0x3e8] sm:$0xff]
      %v5798 = vld [vmem:[%s5 + $0x3f0] sm:$0xff]
      %v5799 = vld [vmem:[%s5 + $0x3f8] sm:$0xff]
      %v5800 = vld [vmem:[%s5 + $0x400] sm:$0xff]
      %v5801 = vld [vmem:[%s5 + $0x408] sm:$0xff]
      %v5802 = vld [vmem:[%s5 + $0x410] sm:$0xff]
      %v5803 = vld [vmem:[%s5 + $0x418] sm:$0xff]
      %v5804 = vld [vmem:[%s5 + $0x420] sm:$0xff]
      %v5805 = vld [vmem:[%s5 + $0x428] sm:$0xff]
      %v5806 = vld [vmem:[%s5 + $0x430] sm:$0xff]
      %v5807 = vld [vmem:[%s5 + $0x438] sm:$0xff]
      %v5808 = vld [vmem:[%s5 + $0x440] sm:$0xff]
      %v5809 = vld [vmem:[%s5 + $0x448] sm:$0xff]
      %v5810 = vld [vmem:[%s5 + $0x450] sm:$0xff]
      %v5811 = vld [vmem:[%s5 + $0x458] sm:$0xff]
      %v5812 = vld [vmem:[%s5 + $0x460] sm:$0xff]
      %v5813 = vld [vmem:[%s5 + $0x468] sm:$0xff]
      %v5814 = vld [vmem:[%s5 + $0x470] sm:$0xff]
      %v5815 = vld [vmem:[%s5 + $0x478] sm:$0xff]
      %v5816 = vld [vmem:[%s5 + $0x480] sm:$0xff]
      %v5817 = vld [vmem:[%s5 + $0x488] sm:$0xff]
      %v5818 = vld [vmem:[%s5 + $0x490] sm:$0xff]
      %v5819 = vld [vmem:[%s5 + $0x498] sm:$0xff]
      %v5820 = vld [vmem:[%s5 + $0x4a0] sm:$0xff]
      %v5821 = vld [vmem:[%s5 + $0x4a8] sm:$0xff]
      %v5822 = vld [vmem:[%s5 + $0x4b0] sm:$0xff]
      %v5823 = vld [vmem:[%s5 + $0x4b8] sm:$0xff]
      %v5824 = vld [vmem:[%s5 + $0x4c0] sm:$0xff]
      %v5825 = vld [vmem:[%s5 + $0x4c8] sm:$0xff]
      %v5826 = vld [vmem:[%s5 + $0x4d0] sm:$0xff]
      %v5827 = vld [vmem:[%s5 + $0x4d8] sm:$0xff]
      %v5828 = vld [vmem:[%s5 + $0x4e0] sm:$0xff]
      %v5829 = vld [vmem:[%s5 + $0x4e8] sm:$0xff]
      %v5830 = vld [vmem:[%s5 + $0x4f0] sm:$0xff]
      %v5831 = vld [vmem:[%s5 + $0x4f8] sm:$0xff]
      %v5832 = vld [vmem:[%s5 + $0x500] sm:$0xff]
      %v5833 = vld [vmem:[%s5 + $0x508] sm:$0xff]
      %v5834 = vld [vmem:[%s5 + $0x510] sm:$0xff]
      %v5835 = vld [vmem:[%s5 + $0x518] sm:$0xff]
      %v5836 = vld [vmem:[%s5 + $0x520] sm:$0xff]
      %v5837 = vld [vmem:[%s5 + $0x528] sm:$0xff]
      %v5838 = vld [vmem:[%s5 + $0x530] sm:$0xff]
      %v5839 = vld [vmem:[%s5 + $0x538] sm:$0xff]
      %v5840 = vld [vmem:[%s5 + $0x540] sm:$0xff]
      %v5841 = vld [vmem:[%s5 + $0x548] sm:$0xff]
      %v5842 = vld [vmem:[%s5 + $0x550] sm:$0xff]
      %v5843 = vld [vmem:[%s5 + $0x558] sm:$0xff]
      %v5844 = vld [vmem:[%s5 + $0x560] sm:$0xff]
      %v5845 = vld [vmem:[%s5 + $0x568] sm:$0xff]
      %v5846 = vld [vmem:[%s5 + $0x570] sm:$0xff]
      %v5847 = vld [vmem:[%s5 + $0x578] sm:$0xff]
      %v5848 = vld [vmem:[%s5 + $0x580] sm:$0xff]
      %v5849 = vld [vmem:[%s5 + $0x588] sm:$0xff]
      %v5850 = vld [vmem:[%s5 + $0x590] sm:$0xff]
      %v5851 = vld [vmem:[%s5 + $0x598] sm:$0xff]
      %v5852 = vld [vmem:[%s5 + $0x5a0] sm:$0xff]
      %v5853 = vld [vmem:[%s5 + $0x5a8] sm:$0xff]
      %v5854 = vld [vmem:[%s5 + $0x5b0] sm:$0xff]
      %v5855 = vld [vmem:[%s5 + $0x5b8] sm:$0xff]
      %v5856 = vld [vmem:[%s5 + $0x5c0] sm:$0xff]
      %v5857 = vld [vmem:[%s5 + $0x5c8] sm:$0xff]
      %v5858 = vld [vmem:[%s5 + $0x5d0] sm:$0xff]
      %v5859 = vld [vmem:[%s5 + $0x5d8] sm:$0xff]
      %v5860 = vld [vmem:[%s5 + $0x5e0] sm:$0xff]
      %v5861 = vld [vmem:[%s5 + $0x5e8] sm:$0xff]
      %v5862 = vld [vmem:[%s5 + $0x5f0] sm:$0xff]
      %v5863 = vld [vmem:[%s5 + $0x5f8] sm:$0xff]
      %v5864 = vld [vmem:[%s6] sm:$0xf]
      %v5866 = vlaneseq
      %v5867 = vshrl.u32 %v5866, 7
      %v5868 = vsub.s32 0, %v5867
      %v5869 = vrot.slane %v5864, %v5868
      %v5870 = vlaneseq
      %v5871 = vshrl.u32 %v5870, 7
      %v5872 = vsub.s32 1, %v5871
      %v5873 = vrot.slane %v5864, %v5872
      %v5874 = vlaneseq
      %v5875 = vshrl.u32 %v5874, 7
      %v5876 = vsub.s32 2, %v5875
      %v5877 = vrot.slane %v5864, %v5876
      %v5878 = vlaneseq
      %v5879 = vshrl.u32 %v5878, 7
      %v5880 = vsub.s32 3, %v5879
      %v5881 = vrot.slane %v5864, %v5880
      %v6078 = vunpack.c.l.b16 %v5672
      %v6079 = vunpack.c.h.b16 %v5672
      %v6080 = vunpack.c.l.b16 %v5673
      %v6081 = vunpack.c.h.b16 %v5673
      %v6082 = vunpack.c.l.b16 %v5674
      %v6083 = vunpack.c.h.b16 %v5674
      %v6084 = vunpack.c.l.b16 %v5675
      %v6085 = vunpack.c.h.b16 %v5675
      %v6086 = vunpack.c.l.b16 %v5676
      %v6087 = vunpack.c.h.b16 %v5676
      %v6088 = vunpack.c.l.b16 %v5677
      %v6089 = vunpack.c.h.b16 %v5677
      %v6090 = vunpack.c.l.b16 %v5678
      %v6091 = vunpack.c.h.b16 %v5678
      %v6092 = vunpack.c.l.b16 %v5679
      %v6093 = vunpack.c.h.b16 %v5679
      %v6094 = vunpack.c.l.b16 %v5680
      %v6095 = vunpack.c.h.b16 %v5680
      %v6096 = vunpack.c.l.b16 %v5681
      %v6097 = vunpack.c.h.b16 %v5681
      %v6098 = vunpack.c.l.b16 %v5682
      %v6099 = vunpack.c.h.b16 %v5682
      %v6100 = vunpack.c.l.b16 %v5683
      %v6101 = vunpack.c.h.b16 %v5683
      %v6102 = vunpack.c.l.b16 %v5684
      %v6103 = vunpack.c.h.b16 %v5684
      %v6104 = vunpack.c.l.b16 %v5685
      %v6105 = vunpack.c.h.b16 %v5685
      %v6106 = vunpack.c.l.b16 %v5686
      %v6107 = vunpack.c.h.b16 %v5686
      %v6108 = vunpack.c.l.b16 %v5687
      %v6109 = vunpack.c.h.b16 %v5687
      %v6110 = vunpack.c.l.b16 %v5688
      %v6111 = vunpack.c.h.b16 %v5688
      %v6112 = vunpack.c.l.b16 %v5689
      %v6113 = vunpack.c.h.b16 %v5689
      %v6114 = vunpack.c.l.b16 %v5690
      %v6115 = vunpack.c.h.b16 %v5690
      %v6116 = vunpack.c.l.b16 %v5691
      %v6117 = vunpack.c.h.b16 %v5691
      %v6118 = vunpack.c.l.b16 %v5692
      %v6119 = vunpack.c.h.b16 %v5692
      %v6120 = vunpack.c.l.b16 %v5693
      %v6121 = vunpack.c.h.b16 %v5693
      %v6122 = vunpack.c.l.b16 %v5694
      %v6123 = vunpack.c.h.b16 %v5694
      %v6124 = vunpack.c.l.b16 %v5695
      %v6125 = vunpack.c.h.b16 %v5695
      %v6126 = vunpack.c.l.b16 %v5696
      %v6127 = vunpack.c.h.b16 %v5696
      %v6128 = vunpack.c.l.b16 %v5697
      %v6129 = vunpack.c.h.b16 %v5697
      %v6130 = vunpack.c.l.b16 %v5698
      %v6131 = vunpack.c.h.b16 %v5698
      %v6132 = vunpack.c.l.b16 %v5699
      %v6133 = vunpack.c.h.b16 %v5699
      %v6134 = vunpack.c.l.b16 %v5700
      %v6135 = vunpack.c.h.b16 %v5700
      %v6136 = vunpack.c.l.b16 %v5701
      %v6137 = vunpack.c.h.b16 %v5701
      %v6138 = vunpack.c.l.b16 %v5702
      %v6139 = vunpack.c.h.b16 %v5702
      %v6140 = vunpack.c.l.b16 %v5703
      %v6141 = vunpack.c.h.b16 %v5703
      %v6142 = vunpack.c.l.b16 %v5704
      %v6143 = vunpack.c.h.b16 %v5704
      %v6144 = vunpack.c.l.b16 %v5705
      %v6145 = vunpack.c.h.b16 %v5705
      %v6146 = vunpack.c.l.b16 %v5706
      %v6147 = vunpack.c.h.b16 %v5706
      %v6148 = vunpack.c.l.b16 %v5707
      %v6149 = vunpack.c.h.b16 %v5707
      %v6150 = vunpack.c.l.b16 %v5708
      %v6151 = vunpack.c.h.b16 %v5708
      %v6152 = vunpack.c.l.b16 %v5709
      %v6153 = vunpack.c.h.b16 %v5709
      %v6154 = vunpack.c.l.b16 %v5710
      %v6155 = vunpack.c.h.b16 %v5710
      %v6156 = vunpack.c.l.b16 %v5711
      %v6157 = vunpack.c.h.b16 %v5711
      %v6158 = vunpack.c.l.b16 %v5712
      %v6159 = vunpack.c.h.b16 %v5712
      %v6160 = vunpack.c.l.b16 %v5713
      %v6161 = vunpack.c.h.b16 %v5713
      %v6162 = vunpack.c.l.b16 %v5714
      %v6163 = vunpack.c.h.b16 %v5714
      %v6164 = vunpack.c.l.b16 %v5715
      %v6165 = vunpack.c.h.b16 %v5715
      %v6166 = vunpack.c.l.b16 %v5716
      %v6167 = vunpack.c.h.b16 %v5716
      %v6168 = vunpack.c.l.b16 %v5717
      %v6169 = vunpack.c.h.b16 %v5717
      %v6170 = vunpack.c.l.b16 %v5718
      %v6171 = vunpack.c.h.b16 %v5718
      %v6172 = vunpack.c.l.b16 %v5719
      %v6173 = vunpack.c.h.b16 %v5719
      %v6174 = vunpack.c.l.b16 %v5720
      %v6175 = vunpack.c.h.b16 %v5720
      %v6176 = vunpack.c.l.b16 %v5721
      %v6177 = vunpack.c.h.b16 %v5721
      %v6178 = vunpack.c.l.b16 %v5722
      %v6179 = vunpack.c.h.b16 %v5722
      %v6180 = vunpack.c.l.b16 %v5723
      %v6181 = vunpack.c.h.b16 %v5723
      %v6182 = vunpack.c.l.b16 %v5724
      %v6183 = vunpack.c.h.b16 %v5724
      %v6184 = vunpack.c.l.b16 %v5725
      %v6185 = vunpack.c.h.b16 %v5725
      %v6186 = vunpack.c.l.b16 %v5726
      %v6187 = vunpack.c.h.b16 %v5726
      %v6188 = vunpack.c.l.b16 %v5727
      %v6189 = vunpack.c.h.b16 %v5727
      %v6190 = vunpack.c.l.b16 %v5728
      %v6191 = vunpack.c.h.b16 %v5728
      %v6192 = vunpack.c.l.b16 %v5729
      %v6193 = vunpack.c.h.b16 %v5729
      %v6194 = vunpack.c.l.b16 %v5730
      %v6195 = vunpack.c.h.b16 %v5730
      %v6196 = vunpack.c.l.b16 %v5731
      %v6197 = vunpack.c.h.b16 %v5731
      %v6198 = vunpack.c.l.b16 %v5732
      %v6199 = vunpack.c.h.b16 %v5732
      %v6200 = vunpack.c.l.b16 %v5733
      %v6201 = vunpack.c.h.b16 %v5733
      %v6202 = vunpack.c.l.b16 %v5734
      %v6203 = vunpack.c.h.b16 %v5734
      %v6204 = vunpack.c.l.b16 %v5735
      %v6205 = vunpack.c.h.b16 %v5735
      %v6206 = vunpack.c.l.b16 %v5736
      %v6207 = vunpack.c.h.b16 %v5736
      %v6208 = vunpack.c.l.b16 %v5737
      %v6209 = vunpack.c.h.b16 %v5737
      %v6210 = vunpack.c.l.b16 %v5738
      %v6211 = vunpack.c.h.b16 %v5738
      %v6212 = vunpack.c.l.b16 %v5739
      %v6213 = vunpack.c.h.b16 %v5739
      %v6214 = vunpack.c.l.b16 %v5740
      %v6215 = vunpack.c.h.b16 %v5740
      %v6216 = vunpack.c.l.b16 %v5741
      %v6217 = vunpack.c.h.b16 %v5741
      %v6218 = vunpack.c.l.b16 %v5742
      %v6219 = vunpack.c.h.b16 %v5742
      %v6220 = vunpack.c.l.b16 %v5743
      %v6221 = vunpack.c.h.b16 %v5743
      %v6222 = vunpack.c.l.b16 %v5744
      %v6223 = vunpack.c.h.b16 %v5744
      %v6224 = vunpack.c.l.b16 %v5745
      %v6225 = vunpack.c.h.b16 %v5745
      %v6226 = vunpack.c.l.b16 %v5746
      %v6227 = vunpack.c.h.b16 %v5746
      %v6228 = vunpack.c.l.b16 %v5747
      %v6229 = vunpack.c.h.b16 %v5747
      %v6230 = vunpack.c.l.b16 %v5748
      %v6231 = vunpack.c.h.b16 %v5748
      %v6232 = vunpack.c.l.b16 %v5749
      %v6233 = vunpack.c.h.b16 %v5749
      %v6234 = vunpack.c.l.b16 %v5750
      %v6235 = vunpack.c.h.b16 %v5750
      %v6236 = vunpack.c.l.b16 %v5751
      %v6237 = vunpack.c.h.b16 %v5751
      %v6238 = vunpack.c.l.b16 %v5752
      %v6239 = vunpack.c.h.b16 %v5752
      %v6240 = vunpack.c.l.b16 %v5753
      %v6241 = vunpack.c.h.b16 %v5753
      %v6242 = vunpack.c.l.b16 %v5754
      %v6243 = vunpack.c.h.b16 %v5754
      %v6244 = vunpack.c.l.b16 %v5755
      %v6245 = vunpack.c.h.b16 %v5755
      %v6246 = vunpack.c.l.b16 %v5756
      %v6247 = vunpack.c.h.b16 %v5756
      %v6248 = vunpack.c.l.b16 %v5757
      %v6249 = vunpack.c.h.b16 %v5757
      %v6250 = vunpack.c.l.b16 %v5758
      %v6251 = vunpack.c.h.b16 %v5758
      %v6252 = vunpack.c.l.b16 %v5759
      %v6253 = vunpack.c.h.b16 %v5759
      %v6254 = vunpack.c.l.b16 %v5760
      %v6255 = vunpack.c.h.b16 %v5760
      %v6256 = vunpack.c.l.b16 %v5761
      %v6257 = vunpack.c.h.b16 %v5761
      %v6258 = vunpack.c.l.b16 %v5762
      %v6259 = vunpack.c.h.b16 %v5762
      %v6260 = vunpack.c.l.b16 %v5763
      %v6261 = vunpack.c.h.b16 %v5763
      %v6262 = vunpack.c.l.b16 %v5764
      %v6263 = vunpack.c.h.b16 %v5764
      %v6264 = vunpack.c.l.b16 %v5765
      %v6265 = vunpack.c.h.b16 %v5765
      %v6266 = vunpack.c.l.b16 %v5766
      %v6267 = vunpack.c.h.b16 %v5766
      %v6268 = vunpack.c.l.b16 %v5767
      %v6269 = vunpack.c.h.b16 %v5767
      %v6270 = vunpack.c.l.b16 %v5768
      %v6271 = vunpack.c.h.b16 %v5768
      %v6272 = vunpack.c.l.b16 %v5769
      %v6273 = vunpack.c.h.b16 %v5769
      %v6274 = vunpack.c.l.b16 %v5770
      %v6275 = vunpack.c.h.b16 %v5770
      %v6276 = vunpack.c.l.b16 %v5771
      %v6277 = vunpack.c.h.b16 %v5771
      %v6278 = vunpack.c.l.b16 %v5772
      %v6279 = vunpack.c.h.b16 %v5772
      %v6280 = vunpack.c.l.b16 %v5773
      %v6281 = vunpack.c.h.b16 %v5773
      %v6282 = vunpack.c.l.b16 %v5774
      %v6283 = vunpack.c.h.b16 %v5774
      %v6284 = vunpack.c.l.b16 %v5775
      %v6285 = vunpack.c.h.b16 %v5775
      %v6286 = vunpack.c.l.b16 %v5776
      %v6287 = vunpack.c.h.b16 %v5776
      %v6288 = vunpack.c.l.b16 %v5777
      %v6289 = vunpack.c.h.b16 %v5777
      %v6290 = vunpack.c.l.b16 %v5778
      %v6291 = vunpack.c.h.b16 %v5778
      %v6292 = vunpack.c.l.b16 %v5779
      %v6293 = vunpack.c.h.b16 %v5779
      %v6294 = vunpack.c.l.b16 %v5780
      %v6295 = vunpack.c.h.b16 %v5780
      %v6296 = vunpack.c.l.b16 %v5781
      %v6297 = vunpack.c.h.b16 %v5781
      %v6298 = vunpack.c.l.b16 %v5782
      %v6299 = vunpack.c.h.b16 %v5782
      %v6300 = vunpack.c.l.b16 %v5783
      %v6301 = vunpack.c.h.b16 %v5783
      %v6302 = vunpack.c.l.b16 %v5784
      %v6303 = vunpack.c.h.b16 %v5784
      %v6304 = vunpack.c.l.b16 %v5785
      %v6305 = vunpack.c.h.b16 %v5785
      %v6306 = vunpack.c.l.b16 %v5786
      %v6307 = vunpack.c.h.b16 %v5786
      %v6308 = vunpack.c.l.b16 %v5787
      %v6309 = vunpack.c.h.b16 %v5787
      %v6310 = vunpack.c.l.b16 %v5788
      %v6311 = vunpack.c.h.b16 %v5788
      %v6312 = vunpack.c.l.b16 %v5789
      %v6313 = vunpack.c.h.b16 %v5789
      %v6314 = vunpack.c.l.b16 %v5790
      %v6315 = vunpack.c.h.b16 %v5790
      %v6316 = vunpack.c.l.b16 %v5791
      %v6317 = vunpack.c.h.b16 %v5791
      %v6318 = vunpack.c.l.b16 %v5792
      %v6319 = vunpack.c.h.b16 %v5792
      %v6320 = vunpack.c.l.b16 %v5793
      %v6321 = vunpack.c.h.b16 %v5793
      %v6322 = vunpack.c.l.b16 %v5794
      %v6323 = vunpack.c.h.b16 %v5794
      %v6324 = vunpack.c.l.b16 %v5795
      %v6325 = vunpack.c.h.b16 %v5795
      %v6326 = vunpack.c.l.b16 %v5796
      %v6327 = vunpack.c.h.b16 %v5796
      %v6328 = vunpack.c.l.b16 %v5797
      %v6329 = vunpack.c.h.b16 %v5797
      %v6330 = vunpack.c.l.b16 %v5798
      %v6331 = vunpack.c.h.b16 %v5798
      %v6332 = vunpack.c.l.b16 %v5799
      %v6333 = vunpack.c.h.b16 %v5799
      %v6334 = vunpack.c.l.b16 %v5800
      %v6335 = vunpack.c.h.b16 %v5800
      %v6336 = vunpack.c.l.b16 %v5801
      %v6337 = vunpack.c.h.b16 %v5801
      %v6338 = vunpack.c.l.b16 %v5802
      %v6339 = vunpack.c.h.b16 %v5802
      %v6340 = vunpack.c.l.b16 %v5803
      %v6341 = vunpack.c.h.b16 %v5803
      %v6342 = vunpack.c.l.b16 %v5804
      %v6343 = vunpack.c.h.b16 %v5804
      %v6344 = vunpack.c.l.b16 %v5805
      %v6345 = vunpack.c.h.b16 %v5805
      %v6346 = vunpack.c.l.b16 %v5806
      %v6347 = vunpack.c.h.b16 %v5806
      %v6348 = vunpack.c.l.b16 %v5807
      %v6349 = vunpack.c.h.b16 %v5807
      %v6350 = vunpack.c.l.b16 %v5808
      %v6351 = vunpack.c.h.b16 %v5808
      %v6352 = vunpack.c.l.b16 %v5809
      %v6353 = vunpack.c.h.b16 %v5809
      %v6354 = vunpack.c.l.b16 %v5810
      %v6355 = vunpack.c.h.b16 %v5810
      %v6356 = vunpack.c.l.b16 %v5811
      %v6357 = vunpack.c.h.b16 %v5811
      %v6358 = vunpack.c.l.b16 %v5812
      %v6359 = vunpack.c.h.b16 %v5812
      %v6360 = vunpack.c.l.b16 %v5813
      %v6361 = vunpack.c.h.b16 %v5813
      %v6362 = vunpack.c.l.b16 %v5814
      %v6363 = vunpack.c.h.b16 %v5814
      %v6364 = vunpack.c.l.b16 %v5815
      %v6365 = vunpack.c.h.b16 %v5815
      %v6366 = vunpack.c.l.b16 %v5816
      %v6367 = vunpack.c.h.b16 %v5816
      %v6368 = vunpack.c.l.b16 %v5817
      %v6369 = vunpack.c.h.b16 %v5817
      %v6370 = vunpack.c.l.b16 %v5818
      %v6371 = vunpack.c.h.b16 %v5818
      %v6372 = vunpack.c.l.b16 %v5819
      %v6373 = vunpack.c.h.b16 %v5819
      %v6374 = vunpack.c.l.b16 %v5820
      %v6375 = vunpack.c.h.b16 %v5820
      %v6376 = vunpack.c.l.b16 %v5821
      %v6377 = vunpack.c.h.b16 %v5821
      %v6378 = vunpack.c.l.b16 %v5822
      %v6379 = vunpack.c.h.b16 %v5822
      %v6380 = vunpack.c.l.b16 %v5823
      %v6381 = vunpack.c.h.b16 %v5823
      %v6382 = vunpack.c.l.b16 %v5824
      %v6383 = vunpack.c.h.b16 %v5824
      %v6384 = vunpack.c.l.b16 %v5825
      %v6385 = vunpack.c.h.b16 %v5825
      %v6386 = vunpack.c.l.b16 %v5826
      %v6387 = vunpack.c.h.b16 %v5826
      %v6388 = vunpack.c.l.b16 %v5827
      %v6389 = vunpack.c.h.b16 %v5827
      %v6390 = vunpack.c.l.b16 %v5828
      %v6391 = vunpack.c.h.b16 %v5828
      %v6392 = vunpack.c.l.b16 %v5829
      %v6393 = vunpack.c.h.b16 %v5829
      %v6394 = vunpack.c.l.b16 %v5830
      %v6395 = vunpack.c.h.b16 %v5830
      %v6396 = vunpack.c.l.b16 %v5831
      %v6397 = vunpack.c.h.b16 %v5831
      %v6398 = vunpack.c.l.b16 %v5832
      %v6399 = vunpack.c.h.b16 %v5832
      %v6400 = vunpack.c.l.b16 %v5833
      %v6401 = vunpack.c.h.b16 %v5833
      %v6402 = vunpack.c.l.b16 %v5834
      %v6403 = vunpack.c.h.b16 %v5834
      %v6404 = vunpack.c.l.b16 %v5835
      %v6405 = vunpack.c.h.b16 %v5835
      %v6406 = vunpack.c.l.b16 %v5836
      %v6407 = vunpack.c.h.b16 %v5836
      %v6408 = vunpack.c.l.b16 %v5837
      %v6409 = vunpack.c.h.b16 %v5837
      %v6410 = vunpack.c.l.b16 %v5838
      %v6411 = vunpack.c.h.b16 %v5838
      %v6412 = vunpack.c.l.b16 %v5839
      %v6413 = vunpack.c.h.b16 %v5839
      %v6414 = vunpack.c.l.b16 %v5840
      %v6415 = vunpack.c.h.b16 %v5840
      %v6416 = vunpack.c.l.b16 %v5841
      %v6417 = vunpack.c.h.b16 %v5841
      %v6418 = vunpack.c.l.b16 %v5842
      %v6419 = vunpack.c.h.b16 %v5842
      %v6420 = vunpack.c.l.b16 %v5843
      %v6421 = vunpack.c.h.b16 %v5843
      %v6422 = vunpack.c.l.b16 %v5844
      %v6423 = vunpack.c.h.b16 %v5844
      %v6424 = vunpack.c.l.b16 %v5845
      %v6425 = vunpack.c.h.b16 %v5845
      %v6426 = vunpack.c.l.b16 %v5846
      %v6427 = vunpack.c.h.b16 %v5846
      %v6428 = vunpack.c.l.b16 %v5847
      %v6429 = vunpack.c.h.b16 %v5847
      %v6430 = vunpack.c.l.b16 %v5848
      %v6431 = vunpack.c.h.b16 %v5848
      %v6432 = vunpack.c.l.b16 %v5849
      %v6433 = vunpack.c.h.b16 %v5849
      %v6434 = vunpack.c.l.b16 %v5850
      %v6435 = vunpack.c.h.b16 %v5850
      %v6436 = vunpack.c.l.b16 %v5851
      %v6437 = vunpack.c.h.b16 %v5851
      %v6438 = vunpack.c.l.b16 %v5852
      %v6439 = vunpack.c.h.b16 %v5852
      %v6440 = vunpack.c.l.b16 %v5853
      %v6441 = vunpack.c.h.b16 %v5853
      %v6442 = vunpack.c.l.b16 %v5854
      %v6443 = vunpack.c.h.b16 %v5854
      %v6444 = vunpack.c.l.b16 %v5855
      %v6445 = vunpack.c.h.b16 %v5855
      %v6446 = vunpack.c.l.b16 %v5856
      %v6447 = vunpack.c.h.b16 %v5856
      %v6448 = vunpack.c.l.b16 %v5857
      %v6449 = vunpack.c.h.b16 %v5857
      %v6450 = vunpack.c.l.b16 %v5858
      %v6451 = vunpack.c.h.b16 %v5858
      %v6452 = vunpack.c.l.b16 %v5859
      %v6453 = vunpack.c.h.b16 %v5859
      %v6454 = vunpack.c.l.b16 %v5860
      %v6455 = vunpack.c.h.b16 %v5860
      %v6456 = vunpack.c.l.b16 %v5861
      %v6457 = vunpack.c.h.b16 %v5861
      %v6458 = vunpack.c.l.b16 %v5862
      %v6459 = vunpack.c.h.b16 %v5862
      %v6460 = vunpack.c.l.b16 %v5863
      %v6461 = vunpack.c.h.b16 %v5863
      %v6462 = vpack.c.b16 %v6082, %v6078
      %v6463 = vpack.c.b16 %v6083, %v6079
      %v6464 = vpack.c.b16 %v6084, %v6080
      %v6465 = vpack.c.b16 %v6085, %v6081
      %v6466 = vpack.c.b16 %v6090, %v6086
      %v6467 = vpack.c.b16 %v6091, %v6087
      %v6468 = vpack.c.b16 %v6092, %v6088
      %v6469 = vpack.c.b16 %v6093, %v6089
      %v6470 = vpack.c.b16 %v6098, %v6094
      %v6471 = vpack.c.b16 %v6099, %v6095
      %v6472 = vpack.c.b16 %v6100, %v6096
      %v6473 = vpack.c.b16 %v6101, %v6097
      %v6474 = vpack.c.b16 %v6106, %v6102
      %v6475 = vpack.c.b16 %v6107, %v6103
      %v6476 = vpack.c.b16 %v6108, %v6104
      %v6477 = vpack.c.b16 %v6109, %v6105
      %v6478 = vpack.c.b16 %v6114, %v6110
      %v6479 = vpack.c.b16 %v6115, %v6111
      %v6480 = vpack.c.b16 %v6116, %v6112
      %v6481 = vpack.c.b16 %v6117, %v6113
      %v6482 = vpack.c.b16 %v6122, %v6118
      %v6483 = vpack.c.b16 %v6123, %v6119
      %v6484 = vpack.c.b16 %v6124, %v6120
      %v6485 = vpack.c.b16 %v6125, %v6121
      %v6486 = vpack.c.b16 %v6130, %v6126
      %v6487 = vpack.c.b16 %v6131, %v6127
      %v6488 = vpack.c.b16 %v6132, %v6128
      %v6489 = vpack.c.b16 %v6133, %v6129
      %v6490 = vpack.c.b16 %v6138, %v6134
      %v6491 = vpack.c.b16 %v6139, %v6135
      %v6492 = vpack.c.b16 %v6140, %v6136
      %v6493 = vpack.c.b16 %v6141, %v6137
      %v6494 = vpack.c.b16 %v6146, %v6142
      %v6495 = vpack.c.b16 %v6147, %v6143
      %v6496 = vpack.c.b16 %v6148, %v6144
      %v6497 = vpack.c.b16 %v6149, %v6145
      %v6498 = vpack.c.b16 %v6154, %v6150
      %v6499 = vpack.c.b16 %v6155, %v6151
      %v6500 = vpack.c.b16 %v6156, %v6152
      %v6501 = vpack.c.b16 %v6157, %v6153
      %v6502 = vpack.c.b16 %v6162, %v6158
      %v6503 = vpack.c.b16 %v6163, %v6159
      %v6504 = vpack.c.b16 %v6164, %v6160
      %v6505 = vpack.c.b16 %v6165, %v6161
      %v6506 = vpack.c.b16 %v6170, %v6166
      %v6507 = vpack.c.b16 %v6171, %v6167
      %v6508 = vpack.c.b16 %v6172, %v6168
      %v6509 = vpack.c.b16 %v6173, %v6169
      %v6510 = vpack.c.b16 %v6178, %v6174
      %v6511 = vpack.c.b16 %v6179, %v6175
      %v6512 = vpack.c.b16 %v6180, %v6176
      %v6513 = vpack.c.b16 %v6181, %v6177
      %v6514 = vpack.c.b16 %v6186, %v6182
      %v6515 = vpack.c.b16 %v6187, %v6183
      %v6516 = vpack.c.b16 %v6188, %v6184
      %v6517 = vpack.c.b16 %v6189, %v6185
      %v6518 = vpack.c.b16 %v6194, %v6190
      %v6519 = vpack.c.b16 %v6195, %v6191
      %v6520 = vpack.c.b16 %v6196, %v6192
      %v6521 = vpack.c.b16 %v6197, %v6193
      %v6522 = vpack.c.b16 %v6202, %v6198
      %v6523 = vpack.c.b16 %v6203, %v6199
      %v6524 = vpack.c.b16 %v6204, %v6200
      %v6525 = vpack.c.b16 %v6205, %v6201
      %v6526 = vpack.c.b16 %v6210, %v6206
      %v6527 = vpack.c.b16 %v6211, %v6207
      %v6528 = vpack.c.b16 %v6212, %v6208
      %v6529 = vpack.c.b16 %v6213, %v6209
      %v6530 = vpack.c.b16 %v6218, %v6214
      %v6531 = vpack.c.b16 %v6219, %v6215
      %v6532 = vpack.c.b16 %v6220, %v6216
      %v6533 = vpack.c.b16 %v6221, %v6217
      %v6534 = vpack.c.b16 %v6226, %v6222
      %v6535 = vpack.c.b16 %v6227, %v6223
      %v6536 = vpack.c.b16 %v6228, %v6224
      %v6537 = vpack.c.b16 %v6229, %v6225
      %v6538 = vpack.c.b16 %v6234, %v6230
      %v6539 = vpack.c.b16 %v6235, %v6231
      %v6540 = vpack.c.b16 %v6236, %v6232
      %v6541 = vpack.c.b16 %v6237, %v6233
      %v6542 = vpack.c.b16 %v6242, %v6238
      %v6543 = vpack.c.b16 %v6243, %v6239
      %v6544 = vpack.c.b16 %v6244, %v6240
      %v6545 = vpack.c.b16 %v6245, %v6241
      %v6546 = vpack.c.b16 %v6250, %v6246
      %v6547 = vpack.c.b16 %v6251, %v6247
      %v6548 = vpack.c.b16 %v6252, %v6248
      %v6549 = vpack.c.b16 %v6253, %v6249
      %v6550 = vpack.c.b16 %v6258, %v6254
      %v6551 = vpack.c.b16 %v6259, %v6255
      %v6552 = vpack.c.b16 %v6260, %v6256
      %v6553 = vpack.c.b16 %v6261, %v6257
      %v6554 = vpack.c.b16 %v6266, %v6262
      %v6555 = vpack.c.b16 %v6267, %v6263
      %v6556 = vpack.c.b16 %v6268, %v6264
      %v6557 = vpack.c.b16 %v6269, %v6265
      %v6558 = vpack.c.b16 %v6274, %v6270
      %v6559 = vpack.c.b16 %v6275, %v6271
      %v6560 = vpack.c.b16 %v6276, %v6272
      %v6561 = vpack.c.b16 %v6277, %v6273
      %v6562 = vpack.c.b16 %v6282, %v6278
      %v6563 = vpack.c.b16 %v6283, %v6279
      %v6564 = vpack.c.b16 %v6284, %v6280
      %v6565 = vpack.c.b16 %v6285, %v6281
      %v6566 = vpack.c.b16 %v6290, %v6286
      %v6567 = vpack.c.b16 %v6291, %v6287
      %v6568 = vpack.c.b16 %v6292, %v6288
      %v6569 = vpack.c.b16 %v6293, %v6289
      %v6570 = vpack.c.b16 %v6298, %v6294
      %v6571 = vpack.c.b16 %v6299, %v6295
      %v6572 = vpack.c.b16 %v6300, %v6296
      %v6573 = vpack.c.b16 %v6301, %v6297
      %v6574 = vpack.c.b16 %v6306, %v6302
      %v6575 = vpack.c.b16 %v6307, %v6303
      %v6576 = vpack.c.b16 %v6308, %v6304
      %v6577 = vpack.c.b16 %v6309, %v6305
      %v6578 = vpack.c.b16 %v6314, %v6310
      %v6579 = vpack.c.b16 %v6315, %v6311
      %v6580 = vpack.c.b16 %v6316, %v6312
      %v6581 = vpack.c.b16 %v6317, %v6313
      %v6582 = vpack.c.b16 %v6322, %v6318
      %v6583 = vpack.c.b16 %v6323, %v6319
      %v6584 = vpack.c.b16 %v6324, %v6320
      %v6585 = vpack.c.b16 %v6325, %v6321
      %v6586 = vpack.c.b16 %v6330, %v6326
      %v6587 = vpack.c.b16 %v6331, %v6327
      %v6588 = vpack.c.b16 %v6332, %v6328
      %v6589 = vpack.c.b16 %v6333, %v6329
      %v6590 = vpack.c.b16 %v6338, %v6334
      %v6591 = vpack.c.b16 %v6339, %v6335
      %v6592 = vpack.c.b16 %v6340, %v6336
      %v6593 = vpack.c.b16 %v6341, %v6337
      %v6594 = vpack.c.b16 %v6346, %v6342
      %v6595 = vpack.c.b16 %v6347, %v6343
      %v6596 = vpack.c.b16 %v6348, %v6344
      %v6597 = vpack.c.b16 %v6349, %v6345
      %v6598 = vpack.c.b16 %v6354, %v6350
      %v6599 = vpack.c.b16 %v6355, %v6351
      %v6600 = vpack.c.b16 %v6356, %v6352
      %v6601 = vpack.c.b16 %v6357, %v6353
      %v6602 = vpack.c.b16 %v6362, %v6358
      %v6603 = vpack.c.b16 %v6363, %v6359
      %v6604 = vpack.c.b16 %v6364, %v6360
      %v6605 = vpack.c.b16 %v6365, %v6361
      %v6606 = vpack.c.b16 %v6370, %v6366
      %v6607 = vpack.c.b16 %v6371, %v6367
      %v6608 = vpack.c.b16 %v6372, %v6368
      %v6609 = vpack.c.b16 %v6373, %v6369
      %v6610 = vpack.c.b16 %v6378, %v6374
      %v6611 = vpack.c.b16 %v6379, %v6375
      %v6612 = vpack.c.b16 %v6380, %v6376
      %v6613 = vpack.c.b16 %v6381, %v6377
      %v6614 = vpack.c.b16 %v6386, %v6382
      %v6615 = vpack.c.b16 %v6387, %v6383
      %v6616 = vpack.c.b16 %v6388, %v6384
      %v6617 = vpack.c.b16 %v6389, %v6385
      %v6618 = vpack.c.b16 %v6394, %v6390
      %v6619 = vpack.c.b16 %v6395, %v6391
      %v6620 = vpack.c.b16 %v6396, %v6392
      %v6621 = vpack.c.b16 %v6397, %v6393
      %v6622 = vpack.c.b16 %v6402, %v6398
      %v6623 = vpack.c.b16 %v6403, %v6399
      %v6624 = vpack.c.b16 %v6404, %v6400
      %v6625 = vpack.c.b16 %v6405, %v6401
      %v6626 = vpack.c.b16 %v6410, %v6406
      %v6627 = vpack.c.b16 %v6411, %v6407
      %v6628 = vpack.c.b16 %v6412, %v6408
      %v6629 = vpack.c.b16 %v6413, %v6409
      %v6630 = vpack.c.b16 %v6418, %v6414
      %v6631 = vpack.c.b16 %v6419, %v6415
      %v6632 = vpack.c.b16 %v6420, %v6416
      %v6633 = vpack.c.b16 %v6421, %v6417
      %v6634 = vpack.c.b16 %v6426, %v6422
      %v6635 = vpack.c.b16 %v6427, %v6423
      %v6636 = vpack.c.b16 %v6428, %v6424
      %v6637 = vpack.c.b16 %v6429, %v6425
      %v6638 = vpack.c.b16 %v6434, %v6430
      %v6639 = vpack.c.b16 %v6435, %v6431
      %v6640 = vpack.c.b16 %v6436, %v6432
      %v6641 = vpack.c.b16 %v6437, %v6433
      %v6642 = vpack.c.b16 %v6442, %v6438
      %v6643 = vpack.c.b16 %v6443, %v6439
      %v6644 = vpack.c.b16 %v6444, %v6440
      %v6645 = vpack.c.b16 %v6445, %v6441
      %v6646 = vpack.c.b16 %v6450, %v6446
      %v6647 = vpack.c.b16 %v6451, %v6447
      %v6648 = vpack.c.b16 %v6452, %v6448
      %v6649 = vpack.c.b16 %v6453, %v6449
      %v6650 = vpack.c.b16 %v6458, %v6454
      %v6651 = vpack.c.b16 %v6459, %v6455
      %v6652 = vpack.c.b16 %v6460, %v6456
      %v6653 = vpack.c.b16 %v6461, %v6457
      %6846 = vmatprep.subr.bf16.mxu0 %v6463
      %6847 = vmatpush1.bf16.msra.mxu0 %v6462
      %6848 = vmatprep.subr.bf16.mxu0 %v6467
      %6849 = vmatpush1.bf16.msra.mxu0 %v6466
      %6850 = vmatprep.subr.bf16.mxu0 %v6471
      %6851 = vmatpush1.bf16.msra.mxu0 %v6470
      %6852 = vmatprep.subr.bf16.mxu0 %v6475
      %6853 = vmatpush1.bf16.msra.mxu0 %v6474
      %6854 = vmatprep.subr.bf16.mxu0 %v6479
      %6855 = vmatpush1.bf16.msra.mxu0 %v6478
      %6856 = vmatprep.subr.bf16.mxu0 %v6483
      %6857 = vmatpush1.bf16.msra.mxu0 %v6482
      %6858 = vmatprep.subr.bf16.mxu0 %v6487
      %6859 = vmatpush1.bf16.msra.mxu0 %v6486
      %6860 = vmatprep.subr.bf16.mxu0 %v6491
      %6861 = vmatpush1.bf16.msra.mxu0 %v6490
      %6862 = vmatprep.subr.bf16.mxu0 %v6495
      %6863 = vmatpush1.bf16.msra.mxu0 %v6494
      %6864 = vmatprep.subr.bf16.mxu0 %v6499
      %6865 = vmatpush1.bf16.msra.mxu0 %v6498
      %6866 = vmatprep.subr.bf16.mxu0 %v6503
      %6867 = vmatpush1.bf16.msra.mxu0 %v6502
      %6868 = vmatprep.subr.bf16.mxu0 %v6507
      %6869 = vmatpush1.bf16.msra.mxu0 %v6506
      %6870 = vmatprep.subr.bf16.mxu0 %v6511
      %6871 = vmatpush1.bf16.msra.mxu0 %v6510
      %6872 = vmatprep.subr.bf16.mxu0 %v6515
      %6873 = vmatpush1.bf16.msra.mxu0 %v6514
      %6874 = vmatprep.subr.bf16.mxu0 %v6519
      %6875 = vmatpush1.bf16.msra.mxu0 %v6518
      %6876 = vmatprep.subr.bf16.mxu0 %v6523
      %6877 = vmatpush1.bf16.msra.mxu0 %v6522
      %6878 = vmatprep.mubr.bf16.mxu0 %v5667
      %6879 = vmatmul.mubr.bf16.gmra.mrb[0].mxu0 %v5666
      %v6880 = vpop.f32.mrb[0].mxu0
      %v6881 = vadd.f32 %v5869, %v6880
      %v6882 = vpop.f32.mrb[0].mxu0
      %v6883 = vadd.f32 %v5873, %v6882
      %v6884 = vpop.f32.mrb[0].mxu0
      %v6885 = vadd.f32 %v5869, %v6884
      %v6886 = vpop.f32.mrb[0].mxu0
      %v6887 = vadd.f32 %v5873, %v6886
      %6888 = vdwg.mxu0
      %6889 = vmatprep.subr.bf16.mxu0 %v6527
      %6890 = vmatpush1.bf16.msra.mxu0 %v6526
      %6891 = vmatprep.subr.bf16.mxu0 %v6531
      %6892 = vmatpush1.bf16.msra.mxu0 %v6530
      %6893 = vmatprep.subr.bf16.mxu0 %v6535
      %6894 = vmatpush1.bf16.msra.mxu0 %v6534
      %6895 = vmatprep.subr.bf16.mxu0 %v6539
      %6896 = vmatpush1.bf16.msra.mxu0 %v6538
      %6897 = vmatprep.subr.bf16.mxu0 %v6543
      %6898 = vmatpush1.bf16.msra.mxu0 %v6542
      %6899 = vmatprep.subr.bf16.mxu0 %v6547
      %6900 = vmatpush1.bf16.msra.mxu0 %v6546
      %6901 = vmatprep.subr.bf16.mxu0 %v6551
      %6902 = vmatpush1.bf16.msra.mxu0 %v6550
      %6903 = vmatprep.subr.bf16.mxu0 %v6555
      %6904 = vmatpush1.bf16.msra.mxu0 %v6554
      %6905 = vmatprep.subr.bf16.mxu0 %v6559
      %6906 = vmatpush1.bf16.msra.mxu0 %v6558
      %6907 = vmatprep.subr.bf16.mxu0 %v6563
      %6908 = vmatpush1.bf16.msra.mxu0 %v6562
      %6909 = vmatprep.subr.bf16.mxu0 %v6567
      %6910 = vmatpush1.bf16.msra.mxu0 %v6566
      %6911 = vmatprep.subr.bf16.mxu0 %v6571
      %6912 = vmatpush1.bf16.msra.mxu0 %v6570
      %6913 = vmatprep.subr.bf16.mxu0 %v6575
      %6914 = vmatpush1.bf16.msra.mxu0 %v6574
      %6915 = vmatprep.subr.bf16.mxu0 %v6579
      %6916 = vmatpush1.bf16.msra.mxu0 %v6578
      %6917 = vmatprep.subr.bf16.mxu0 %v6583
      %6918 = vmatpush1.bf16.msra.mxu0 %v6582
      %6919 = vmatprep.subr.bf16.mxu0 %v6587
      %6920 = vmatpush1.bf16.msra.mxu0 %v6586
      %6921 = vmatprep.mubr.bf16.mxu0 %v5669
      %6922 = vmatmul.mubr.bf16.gmra.mrb[0].mxu0 %v5668
      %v6923 = vpop.f32.mrb[0].mxu0
      %v6924 = vadd.f32 %v6881, %v6923
      %v6925 = vpop.f32.mrb[0].mxu0
      %v6926 = vadd.f32 %v6883, %v6925
      %v6927 = vpop.f32.mrb[0].mxu0
      %v6928 = vadd.f32 %v6885, %v6927
      %v6929 = vpop.f32.mrb[0].mxu0
      %v6930 = vadd.f32 %v6887, %v6929
      %6931 = vdwg.mxu0
      %6932 = vmatprep.subr.bf16.mxu0 %v6591
      %6933 = vmatpush1.bf16.msra.mxu0 %v6590
      %6934 = vmatprep.subr.bf16.mxu0 %v6595
      %6935 = vmatpush1.bf16.msra.mxu0 %v6594
      %6936 = vmatprep.subr.bf16.mxu0 %v6599
      %6937 = vmatpush1.bf16.msra.mxu0 %v6598
      %6938 = vmatprep.subr.bf16.mxu0 %v6603
      %6939 = vmatpush1.bf16.msra.mxu0 %v6602
      %6940 = vmatprep.subr.bf16.mxu0 %v6607
      %6941 = vmatpush1.bf16.msra.mxu0 %v6606
      %6942 = vmatprep.subr.bf16.mxu0 %v6611
      %6943 = vmatpush1.bf16.msra.mxu0 %v6610
      %6944 = vmatprep.subr.bf16.mxu0 %v6615
      %6945 = vmatpush1.bf16.msra.mxu0 %v6614
      %6946 = vmatprep.subr.bf16.mxu0 %v6619
      %6947 = vmatpush1.bf16.msra.mxu0 %v6618
      %6948 = vmatprep.subr.bf16.mxu0 %v6623
      %6949 = vmatpush1.bf16.msra.mxu0 %v6622
      %6950 = vmatprep.subr.bf16.mxu0 %v6627
      %6951 = vmatpush1.bf16.msra.mxu0 %v6626
      %6952 = vmatprep.subr.bf16.mxu0 %v6631
      %6953 = vmatpush1.bf16.msra.mxu0 %v6630
      %6954 = vmatprep.subr.bf16.mxu0 %v6635
      %6955 = vmatpush1.bf16.msra.mxu0 %v6634
      %6956 = vmatprep.subr.bf16.mxu0 %v6639
      %6957 = vmatpush1.bf16.msra.mxu0 %v6638
      %6958 = vmatprep.subr.bf16.mxu0 %v6643
      %6959 = vmatpush1.bf16.msra.mxu0 %v6642
      %6960 = vmatprep.subr.bf16.mxu0 %v6647
      %6961 = vmatpush1.bf16.msra.mxu0 %v6646
      %6962 = vmatprep.subr.bf16.mxu0 %v6651
      %6963 = vmatpush1.bf16.msra.mxu0 %v6650
      %6964 = vmatprep.mubr.bf16.mxu0 %v5671
      %6965 = vmatmul.mubr.bf16.gmra.mrb[0].mxu0 %v5670
      %v6966 = vpop.f32.mrb[0].mxu0
      %v6967 = vadd.f32 %v6924, %v6966
      %v6968 = vpop.f32.mrb[0].mxu0
      %v6969 = vadd.f32 %v6926, %v6968
      %v6970 = vpop.f32.mrb[0].mxu0
      %v6971 = vadd.f32 %v6928, %v6970
      %v6972 = vpop.f32.mrb[0].mxu0
      %v6973 = vadd.f32 %v6930, %v6972
      %6974 = vdwg.mxu0
      %6975 = vmatprep.subr.bf16.mxu0 %v6465
      %6976 = vmatpush1.bf16.msra.mxu0 %v6464
      %6977 = vmatprep.subr.bf16.mxu0 %v6469
      %6978 = vmatpush1.bf16.msra.mxu0 %v6468
      %6979 = vmatprep.subr.bf16.mxu0 %v6473
      %6980 = vmatpush1.bf16.msra.mxu0 %v6472
      %6981 = vmatprep.subr.bf16.mxu0 %v6477
      %6982 = vmatpush1.bf16.msra.mxu0 %v6476
      %6983 = vmatprep.subr.bf16.mxu0 %v6481
      %6984 = vmatpush1.bf16.msra.mxu0 %v6480
      %6985 = vmatprep.subr.bf16.mxu0 %v6485
      %6986 = vmatpush1.bf16.msra.mxu0 %v6484
      %6987 = vmatprep.subr.bf16.mxu0 %v6489
      %6988 = vmatpush1.bf16.msra.mxu0 %v6488
      %6989 = vmatprep.subr.bf16.mxu0 %v6493
      %6990 = vmatpush1.bf16.msra.mxu0 %v6492
      %6991 = vmatprep.subr.bf16.mxu0 %v6497
      %6992 = vmatpush1.bf16.msra.mxu0 %v6496
      %6993 = vmatprep.subr.bf16.mxu0 %v6501
      %6994 = vmatpush1.bf16.msra.mxu0 %v6500
      %6995 = vmatprep.subr.bf16.mxu0 %v6505
      %6996 = vmatpush1.bf16.msra.mxu0 %v6504
      %6997 = vmatprep.subr.bf16.mxu0 %v6509
      %6998 = vmatpush1.bf16.msra.mxu0 %v6508
      %6999 = vmatprep.subr.bf16.mxu0 %v6513
      %7000 = vmatpush1.bf16.msra.mxu0 %v6512
      %7001 = vmatprep.subr.bf16.mxu0 %v6517
      %7002 = vmatpush1.bf16.msra.mxu0 %v6516
      %7003 = vmatprep.subr.bf16.mxu0 %v6521
      %7004 = vmatpush1.bf16.msra.mxu0 %v6520
      %7005 = vmatprep.subr.bf16.mxu0 %v6525
      %7006 = vmatpush1.bf16.msra.mxu0 %v6524
      %7007 = vmatprep.mubr.bf16.mxu0 %v5667
      %7008 = vmatmul.mubr.bf16.gmra.mrb[0].mxu0 %v5666
      %v7009 = vpop.f32.mrb[0].mxu0
      %v7010 = vadd.f32 %v5877, %v7009
      %v7011 = vpop.f32.mrb[0].mxu0
      %v7012 = vadd.f32 %v5881, %v7011
      %v7013 = vpop.f32.mrb[0].mxu0
      %v7014 = vadd.f32 %v5877, %v7013
      %v7015 = vpop.f32.mrb[0].mxu0
      %v7016 = vadd.f32 %v5881, %v7015
      %7017 = vdwg.mxu0
      %7018 = vmatprep.subr.bf16.mxu0 %v6529
      %7019 = vmatpush1.bf16.msra.mxu0 %v6528
      %7020 = vmatprep.subr.bf16.mxu0 %v6533
      %7021 = vmatpush1.bf16.msra.mxu0 %v6532
      %7022 = vmatprep.subr.bf16.mxu0 %v6537
      %7023 = vmatpush1.bf16.msra.mxu0 %v6536
      %7024 = vmatprep.subr.bf16.mxu0 %v6541
      %7025 = vmatpush1.bf16.msra.mxu0 %v6540
      %7026 = vmatprep.subr.bf16.mxu0 %v6545
      %7027 = vmatpush1.bf16.msra.mxu0 %v6544
      %7028 = vmatprep.subr.bf16.mxu0 %v6549
      %7029 = vmatpush1.bf16.msra.mxu0 %v6548
      %7030 = vmatprep.subr.bf16.mxu0 %v6553
      %7031 = vmatpush1.bf16.msra.mxu0 %v6552
      %7032 = vmatprep.subr.bf16.mxu0 %v6557
      %7033 = vmatpush1.bf16.msra.mxu0 %v6556
      %7034 = vmatprep.subr.bf16.mxu0 %v6561
      %7035 = vmatpush1.bf16.msra.mxu0 %v6560
      %7036 = vmatprep.subr.bf16.mxu0 %v6565
      %7037 = vmatpush1.bf16.msra.mxu0 %v6564
      %7038 = vmatprep.subr.bf16.mxu0 %v6569
      %7039 = vmatpush1.bf16.msra.mxu0 %v6568
      %7040 = vmatprep.subr.bf16.mxu0 %v6573
      %7041 = vmatpush1.bf16.msra.mxu0 %v6572
      %7042 = vmatprep.subr.bf16.mxu0 %v6577
      %7043 = vmatpush1.bf16.msra.mxu0 %v6576
      %7044 = vmatprep.subr.bf16.mxu0 %v6581
      %7045 = vmatpush1.bf16.msra.mxu0 %v6580
      %7046 = vmatprep.subr.bf16.mxu0 %v6585
      %7047 = vmatpush1.bf16.msra.mxu0 %v6584
      %7048 = vmatprep.subr.bf16.mxu0 %v6589
      %7049 = vmatpush1.bf16.msra.mxu0 %v6588
      %7050 = vmatprep.mubr.bf16.mxu0 %v5669
      %7051 = vmatmul.mubr.bf16.gmra.mrb[0].mxu0 %v5668
      %v7052 = vpop.f32.mrb[0].mxu0
      %v7053 = vadd.f32 %v7010, %v7052
      %v7054 = vpop.f32.mrb[0].mxu0
      %v7055 = vadd.f32 %v7012, %v7054
      %v7056 = vpop.f32.mrb[0].mxu0
      %v7057 = vadd.f32 %v7014, %v7056
      %v7058 = vpop.f32.mrb[0].mxu0
      %v7059 = vadd.f32 %v7016, %v7058
      %7060 = vdwg.mxu0
      %7061 = vmatprep.subr.bf16.mxu0 %v6593
      %7062 = vmatpush1.bf16.msra.mxu0 %v6592
      %7063 = vmatprep.subr.bf16.mxu0 %v6597
      %7064 = vmatpush1.bf16.msra.mxu0 %v6596
      %7065 = vmatprep.subr.bf16.mxu0 %v6601
      %7066 = vmatpush1.bf16.msra.mxu0 %v6600
      %7067 = vmatprep.subr.bf16.mxu0 %v6605
      %7068 = vmatpush1.bf16.msra.mxu0 %v6604
      %7069 = vmatprep.subr.bf16.mxu0 %v6609
      %7070 = vmatpush1.bf16.msra.mxu0 %v6608
      %7071 = vmatprep.subr.bf16.mxu0 %v6613
      %7072 = vmatpush1.bf16.msra.mxu0 %v6612
      %7073 = vmatprep.subr.bf16.mxu0 %v6617
      %7074 = vmatpush1.bf16.msra.mxu0 %v6616
      %7075 = vmatprep.subr.bf16.mxu0 %v6621
      %7076 = vmatpush1.bf16.msra.mxu0 %v6620
      %7077 = vmatprep.subr.bf16.mxu0 %v6625
      %7078 = vmatpush1.bf16.msra.mxu0 %v6624
      %7079 = vmatprep.subr.bf16.mxu0 %v6629
      %7080 = vmatpush1.bf16.msra.mxu0 %v6628
      %7081 = vmatprep.subr.bf16.mxu0 %v6633
      %7082 = vmatpush1.bf16.msra.mxu0 %v6632
      %7083 = vmatprep.subr.bf16.mxu0 %v6637
      %7084 = vmatpush1.bf16.msra.mxu0 %v6636
      %7085 = vmatprep.subr.bf16.mxu0 %v6641
      %7086 = vmatpush1.bf16.msra.mxu0 %v6640
      %7087 = vmatprep.subr.bf16.mxu0 %v6645
      %7088 = vmatpush1.bf16.msra.mxu0 %v6644
      %7089 = vmatprep.subr.bf16.mxu0 %v6649
      %7090 = vmatpush1.bf16.msra.mxu0 %v6648
      %7091 = vmatprep.subr.bf16.mxu0 %v6653
      %7092 = vmatpush1.bf16.msra.mxu0 %v6652
      %7093 = vmatprep.mubr.bf16.mxu0 %v5671
      %7094 = vmatmul.mubr.bf16.gmra.mrb[0].mxu0 %v5670
      %v7095 = vpop.f32.mrb[0].mxu0
      %v7096 = vadd.f32 %v7053, %v7095
      %v7097 = vpop.f32.mrb[0].mxu0
      %v7098 = vadd.f32 %v7055, %v7097
      %v7099 = vpop.f32.mrb[0].mxu0
      %v7100 = vadd.f32 %v7057, %v7099
      %v7101 = vpop.f32.mrb[0].mxu0
      %v7102 = vadd.f32 %v7059, %v7101
      %7103 = vdwg.mxu0
      %v7104 = vmax.f32 %v6967, 0.0
      %v7105 = vmax.f32 %v6969, 0.0
      %v7106 = vmax.f32 %v7096, 0.0
      %v7107 = vmax.f32 %v7098, 0.0
      %v7108 = vmax.f32 %v6971, 0.0
      %v7109 = vmax.f32 %v6973, 0.0
      %v7110 = vmax.f32 %v7100, 0.0
      %v7111 = vmax.f32 %v7102, 0.0
      %v7112 = vpack.c.bf16 %v7108, %v7104
      %v7113 = vpack.c.bf16 %v7109, %v7105
      %v7114 = vpack.c.bf16 %v7110, %v7106
      %v7115 = vpack.c.bf16 %v7111, %v7107
      %v7116 = vld [vmem:[%s7] sm:$0xf]
      %v7117 = vld [vmem:[%s7 + $0x4] sm:$0xf]
      %v7118 = vld [vmem:[%s7 + $0x8] sm:$0xf]
      %v7119 = vld [vmem:[%s7 + $0xc] sm:$0xf]
      %v7120 = vld [vmem:[%s7 + $0x10] sm:$0xf]
      %v7121 = vld [vmem:[%s7 + $0x14] sm:$0xf]
      %v7122 = vld [vmem:[%s7 + $0x18] sm:$0xf]
      %v7123 = vld [vmem:[%s7 + $0x1c] sm:$0xf]
      %v7124 = vld [vmem:[%s7 + $0x20] sm:$0xf]
      %v7125 = vld [vmem:[%s7 + $0x24] sm:$0xf]
      %v7126 = vld [vmem:[%s7 + $0x28] sm:$0xf]
      %v7127 = vld [vmem:[%s7 + $0x2c] sm:$0xf]
      %v7128 = vld [vmem:[%s7 + $0x30] sm:$0xf]
      %v7129 = vld [vmem:[%s7 + $0x34] sm:$0xf]
      %v7130 = vld [vmem:[%s7 + $0x38] sm:$0xf]
      %v7131 = vld [vmem:[%s7 + $0x3c] sm:$0xf]
      %v7132 = vld [vmem:[%s7 + $0x40] sm:$0xf]
      %v7133 = vld [vmem:[%s7 + $0x44] sm:$0xf]
      %v7134 = vld [vmem:[%s7 + $0x48] sm:$0xf]
      %v7135 = vld [vmem:[%s7 + $0x4c] sm:$0xf]
      %v7136 = vld [vmem:[%s7 + $0x50] sm:$0xf]
      %v7137 = vld [vmem:[%s7 + $0x54] sm:$0xf]
      %v7138 = vld [vmem:[%s7 + $0x58] sm:$0xf]
      %v7139 = vld [vmem:[%s7 + $0x5c] sm:$0xf]
      %v7140 = vld [vmem:[%s7 + $0x60] sm:$0xf]
      %v7141 = vld [vmem:[%s7 + $0x64] sm:$0xf]
      %v7142 = vld [vmem:[%s7 + $0x68] sm:$0xf]
      %v7143 = vld [vmem:[%s7 + $0x6c] sm:$0xf]
      %v7144 = vld [vmem:[%s7 + $0x70] sm:$0xf]
      %v7145 = vld [vmem:[%s7 + $0x74] sm:$0xf]
      %v7146 = vld [vmem:[%s7 + $0x78] sm:$0xf]
      %v7147 = vld [vmem:[%s7 + $0x7c] sm:$0xf]
      %v7148 = vld [vmem:[%s7 + $0x80] sm:$0xf]
      %v7149 = vld [vmem:[%s7 + $0x84] sm:$0xf]
      %v7150 = vld [vmem:[%s7 + $0x88] sm:$0xf]
      %v7151 = vld [vmem:[%s7 + $0x8c] sm:$0xf]
      %v7152 = vld [vmem:[%s7 + $0x90] sm:$0xf]
      %v7153 = vld [vmem:[%s7 + $0x94] sm:$0xf]
      %v7154 = vld [vmem:[%s7 + $0x98] sm:$0xf]
      %v7155 = vld [vmem:[%s7 + $0x9c] sm:$0xf]
      %v7156 = vld [vmem:[%s7 + $0xa0] sm:$0xf]
      %v7157 = vld [vmem:[%s7 + $0xa4] sm:$0xf]
      %v7158 = vld [vmem:[%s7 + $0xa8] sm:$0xf]
      %v7159 = vld [vmem:[%s7 + $0xac] sm:$0xf]
      %v7160 = vld [vmem:[%s7 + $0xb0] sm:$0xf]
      %v7161 = vld [vmem:[%s7 + $0xb4] sm:$0xf]
      %v7162 = vld [vmem:[%s7 + $0xb8] sm:$0xf]
      %v7163 = vld [vmem:[%s7 + $0xbc] sm:$0xf]
      %v7164 = vld [vmem:[%s7 + $0xc0] sm:$0xf]
      %v7165 = vld [vmem:[%s7 + $0xc4] sm:$0xf]
      %v7166 = vld [vmem:[%s8] sm:$0x1]
      %v7168 = vlaneseq
      %v7169 = vshrl.u32 %v7168, 7
      %v7170 = vsub.s32 0, %v7169
      %v7171 = vrot.slane %v7166, %v7170
      %v7223 = vunpack.c.l.b16 %v7116
      %v7224 = vunpack.c.l.b16 %v7117
      %v7225 = vunpack.c.l.b16 %v7118
      %v7226 = vunpack.c.l.b16 %v7119
      %v7227 = vunpack.c.l.b16 %v7120
      %v7228 = vunpack.c.l.b16 %v7121
      %v7229 = vunpack.c.l.b16 %v7122
      %v7230 = vunpack.c.l.b16 %v7123
      %v7231 = vunpack.c.l.b16 %v7124
      %v7232 = vunpack.c.l.b16 %v7125
      %v7233 = vunpack.c.l.b16 %v7126
      %v7234 = vunpack.c.l.b16 %v7127
      %v7235 = vunpack.c.l.b16 %v7128
      %v7236 = vunpack.c.l.b16 %v7129
      %v7237 = vunpack.c.l.b16 %v7130
      %v7238 = vunpack.c.l.b16 %v7131
      %v7239 = vunpack.c.l.b16 %v7132
      %v7240 = vunpack.c.l.b16 %v7133
      %v7241 = vunpack.c.l.b16 %v7134
      %v7242 = vunpack.c.l.b16 %v7135
      %v7243 = vunpack.c.l.b16 %v7136
      %v7244 = vunpack.c.l.b16 %v7137
      %v7245 = vunpack.c.l.b16 %v7138
      %v7246 = vunpack.c.l.b16 %v7139
      %v7247 = vunpack.c.l.b16 %v7140
      %v7248 = vunpack.c.l.b16 %v7141
      %v7249 = vunpack.c.l.b16 %v7142
      %v7250 = vunpack.c.l.b16 %v7143
      %v7251 = vunpack.c.l.b16 %v7144
      %v7252 = vunpack.c.l.b16 %v7145
      %v7253 = vunpack.c.l.b16 %v7146
      %v7254 = vunpack.c.l.b16 %v7147
      %v7255 = vunpack.c.l.b16 %v7148
      %v7256 = vunpack.c.l.b16 %v7149
      %v7257 = vunpack.c.l.b16 %v7150
      %v7258 = vunpack.c.l.b16 %v7151
      %v7259 = vunpack.c.l.b16 %v7152
      %v7260 = vunpack.c.l.b16 %v7153
      %v7261 = vunpack.c.l.b16 %v7154
      %v7262 = vunpack.c.l.b16 %v7155
      %v7263 = vunpack.c.l.b16 %v7156
      %v7264 = vunpack.c.l.b16 %v7157
      %v7265 = vunpack.c.l.b16 %v7158
      %v7266 = vunpack.c.l.b16 %v7159
      %v7267 = vunpack.c.l.b16 %v7160
      %v7268 = vunpack.c.l.b16 %v7161
      %v7269 = vunpack.c.l.b16 %v7162
      %v7270 = vunpack.c.l.b16 %v7163
      %v7271 = vunpack.c.l.b16 %v7164
      %v7272 = vunpack.c.l.b16 %v7165
      %v7273 = vpack.c.b16 %v7224, %v7223
      %v7274 = vpack.c.b16 %v7226, %v7225
      %v7275 = vpack.c.b16 %v7228, %v7227
      %v7276 = vpack.c.b16 %v7230, %v7229
      %v7277 = vpack.c.b16 %v7232, %v7231
      %v7278 = vpack.c.b16 %v7234, %v7233
      %v7279 = vpack.c.b16 %v7236, %v7235
      %v7280 = vpack.c.b16 %v7238, %v7237
      %v7281 = vpack.c.b16 %v7240, %v7239
      %v7282 = vpack.c.b16 %v7242, %v7241
      %v7283 = vpack.c.b16 %v7244, %v7243
      %v7284 = vpack.c.b16 %v7246, %v7245
      %v7285 = vpack.c.b16 %v7248, %v7247
      %v7286 = vpack.c.b16 %v7250, %v7249
      %v7287 = vpack.c.b16 %v7252, %v7251
      %v7288 = vpack.c.b16 %v7254, %v7253
      %v7289 = vpack.c.b16 %v7256, %v7255
      %v7290 = vpack.c.b16 %v7258, %v7257
      %v7291 = vpack.c.b16 %v7260, %v7259
      %v7292 = vpack.c.b16 %v7262, %v7261
      %v7293 = vpack.c.b16 %v7264, %v7263
      %v7294 = vpack.c.b16 %v7266, %v7265
      %v7295 = vpack.c.b16 %v7268, %v7267
      %v7296 = vpack.c.b16 %v7270, %v7269
      %v7297 = vpack.c.b16 %v7272, %v7271
      %v7324 = vsel %vm5288, %v7115, 0
      %7326 = vmatprep.subr.bf16.mxu0 0
      %7327 = vmatpush1.bf16.msra.mxu0 %v7273
      %7328 = vmatprep.subr.bf16.mxu0 0
      %7329 = vmatpush1.bf16.msra.mxu0 %v7274
      %7330 = vmatprep.subr.bf16.mxu0 0
      %7331 = vmatpush1.bf16.msra.mxu0 %v7275
      %7332 = vmatprep.subr.bf16.mxu0 0
      %7333 = vmatpush1.bf16.msra.mxu0 %v7276
      %7334 = vmatprep.subr.bf16.mxu0 0
      %7335 = vmatpush1.bf16.msra.mxu0 %v7277
      %7336 = vmatprep.subr.bf16.mxu0 0
      %7337 = vmatpush1.bf16.msra.mxu0 %v7278
      %7338 = vmatprep.subr.bf16.mxu0 0
      %7339 = vmatpush1.bf16.msra.mxu0 %v7279
      %7340 = vmatprep.subr.bf16.mxu0 0
      %7341 = vmatpush1.bf16.msra.mxu0 %v7280
      %7342 = vmatprep.subr.bf16.mxu0 0
      %7343 = vmatpush1.bf16.msra.mxu0 %v7281
      %7344 = vmatprep.subr.bf16.mxu0 0
      %7345 = vmatpush1.bf16.msra.mxu0 %v7282
      %7346 = vmatprep.subr.bf16.mxu0 0
      %7347 = vmatpush1.bf16.msra.mxu0 %v7283
      %7348 = vmatprep.subr.bf16.mxu0 0
      %7349 = vmatpush1.bf16.msra.mxu0 %v7284
      %7350 = vmatprep.subr.bf16.mxu0 0
      %7351 = vmatpush1.bf16.msra.mxu0 %v7285
      %7352 = vmatprep.subr.bf16.mxu0 0
      %7353 = vmatpush1.bf16.msra.mxu0 %v7286
      %7354 = vmatprep.subr.bf16.mxu0 0
      %7355 = vmatpush1.bf16.msra.mxu0 %v7287
      %7356 = vmatprep.subr.bf16.mxu0 0
      %7357 = vmatpush1.bf16.msra.mxu0 %v7288
      %7358 = vmatprep.mubr.bf16.mxu0 %v7113
      %7359 = vmatmul.mubr.bf16.gmra.mrb[0].mxu0 %v7112
      %v7360 = vpop.f32.mrb[0].mxu0
      %v7361 = vadd.f32 %v7171, %v7360
      %v7362 = vpop.f32.mrb[0].mxu0
      %v7363 = vpop.f32.mrb[0].mxu0
      %v7364 = vadd.f32 %v7171, %v7363
      %v7365 = vpop.f32.mrb[0].mxu0
      %7366 = vdwg.mxu0
      %7367 = vmatprep.subr.bf16.mxu0 0
      %7368 = vmatpush1.bf16.msra.mxu0 %v7289
      %7369 = vmatprep.subr.bf16.mxu0 0
      %7370 = vmatpush1.bf16.msra.mxu0 %v7290
      %7371 = vmatprep.subr.bf16.mxu0 0
      %7372 = vmatpush1.bf16.msra.mxu0 %v7291
      %7373 = vmatprep.subr.bf16.mxu0 0
      %7374 = vmatpush1.bf16.msra.mxu0 %v7292
      %7375 = vmatprep.subr.bf16.mxu0 0
      %7376 = vmatpush1.bf16.msra.mxu0 %v7293
      %7377 = vmatprep.subr.bf16.mxu0 0
      %7378 = vmatpush1.bf16.msra.mxu0 %v7294
      %7379 = vmatprep.subr.bf16.mxu0 0
      %7380 = vmatpush1.bf16.msra.mxu0 %v7295
      %7381 = vmatprep.subr.bf16.mxu0 0
      %7382 = vmatpush1.bf16.msra.mxu0 %v7296
      %7383 = vmatprep.subr.bf16.mxu0 0
      %7384 = vmatpush1.bf16.msra.mxu0 %v7297
      %7385 = vmatprep.subr.bf16.mxu0 0
      %7386 = vmatpush1.bf16.msra.mxu0 0
      %7387 = vmatprep.subr.bf16.mxu0 0
      %7388 = vmatpush1.bf16.msra.mxu0 0
      %7389 = vmatprep.subr.bf16.mxu0 0
      %7390 = vmatpush1.bf16.msra.mxu0 0
      %7391 = vmatprep.subr.bf16.mxu0 0
      %7392 = vmatpush1.bf16.msra.mxu0 0
      %7393 = vmatprep.subr.bf16.mxu0 0
      %7394 = vmatpush1.bf16.msra.mxu0 0
      %7395 = vmatprep.subr.bf16.mxu0 0
      %7396 = vmatpush1.bf16.msra.mxu0 0
      %7397 = vmatprep.subr.bf16.mxu0 0
      %7398 = vmatpush1.bf16.msra.mxu0 0
      %7399 = vmatprep.mubr.bf16.mxu0 %v7324
      %7400 = vmatmul.mubr.bf16.gmra.mrb[0].mxu0 %v7114
      %v7401 = vpop.f32.mrb[0].mxu0
      %v7402 = vadd.f32 %v7361, %v7401
      %v7403 = vpop.f32.mrb[0].mxu0
      %v7404 = vpop.f32.mrb[0].mxu0
      %v7405 = vadd.f32 %v7364, %v7404
      %v7406 = vpop.f32.mrb[0].mxu0
      %7407 = vdwg.mxu0
      %v7408 = vmax.f32 %v7402, 0.0
      %v7409 = vmax.f32 %v7405, 0.0
      %v7410 = vpack.c.bf16 %v7409, %v7408
      %v7411 = vld [vmem:[%s9] sm:$0xf]
      %v7412 = vld [vmem:[%s9 + $0x4] sm:$0xf]
      %v7413 = vld [vmem:[%s9 + $0x8] sm:$0xf]
      %v7414 = vld [vmem:[%s9 + $0xc] sm:$0xf]
      %v7415 = vld [vmem:[%s9 + $0x10] sm:$0xf]
      %v7416 = vld [vmem:[%s9 + $0x14] sm:$0xf]
      %v7417 = vld [vmem:[%s9 + $0x18] sm:$0xf]
      %v7418 = vld [vmem:[%s9 + $0x1c] sm:$0xf]
      %v7419 = vld [vmem:[%s9 + $0x20] sm:$0xf]
      %v7420 = vld [vmem:[%s9 + $0x24] sm:$0xf]
      %v7421 = vld [vmem:[%s9 + $0x28] sm:$0xf]
      %v7422 = vld [vmem:[%s9 + $0x2c] sm:$0xf]
      %v7423 = vld [vmem:[%s9 + $0x30] sm:$0xf]
      %v7424 = vld [vmem:[%s9 + $0x34] sm:$0xf]
      %v7425 = vld [vmem:[%s9 + $0x38] sm:$0xf]
      %v7426 = vld [vmem:[%s10] sm:$0x1]
      %v7428 = vlaneseq
      %v7429 = vshrl.u32 %v7428, 7
      %v7430 = vsub.s32 0, %v7429
      %v7431 = vrot.slane %v7426, %v7430
      %v7448 = vunpack.c.l.b16 %v7411
      %v7449 = vunpack.c.l.b16 %v7412
      %v7450 = vunpack.c.l.b16 %v7413
      %v7451 = vunpack.c.l.b16 %v7414
      %v7452 = vunpack.c.l.b16 %v7415
      %v7453 = vunpack.c.l.b16 %v7416
      %v7454 = vunpack.c.l.b16 %v7417
      %v7455 = vunpack.c.l.b16 %v7418
      %v7456 = vunpack.c.l.b16 %v7419
      %v7457 = vunpack.c.l.b16 %v7420
      %v7458 = vunpack.c.l.b16 %v7421
      %v7459 = vunpack.c.l.b16 %v7422
      %v7460 = vunpack.c.l.b16 %v7423
      %v7461 = vunpack.c.l.b16 %v7424
      %v7462 = vunpack.c.l.b16 %v7425
      %v7463 = vpack.c.b16 %v7449, %v7448
      %v7464 = vpack.c.b16 %v7451, %v7450
      %v7465 = vpack.c.b16 %v7453, %v7452
      %v7466 = vpack.c.b16 %v7455, %v7454
      %v7467 = vpack.c.b16 %v7457, %v7456
      %v7468 = vpack.c.b16 %v7459, %v7458
      %v7469 = vpack.c.b16 %v7461, %v7460
      %v7470 = vpack.c.b16 %v7462, %v7462
      %vm7478 = vcmask 982016
      %v7480 = vsel %vm7478, %v7410, 0
      %vm7482 = vcmask 1043456
      %v7484 = vsel %vm7482, %v7470, 0
      %7486 = vmatprep.subr.bf16.mxu0 0
      %7487 = vmatpush1.bf16.msra.mxu0 %v7463
      %7488 = vmatprep.subr.bf16.mxu0 0
      %7489 = vmatpush1.bf16.msra.mxu0 %v7464
      %7490 = vmatprep.subr.bf16.mxu0 0
      %7491 = vmatpush1.bf16.msra.mxu0 %v7465
      %7492 = vmatprep.subr.bf16.mxu0 0
      %7493 = vmatpush1.bf16.msra.mxu0 %v7466
      %7494 = vmatprep.subr.bf16.mxu0 0
      %7495 = vmatpush1.bf16.msra.mxu0 %v7467
      %7496 = vmatprep.subr.bf16.mxu0 0
      %7497 = vmatpush1.bf16.msra.mxu0 %v7468
      %7498 = vmatprep.subr.bf16.mxu0 0
      %7499 = vmatpush1.bf16.msra.mxu0 %v7469
      %7500 = vmatprep.subr.bf16.mxu0 0
      %7501 = vmatpush1.bf16.msra.mxu0 %v7484
      %7502 = vmatprep.subr.bf16.mxu0 0
      %7503 = vmatpush1.bf16.msra.mxu0 0
      %7504 = vmatprep.subr.bf16.mxu0 0
      %7505 = vmatpush1.bf16.msra.mxu0 0
      %7506 = vmatprep.subr.bf16.mxu0 0
      %7507 = vmatpush1.bf16.msra.mxu0 0
      %7508 = vmatprep.subr.bf16.mxu0 0
      %7509 = vmatpush1.bf16.msra.mxu0 0
      %7510 = vmatprep.subr.bf16.mxu0 0
      %7511 = vmatpush1.bf16.msra.mxu0 0
      %7512 = vmatprep.subr.bf16.mxu0 0
      %7513 = vmatpush1.bf16.msra.mxu0 0
      %7514 = vmatprep.subr.bf16.mxu0 0
      %7515 = vmatpush1.bf16.msra.mxu0 0
      %7516 = vmatprep.subr.bf16.mxu0 0
      %7517 = vmatpush1.bf16.msra.mxu0 0
      %7518 = vmatprep.mubr.bf16.mxu0 0
      %7519 = vmatmul.mubr.bf16.gmra.mrb[0].mxu0 %v7480
      %v7520 = vpop.f32.mrb[0].mxu0
      %v7521 = vadd.f32 %v7431, %v7520
      %v7522 = vpop.f32.mrb[0].mxu0
      %v7523 = vpop.f32.mrb[0].mxu0
      %v7524 = vadd.f32 %v7431, %v7523
      %v7525 = vpop.f32.mrb[0].mxu0
      %7526 = vdwg.mxu0
      %v7527 = vmax.f32 %v7521, 0.0
      %v7528 = vmax.f32 %v7524, 0.0
      %v7529 = vpack.c.bf16 %v7528, %v7527
      %v7530 = vld [vmem:[%s11] sm:$0xf]
      %v7531 = vld [vmem:[%s11 + $0x4] sm:$0xf]
      %v7532 = vld [vmem:[%s11 + $0x8] sm:$0xf]
      %v7533 = vld [vmem:[%s11 + $0xc] sm:$0xf]
      %v7534 = vld [vmem:[%s11 + $0x10] sm:$0xf]
      %v7535 = vld [vmem:[%s11 + $0x14] sm:$0xf]
      %v7536 = vld [vmem:[%s11 + $0x18] sm:$0xf]
      %v7537 = vld [vmem:[%s11 + $0x1c] sm:$0x3]
      %v7538 = vld [vmem:[%s12] sm:$0x1]
      %v7540 = vlaneseq
      %v7541 = vshrl.u32 %v7540, 7
      %v7542 = vsub.s32 0, %v7541
      %v7543 = vrot.slane %v7538, %v7542
      %v7553 = vunpack.c.l.b16 %v7530
      %v7554 = vunpack.c.l.b16 %v7531
      %v7555 = vunpack.c.l.b16 %v7532
      %v7556 = vunpack.c.l.b16 %v7533
      %v7557 = vunpack.c.l.b16 %v7534
      %v7558 = vunpack.c.l.b16 %v7535
      %v7559 = vunpack.c.l.b16 %v7536
      %v7560 = vunpack.c.l.b16 %v7537
      %v7561 = vpack.c.b16 %v7554, %v7553
      %v7562 = vpack.c.b16 %v7556, %v7555
      %v7563 = vpack.c.b16 %v7558, %v7557
      %v7564 = vpack.c.b16 %v7560, %v7559
      %vm7568 = vcmask 490496
      %v7570 = vsel %vm7568, %v7529, 0
      %vm7572 = vcmask 1045504
      %v7574 = vsel %vm7572, %v7564, 0
      %7576 = vmatprep.subr.bf16.mxu0 0
      %7577 = vmatpush1.bf16.msra.mxu0 %v7561
      %7578 = vmatprep.subr.bf16.mxu0 0
      %7579 = vmatpush1.bf16.msra.mxu0 %v7562
      %7580 = vmatprep.subr.bf16.mxu0 0
      %7581 = vmatpush1.bf16.msra.mxu0 %v7563
      %7582 = vmatprep.subr.bf16.mxu0 0
      %7583 = vmatpush1.bf16.msra.mxu0 %v7574
      %7584 = vmatprep.subr.bf16.mxu0 0
      %7585 = vmatpush1.bf16.msra.mxu0 0
      %7586 = vmatprep.subr.bf16.mxu0 0
      %7587 = vmatpush1.bf16.msra.mxu0 0
      %7588 = vmatprep.subr.bf16.mxu0 0
      %7589 = vmatpush1.bf16.msra.mxu0 0
      %7590 = vmatprep.subr.bf16.mxu0 0
      %7591 = vmatpush1.bf16.msra.mxu0 0
      %7592 = vmatprep.subr.bf16.mxu0 0
      %7593 = vmatpush1.bf16.msra.mxu0 0
      %7594 = vmatprep.subr.bf16.mxu0 0
      %7595 = vmatpush1.bf16.msra.mxu0 0
      %7596 = vmatprep.subr.bf16.mxu0 0
      %7597 = vmatpush1.bf16.msra.mxu0 0
      %7598 = vmatprep.subr.bf16.mxu0 0
      %7599 = vmatpush1.bf16.msra.mxu0 0
      %7600 = vmatprep.subr.bf16.mxu0 0
      %7601 = vmatpush1.bf16.msra.mxu0 0
      %7602 = vmatprep.subr.bf16.mxu0 0
      %7603 = vmatpush1.bf16.msra.mxu0 0
      %7604 = vmatprep.subr.bf16.mxu0 0
      %7605 = vmatpush1.bf16.msra.mxu0 0
      %7606 = vmatprep.subr.bf16.mxu0 0
      %7607 = vmatpush1.bf16.msra.mxu0 0
      %7608 = vmatprep.mubr.bf16.mxu0 0
      %7609 = vmatmul.mubr.bf16.gmra.mrb[0].mxu0 %v7570
      %v7610 = vpop.f32.mrb[0].mxu0
      %v7611 = vadd.f32 %v7543, %v7610
      %v7612 = vpop.f32.mrb[0].mxu0
      %v7613 = vpop.f32.mrb[0].mxu0
      %v7614 = vadd.f32 %v7543, %v7613
      %v7615 = vpop.f32.mrb[0].mxu0
      %7616 = vdwg.mxu0
      %vm7617 = vcmask 80896
      %7618 = vst.msk [vmem:[%s445] sm:$0xff] %vm7617, %v7611
      %7619 = vst.msk [vmem:[%s445 + $0x8] sm:$0xff] %vm7617, %v7614
      %s7620 = smul.u32 2, %s24
      %p7621 = scmp.lt.s32.totalorder %s7620, 3
      %s7622 = scalar_select %p7621, %s7620, 3
      %s7623 = smul.addr %s7622, 8
      %s7624 = scalar_lea.vmem %s13, %s7623
      // Predicated region
      $region87: #{network_forward.1} parent=71 // pred_check
        %p7625 = pneg %p320
      $region88: #{network_forward.1} parent=71 // pred_check_branch
        %7627 = sbr.rel (%p7625) target = $region90
      $region89: #{network_forward.1} parent=71 // pred_region
        %s7628 = smul.u32 2, %s24
      $region90: #{network_forward.1} parent=71 // pred_fallthru
        _
    $region72: #{network_forward.1} parent=5 // pred_fallthru
      _
    %p7629 = scmp.le.s32.totalorder 2, %s19
    // Predicated region
    $region91: #{network_forward.1} parent=5 // pred_check
      %p7630 = pneg %p7629
    $region92: #{network_forward.1} parent=5 // pred_check_branch
      %7632 = sbr.rel (%p7630) target = $region94
    $region93: #{network_forward.1} parent=5 // pred_region
      %s7633 = ssub.s32 %s19, 2
      // Predicated region
      $region95: #{network_forward.1} parent=93 // pred_check
        %p7634 = pneg %p326
      $region96: #{network_forward.1} parent=93 // pred_check_branch
        %7636 = sbr.rel (%p7634) target = $region98
      $region97: #{network_forward.1} parent=93 // pred_region
        %s7637 = smul.u32 2, %s25
        %p7638 = scmp.lt.s32.totalorder %s7637, 3
        %s7639 = scalar_select %p7638, %s7637, 3
        %s7640 = smul.addr %s7639, 8
        %s7641 = scalar_lea.vmem %s13, %s7640
      $region98: #{network_forward.1} parent=93 // pred_fallthru
        _
    $region94: #{network_forward.1} parent=5 // pred_fallthru
      _
  $region6: #{network_forward.1} parent=0 // loop_footer
    %s23 = sadd.s32 1, %s19
  $region7: #{network_forward.1} parent=0 // loop_footer_branch
    %18 = sbr.rel target = $region3
  $region8: #{network_forward.1} parent=0 // loop_exit
    _

</llo_original>
